<compile_context>
chip_gen: v5e
topology: v5e:2x2
jax: 0.10.0
libtpu: 0.0.40
codegen_flags: <defaults>
</compile_context>

<pallas_src>
import functools
import math

import jax
import jax.numpy as jnp
from jax.experimental import pallas as pl
from jax.experimental.pallas import tpu as pltpu


# ----------------------------------------------------------------------------
# In-kernel helpers
# ----------------------------------------------------------------------------

def _mm(a, b):
    """MXU matmul: bf16 operands (weights are already bf16), f32 accumulation."""
    return jnp.dot(a.astype(jnp.bfloat16), b.astype(jnp.bfloat16),
                   preferred_element_type=jnp.float32)


def _layernorm(z, g, b, eps):
    mu = jnp.mean(z, axis=-1, keepdims=True)
    var = jnp.mean((z - mu) ** 2, axis=-1, keepdims=True)
    return (z - mu) * jax.lax.rsqrt(var + eps) * g + b


# Per-branch argument layout: x + these keys (order matters).
_BRANCH_KEYS = ("dft_cosT", "dft_nsinT", "in_w_re", "in_w_im", "in_b", "pe",
                "qkv_w", "qkv_b", "out_w_hm", "out_b",
                "ff1_w", "ff1_b", "ff2_w", "ff2_b",
                "ln1_g", "ln1_b", "ln2_g", "ln2_b")
_N_BRANCH_ARGS = 1 + len(_BRANCH_KEYS)          # = 19


def _branch_compute(refs, *, num_layers, nhead, d_model, eps):
    """rfft -> proj -> L post-LN encoder layers -> mean pool for ONE batch element."""
    (x_ref, cosT_ref, nsinT_ref, w_re_ref, w_im_ref, in_b_ref, pe_ref,
     qkv_w_ref, qkv_b_ref, out_w_ref, out_b_ref,
     ff1_w_ref, ff1_b_ref, ff2_w_ref, ff2_b_ref,
     ln1_g_ref, ln1_b_ref, ln2_g_ref, ln2_b_ref) = refs

    f32 = jnp.float32
    bf16 = jnp.bfloat16

    x = x_ref[0].astype(bf16)                                       # (N, F)

    # torch.fft.rfft(x, dim=1) + real|imag concat folded into the input projection,
    # re-associated so every intermediate is D lanes wide:
    #   [real | imag] @ W = cosT @ (x @ W_re) + (-sinT) @ (x @ W_im)
    xWre = jnp.dot(x, w_re_ref[...], preferred_element_type=f32)    # (N, D)
    xWim = jnp.dot(x, w_im_ref[...], preferred_element_type=f32)    # (N, D)
    h = (jnp.dot(cosT_ref[...], xWre.astype(bf16), preferred_element_type=f32)
         + jnp.dot(nsinT_ref[...], xWim.astype(bf16), preferred_element_type=f32)
         + in_b_ref[...])                                           # (K, D)
    h = h * math.sqrt(d_model) + pe_ref[...]

    dh = d_model // nhead
    scale = 1.0 / math.sqrt(dh)
    K = h.shape[0]

    for l in range(num_layers):
        # ----------------- self-attention (post-LN encoder layer) -----------------
        qkv = _mm(h, qkv_w_ref[l]) + qkv_b_ref[l]                   # (K, 3D) f32
        attn = jnp.zeros((K, d_model), f32)
        for hd in range(nhead):
            q = qkv[:, hd * dh:(hd + 1) * dh]
            k = qkv[:, d_model + hd * dh:d_model + (hd + 1) * dh]
            v = qkv[:, 2 * d_model + hd * dh:2 * d_model + (hd + 1) * dh]
            s = jax.lax.dot_general(
                q.astype(bf16), k.astype(bf16),
                (((1,), (1,)), ((), ())),
                preferred_element_type=f32) * scale                 # (K, K)
            m = jnp.max(s, axis=-1, keepdims=True)
            p = jnp.exp(s - m)
            p = p * pl.reciprocal(jnp.sum(p, axis=-1, keepdims=True), approx=True)
            ctx = _mm(p, v)                                         # (K, dh)
            # head merge folded into the output projection (no concatenate)
            attn = attn + _mm(ctx, out_w_ref[l, hd])                # (K, D)
        attn = attn + out_b_ref[l]
        h = _layernorm(h + attn, ln1_g_ref[l], ln1_b_ref[l], eps)

        # --------------------------------- FFN ------------------------------------
        ff = jnp.maximum(_mm(h, ff1_w_ref[l]) + ff1_b_ref[l], 0.0)
        ff = _mm(ff, ff2_w_ref[l]) + ff2_b_ref[l]
        h = _layernorm(h + ff, ln2_g_ref[l], ln2_b_ref[l], eps)

    return jnp.mean(h, axis=0, keepdims=True)                       # (1, D)


# ----------------------------------------------------------------------------
# Fully fused kernel: branch A + branch B + fuse-add + MLP classifier per batch elem
# ----------------------------------------------------------------------------

def _fused_kernel(*refs, num_layers, nhead, d_model, eps):
    nb = _N_BRANCH_ARGS
    a_refs = refs[:nb]
    b_refs = refs[nb:2 * nb]
    cls1_w_ref, cls1_b_ref, cls2_w_ref, cls2_b_ref, o_ref = refs[2 * nb:]

    feat_a = _branch_compute(a_refs, num_layers=num_layers, nhead=nhead,
                             d_model=d_model, eps=eps)              # (1, D)
    feat_b = _branch_compute(b_refs, num_layers=num_layers, nhead=nhead,
                             d_model=d_model, eps=eps)              # (1, D)

    fused = feat_a + feat_b
    hcls = jnp.maximum(_mm(fused, cls1_w_ref[...]) + cls1_b_ref[...], 0.0)
    logits = _mm(hcls, cls2_w_ref[...]) + cls2_b_ref[...]           # (1, Cpad)
    o_ref[0] = logits.astype(o_ref.dtype)


def _full_spec(a):
    zeros = (0,) * a.ndim
    return pl.BlockSpec(a.shape, lambda b: zeros)


def _branch_args(bp, x):
    arrs = [x] + [bp[k] for k in _BRANCH_KEYS]
    specs = ([pl.BlockSpec((1,) + x.shape[1:], lambda b: (b, 0, 0))]
             + [_full_spec(bp[k]) for k in _BRANCH_KEYS])
    return arrs, specs


def paired_fft_transformer_forward(params, x1, x2):
    """x1: (B, seq_len_A, feat_A), x2: (B, seq_len_B, feat_B) -> (B, class_num)."""
    tA, tB = params["transformer_A"], params["transformer_B"]
    B = x1.shape[0]
    D = int(params["d_model"])
    H = int(params["nhead"])
    L = int(params["num_layers"])
    Cp = params["cls2_w_pad"].shape[1]

    arrs_a, specs_a = _branch_args(tA, x1.astype(jnp.float32))
    arrs_b, specs_b = _branch_args(tB, x2.astype(jnp.float32))
    cls_arrs = [params["cls1_w"], params["cls1_b"],
                params["cls2_w_pad"], params["cls2_b_pad"]]
    cls_specs = [_full_spec(a) for a in cls_arrs]

    out = pl.pallas_call(
        functools.partial(_fused_kernel, num_layers=L, nhead=H,
                          d_model=D, eps=1e-5),
        out_shape=jax.ShapeDtypeStruct((B, 1, Cp), jnp.float32),
        grid=(B,),
        in_specs=specs_a + specs_b + cls_specs,
        out_specs=pl.BlockSpec((1, 1, Cp), lambda b: (b, 0, 0)),
        compiler_params=pltpu.CompilerParams(
            dimension_semantics=("parallel",)),
    )(*arrs_a, *arrs_b, *cls_arrs)

    return out.reshape(B, Cp)[:, :params["class_num"]]


# ----------------------------------------------------------------------------
# Parameter construction (rfft bases, positional encoding, weights; bf16 pre-cast)
# ----------------------------------------------------------------------------

def rfft_matrices_T(n):
    """Transposed real-DFT bases (K, N): real = cosT @ x, imag = (-sinT) @ x."""
    k = jnp.arange(n // 2 + 1, dtype=jnp.float32)[:, None]
    nn = jnp.arange(n, dtype=jnp.float32)[None, :]
    ang = 2.0 * math.pi * k * nn / float(n)
    return jnp.cos(ang), -jnp.sin(ang)


def positional_encoding(max_len, d_model):
    position = jnp.arange(max_len, dtype=jnp.float32)[:, None]
    div_term = jnp.exp(jnp.arange(0, d_model, 2, dtype=jnp.float32)
                       * (-math.log(10000.0) / d_model))
    pe = jnp.zeros((max_len, d_model), jnp.float32)
    pe = pe.at[:, 0::2].set(jnp.sin(position * div_term))
    pe = pe.at[:, 1::2].set(jnp.cos(position * div_term))
    return pe


def _dense(key, shape, scale=0.05):
    return scale * jax.random.normal(key, shape, dtype=jnp.float32)


def init_transformer_params(key, input_size, d_model, nhead, num_layers,
                            dim_ff, seq_len):
    freq = seq_len // 2 + 1
    keys = jax.random.split(key, 1 + num_layers)
    # matches PyTorch init_weights(): uniform(-0.1, 0.1) weight, zero bias
    in_w = jax.random.uniform(keys[0], (input_size, d_model),
                              jnp.float32, -0.1, 0.1)
    feat = input_size // 2
    dh = d_model // nhead
    qkv_w, out_w_hm, ff1_w, ff2_w = [], [], [], []
    for li in range(num_layers):
        lk = jax.random.split(keys[1 + li], 4)
        qkv_w.append(_dense(lk[0], (d_model, 3 * d_model)))
        # head-major repack of the output projection: (nhead, dh, d_model)
        out_w_hm.append(_dense(lk[1], (d_model, d_model)).reshape(nhead, dh, d_model))
        ff1_w.append(_dense(lk[2], (d_model, dim_ff)))
        ff2_w.append(_dense(lk[3], (dim_ff, d_model)))
    cosT, nsinT = rfft_matrices_T(seq_len)
    L = num_layers
    bf16, f32 = jnp.bfloat16, jnp.float32
    return {
        "dft_cosT": cosT.astype(bf16), "dft_nsinT": nsinT.astype(bf16),
        "in_w_re": in_w[:feat].astype(bf16), "in_w_im": in_w[feat:].astype(bf16),
        "in_b": jnp.zeros((1, d_model), f32),
        "pe": positional_encoding(freq, d_model),
        "qkv_w": jnp.stack(qkv_w).astype(bf16),
        "qkv_b": jnp.zeros((L, 1, 3 * d_model), f32),
        "out_w_hm": jnp.stack(out_w_hm).astype(bf16),
        "out_b": jnp.zeros((L, 1, d_model), f32),
        "ff1_w": jnp.stack(ff1_w).astype(bf16),
        "ff1_b": jnp.zeros((L, 1, dim_ff), f32),
        "ff2_w": jnp.stack(ff2_w).astype(bf16),
        "ff2_b": jnp.zeros((L, 1, d_model), f32),
        "ln1_g": jnp.ones((L, 1, d_model), f32),
        "ln1_b": jnp.zeros((L, 1, d_model), f32),
        "ln2_g": jnp.ones((L, 1, d_model), f32),
        "ln2_b": jnp.zeros((L, 1, d_model), f32),
    }


def init_params(key, feature_num_A, feature_num_B, seq_len_A, seq_len_B,
                class_num, d_model, nhead, num_layers, dim_ff, mlp_hidden):
    kA, kB, kc1, kc2 = jax.random.split(key, 4)
    tA = init_transformer_params(kA, feature_num_A * 2, d_model, nhead,
                                 num_layers, dim_ff, seq_len_A)
    tB = init_transformer_params(kB, feature_num_B * 2, d_model, nhead,
                                 num_layers, dim_ff, seq_len_B)
    # classifier: second Linear lane-padded to 128 output columns (sliced in wrapper)
    c_pad = 128
    cls2_w = _dense(kc2, (mlp_hidden, class_num))
    cls2_w_pad = jnp.zeros((mlp_hidden, c_pad), jnp.float32).at[:, :class_num].set(cls2_w)
    return {
        "transformer_A": tA, "transformer_B": tB,
        "cls1_w": _dense(kc1, (d_model, mlp_hidden)).astype(jnp.bfloat16),
        "cls1_b": jnp.zeros((1, mlp_hidden), jnp.float32),
        "cls2_w_pad": cls2_w_pad.astype(jnp.bfloat16),
        "cls2_b_pad": jnp.zeros((1, c_pad), jnp.float32),
        "class_num": class_num,
        "d_model": d_model, "nhead": nhead, "num_layers": num_layers,
    }


# ----------------------------------------------------------------------------
# Main
# ----------------------------------------------------------------------------

if __name__ == "__main__":
    B = 2
    feature_num_A, feature_num_B = 4, 6
    seq_len_A, seq_len_B = 16, 12
    class_num = 3
    d_model, nhead = 32, 4
    num_encoder_layers, dim_feedforward, mlp_hidden_dim = 2, 64, 64

    key = jax.random.PRNGKey(0)
    k_x1, k_x2, k_params = jax.random.split(key, 3)
    x1 = jax.random.normal(k_x1, (B, seq_len_A, feature_num_A), jnp.float32)
    x2 = jax.random.normal(k_x2, (B, seq_len_B, feature_num_B), jnp.float32)

    params = init_params(k_params, feature_num_A, feature_num_B,
                         seq_len_A, seq_len_B, class_num,
                         d_model, nhead, num_encoder_layers,
                         dim_feedforward, mlp_hidden_dim)

    out = paired_fft_transformer_forward(params, x1, x2)
    out = jax.block_until_ready(out)
    assert out.shape == (B, class_num)
    assert jnp.all(jnp.isfinite(out))
    print("KERNEL_OK")
</pallas_src>

<mosaic_0001>
module attributes {stable_mosaic.version = 11 : i64} {
  func.func @_fused_kernel(%arg0: i32, %arg1: memref<1x16x4xf32, #tpu.memory_space<vmem>>, %arg2: memref<9x16xbf16, #tpu.memory_space<vmem>>, %arg3: memref<9x16xbf16, #tpu.memory_space<vmem>>, %arg4: memref<4x32xbf16, #tpu.memory_space<vmem>>, %arg5: memref<4x32xbf16, #tpu.memory_space<vmem>>, %arg6: memref<1x32xf32, #tpu.memory_space<vmem>>, %arg7: memref<9x32xf32, #tpu.memory_space<vmem>>, %arg8: memref<2x32x96xbf16, #tpu.memory_space<vmem>>, %arg9: memref<2x1x96xf32, #tpu.memory_space<vmem>>, %arg10: memref<2x4x8x32xbf16, #tpu.memory_space<vmem>>, %arg11: memref<2x1x32xf32, #tpu.memory_space<vmem>>, %arg12: memref<2x32x64xbf16, #tpu.memory_space<vmem>>, %arg13: memref<2x1x64xf32, #tpu.memory_space<vmem>>, %arg14: memref<2x64x32xbf16, #tpu.memory_space<vmem>>, %arg15: memref<2x1x32xf32, #tpu.memory_space<vmem>>, %arg16: memref<2x1x32xf32, #tpu.memory_space<vmem>>, %arg17: memref<2x1x32xf32, #tpu.memory_space<vmem>>, %arg18: memref<2x1x32xf32, #tpu.memory_space<vmem>>, %arg19: memref<2x1x32xf32, #tpu.memory_space<vmem>>, %arg20: memref<1x12x6xf32, #tpu.memory_space<vmem>>, %arg21: memref<7x12xbf16, #tpu.memory_space<vmem>>, %arg22: memref<7x12xbf16, #tpu.memory_space<vmem>>, %arg23: memref<6x32xbf16, #tpu.memory_space<vmem>>, %arg24: memref<6x32xbf16, #tpu.memory_space<vmem>>, %arg25: memref<1x32xf32, #tpu.memory_space<vmem>>, %arg26: memref<7x32xf32, #tpu.memory_space<vmem>>, %arg27: memref<2x32x96xbf16, #tpu.memory_space<vmem>>, %arg28: memref<2x1x96xf32, #tpu.memory_space<vmem>>, %arg29: memref<2x4x8x32xbf16, #tpu.memory_space<vmem>>, %arg30: memref<2x1x32xf32, #tpu.memory_space<vmem>>, %arg31: memref<2x32x64xbf16, #tpu.memory_space<vmem>>, %arg32: memref<2x1x64xf32, #tpu.memory_space<vmem>>, %arg33: memref<2x64x32xbf16, #tpu.memory_space<vmem>>, %arg34: memref<2x1x32xf32, #tpu.memory_space<vmem>>, %arg35: memref<2x1x32xf32, #tpu.memory_space<vmem>>, %arg36: memref<2x1x32xf32, #tpu.memory_space<vmem>>, %arg37: memref<2x1x32xf32, #tpu.memory_space<vmem>>, %arg38: memref<2x1x32xf32, #tpu.memory_space<vmem>>, %arg39: memref<32x64xbf16, #tpu.memory_space<vmem>>, %arg40: memref<1x64xf32, #tpu.memory_space<vmem>>, %arg41: memref<64x128xbf16, #tpu.memory_space<vmem>>, %arg42: memref<1x128xf32, #tpu.memory_space<vmem>>, %arg43: memref<1x1x128xf32, #tpu.memory_space<vmem>>) attributes {dimension_semantics = [#tpu.dimension_semantics<parallel>], iteration_bounds = array<i64: 2>, scalar_prefetch = 0 : i64, scratch_operands = 0 : i64, tpu.core_type = #tpu.core_type<tc>, window_params = [{transform_indices = @transform_0, window_bounds = array<i64: 1, 16, 4>}, {pipeline_mode = #tpu.pipeline_mode<synchronous>, transform_indices = @transform_1, window_bounds = array<i64: 9, 16>}, {pipeline_mode = #tpu.pipeline_mode<synchronous>, transform_indices = @transform_2, window_bounds = array<i64: 9, 16>}, {pipeline_mode = #tpu.pipeline_mode<synchronous>, transform_indices = @transform_3, window_bounds = array<i64: 4, 32>}, {pipeline_mode = #tpu.pipeline_mode<synchronous>, transform_indices = @transform_4, window_bounds = array<i64: 4, 32>}, {pipeline_mode = #tpu.pipeline_mode<synchronous>, transform_indices = @transform_5, window_bounds = array<i64: 1, 32>}, {pipeline_mode = #tpu.pipeline_mode<synchronous>, transform_indices = @transform_6, window_bounds = array<i64: 9, 32>}, {pipeline_mode = #tpu.pipeline_mode<synchronous>, transform_indices = @transform_7, window_bounds = array<i64: 2, 32, 96>}, {pipeline_mode = #tpu.pipeline_mode<synchronous>, transform_indices = @transform_8, window_bounds = array<i64: 2, 1, 96>}, {pipeline_mode = #tpu.pipeline_mode<synchronous>, transform_indices = @transform_9, window_bounds = array<i64: 2, 4, 8, 32>}, {pipeline_mode = #tpu.pipeline_mode<synchronous>, transform_indices = @transform_10, window_bounds = array<i64: 2, 1, 32>}, {pipeline_mode = #tpu.pipeline_mode<synchronous>, transform_indices = @transform_11, window_bounds = array<i64: 2, 32, 64>}, {pipeline_mode = #tpu.pipeline_mode<synchronous>, transform_indices = @transform_12, window_bounds = array<i64: 2, 1, 64>}, {pipeline_mode = #tpu.pipeline_mode<synchronous>, transform_indices = @transform_13, window_bounds = array<i64: 2, 64, 32>}, {pipeline_mode = #tpu.pipeline_mode<synchronous>, transform_indices = @transform_14, window_bounds = array<i64: 2, 1, 32>}, {pipeline_mode = #tpu.pipeline_mode<synchronous>, transform_indices = @transform_15, window_bounds = array<i64: 2, 1, 32>}, {pipeline_mode = #tpu.pipeline_mode<synchronous>, transform_indices = @transform_16, window_bounds = array<i64: 2, 1, 32>}, {pipeline_mode = #tpu.pipeline_mode<synchronous>, transform_indices = @transform_17, window_bounds = array<i64: 2, 1, 32>}, {pipeline_mode = #tpu.pipeline_mode<synchronous>, transform_indices = @transform_18, window_bounds = array<i64: 2, 1, 32>}, {transform_indices = @transform_19, window_bounds = array<i64: 1, 12, 6>}, {pipeline_mode = #tpu.pipeline_mode<synchronous>, transform_indices = @transform_20, window_bounds = array<i64: 7, 12>}, {pipeline_mode = #tpu.pipeline_mode<synchronous>, transform_indices = @transform_21, window_bounds = array<i64: 7, 12>}, {pipeline_mode = #tpu.pipeline_mode<synchronous>, transform_indices = @transform_22, window_bounds = array<i64: 6, 32>}, {pipeline_mode = #tpu.pipeline_mode<synchronous>, transform_indices = @transform_23, window_bounds = array<i64: 6, 32>}, {pipeline_mode = #tpu.pipeline_mode<synchronous>, transform_indices = @transform_24, window_bounds = array<i64: 1, 32>}, {pipeline_mode = #tpu.pipeline_mode<synchronous>, transform_indices = @transform_25, window_bounds = array<i64: 7, 32>}, {pipeline_mode = #tpu.pipeline_mode<synchronous>, transform_indices = @transform_26, window_bounds = array<i64: 2, 32, 96>}, {pipeline_mode = #tpu.pipeline_mode<synchronous>, transform_indices = @transform_27, window_bounds = array<i64: 2, 1, 96>}, {pipeline_mode = #tpu.pipeline_mode<synchronous>, transform_indices = @transform_28, window_bounds = array<i64: 2, 4, 8, 32>}, {pipeline_mode = #tpu.pipeline_mode<synchronous>, transform_indices = @transform_29, window_bounds = array<i64: 2, 1, 32>}, {pipeline_mode = #tpu.pipeline_mode<synchronous>, transform_indices = @transform_30, window_bounds = array<i64: 2, 32, 64>}, {pipeline_mode = #tpu.pipeline_mode<synchronous>, transform_indices = @transform_31, window_bounds = array<i64: 2, 1, 64>}, {pipeline_mode = #tpu.pipeline_mode<synchronous>, transform_indices = @transform_32, window_bounds = array<i64: 2, 64, 32>}, {pipeline_mode = #tpu.pipeline_mode<synchronous>, transform_indices = @transform_33, window_bounds = array<i64: 2, 1, 32>}, {pipeline_mode = #tpu.pipeline_mode<synchronous>, transform_indices = @transform_34, window_bounds = array<i64: 2, 1, 32>}, {pipeline_mode = #tpu.pipeline_mode<synchronous>, transform_indices = @transform_35, window_bounds = array<i64: 2, 1, 32>}, {pipeline_mode = #tpu.pipeline_mode<synchronous>, transform_indices = @transform_36, window_bounds = array<i64: 2, 1, 32>}, {pipeline_mode = #tpu.pipeline_mode<synchronous>, transform_indices = @transform_37, window_bounds = array<i64: 2, 1, 32>}, {pipeline_mode = #tpu.pipeline_mode<synchronous>, transform_indices = @transform_38, window_bounds = array<i64: 32, 64>}, {pipeline_mode = #tpu.pipeline_mode<synchronous>, transform_indices = @transform_39, window_bounds = array<i64: 1, 64>}, {pipeline_mode = #tpu.pipeline_mode<synchronous>, transform_indices = @transform_40, window_bounds = array<i64: 64, 128>}, {pipeline_mode = #tpu.pipeline_mode<synchronous>, transform_indices = @transform_41, window_bounds = array<i64: 1, 128>}, {transform_indices = @transform_42, window_bounds = array<i64: 1, 1, 128>}]} {
    %c0 = arith.constant 0 : index
    %c0_0 = arith.constant 0 : index
    %c0_1 = arith.constant 0 : index
    %0 = vector.load %arg1[%c0, %c0_0, %c0_1] : memref<1x16x4xf32, #tpu.memory_space<vmem>>, vector<1x16x4xf32>
    %1 = vector.shape_cast %0 : vector<1x16x4xf32> to vector<16x4xf32>
    %2 = arith.truncf %1 : vector<16x4xf32> to vector<16x4xbf16>
    %c0_2 = arith.constant 0 : index
    %c0_3 = arith.constant 0 : index
    %3 = vector.load %arg4[%c0_2, %c0_3] : memref<4x32xbf16, #tpu.memory_space<vmem>>, vector<4x32xbf16>
    %cst = arith.constant dense<0.000000e+00> : vector<16x32xf32>
    %4 = tpu.matmul %2, %3, %cst {dimension_numbers = #tpu.dot_dimension_numbers<[1], [0], [0], [1], [0, 0, 1, 1], [], []>} : vector<16x4xbf16>, vector<4x32xbf16>, vector<16x32xf32> -> vector<16x32xf32>
    %c0_4 = arith.constant 0 : index
    %c0_5 = arith.constant 0 : index
    %5 = vector.load %arg5[%c0_4, %c0_5] : memref<4x32xbf16, #tpu.memory_space<vmem>>, vector<4x32xbf16>
    %cst_6 = arith.constant dense<0.000000e+00> : vector<16x32xf32>
    %6 = tpu.matmul %2, %5, %cst_6 {dimension_numbers = #tpu.dot_dimension_numbers<[1], [0], [0], [1], [0, 0, 1, 1], [], []>} : vector<16x4xbf16>, vector<4x32xbf16>, vector<16x32xf32> -> vector<16x32xf32>
    %c0_7 = arith.constant 0 : index
    %c0_8 = arith.constant 0 : index
    %7 = vector.load %arg2[%c0_7, %c0_8] : memref<9x16xbf16, #tpu.memory_space<vmem>>, vector<9x16xbf16>
    %8 = arith.truncf %4 : vector<16x32xf32> to vector<16x32xbf16>
    %cst_9 = arith.constant dense<0.000000e+00> : vector<9x32xf32>
    %9 = tpu.matmul %7, %8, %cst_9 {dimension_numbers = #tpu.dot_dimension_numbers<[1], [0], [0], [1], [0, 0, 1, 1], [], []>} : vector<9x16xbf16>, vector<16x32xbf16>, vector<9x32xf32> -> vector<9x32xf32>
    %c0_10 = arith.constant 0 : index
    %c0_11 = arith.constant 0 : index
    %10 = vector.load %arg3[%c0_10, %c0_11] : memref<9x16xbf16, #tpu.memory_space<vmem>>, vector<9x16xbf16>
    %11 = arith.truncf %6 : vector<16x32xf32> to vector<16x32xbf16>
    %cst_12 = arith.constant dense<0.000000e+00> : vector<9x32xf32>
    %12 = tpu.matmul %10, %11, %cst_12 {dimension_numbers = #tpu.dot_dimension_numbers<[1], [0], [0], [1], [0, 0, 1, 1], [], []>} : vector<9x16xbf16>, vector<16x32xbf16>, vector<9x32xf32> -> vector<9x32xf32>
    %13 = arith.addf %9, %12 : vector<9x32xf32>
    %c0_13 = arith.constant 0 : index
    %c0_14 = arith.constant 0 : index
    %14 = vector.load %arg6[%c0_13, %c0_14] : memref<1x32xf32, #tpu.memory_space<vmem>>, vector<1x32xf32>
    %15 = vector.broadcast %14 : vector<1x32xf32> to vector<9x32xf32>
    %16 = arith.addf %13, %15 : vector<9x32xf32>
    %cst_15 = arith.constant 5.65685415 : f32
    %17 = vector.broadcast %cst_15 : f32 to vector<9x32xf32>
    %18 = arith.mulf %16, %17 : vector<9x32xf32>
    %c0_16 = arith.constant 0 : index
    %c0_17 = arith.constant 0 : index
    %19 = vector.load %arg7[%c0_16, %c0_17] : memref<9x32xf32, #tpu.memory_space<vmem>>, vector<9x32xf32>
    %20 = arith.addf %18, %19 : vector<9x32xf32>
    %c0_18 = arith.constant 0 : index
    %c0_19 = arith.constant 0 : index
    %c0_20 = arith.constant 0 : index
    %21 = vector.load %arg8[%c0_18, %c0_19, %c0_20] : memref<2x32x96xbf16, #tpu.memory_space<vmem>>, vector<1x32x96xbf16>
    %22 = vector.shape_cast %21 : vector<1x32x96xbf16> to vector<32x96xbf16>
    %23 = arith.truncf %20 : vector<9x32xf32> to vector<9x32xbf16>
    %cst_21 = arith.constant dense<0.000000e+00> : vector<9x96xf32>
    %24 = tpu.matmul %23, %22, %cst_21 {dimension_numbers = #tpu.dot_dimension_numbers<[1], [0], [0], [1], [0, 0, 1, 1], [], []>} : vector<9x32xbf16>, vector<32x96xbf16>, vector<9x96xf32> -> vector<9x96xf32>
    %c0_22 = arith.constant 0 : index
    %c0_23 = arith.constant 0 : index
    %c0_24 = arith.constant 0 : index
    %25 = vector.load %arg9[%c0_22, %c0_23, %c0_24] : memref<2x1x96xf32, #tpu.memory_space<vmem>>, vector<1x1x96xf32>
    %26 = vector.shape_cast %25 : vector<1x1x96xf32> to vector<1x96xf32>
    %27 = vector.broadcast %26 : vector<1x96xf32> to vector<9x96xf32>
    %28 = arith.addf %24, %27 : vector<9x96xf32>
    %cst_25 = arith.constant 0.000000e+00 : f32
    %29 = vector.broadcast %cst_25 : f32 to vector<9x32xf32>
    %30 = vector.extract_strided_slice %28 {offsets = [0, 0], sizes = [9, 8], strides = [1, 1]} : vector<9x96xf32> to vector<9x8xf32>
    %31 = vector.extract_strided_slice %28 {offsets = [0, 32], sizes = [9, 8], strides = [1, 1]} : vector<9x96xf32> to vector<9x8xf32>
    %32 = vector.extract_strided_slice %28 {offsets = [0, 64], sizes = [9, 8], strides = [1, 1]} : vector<9x96xf32> to vector<9x8xf32>
    %33 = arith.truncf %30 : vector<9x8xf32> to vector<9x8xbf16>
    %34 = arith.truncf %31 : vector<9x8xf32> to vector<9x8xbf16>
    %cst_26 = arith.constant dense<0.000000e+00> : vector<9x9xf32>
    %35 = tpu.matmul %33, %34, %cst_26 {dimension_numbers = #tpu.dot_dimension_numbers<[1], [1], [0], [0], [0, 0, 1, 0], [], []>} : vector<9x8xbf16>, vector<9x8xbf16>, vector<9x9xf32> -> vector<9x9xf32>
    %cst_27 = arith.constant 0.353553385 : f32
    %36 = vector.broadcast %cst_27 : f32 to vector<9x9xf32>
    %37 = arith.mulf %35, %36 : vector<9x9xf32>
    %cst_28 = arith.constant dense<0xFF800000> : vector<9xf32>
    %38 = vector.multi_reduction <maximumf>, %37, %cst_28 [1] : vector<9x9xf32> to vector<9xf32>
    %39 = vector.shape_cast %38 : vector<9xf32> to vector<9x1xf32>
    %40 = vector.broadcast %39 : vector<9x1xf32> to vector<9x9xf32>
    %41 = arith.subf %37, %40 : vector<9x9xf32>
    %42 = math.exp %41 : vector<9x9xf32>
    %cst_29 = arith.constant dense<0.000000e+00> : vector<9xf32>
    %43 = vector.multi_reduction <add>, %42, %cst_29 [1] : vector<9x9xf32> to vector<9xf32>
    %44 = vector.shape_cast %43 : vector<9xf32> to vector<9x1xf32>
    %45 = tpu.reciprocal %44 {approx = true} : vector<9x1xf32> -> vector<9x1xf32>
    %46 = vector.broadcast %45 : vector<9x1xf32> to vector<9x9xf32>
    %47 = arith.mulf %42, %46 : vector<9x9xf32>
    %48 = arith.truncf %47 : vector<9x9xf32> to vector<9x9xbf16>
    %49 = arith.truncf %32 : vector<9x8xf32> to vector<9x8xbf16>
    %cst_30 = arith.constant dense<0.000000e+00> : vector<9x8xf32>
    %50 = tpu.matmul %48, %49, %cst_30 {dimension_numbers = #tpu.dot_dimension_numbers<[1], [0], [0], [1], [0, 0, 1, 1], [], []>} : vector<9x9xbf16>, vector<9x8xbf16>, vector<9x8xf32> -> vector<9x8xf32>
    %c0_31 = arith.constant 0 : index
    %c0_32 = arith.constant 0 : index
    %c0_33 = arith.constant 0 : index
    %c0_34 = arith.constant 0 : index
    %51 = vector.load %arg10[%c0_31, %c0_32, %c0_33, %c0_34] : memref<2x4x8x32xbf16, #tpu.memory_space<vmem>>, vector<1x1x8x32xbf16>
    %52 = vector.shape_cast %51 : vector<1x1x8x32xbf16> to vector<8x32xbf16>
    %53 = arith.truncf %50 : vector<9x8xf32> to vector<9x8xbf16>
    %cst_35 = arith.constant dense<0.000000e+00> : vector<9x32xf32>
    %54 = tpu.matmul %53, %52, %cst_35 {dimension_numbers = #tpu.dot_dimension_numbers<[1], [0], [0], [1], [0, 0, 1, 1], [], []>} : vector<9x8xbf16>, vector<8x32xbf16>, vector<9x32xf32> -> vector<9x32xf32>
    %55 = arith.addf %29, %54 : vector<9x32xf32>
    %56 = vector.extract_strided_slice %28 {offsets = [0, 8], sizes = [9, 8], strides = [1, 1]} : vector<9x96xf32> to vector<9x8xf32>
    %57 = vector.extract_strided_slice %28 {offsets = [0, 40], sizes = [9, 8], strides = [1, 1]} : vector<9x96xf32> to vector<9x8xf32>
    %58 = vector.extract_strided_slice %28 {offsets = [0, 72], sizes = [9, 8], strides = [1, 1]} : vector<9x96xf32> to vector<9x8xf32>
    %59 = arith.truncf %56 : vector<9x8xf32> to vector<9x8xbf16>
    %60 = arith.truncf %57 : vector<9x8xf32> to vector<9x8xbf16>
    %cst_36 = arith.constant dense<0.000000e+00> : vector<9x9xf32>
    %61 = tpu.matmul %59, %60, %cst_36 {dimension_numbers = #tpu.dot_dimension_numbers<[1], [1], [0], [0], [0, 0, 1, 0], [], []>} : vector<9x8xbf16>, vector<9x8xbf16>, vector<9x9xf32> -> vector<9x9xf32>
    %cst_37 = arith.constant 0.353553385 : f32
    %62 = vector.broadcast %cst_37 : f32 to vector<9x9xf32>
    %63 = arith.mulf %61, %62 : vector<9x9xf32>
    %cst_38 = arith.constant dense<0xFF800000> : vector<9xf32>
    %64 = vector.multi_reduction <maximumf>, %63, %cst_38 [1] : vector<9x9xf32> to vector<9xf32>
    %65 = vector.shape_cast %64 : vector<9xf32> to vector<9x1xf32>
    %66 = vector.broadcast %65 : vector<9x1xf32> to vector<9x9xf32>
    %67 = arith.subf %63, %66 : vector<9x9xf32>
    %68 = math.exp %67 : vector<9x9xf32>
    %cst_39 = arith.constant dense<0.000000e+00> : vector<9xf32>
    %69 = vector.multi_reduction <add>, %68, %cst_39 [1] : vector<9x9xf32> to vector<9xf32>
    %70 = vector.shape_cast %69 : vector<9xf32> to vector<9x1xf32>
    %71 = tpu.reciprocal %70 {approx = true} : vector<9x1xf32> -> vector<9x1xf32>
    %72 = vector.broadcast %71 : vector<9x1xf32> to vector<9x9xf32>
    %73 = arith.mulf %68, %72 : vector<9x9xf32>
    %74 = arith.truncf %73 : vector<9x9xf32> to vector<9x9xbf16>
    %75 = arith.truncf %58 : vector<9x8xf32> to vector<9x8xbf16>
    %cst_40 = arith.constant dense<0.000000e+00> : vector<9x8xf32>
    %76 = tpu.matmul %74, %75, %cst_40 {dimension_numbers = #tpu.dot_dimension_numbers<[1], [0], [0], [1], [0, 0, 1, 1], [], []>} : vector<9x9xbf16>, vector<9x8xbf16>, vector<9x8xf32> -> vector<9x8xf32>
    %c0_41 = arith.constant 0 : index
    %c1 = arith.constant 1 : index
    %c0_42 = arith.constant 0 : index
    %c0_43 = arith.constant 0 : index
    %77 = vector.load %arg10[%c0_41, %c1, %c0_42, %c0_43] : memref<2x4x8x32xbf16, #tpu.memory_space<vmem>>, vector<1x1x8x32xbf16>
    %78 = vector.shape_cast %77 : vector<1x1x8x32xbf16> to vector<8x32xbf16>
    %79 = arith.truncf %76 : vector<9x8xf32> to vector<9x8xbf16>
    %cst_44 = arith.constant dense<0.000000e+00> : vector<9x32xf32>
    %80 = tpu.matmul %79, %78, %cst_44 {dimension_numbers = #tpu.dot_dimension_numbers<[1], [0], [0], [1], [0, 0, 1, 1], [], []>} : vector<9x8xbf16>, vector<8x32xbf16>, vector<9x32xf32> -> vector<9x32xf32>
    %81 = arith.addf %55, %80 : vector<9x32xf32>
    %82 = vector.extract_strided_slice %28 {offsets = [0, 16], sizes = [9, 8], strides = [1, 1]} : vector<9x96xf32> to vector<9x8xf32>
    %83 = vector.extract_strided_slice %28 {offsets = [0, 48], sizes = [9, 8], strides = [1, 1]} : vector<9x96xf32> to vector<9x8xf32>
    %84 = vector.extract_strided_slice %28 {offsets = [0, 80], sizes = [9, 8], strides = [1, 1]} : vector<9x96xf32> to vector<9x8xf32>
    %85 = arith.truncf %82 : vector<9x8xf32> to vector<9x8xbf16>
    %86 = arith.truncf %83 : vector<9x8xf32> to vector<9x8xbf16>
    %cst_45 = arith.constant dense<0.000000e+00> : vector<9x9xf32>
    %87 = tpu.matmul %85, %86, %cst_45 {dimension_numbers = #tpu.dot_dimension_numbers<[1], [1], [0], [0], [0, 0, 1, 0], [], []>} : vector<9x8xbf16>, vector<9x8xbf16>, vector<9x9xf32> -> vector<9x9xf32>
    %cst_46 = arith.constant 0.353553385 : f32
    %88 = vector.broadcast %cst_46 : f32 to vector<9x9xf32>
    %89 = arith.mulf %87, %88 : vector<9x9xf32>
    %cst_47 = arith.constant dense<0xFF800000> : vector<9xf32>
    %90 = vector.multi_reduction <maximumf>, %89, %cst_47 [1] : vector<9x9xf32> to vector<9xf32>
    %91 = vector.shape_cast %90 : vector<9xf32> to vector<9x1xf32>
    %92 = vector.broadcast %91 : vector<9x1xf32> to vector<9x9xf32>
    %93 = arith.subf %89, %92 : vector<9x9xf32>
    %94 = math.exp %93 : vector<9x9xf32>
    %cst_48 = arith.constant dense<0.000000e+00> : vector<9xf32>
    %95 = vector.multi_reduction <add>, %94, %cst_48 [1] : vector<9x9xf32> to vector<9xf32>
    %96 = vector.shape_cast %95 : vector<9xf32> to vector<9x1xf32>
    %97 = tpu.reciprocal %96 {approx = true} : vector<9x1xf32> -> vector<9x1xf32>
    %98 = vector.broadcast %97 : vector<9x1xf32> to vector<9x9xf32>
    %99 = arith.mulf %94, %98 : vector<9x9xf32>
    %100 = arith.truncf %99 : vector<9x9xf32> to vector<9x9xbf16>
    %101 = arith.truncf %84 : vector<9x8xf32> to vector<9x8xbf16>
    %cst_49 = arith.constant dense<0.000000e+00> : vector<9x8xf32>
    %102 = tpu.matmul %100, %101, %cst_49 {dimension_numbers = #tpu.dot_dimension_numbers<[1], [0], [0], [1], [0, 0, 1, 1], [], []>} : vector<9x9xbf16>, vector<9x8xbf16>, vector<9x8xf32> -> vector<9x8xf32>
    %c0_50 = arith.constant 0 : index
    %c2 = arith.constant 2 : index
    %c0_51 = arith.constant 0 : index
    %c0_52 = arith.constant 0 : index
    %103 = vector.load %arg10[%c0_50, %c2, %c0_51, %c0_52] : memref<2x4x8x32xbf16, #tpu.memory_space<vmem>>, vector<1x1x8x32xbf16>
    %104 = vector.shape_cast %103 : vector<1x1x8x32xbf16> to vector<8x32xbf16>
    %105 = arith.truncf %102 : vector<9x8xf32> to vector<9x8xbf16>
    %cst_53 = arith.constant dense<0.000000e+00> : vector<9x32xf32>
    %106 = tpu.matmul %105, %104, %cst_53 {dimension_numbers = #tpu.dot_dimension_numbers<[1], [0], [0], [1], [0, 0, 1, 1], [], []>} : vector<9x8xbf16>, vector<8x32xbf16>, vector<9x32xf32> -> vector<9x32xf32>
    %107 = arith.addf %81, %106 : vector<9x32xf32>
    %108 = vector.extract_strided_slice %28 {offsets = [0, 24], sizes = [9, 8], strides = [1, 1]} : vector<9x96xf32> to vector<9x8xf32>
    %109 = vector.extract_strided_slice %28 {offsets = [0, 56], sizes = [9, 8], strides = [1, 1]} : vector<9x96xf32> to vector<9x8xf32>
    %110 = vector.extract_strided_slice %28 {offsets = [0, 88], sizes = [9, 8], strides = [1, 1]} : vector<9x96xf32> to vector<9x8xf32>
    %111 = arith.truncf %108 : vector<9x8xf32> to vector<9x8xbf16>
    %112 = arith.truncf %109 : vector<9x8xf32> to vector<9x8xbf16>
    %cst_54 = arith.constant dense<0.000000e+00> : vector<9x9xf32>
    %113 = tpu.matmul %111, %112, %cst_54 {dimension_numbers = #tpu.dot_dimension_numbers<[1], [1], [0], [0], [0, 0, 1, 0], [], []>} : vector<9x8xbf16>, vector<9x8xbf16>, vector<9x9xf32> -> vector<9x9xf32>
    %cst_55 = arith.constant 0.353553385 : f32
    %114 = vector.broadcast %cst_55 : f32 to vector<9x9xf32>
    %115 = arith.mulf %113, %114 : vector<9x9xf32>
    %cst_56 = arith.constant dense<0xFF800000> : vector<9xf32>
    %116 = vector.multi_reduction <maximumf>, %115, %cst_56 [1] : vector<9x9xf32> to vector<9xf32>
    %117 = vector.shape_cast %116 : vector<9xf32> to vector<9x1xf32>
    %118 = vector.broadcast %117 : vector<9x1xf32> to vector<9x9xf32>
    %119 = arith.subf %115, %118 : vector<9x9xf32>
    %120 = math.exp %119 : vector<9x9xf32>
    %cst_57 = arith.constant dense<0.000000e+00> : vector<9xf32>
    %121 = vector.multi_reduction <add>, %120, %cst_57 [1] : vector<9x9xf32> to vector<9xf32>
    %122 = vector.shape_cast %121 : vector<9xf32> to vector<9x1xf32>
    %123 = tpu.reciprocal %122 {approx = true} : vector<9x1xf32> -> vector<9x1xf32>
    %124 = vector.broadcast %123 : vector<9x1xf32> to vector<9x9xf32>
    %125 = arith.mulf %120, %124 : vector<9x9xf32>
    %126 = arith.truncf %125 : vector<9x9xf32> to vector<9x9xbf16>
    %127 = arith.truncf %110 : vector<9x8xf32> to vector<9x8xbf16>
    %cst_58 = arith.constant dense<0.000000e+00> : vector<9x8xf32>
    %128 = tpu.matmul %126, %127, %cst_58 {dimension_numbers = #tpu.dot_dimension_numbers<[1], [0], [0], [1], [0, 0, 1, 1], [], []>} : vector<9x9xbf16>, vector<9x8xbf16>, vector<9x8xf32> -> vector<9x8xf32>
    %c0_59 = arith.constant 0 : index
    %c3 = arith.constant 3 : index
    %c0_60 = arith.constant 0 : index
    %c0_61 = arith.constant 0 : index
    %129 = vector.load %arg10[%c0_59, %c3, %c0_60, %c0_61] : memref<2x4x8x32xbf16, #tpu.memory_space<vmem>>, vector<1x1x8x32xbf16>
    %130 = vector.shape_cast %129 : vector<1x1x8x32xbf16> to vector<8x32xbf16>
    %131 = arith.truncf %128 : vector<9x8xf32> to vector<9x8xbf16>
    %cst_62 = arith.constant dense<0.000000e+00> : vector<9x32xf32>
    %132 = tpu.matmul %131, %130, %cst_62 {dimension_numbers = #tpu.dot_dimension_numbers<[1], [0], [0], [1], [0, 0, 1, 1], [], []>} : vector<9x8xbf16>, vector<8x32xbf16>, vector<9x32xf32> -> vector<9x32xf32>
    %133 = arith.addf %107, %132 : vector<9x32xf32>
    %c0_63 = arith.constant 0 : index
    %c0_64 = arith.constant 0 : index
    %c0_65 = arith.constant 0 : index
    %134 = vector.load %arg11[%c0_63, %c0_64, %c0_65] : memref<2x1x32xf32, #tpu.memory_space<vmem>>, vector<1x1x32xf32>
    %135 = vector.shape_cast %134 : vector<1x1x32xf32> to vector<1x32xf32>
    %136 = vector.broadcast %135 : vector<1x32xf32> to vector<9x32xf32>
    %137 = arith.addf %133, %136 : vector<9x32xf32>
    %138 = arith.addf %20, %137 : vector<9x32xf32>
    %c0_66 = arith.constant 0 : index
    %c0_67 = arith.constant 0 : index
    %c0_68 = arith.constant 0 : index
    %139 = vector.load %arg16[%c0_66, %c0_67, %c0_68] : memref<2x1x32xf32, #tpu.memory_space<vmem>>, vector<1x1x32xf32>
    %140 = vector.shape_cast %139 : vector<1x1x32xf32> to vector<1x32xf32>
    %c0_69 = arith.constant 0 : index
    %c0_70 = arith.constant 0 : index
    %c0_71 = arith.constant 0 : index
    %141 = vector.load %arg17[%c0_69, %c0_70, %c0_71] : memref<2x1x32xf32, #tpu.memory_space<vmem>>, vector<1x1x32xf32>
    %142 = vector.shape_cast %141 : vector<1x1x32xf32> to vector<1x32xf32>
    %cst_72 = arith.constant dense<0.000000e+00> : vector<9xf32>
    %143 = vector.multi_reduction <add>, %138, %cst_72 [1] : vector<9x32xf32> to vector<9xf32>
    %144 = vector.shape_cast %143 : vector<9xf32> to vector<9x1xf32>
    %cst_73 = arith.constant 3.200000e+01 : f32
    %145 = vector.broadcast %cst_73 : f32 to vector<9x1xf32>
    %146 = arith.divf %144, %145 : vector<9x1xf32>
    %147 = vector.broadcast %146 : vector<9x1xf32> to vector<9x32xf32>
    %148 = arith.subf %138, %147 : vector<9x32xf32>
    %149 = arith.mulf %148, %148 : vector<9x32xf32>
    %cst_74 = arith.constant dense<0.000000e+00> : vector<9xf32>
    %150 = vector.multi_reduction <add>, %149, %cst_74 [1] : vector<9x32xf32> to vector<9xf32>
    %151 = vector.shape_cast %150 : vector<9xf32> to vector<9x1xf32>
    %cst_75 = arith.constant 3.200000e+01 : f32
    %152 = vector.broadcast %cst_75 : f32 to vector<9x1xf32>
    %153 = arith.divf %151, %152 : vector<9x1xf32>
    %154 = vector.broadcast %146 : vector<9x1xf32> to vector<9x32xf32>
    %155 = arith.subf %138, %154 : vector<9x32xf32>
    %cst_76 = arith.constant 9.99999974E-6 : f32
    %156 = vector.broadcast %cst_76 : f32 to vector<9x1xf32>
    %157 = arith.addf %153, %156 : vector<9x1xf32>
    %158 = math.rsqrt %157 : vector<9x1xf32>
    %159 = vector.broadcast %158 : vector<9x1xf32> to vector<9x32xf32>
    %160 = arith.mulf %155, %159 : vector<9x32xf32>
    %161 = vector.broadcast %140 : vector<1x32xf32> to vector<9x32xf32>
    %162 = arith.mulf %160, %161 : vector<9x32xf32>
    %163 = vector.broadcast %142 : vector<1x32xf32> to vector<9x32xf32>
    %164 = arith.addf %162, %163 : vector<9x32xf32>
    %c0_77 = arith.constant 0 : index
    %c0_78 = arith.constant 0 : index
    %c0_79 = arith.constant 0 : index
    %165 = vector.load %arg12[%c0_77, %c0_78, %c0_79] : memref<2x32x64xbf16, #tpu.memory_space<vmem>>, vector<1x32x64xbf16>
    %166 = vector.shape_cast %165 : vector<1x32x64xbf16> to vector<32x64xbf16>
    %167 = arith.truncf %164 : vector<9x32xf32> to vector<9x32xbf16>
    %cst_80 = arith.constant dense<0.000000e+00> : vector<9x64xf32>
    %168 = tpu.matmul %167, %166, %cst_80 {dimension_numbers = #tpu.dot_dimension_numbers<[1], [0], [0], [1], [0, 0, 1, 1], [], []>} : vector<9x32xbf16>, vector<32x64xbf16>, vector<9x64xf32> -> vector<9x64xf32>
    %c0_81 = arith.constant 0 : index
    %c0_82 = arith.constant 0 : index
    %c0_83 = arith.constant 0 : index
    %169 = vector.load %arg13[%c0_81, %c0_82, %c0_83] : memref<2x1x64xf32, #tpu.memory_space<vmem>>, vector<1x1x64xf32>
    %170 = vector.shape_cast %169 : vector<1x1x64xf32> to vector<1x64xf32>
    %171 = vector.broadcast %170 : vector<1x64xf32> to vector<9x64xf32>
    %172 = arith.addf %168, %171 : vector<9x64xf32>
    %cst_84 = arith.constant 0.000000e+00 : f32
    %173 = vector.broadcast %cst_84 : f32 to vector<9x64xf32>
    %174 = arith.maximumf %172, %173 : vector<9x64xf32>
    %c0_85 = arith.constant 0 : index
    %c0_86 = arith.constant 0 : index
    %c0_87 = arith.constant 0 : index
    %175 = vector.load %arg14[%c0_85, %c0_86, %c0_87] : memref<2x64x32xbf16, #tpu.memory_space<vmem>>, vector<1x64x32xbf16>
    %176 = vector.shape_cast %175 : vector<1x64x32xbf16> to vector<64x32xbf16>
    %177 = arith.truncf %174 : vector<9x64xf32> to vector<9x64xbf16>
    %cst_88 = arith.constant dense<0.000000e+00> : vector<9x32xf32>
    %178 = tpu.matmul %177, %176, %cst_88 {dimension_numbers = #tpu.dot_dimension_numbers<[1], [0], [0], [1], [0, 0, 1, 1], [], []>} : vector<9x64xbf16>, vector<64x32xbf16>, vector<9x32xf32> -> vector<9x32xf32>
    %c0_89 = arith.constant 0 : index
    %c0_90 = arith.constant 0 : index
    %c0_91 = arith.constant 0 : index
    %179 = vector.load %arg15[%c0_89, %c0_90, %c0_91] : memref<2x1x32xf32, #tpu.memory_space<vmem>>, vector<1x1x32xf32>
    %180 = vector.shape_cast %179 : vector<1x1x32xf32> to vector<1x32xf32>
    %181 = vector.broadcast %180 : vector<1x32xf32> to vector<9x32xf32>
    %182 = arith.addf %178, %181 : vector<9x32xf32>
    %183 = arith.addf %164, %182 : vector<9x32xf32>
    %c0_92 = arith.constant 0 : index
    %c0_93 = arith.constant 0 : index
    %c0_94 = arith.constant 0 : index
    %184 = vector.load %arg18[%c0_92, %c0_93, %c0_94] : memref<2x1x32xf32, #tpu.memory_space<vmem>>, vector<1x1x32xf32>
    %185 = vector.shape_cast %184 : vector<1x1x32xf32> to vector<1x32xf32>
    %c0_95 = arith.constant 0 : index
    %c0_96 = arith.constant 0 : index
    %c0_97 = arith.constant 0 : index
    %186 = vector.load %arg19[%c0_95, %c0_96, %c0_97] : memref<2x1x32xf32, #tpu.memory_space<vmem>>, vector<1x1x32xf32>
    %187 = vector.shape_cast %186 : vector<1x1x32xf32> to vector<1x32xf32>
    %cst_98 = arith.constant dense<0.000000e+00> : vector<9xf32>
    %188 = vector.multi_reduction <add>, %183, %cst_98 [1] : vector<9x32xf32> to vector<9xf32>
    %189 = vector.shape_cast %188 : vector<9xf32> to vector<9x1xf32>
    %cst_99 = arith.constant 3.200000e+01 : f32
    %190 = vector.broadcast %cst_99 : f32 to vector<9x1xf32>
    %191 = arith.divf %189, %190 : vector<9x1xf32>
    %192 = vector.broadcast %191 : vector<9x1xf32> to vector<9x32xf32>
    %193 = arith.subf %183, %192 : vector<9x32xf32>
    %194 = arith.mulf %193, %193 : vector<9x32xf32>
    %cst_100 = arith.constant dense<0.000000e+00> : vector<9xf32>
    %195 = vector.multi_reduction <add>, %194, %cst_100 [1] : vector<9x32xf32> to vector<9xf32>
    %196 = vector.shape_cast %195 : vector<9xf32> to vector<9x1xf32>
    %cst_101 = arith.constant 3.200000e+01 : f32
    %197 = vector.broadcast %cst_101 : f32 to vector<9x1xf32>
    %198 = arith.divf %196, %197 : vector<9x1xf32>
    %199 = vector.broadcast %191 : vector<9x1xf32> to vector<9x32xf32>
    %200 = arith.subf %183, %199 : vector<9x32xf32>
    %cst_102 = arith.constant 9.99999974E-6 : f32
    %201 = vector.broadcast %cst_102 : f32 to vector<9x1xf32>
    %202 = arith.addf %198, %201 : vector<9x1xf32>
    %203 = math.rsqrt %202 : vector<9x1xf32>
    %204 = vector.broadcast %203 : vector<9x1xf32> to vector<9x32xf32>
    %205 = arith.mulf %200, %204 : vector<9x32xf32>
    %206 = vector.broadcast %185 : vector<1x32xf32> to vector<9x32xf32>
    %207 = arith.mulf %205, %206 : vector<9x32xf32>
    %208 = vector.broadcast %187 : vector<1x32xf32> to vector<9x32xf32>
    %209 = arith.addf %207, %208 : vector<9x32xf32>
    %c1_103 = arith.constant 1 : index
    %c0_104 = arith.constant 0 : index
    %c0_105 = arith.constant 0 : index
    %210 = vector.load %arg8[%c1_103, %c0_104, %c0_105] : memref<2x32x96xbf16, #tpu.memory_space<vmem>>, vector<1x32x96xbf16>
    %211 = vector.shape_cast %210 : vector<1x32x96xbf16> to vector<32x96xbf16>
    %212 = arith.truncf %209 : vector<9x32xf32> to vector<9x32xbf16>
    %cst_106 = arith.constant dense<0.000000e+00> : vector<9x96xf32>
    %213 = tpu.matmul %212, %211, %cst_106 {dimension_numbers = #tpu.dot_dimension_numbers<[1], [0], [0], [1], [0, 0, 1, 1], [], []>} : vector<9x32xbf16>, vector<32x96xbf16>, vector<9x96xf32> -> vector<9x96xf32>
    %c1_107 = arith.constant 1 : index
    %c0_108 = arith.constant 0 : index
    %c0_109 = arith.constant 0 : index
    %214 = vector.load %arg9[%c1_107, %c0_108, %c0_109] : memref<2x1x96xf32, #tpu.memory_space<vmem>>, vector<1x1x96xf32>
    %215 = vector.shape_cast %214 : vector<1x1x96xf32> to vector<1x96xf32>
    %216 = vector.broadcast %215 : vector<1x96xf32> to vector<9x96xf32>
    %217 = arith.addf %213, %216 : vector<9x96xf32>
    %cst_110 = arith.constant 0.000000e+00 : f32
    %218 = vector.broadcast %cst_110 : f32 to vector<9x32xf32>
    %219 = vector.extract_strided_slice %217 {offsets = [0, 0], sizes = [9, 8], strides = [1, 1]} : vector<9x96xf32> to vector<9x8xf32>
    %220 = vector.extract_strided_slice %217 {offsets = [0, 32], sizes = [9, 8], strides = [1, 1]} : vector<9x96xf32> to vector<9x8xf32>
    %221 = vector.extract_strided_slice %217 {offsets = [0, 64], sizes = [9, 8], strides = [1, 1]} : vector<9x96xf32> to vector<9x8xf32>
    %222 = arith.truncf %219 : vector<9x8xf32> to vector<9x8xbf16>
    %223 = arith.truncf %220 : vector<9x8xf32> to vector<9x8xbf16>
    %cst_111 = arith.constant dense<0.000000e+00> : vector<9x9xf32>
    %224 = tpu.matmul %222, %223, %cst_111 {dimension_numbers = #tpu.dot_dimension_numbers<[1], [1], [0], [0], [0, 0, 1, 0], [], []>} : vector<9x8xbf16>, vector<9x8xbf16>, vector<9x9xf32> -> vector<9x9xf32>
    %cst_112 = arith.constant 0.353553385 : f32
    %225 = vector.broadcast %cst_112 : f32 to vector<9x9xf32>
    %226 = arith.mulf %224, %225 : vector<9x9xf32>
    %cst_113 = arith.constant dense<0xFF800000> : vector<9xf32>
    %227 = vector.multi_reduction <maximumf>, %226, %cst_113 [1] : vector<9x9xf32> to vector<9xf32>
    %228 = vector.shape_cast %227 : vector<9xf32> to vector<9x1xf32>
    %229 = vector.broadcast %228 : vector<9x1xf32> to vector<9x9xf32>
    %230 = arith.subf %226, %229 : vector<9x9xf32>
    %231 = math.exp %230 : vector<9x9xf32>
    %cst_114 = arith.constant dense<0.000000e+00> : vector<9xf32>
    %232 = vector.multi_reduction <add>, %231, %cst_114 [1] : vector<9x9xf32> to vector<9xf32>
    %233 = vector.shape_cast %232 : vector<9xf32> to vector<9x1xf32>
    %234 = tpu.reciprocal %233 {approx = true} : vector<9x1xf32> -> vector<9x1xf32>
    %235 = vector.broadcast %234 : vector<9x1xf32> to vector<9x9xf32>
    %236 = arith.mulf %231, %235 : vector<9x9xf32>
    %237 = arith.truncf %236 : vector<9x9xf32> to vector<9x9xbf16>
    %238 = arith.truncf %221 : vector<9x8xf32> to vector<9x8xbf16>
    %cst_115 = arith.constant dense<0.000000e+00> : vector<9x8xf32>
    %239 = tpu.matmul %237, %238, %cst_115 {dimension_numbers = #tpu.dot_dimension_numbers<[1], [0], [0], [1], [0, 0, 1, 1], [], []>} : vector<9x9xbf16>, vector<9x8xbf16>, vector<9x8xf32> -> vector<9x8xf32>
    %c1_116 = arith.constant 1 : index
    %c0_117 = arith.constant 0 : index
    %c0_118 = arith.constant 0 : index
    %c0_119 = arith.constant 0 : index
    %240 = vector.load %arg10[%c1_116, %c0_117, %c0_118, %c0_119] : memref<2x4x8x32xbf16, #tpu.memory_space<vmem>>, vector<1x1x8x32xbf16>
    %241 = vector.shape_cast %240 : vector<1x1x8x32xbf16> to vector<8x32xbf16>
    %242 = arith.truncf %239 : vector<9x8xf32> to vector<9x8xbf16>
    %cst_120 = arith.constant dense<0.000000e+00> : vector<9x32xf32>
    %243 = tpu.matmul %242, %241, %cst_120 {dimension_numbers = #tpu.dot_dimension_numbers<[1], [0], [0], [1], [0, 0, 1, 1], [], []>} : vector<9x8xbf16>, vector<8x32xbf16>, vector<9x32xf32> -> vector<9x32xf32>
    %244 = arith.addf %218, %243 : vector<9x32xf32>
    %245 = vector.extract_strided_slice %217 {offsets = [0, 8], sizes = [9, 8], strides = [1, 1]} : vector<9x96xf32> to vector<9x8xf32>
    %246 = vector.extract_strided_slice %217 {offsets = [0, 40], sizes = [9, 8], strides = [1, 1]} : vector<9x96xf32> to vector<9x8xf32>
    %247 = vector.extract_strided_slice %217 {offsets = [0, 72], sizes = [9, 8], strides = [1, 1]} : vector<9x96xf32> to vector<9x8xf32>
    %248 = arith.truncf %245 : vector<9x8xf32> to vector<9x8xbf16>
    %249 = arith.truncf %246 : vector<9x8xf32> to vector<9x8xbf16>
    %cst_121 = arith.constant dense<0.000000e+00> : vector<9x9xf32>
    %250 = tpu.matmul %248, %249, %cst_121 {dimension_numbers = #tpu.dot_dimension_numbers<[1], [1], [0], [0], [0, 0, 1, 0], [], []>} : vector<9x8xbf16>, vector<9x8xbf16>, vector<9x9xf32> -> vector<9x9xf32>
    %cst_122 = arith.constant 0.353553385 : f32
    %251 = vector.broadcast %cst_122 : f32 to vector<9x9xf32>
    %252 = arith.mulf %250, %251 : vector<9x9xf32>
    %cst_123 = arith.constant dense<0xFF800000> : vector<9xf32>
    %253 = vector.multi_reduction <maximumf>, %252, %cst_123 [1] : vector<9x9xf32> to vector<9xf32>
    %254 = vector.shape_cast %253 : vector<9xf32> to vector<9x1xf32>
    %255 = vector.broadcast %254 : vector<9x1xf32> to vector<9x9xf32>
    %256 = arith.subf %252, %255 : vector<9x9xf32>
    %257 = math.exp %256 : vector<9x9xf32>
    %cst_124 = arith.constant dense<0.000000e+00> : vector<9xf32>
    %258 = vector.multi_reduction <add>, %257, %cst_124 [1] : vector<9x9xf32> to vector<9xf32>
    %259 = vector.shape_cast %258 : vector<9xf32> to vector<9x1xf32>
    %260 = tpu.reciprocal %259 {approx = true} : vector<9x1xf32> -> vector<9x1xf32>
    %261 = vector.broadcast %260 : vector<9x1xf32> to vector<9x9xf32>
    %262 = arith.mulf %257, %261 : vector<9x9xf32>
    %263 = arith.truncf %262 : vector<9x9xf32> to vector<9x9xbf16>
    %264 = arith.truncf %247 : vector<9x8xf32> to vector<9x8xbf16>
    %cst_125 = arith.constant dense<0.000000e+00> : vector<9x8xf32>
    %265 = tpu.matmul %263, %264, %cst_125 {dimension_numbers = #tpu.dot_dimension_numbers<[1], [0], [0], [1], [0, 0, 1, 1], [], []>} : vector<9x9xbf16>, vector<9x8xbf16>, vector<9x8xf32> -> vector<9x8xf32>
    %c1_126 = arith.constant 1 : index
    %c1_127 = arith.constant 1 : index
    %c0_128 = arith.constant 0 : index
    %c0_129 = arith.constant 0 : index
    %266 = vector.load %arg10[%c1_126, %c1_127, %c0_128, %c0_129] : memref<2x4x8x32xbf16, #tpu.memory_space<vmem>>, vector<1x1x8x32xbf16>
    %267 = vector.shape_cast %266 : vector<1x1x8x32xbf16> to vector<8x32xbf16>
    %268 = arith.truncf %265 : vector<9x8xf32> to vector<9x8xbf16>
    %cst_130 = arith.constant dense<0.000000e+00> : vector<9x32xf32>
    %269 = tpu.matmul %268, %267, %cst_130 {dimension_numbers = #tpu.dot_dimension_numbers<[1], [0], [0], [1], [0, 0, 1, 1], [], []>} : vector<9x8xbf16>, vector<8x32xbf16>, vector<9x32xf32> -> vector<9x32xf32>
    %270 = arith.addf %244, %269 : vector<9x32xf32>
    %271 = vector.extract_strided_slice %217 {offsets = [0, 16], sizes = [9, 8], strides = [1, 1]} : vector<9x96xf32> to vector<9x8xf32>
    %272 = vector.extract_strided_slice %217 {offsets = [0, 48], sizes = [9, 8], strides = [1, 1]} : vector<9x96xf32> to vector<9x8xf32>
    %273 = vector.extract_strided_slice %217 {offsets = [0, 80], sizes = [9, 8], strides = [1, 1]} : vector<9x96xf32> to vector<9x8xf32>
    %274 = arith.truncf %271 : vector<9x8xf32> to vector<9x8xbf16>
    %275 = arith.truncf %272 : vector<9x8xf32> to vector<9x8xbf16>
    %cst_131 = arith.constant dense<0.000000e+00> : vector<9x9xf32>
    %276 = tpu.matmul %274, %275, %cst_131 {dimension_numbers = #tpu.dot_dimension_numbers<[1], [1], [0], [0], [0, 0, 1, 0], [], []>} : vector<9x8xbf16>, vector<9x8xbf16>, vector<9x9xf32> -> vector<9x9xf32>
    %cst_132 = arith.constant 0.353553385 : f32
    %277 = vector.broadcast %cst_132 : f32 to vector<9x9xf32>
    %278 = arith.mulf %276, %277 : vector<9x9xf32>
    %cst_133 = arith.constant dense<0xFF800000> : vector<9xf32>
    %279 = vector.multi_reduction <maximumf>, %278, %cst_133 [1] : vector<9x9xf32> to vector<9xf32>
    %280 = vector.shape_cast %279 : vector<9xf32> to vector<9x1xf32>
    %281 = vector.broadcast %280 : vector<9x1xf32> to vector<9x9xf32>
    %282 = arith.subf %278, %281 : vector<9x9xf32>
    %283 = math.exp %282 : vector<9x9xf32>
    %cst_134 = arith.constant dense<0.000000e+00> : vector<9xf32>
    %284 = vector.multi_reduction <add>, %283, %cst_134 [1] : vector<9x9xf32> to vector<9xf32>
    %285 = vector.shape_cast %284 : vector<9xf32> to vector<9x1xf32>
    %286 = tpu.reciprocal %285 {approx = true} : vector<9x1xf32> -> vector<9x1xf32>
    %287 = vector.broadcast %286 : vector<9x1xf32> to vector<9x9xf32>
    %288 = arith.mulf %283, %287 : vector<9x9xf32>
    %289 = arith.truncf %288 : vector<9x9xf32> to vector<9x9xbf16>
    %290 = arith.truncf %273 : vector<9x8xf32> to vector<9x8xbf16>
    %cst_135 = arith.constant dense<0.000000e+00> : vector<9x8xf32>
    %291 = tpu.matmul %289, %290, %cst_135 {dimension_numbers = #tpu.dot_dimension_numbers<[1], [0], [0], [1], [0, 0, 1, 1], [], []>} : vector<9x9xbf16>, vector<9x8xbf16>, vector<9x8xf32> -> vector<9x8xf32>
    %c1_136 = arith.constant 1 : index
    %c2_137 = arith.constant 2 : index
    %c0_138 = arith.constant 0 : index
    %c0_139 = arith.constant 0 : index
    %292 = vector.load %arg10[%c1_136, %c2_137, %c0_138, %c0_139] : memref<2x4x8x32xbf16, #tpu.memory_space<vmem>>, vector<1x1x8x32xbf16>
    %293 = vector.shape_cast %292 : vector<1x1x8x32xbf16> to vector<8x32xbf16>
    %294 = arith.truncf %291 : vector<9x8xf32> to vector<9x8xbf16>
    %cst_140 = arith.constant dense<0.000000e+00> : vector<9x32xf32>
    %295 = tpu.matmul %294, %293, %cst_140 {dimension_numbers = #tpu.dot_dimension_numbers<[1], [0], [0], [1], [0, 0, 1, 1], [], []>} : vector<9x8xbf16>, vector<8x32xbf16>, vector<9x32xf32> -> vector<9x32xf32>
    %296 = arith.addf %270, %295 : vector<9x32xf32>
    %297 = vector.extract_strided_slice %217 {offsets = [0, 24], sizes = [9, 8], strides = [1, 1]} : vector<9x96xf32> to vector<9x8xf32>
    %298 = vector.extract_strided_slice %217 {offsets = [0, 56], sizes = [9, 8], strides = [1, 1]} : vector<9x96xf32> to vector<9x8xf32>
    %299 = vector.extract_strided_slice %217 {offsets = [0, 88], sizes = [9, 8], strides = [1, 1]} : vector<9x96xf32> to vector<9x8xf32>
    %300 = arith.truncf %297 : vector<9x8xf32> to vector<9x8xbf16>
    %301 = arith.truncf %298 : vector<9x8xf32> to vector<9x8xbf16>
    %cst_141 = arith.constant dense<0.000000e+00> : vector<9x9xf32>
    %302 = tpu.matmul %300, %301, %cst_141 {dimension_numbers = #tpu.dot_dimension_numbers<[1], [1], [0], [0], [0, 0, 1, 0], [], []>} : vector<9x8xbf16>, vector<9x8xbf16>, vector<9x9xf32> -> vector<9x9xf32>
    %cst_142 = arith.constant 0.353553385 : f32
    %303 = vector.broadcast %cst_142 : f32 to vector<9x9xf32>
    %304 = arith.mulf %302, %303 : vector<9x9xf32>
    %cst_143 = arith.constant dense<0xFF800000> : vector<9xf32>
    %305 = vector.multi_reduction <maximumf>, %304, %cst_143 [1] : vector<9x9xf32> to vector<9xf32>
    %306 = vector.shape_cast %305 : vector<9xf32> to vector<9x1xf32>
    %307 = vector.broadcast %306 : vector<9x1xf32> to vector<9x9xf32>
    %308 = arith.subf %304, %307 : vector<9x9xf32>
    %309 = math.exp %308 : vector<9x9xf32>
    %cst_144 = arith.constant dense<0.000000e+00> : vector<9xf32>
    %310 = vector.multi_reduction <add>, %309, %cst_144 [1] : vector<9x9xf32> to vector<9xf32>
    %311 = vector.shape_cast %310 : vector<9xf32> to vector<9x1xf32>
    %312 = tpu.reciprocal %311 {approx = true} : vector<9x1xf32> -> vector<9x1xf32>
    %313 = vector.broadcast %312 : vector<9x1xf32> to vector<9x9xf32>
    %314 = arith.mulf %309, %313 : vector<9x9xf32>
    %315 = arith.truncf %314 : vector<9x9xf32> to vector<9x9xbf16>
    %316 = arith.truncf %299 : vector<9x8xf32> to vector<9x8xbf16>
    %cst_145 = arith.constant dense<0.000000e+00> : vector<9x8xf32>
    %317 = tpu.matmul %315, %316, %cst_145 {dimension_numbers = #tpu.dot_dimension_numbers<[1], [0], [0], [1], [0, 0, 1, 1], [], []>} : vector<9x9xbf16>, vector<9x8xbf16>, vector<9x8xf32> -> vector<9x8xf32>
    %c1_146 = arith.constant 1 : index
    %c3_147 = arith.constant 3 : index
    %c0_148 = arith.constant 0 : index
    %c0_149 = arith.constant 0 : index
    %318 = vector.load %arg10[%c1_146, %c3_147, %c0_148, %c0_149] : memref<2x4x8x32xbf16, #tpu.memory_space<vmem>>, vector<1x1x8x32xbf16>
    %319 = vector.shape_cast %318 : vector<1x1x8x32xbf16> to vector<8x32xbf16>
    %320 = arith.truncf %317 : vector<9x8xf32> to vector<9x8xbf16>
    %cst_150 = arith.constant dense<0.000000e+00> : vector<9x32xf32>
    %321 = tpu.matmul %320, %319, %cst_150 {dimension_numbers = #tpu.dot_dimension_numbers<[1], [0], [0], [1], [0, 0, 1, 1], [], []>} : vector<9x8xbf16>, vector<8x32xbf16>, vector<9x32xf32> -> vector<9x32xf32>
    %322 = arith.addf %296, %321 : vector<9x32xf32>
    %c1_151 = arith.constant 1 : index
    %c0_152 = arith.constant 0 : index
    %c0_153 = arith.constant 0 : index
    %323 = vector.load %arg11[%c1_151, %c0_152, %c0_153] : memref<2x1x32xf32, #tpu.memory_space<vmem>>, vector<1x1x32xf32>
    %324 = vector.shape_cast %323 : vector<1x1x32xf32> to vector<1x32xf32>
    %325 = vector.broadcast %324 : vector<1x32xf32> to vector<9x32xf32>
    %326 = arith.addf %322, %325 : vector<9x32xf32>
    %327 = arith.addf %209, %326 : vector<9x32xf32>
    %c1_154 = arith.constant 1 : index
    %c0_155 = arith.constant 0 : index
    %c0_156 = arith.constant 0 : index
    %328 = vector.load %arg16[%c1_154, %c0_155, %c0_156] : memref<2x1x32xf32, #tpu.memory_space<vmem>>, vector<1x1x32xf32>
    %329 = vector.shape_cast %328 : vector<1x1x32xf32> to vector<1x32xf32>
    %c1_157 = arith.constant 1 : index
    %c0_158 = arith.constant 0 : index
    %c0_159 = arith.constant 0 : index
    %330 = vector.load %arg17[%c1_157, %c0_158, %c0_159] : memref<2x1x32xf32, #tpu.memory_space<vmem>>, vector<1x1x32xf32>
    %331 = vector.shape_cast %330 : vector<1x1x32xf32> to vector<1x32xf32>
    %cst_160 = arith.constant dense<0.000000e+00> : vector<9xf32>
    %332 = vector.multi_reduction <add>, %327, %cst_160 [1] : vector<9x32xf32> to vector<9xf32>
    %333 = vector.shape_cast %332 : vector<9xf32> to vector<9x1xf32>
    %cst_161 = arith.constant 3.200000e+01 : f32
    %334 = vector.broadcast %cst_161 : f32 to vector<9x1xf32>
    %335 = arith.divf %333, %334 : vector<9x1xf32>
    %336 = vector.broadcast %335 : vector<9x1xf32> to vector<9x32xf32>
    %337 = arith.subf %327, %336 : vector<9x32xf32>
    %338 = arith.mulf %337, %337 : vector<9x32xf32>
    %cst_162 = arith.constant dense<0.000000e+00> : vector<9xf32>
    %339 = vector.multi_reduction <add>, %338, %cst_162 [1] : vector<9x32xf32> to vector<9xf32>
    %340 = vector.shape_cast %339 : vector<9xf32> to vector<9x1xf32>
    %cst_163 = arith.constant 3.200000e+01 : f32
    %341 = vector.broadcast %cst_163 : f32 to vector<9x1xf32>
    %342 = arith.divf %340, %341 : vector<9x1xf32>
    %343 = vector.broadcast %335 : vector<9x1xf32> to vector<9x32xf32>
    %344 = arith.subf %327, %343 : vector<9x32xf32>
    %cst_164 = arith.constant 9.99999974E-6 : f32
    %345 = vector.broadcast %cst_164 : f32 to vector<9x1xf32>
    %346 = arith.addf %342, %345 : vector<9x1xf32>
    %347 = math.rsqrt %346 : vector<9x1xf32>
    %348 = vector.broadcast %347 : vector<9x1xf32> to vector<9x32xf32>
    %349 = arith.mulf %344, %348 : vector<9x32xf32>
    %350 = vector.broadcast %329 : vector<1x32xf32> to vector<9x32xf32>
    %351 = arith.mulf %349, %350 : vector<9x32xf32>
    %352 = vector.broadcast %331 : vector<1x32xf32> to vector<9x32xf32>
    %353 = arith.addf %351, %352 : vector<9x32xf32>
    %c1_165 = arith.constant 1 : index
    %c0_166 = arith.constant 0 : index
    %c0_167 = arith.constant 0 : index
    %354 = vector.load %arg12[%c1_165, %c0_166, %c0_167] : memref<2x32x64xbf16, #tpu.memory_space<vmem>>, vector<1x32x64xbf16>
    %355 = vector.shape_cast %354 : vector<1x32x64xbf16> to vector<32x64xbf16>
    %356 = arith.truncf %353 : vector<9x32xf32> to vector<9x32xbf16>
    %cst_168 = arith.constant dense<0.000000e+00> : vector<9x64xf32>
    %357 = tpu.matmul %356, %355, %cst_168 {dimension_numbers = #tpu.dot_dimension_numbers<[1], [0], [0], [1], [0, 0, 1, 1], [], []>} : vector<9x32xbf16>, vector<32x64xbf16>, vector<9x64xf32> -> vector<9x64xf32>
    %c1_169 = arith.constant 1 : index
    %c0_170 = arith.constant 0 : index
    %c0_171 = arith.constant 0 : index
    %358 = vector.load %arg13[%c1_169, %c0_170, %c0_171] : memref<2x1x64xf32, #tpu.memory_space<vmem>>, vector<1x1x64xf32>
    %359 = vector.shape_cast %358 : vector<1x1x64xf32> to vector<1x64xf32>
    %360 = vector.broadcast %359 : vector<1x64xf32> to vector<9x64xf32>
    %361 = arith.addf %357, %360 : vector<9x64xf32>
    %cst_172 = arith.constant 0.000000e+00 : f32
    %362 = vector.broadcast %cst_172 : f32 to vector<9x64xf32>
    %363 = arith.maximumf %361, %362 : vector<9x64xf32>
    %c1_173 = arith.constant 1 : index
    %c0_174 = arith.constant 0 : index
    %c0_175 = arith.constant 0 : index
    %364 = vector.load %arg14[%c1_173, %c0_174, %c0_175] : memref<2x64x32xbf16, #tpu.memory_space<vmem>>, vector<1x64x32xbf16>
    %365 = vector.shape_cast %364 : vector<1x64x32xbf16> to vector<64x32xbf16>
    %366 = arith.truncf %363 : vector<9x64xf32> to vector<9x64xbf16>
    %cst_176 = arith.constant dense<0.000000e+00> : vector<9x32xf32>
    %367 = tpu.matmul %366, %365, %cst_176 {dimension_numbers = #tpu.dot_dimension_numbers<[1], [0], [0], [1], [0, 0, 1, 1], [], []>} : vector<9x64xbf16>, vector<64x32xbf16>, vector<9x32xf32> -> vector<9x32xf32>
    %c1_177 = arith.constant 1 : index
    %c0_178 = arith.constant 0 : index
    %c0_179 = arith.constant 0 : index
    %368 = vector.load %arg15[%c1_177, %c0_178, %c0_179] : memref<2x1x32xf32, #tpu.memory_space<vmem>>, vector<1x1x32xf32>
    %369 = vector.shape_cast %368 : vector<1x1x32xf32> to vector<1x32xf32>
    %370 = vector.broadcast %369 : vector<1x32xf32> to vector<9x32xf32>
    %371 = arith.addf %367, %370 : vector<9x32xf32>
    %372 = arith.addf %353, %371 : vector<9x32xf32>
    %c1_180 = arith.constant 1 : index
    %c0_181 = arith.constant 0 : index
    %c0_182 = arith.constant 0 : index
    %373 = vector.load %arg18[%c1_180, %c0_181, %c0_182] : memref<2x1x32xf32, #tpu.memory_space<vmem>>, vector<1x1x32xf32>
    %374 = vector.shape_cast %373 : vector<1x1x32xf32> to vector<1x32xf32>
    %c1_183 = arith.constant 1 : index
    %c0_184 = arith.constant 0 : index
    %c0_185 = arith.constant 0 : index
    %375 = vector.load %arg19[%c1_183, %c0_184, %c0_185] : memref<2x1x32xf32, #tpu.memory_space<vmem>>, vector<1x1x32xf32>
    %376 = vector.shape_cast %375 : vector<1x1x32xf32> to vector<1x32xf32>
    %cst_186 = arith.constant dense<0.000000e+00> : vector<9xf32>
    %377 = vector.multi_reduction <add>, %372, %cst_186 [1] : vector<9x32xf32> to vector<9xf32>
    %378 = vector.shape_cast %377 : vector<9xf32> to vector<9x1xf32>
    %cst_187 = arith.constant 3.200000e+01 : f32
    %379 = vector.broadcast %cst_187 : f32 to vector<9x1xf32>
    %380 = arith.divf %378, %379 : vector<9x1xf32>
    %381 = vector.broadcast %380 : vector<9x1xf32> to vector<9x32xf32>
    %382 = arith.subf %372, %381 : vector<9x32xf32>
    %383 = arith.mulf %382, %382 : vector<9x32xf32>
    %cst_188 = arith.constant dense<0.000000e+00> : vector<9xf32>
    %384 = vector.multi_reduction <add>, %383, %cst_188 [1] : vector<9x32xf32> to vector<9xf32>
    %385 = vector.shape_cast %384 : vector<9xf32> to vector<9x1xf32>
    %cst_189 = arith.constant 3.200000e+01 : f32
    %386 = vector.broadcast %cst_189 : f32 to vector<9x1xf32>
    %387 = arith.divf %385, %386 : vector<9x1xf32>
    %388 = vector.broadcast %380 : vector<9x1xf32> to vector<9x32xf32>
    %389 = arith.subf %372, %388 : vector<9x32xf32>
    %cst_190 = arith.constant 9.99999974E-6 : f32
    %390 = vector.broadcast %cst_190 : f32 to vector<9x1xf32>
    %391 = arith.addf %387, %390 : vector<9x1xf32>
    %392 = math.rsqrt %391 : vector<9x1xf32>
    %393 = vector.broadcast %392 : vector<9x1xf32> to vector<9x32xf32>
    %394 = arith.mulf %389, %393 : vector<9x32xf32>
    %395 = vector.broadcast %374 : vector<1x32xf32> to vector<9x32xf32>
    %396 = arith.mulf %394, %395 : vector<9x32xf32>
    %397 = vector.broadcast %376 : vector<1x32xf32> to vector<9x32xf32>
    %398 = arith.addf %396, %397 : vector<9x32xf32>
    %cst_191 = arith.constant dense<0.000000e+00> : vector<32xf32>
    %399 = vector.multi_reduction <add>, %398, %cst_191 [0] : vector<9x32xf32> to vector<32xf32>
    %400 = vector.shape_cast %399 : vector<32xf32> to vector<1x32xf32>
    %cst_192 = arith.constant 9.000000e+00 : f32
    %401 = vector.broadcast %cst_192 : f32 to vector<1x32xf32>
    %402 = arith.divf %400, %401 : vector<1x32xf32>
    %c0_193 = arith.constant 0 : index
    %c0_194 = arith.constant 0 : index
    %c0_195 = arith.constant 0 : index
    %403 = vector.load %arg20[%c0_193, %c0_194, %c0_195] : memref<1x12x6xf32, #tpu.memory_space<vmem>>, vector<1x12x6xf32>
    %404 = vector.shape_cast %403 : vector<1x12x6xf32> to vector<12x6xf32>
    %405 = arith.truncf %404 : vector<12x6xf32> to vector<12x6xbf16>
    %c0_196 = arith.constant 0 : index
    %c0_197 = arith.constant 0 : index
    %406 = vector.load %arg23[%c0_196, %c0_197] : memref<6x32xbf16, #tpu.memory_space<vmem>>, vector<6x32xbf16>
    %cst_198 = arith.constant dense<0.000000e+00> : vector<12x32xf32>
    %407 = tpu.matmul %405, %406, %cst_198 {dimension_numbers = #tpu.dot_dimension_numbers<[1], [0], [0], [1], [0, 0, 1, 1], [], []>} : vector<12x6xbf16>, vector<6x32xbf16>, vector<12x32xf32> -> vector<12x32xf32>
    %c0_199 = arith.constant 0 : index
    %c0_200 = arith.constant 0 : index
    %408 = vector.load %arg24[%c0_199, %c0_200] : memref<6x32xbf16, #tpu.memory_space<vmem>>, vector<6x32xbf16>
    %cst_201 = arith.constant dense<0.000000e+00> : vector<12x32xf32>
    %409 = tpu.matmul %405, %408, %cst_201 {dimension_numbers = #tpu.dot_dimension_numbers<[1], [0], [0], [1], [0, 0, 1, 1], [], []>} : vector<12x6xbf16>, vector<6x32xbf16>, vector<12x32xf32> -> vector<12x32xf32>
    %c0_202 = arith.constant 0 : index
    %c0_203 = arith.constant 0 : index
    %410 = vector.load %arg21[%c0_202, %c0_203] : memref<7x12xbf16, #tpu.memory_space<vmem>>, vector<7x12xbf16>
    %411 = arith.truncf %407 : vector<12x32xf32> to vector<12x32xbf16>
    %cst_204 = arith.constant dense<0.000000e+00> : vector<7x32xf32>
    %412 = tpu.matmul %410, %411, %cst_204 {dimension_numbers = #tpu.dot_dimension_numbers<[1], [0], [0], [1], [0, 0, 1, 1], [], []>} : vector<7x12xbf16>, vector<12x32xbf16>, vector<7x32xf32> -> vector<7x32xf32>
    %c0_205 = arith.constant 0 : index
    %c0_206 = arith.constant 0 : index
    %413 = vector.load %arg22[%c0_205, %c0_206] : memref<7x12xbf16, #tpu.memory_space<vmem>>, vector<7x12xbf16>
    %414 = arith.truncf %409 : vector<12x32xf32> to vector<12x32xbf16>
    %cst_207 = arith.constant dense<0.000000e+00> : vector<7x32xf32>
    %415 = tpu.matmul %413, %414, %cst_207 {dimension_numbers = #tpu.dot_dimension_numbers<[1], [0], [0], [1], [0, 0, 1, 1], [], []>} : vector<7x12xbf16>, vector<12x32xbf16>, vector<7x32xf32> -> vector<7x32xf32>
    %416 = arith.addf %412, %415 : vector<7x32xf32>
    %c0_208 = arith.constant 0 : index
    %c0_209 = arith.constant 0 : index
    %417 = vector.load %arg25[%c0_208, %c0_209] : memref<1x32xf32, #tpu.memory_space<vmem>>, vector<1x32xf32>
    %418 = vector.broadcast %417 : vector<1x32xf32> to vector<7x32xf32>
    %419 = arith.addf %416, %418 : vector<7x32xf32>
    %cst_210 = arith.constant 5.65685415 : f32
    %420 = vector.broadcast %cst_210 : f32 to vector<7x32xf32>
    %421 = arith.mulf %419, %420 : vector<7x32xf32>
    %c0_211 = arith.constant 0 : index
    %c0_212 = arith.constant 0 : index
    %422 = vector.load %arg26[%c0_211, %c0_212] : memref<7x32xf32, #tpu.memory_space<vmem>>, vector<7x32xf32>
    %423 = arith.addf %421, %422 : vector<7x32xf32>
    %c0_213 = arith.constant 0 : index
    %c0_214 = arith.constant 0 : index
    %c0_215 = arith.constant 0 : index
    %424 = vector.load %arg27[%c0_213, %c0_214, %c0_215] : memref<2x32x96xbf16, #tpu.memory_space<vmem>>, vector<1x32x96xbf16>
    %425 = vector.shape_cast %424 : vector<1x32x96xbf16> to vector<32x96xbf16>
    %426 = arith.truncf %423 : vector<7x32xf32> to vector<7x32xbf16>
    %cst_216 = arith.constant dense<0.000000e+00> : vector<7x96xf32>
    %427 = tpu.matmul %426, %425, %cst_216 {dimension_numbers = #tpu.dot_dimension_numbers<[1], [0], [0], [1], [0, 0, 1, 1], [], []>} : vector<7x32xbf16>, vector<32x96xbf16>, vector<7x96xf32> -> vector<7x96xf32>
    %c0_217 = arith.constant 0 : index
    %c0_218 = arith.constant 0 : index
    %c0_219 = arith.constant 0 : index
    %428 = vector.load %arg28[%c0_217, %c0_218, %c0_219] : memref<2x1x96xf32, #tpu.memory_space<vmem>>, vector<1x1x96xf32>
    %429 = vector.shape_cast %428 : vector<1x1x96xf32> to vector<1x96xf32>
    %430 = vector.broadcast %429 : vector<1x96xf32> to vector<7x96xf32>
    %431 = arith.addf %427, %430 : vector<7x96xf32>
    %cst_220 = arith.constant 0.000000e+00 : f32
    %432 = vector.broadcast %cst_220 : f32 to vector<7x32xf32>
    %433 = vector.extract_strided_slice %431 {offsets = [0, 0], sizes = [7, 8], strides = [1, 1]} : vector<7x96xf32> to vector<7x8xf32>
    %434 = vector.extract_strided_slice %431 {offsets = [0, 32], sizes = [7, 8], strides = [1, 1]} : vector<7x96xf32> to vector<7x8xf32>
    %435 = vector.extract_strided_slice %431 {offsets = [0, 64], sizes = [7, 8], strides = [1, 1]} : vector<7x96xf32> to vector<7x8xf32>
    %436 = arith.truncf %433 : vector<7x8xf32> to vector<7x8xbf16>
    %437 = arith.truncf %434 : vector<7x8xf32> to vector<7x8xbf16>
    %cst_221 = arith.constant dense<0.000000e+00> : vector<7x7xf32>
    %438 = tpu.matmul %436, %437, %cst_221 {dimension_numbers = #tpu.dot_dimension_numbers<[1], [1], [0], [0], [0, 0, 1, 0], [], []>} : vector<7x8xbf16>, vector<7x8xbf16>, vector<7x7xf32> -> vector<7x7xf32>
    %cst_222 = arith.constant 0.353553385 : f32
    %439 = vector.broadcast %cst_222 : f32 to vector<7x7xf32>
    %440 = arith.mulf %438, %439 : vector<7x7xf32>
    %cst_223 = arith.constant dense<0xFF800000> : vector<7xf32>
    %441 = vector.multi_reduction <maximumf>, %440, %cst_223 [1] : vector<7x7xf32> to vector<7xf32>
    %442 = vector.shape_cast %441 : vector<7xf32> to vector<7x1xf32>
    %443 = vector.broadcast %442 : vector<7x1xf32> to vector<7x7xf32>
    %444 = arith.subf %440, %443 : vector<7x7xf32>
    %445 = math.exp %444 : vector<7x7xf32>
    %cst_224 = arith.constant dense<0.000000e+00> : vector<7xf32>
    %446 = vector.multi_reduction <add>, %445, %cst_224 [1] : vector<7x7xf32> to vector<7xf32>
    %447 = vector.shape_cast %446 : vector<7xf32> to vector<7x1xf32>
    %448 = tpu.reciprocal %447 {approx = true} : vector<7x1xf32> -> vector<7x1xf32>
    %449 = vector.broadcast %448 : vector<7x1xf32> to vector<7x7xf32>
    %450 = arith.mulf %445, %449 : vector<7x7xf32>
    %451 = arith.truncf %450 : vector<7x7xf32> to vector<7x7xbf16>
    %452 = arith.truncf %435 : vector<7x8xf32> to vector<7x8xbf16>
    %cst_225 = arith.constant dense<0.000000e+00> : vector<7x8xf32>
    %453 = tpu.matmul %451, %452, %cst_225 {dimension_numbers = #tpu.dot_dimension_numbers<[1], [0], [0], [1], [0, 0, 1, 1], [], []>} : vector<7x7xbf16>, vector<7x8xbf16>, vector<7x8xf32> -> vector<7x8xf32>
    %c0_226 = arith.constant 0 : index
    %c0_227 = arith.constant 0 : index
    %c0_228 = arith.constant 0 : index
    %c0_229 = arith.constant 0 : index
    %454 = vector.load %arg29[%c0_226, %c0_227, %c0_228, %c0_229] : memref<2x4x8x32xbf16, #tpu.memory_space<vmem>>, vector<1x1x8x32xbf16>
    %455 = vector.shape_cast %454 : vector<1x1x8x32xbf16> to vector<8x32xbf16>
    %456 = arith.truncf %453 : vector<7x8xf32> to vector<7x8xbf16>
    %cst_230 = arith.constant dense<0.000000e+00> : vector<7x32xf32>
    %457 = tpu.matmul %456, %455, %cst_230 {dimension_numbers = #tpu.dot_dimension_numbers<[1], [0], [0], [1], [0, 0, 1, 1], [], []>} : vector<7x8xbf16>, vector<8x32xbf16>, vector<7x32xf32> -> vector<7x32xf32>
    %458 = arith.addf %432, %457 : vector<7x32xf32>
    %459 = vector.extract_strided_slice %431 {offsets = [0, 8], sizes = [7, 8], strides = [1, 1]} : vector<7x96xf32> to vector<7x8xf32>
    %460 = vector.extract_strided_slice %431 {offsets = [0, 40], sizes = [7, 8], strides = [1, 1]} : vector<7x96xf32> to vector<7x8xf32>
    %461 = vector.extract_strided_slice %431 {offsets = [0, 72], sizes = [7, 8], strides = [1, 1]} : vector<7x96xf32> to vector<7x8xf32>
    %462 = arith.truncf %459 : vector<7x8xf32> to vector<7x8xbf16>
    %463 = arith.truncf %460 : vector<7x8xf32> to vector<7x8xbf16>
    %cst_231 = arith.constant dense<0.000000e+00> : vector<7x7xf32>
    %464 = tpu.matmul %462, %463, %cst_231 {dimension_numbers = #tpu.dot_dimension_numbers<[1], [1], [0], [0], [0, 0, 1, 0], [], []>} : vector<7x8xbf16>, vector<7x8xbf16>, vector<7x7xf32> -> vector<7x7xf32>
    %cst_232 = arith.constant 0.353553385 : f32
    %465 = vector.broadcast %cst_232 : f32 to vector<7x7xf32>
    %466 = arith.mulf %464, %465 : vector<7x7xf32>
    %cst_233 = arith.constant dense<0xFF800000> : vector<7xf32>
    %467 = vector.multi_reduction <maximumf>, %466, %cst_233 [1] : vector<7x7xf32> to vector<7xf32>
    %468 = vector.shape_cast %467 : vector<7xf32> to vector<7x1xf32>
    %469 = vector.broadcast %468 : vector<7x1xf32> to vector<7x7xf32>
    %470 = arith.subf %466, %469 : vector<7x7xf32>
    %471 = math.exp %470 : vector<7x7xf32>
    %cst_234 = arith.constant dense<0.000000e+00> : vector<7xf32>
    %472 = vector.multi_reduction <add>, %471, %cst_234 [1] : vector<7x7xf32> to vector<7xf32>
    %473 = vector.shape_cast %472 : vector<7xf32> to vector<7x1xf32>
    %474 = tpu.reciprocal %473 {approx = true} : vector<7x1xf32> -> vector<7x1xf32>
    %475 = vector.broadcast %474 : vector<7x1xf32> to vector<7x7xf32>
    %476 = arith.mulf %471, %475 : vector<7x7xf32>
    %477 = arith.truncf %476 : vector<7x7xf32> to vector<7x7xbf16>
    %478 = arith.truncf %461 : vector<7x8xf32> to vector<7x8xbf16>
    %cst_235 = arith.constant dense<0.000000e+00> : vector<7x8xf32>
    %479 = tpu.matmul %477, %478, %cst_235 {dimension_numbers = #tpu.dot_dimension_numbers<[1], [0], [0], [1], [0, 0, 1, 1], [], []>} : vector<7x7xbf16>, vector<7x8xbf16>, vector<7x8xf32> -> vector<7x8xf32>
    %c0_236 = arith.constant 0 : index
    %c1_237 = arith.constant 1 : index
    %c0_238 = arith.constant 0 : index
    %c0_239 = arith.constant 0 : index
    %480 = vector.load %arg29[%c0_236, %c1_237, %c0_238, %c0_239] : memref<2x4x8x32xbf16, #tpu.memory_space<vmem>>, vector<1x1x8x32xbf16>
    %481 = vector.shape_cast %480 : vector<1x1x8x32xbf16> to vector<8x32xbf16>
    %482 = arith.truncf %479 : vector<7x8xf32> to vector<7x8xbf16>
    %cst_240 = arith.constant dense<0.000000e+00> : vector<7x32xf32>
    %483 = tpu.matmul %482, %481, %cst_240 {dimension_numbers = #tpu.dot_dimension_numbers<[1], [0], [0], [1], [0, 0, 1, 1], [], []>} : vector<7x8xbf16>, vector<8x32xbf16>, vector<7x32xf32> -> vector<7x32xf32>
    %484 = arith.addf %458, %483 : vector<7x32xf32>
    %485 = vector.extract_strided_slice %431 {offsets = [0, 16], sizes = [7, 8], strides = [1, 1]} : vector<7x96xf32> to vector<7x8xf32>
    %486 = vector.extract_strided_slice %431 {offsets = [0, 48], sizes = [7, 8], strides = [1, 1]} : vector<7x96xf32> to vector<7x8xf32>
    %487 = vector.extract_strided_slice %431 {offsets = [0, 80], sizes = [7, 8], strides = [1, 1]} : vector<7x96xf32> to vector<7x8xf32>
    %488 = arith.truncf %485 : vector<7x8xf32> to vector<7x8xbf16>
    %489 = arith.truncf %486 : vector<7x8xf32> to vector<7x8xbf16>
    %cst_241 = arith.constant dense<0.000000e+00> : vector<7x7xf32>
    %490 = tpu.matmul %488, %489, %cst_241 {dimension_numbers = #tpu.dot_dimension_numbers<[1], [1], [0], [0], [0, 0, 1, 0], [], []>} : vector<7x8xbf16>, vector<7x8xbf16>, vector<7x7xf32> -> vector<7x7xf32>
    %cst_242 = arith.constant 0.353553385 : f32
    %491 = vector.broadcast %cst_242 : f32 to vector<7x7xf32>
    %492 = arith.mulf %490, %491 : vector<7x7xf32>
    %cst_243 = arith.constant dense<0xFF800000> : vector<7xf32>
    %493 = vector.multi_reduction <maximumf>, %492, %cst_243 [1] : vector<7x7xf32> to vector<7xf32>
    %494 = vector.shape_cast %493 : vector<7xf32> to vector<7x1xf32>
    %495 = vector.broadcast %494 : vector<7x1xf32> to vector<7x7xf32>
    %496 = arith.subf %492, %495 : vector<7x7xf32>
    %497 = math.exp %496 : vector<7x7xf32>
    %cst_244 = arith.constant dense<0.000000e+00> : vector<7xf32>
    %498 = vector.multi_reduction <add>, %497, %cst_244 [1] : vector<7x7xf32> to vector<7xf32>
    %499 = vector.shape_cast %498 : vector<7xf32> to vector<7x1xf32>
    %500 = tpu.reciprocal %499 {approx = true} : vector<7x1xf32> -> vector<7x1xf32>
    %501 = vector.broadcast %500 : vector<7x1xf32> to vector<7x7xf32>
    %502 = arith.mulf %497, %501 : vector<7x7xf32>
    %503 = arith.truncf %502 : vector<7x7xf32> to vector<7x7xbf16>
    %504 = arith.truncf %487 : vector<7x8xf32> to vector<7x8xbf16>
    %cst_245 = arith.constant dense<0.000000e+00> : vector<7x8xf32>
    %505 = tpu.matmul %503, %504, %cst_245 {dimension_numbers = #tpu.dot_dimension_numbers<[1], [0], [0], [1], [0, 0, 1, 1], [], []>} : vector<7x7xbf16>, vector<7x8xbf16>, vector<7x8xf32> -> vector<7x8xf32>
    %c0_246 = arith.constant 0 : index
    %c2_247 = arith.constant 2 : index
    %c0_248 = arith.constant 0 : index
    %c0_249 = arith.constant 0 : index
    %506 = vector.load %arg29[%c0_246, %c2_247, %c0_248, %c0_249] : memref<2x4x8x32xbf16, #tpu.memory_space<vmem>>, vector<1x1x8x32xbf16>
    %507 = vector.shape_cast %506 : vector<1x1x8x32xbf16> to vector<8x32xbf16>
    %508 = arith.truncf %505 : vector<7x8xf32> to vector<7x8xbf16>
    %cst_250 = arith.constant dense<0.000000e+00> : vector<7x32xf32>
    %509 = tpu.matmul %508, %507, %cst_250 {dimension_numbers = #tpu.dot_dimension_numbers<[1], [0], [0], [1], [0, 0, 1, 1], [], []>} : vector<7x8xbf16>, vector<8x32xbf16>, vector<7x32xf32> -> vector<7x32xf32>
    %510 = arith.addf %484, %509 : vector<7x32xf32>
    %511 = vector.extract_strided_slice %431 {offsets = [0, 24], sizes = [7, 8], strides = [1, 1]} : vector<7x96xf32> to vector<7x8xf32>
    %512 = vector.extract_strided_slice %431 {offsets = [0, 56], sizes = [7, 8], strides = [1, 1]} : vector<7x96xf32> to vector<7x8xf32>
    %513 = vector.extract_strided_slice %431 {offsets = [0, 88], sizes = [7, 8], strides = [1, 1]} : vector<7x96xf32> to vector<7x8xf32>
    %514 = arith.truncf %511 : vector<7x8xf32> to vector<7x8xbf16>
    %515 = arith.truncf %512 : vector<7x8xf32> to vector<7x8xbf16>
    %cst_251 = arith.constant dense<0.000000e+00> : vector<7x7xf32>
    %516 = tpu.matmul %514, %515, %cst_251 {dimension_numbers = #tpu.dot_dimension_numbers<[1], [1], [0], [0], [0, 0, 1, 0], [], []>} : vector<7x8xbf16>, vector<7x8xbf16>, vector<7x7xf32> -> vector<7x7xf32>
    %cst_252 = arith.constant 0.353553385 : f32
    %517 = vector.broadcast %cst_252 : f32 to vector<7x7xf32>
    %518 = arith.mulf %516, %517 : vector<7x7xf32>
    %cst_253 = arith.constant dense<0xFF800000> : vector<7xf32>
    %519 = vector.multi_reduction <maximumf>, %518, %cst_253 [1] : vector<7x7xf32> to vector<7xf32>
    %520 = vector.shape_cast %519 : vector<7xf32> to vector<7x1xf32>
    %521 = vector.broadcast %520 : vector<7x1xf32> to vector<7x7xf32>
    %522 = arith.subf %518, %521 : vector<7x7xf32>
    %523 = math.exp %522 : vector<7x7xf32>
    %cst_254 = arith.constant dense<0.000000e+00> : vector<7xf32>
    %524 = vector.multi_reduction <add>, %523, %cst_254 [1] : vector<7x7xf32> to vector<7xf32>
    %525 = vector.shape_cast %524 : vector<7xf32> to vector<7x1xf32>
    %526 = tpu.reciprocal %525 {approx = true} : vector<7x1xf32> -> vector<7x1xf32>
    %527 = vector.broadcast %526 : vector<7x1xf32> to vector<7x7xf32>
    %528 = arith.mulf %523, %527 : vector<7x7xf32>
    %529 = arith.truncf %528 : vector<7x7xf32> to vector<7x7xbf16>
    %530 = arith.truncf %513 : vector<7x8xf32> to vector<7x8xbf16>
    %cst_255 = arith.constant dense<0.000000e+00> : vector<7x8xf32>
    %531 = tpu.matmul %529, %530, %cst_255 {dimension_numbers = #tpu.dot_dimension_numbers<[1], [0], [0], [1], [0, 0, 1, 1], [], []>} : vector<7x7xbf16>, vector<7x8xbf16>, vector<7x8xf32> -> vector<7x8xf32>
    %c0_256 = arith.constant 0 : index
    %c3_257 = arith.constant 3 : index
    %c0_258 = arith.constant 0 : index
    %c0_259 = arith.constant 0 : index
    %532 = vector.load %arg29[%c0_256, %c3_257, %c0_258, %c0_259] : memref<2x4x8x32xbf16, #tpu.memory_space<vmem>>, vector<1x1x8x32xbf16>
    %533 = vector.shape_cast %532 : vector<1x1x8x32xbf16> to vector<8x32xbf16>
    %534 = arith.truncf %531 : vector<7x8xf32> to vector<7x8xbf16>
    %cst_260 = arith.constant dense<0.000000e+00> : vector<7x32xf32>
    %535 = tpu.matmul %534, %533, %cst_260 {dimension_numbers = #tpu.dot_dimension_numbers<[1], [0], [0], [1], [0, 0, 1, 1], [], []>} : vector<7x8xbf16>, vector<8x32xbf16>, vector<7x32xf32> -> vector<7x32xf32>
    %536 = arith.addf %510, %535 : vector<7x32xf32>
    %c0_261 = arith.constant 0 : index
    %c0_262 = arith.constant 0 : index
    %c0_263 = arith.constant 0 : index
    %537 = vector.load %arg30[%c0_261, %c0_262, %c0_263] : memref<2x1x32xf32, #tpu.memory_space<vmem>>, vector<1x1x32xf32>
    %538 = vector.shape_cast %537 : vector<1x1x32xf32> to vector<1x32xf32>
    %539 = vector.broadcast %538 : vector<1x32xf32> to vector<7x32xf32>
    %540 = arith.addf %536, %539 : vector<7x32xf32>
    %541 = arith.addf %423, %540 : vector<7x32xf32>
    %c0_264 = arith.constant 0 : index
    %c0_265 = arith.constant 0 : index
    %c0_266 = arith.constant 0 : index
    %542 = vector.load %arg35[%c0_264, %c0_265, %c0_266] : memref<2x1x32xf32, #tpu.memory_space<vmem>>, vector<1x1x32xf32>
    %543 = vector.shape_cast %542 : vector<1x1x32xf32> to vector<1x32xf32>
    %c0_267 = arith.constant 0 : index
    %c0_268 = arith.constant 0 : index
    %c0_269 = arith.constant 0 : index
    %544 = vector.load %arg36[%c0_267, %c0_268, %c0_269] : memref<2x1x32xf32, #tpu.memory_space<vmem>>, vector<1x1x32xf32>
    %545 = vector.shape_cast %544 : vector<1x1x32xf32> to vector<1x32xf32>
    %cst_270 = arith.constant dense<0.000000e+00> : vector<7xf32>
    %546 = vector.multi_reduction <add>, %541, %cst_270 [1] : vector<7x32xf32> to vector<7xf32>
    %547 = vector.shape_cast %546 : vector<7xf32> to vector<7x1xf32>
    %cst_271 = arith.constant 3.200000e+01 : f32
    %548 = vector.broadcast %cst_271 : f32 to vector<7x1xf32>
    %549 = arith.divf %547, %548 : vector<7x1xf32>
    %550 = vector.broadcast %549 : vector<7x1xf32> to vector<7x32xf32>
    %551 = arith.subf %541, %550 : vector<7x32xf32>
    %552 = arith.mulf %551, %551 : vector<7x32xf32>
    %cst_272 = arith.constant dense<0.000000e+00> : vector<7xf32>
    %553 = vector.multi_reduction <add>, %552, %cst_272 [1] : vector<7x32xf32> to vector<7xf32>
    %554 = vector.shape_cast %553 : vector<7xf32> to vector<7x1xf32>
    %cst_273 = arith.constant 3.200000e+01 : f32
    %555 = vector.broadcast %cst_273 : f32 to vector<7x1xf32>
    %556 = arith.divf %554, %555 : vector<7x1xf32>
    %557 = vector.broadcast %549 : vector<7x1xf32> to vector<7x32xf32>
    %558 = arith.subf %541, %557 : vector<7x32xf32>
    %cst_274 = arith.constant 9.99999974E-6 : f32
    %559 = vector.broadcast %cst_274 : f32 to vector<7x1xf32>
    %560 = arith.addf %556, %559 : vector<7x1xf32>
    %561 = math.rsqrt %560 : vector<7x1xf32>
    %562 = vector.broadcast %561 : vector<7x1xf32> to vector<7x32xf32>
    %563 = arith.mulf %558, %562 : vector<7x32xf32>
    %564 = vector.broadcast %543 : vector<1x32xf32> to vector<7x32xf32>
    %565 = arith.mulf %563, %564 : vector<7x32xf32>
    %566 = vector.broadcast %545 : vector<1x32xf32> to vector<7x32xf32>
    %567 = arith.addf %565, %566 : vector<7x32xf32>
    %c0_275 = arith.constant 0 : index
    %c0_276 = arith.constant 0 : index
    %c0_277 = arith.constant 0 : index
    %568 = vector.load %arg31[%c0_275, %c0_276, %c0_277] : memref<2x32x64xbf16, #tpu.memory_space<vmem>>, vector<1x32x64xbf16>
    %569 = vector.shape_cast %568 : vector<1x32x64xbf16> to vector<32x64xbf16>
    %570 = arith.truncf %567 : vector<7x32xf32> to vector<7x32xbf16>
    %cst_278 = arith.constant dense<0.000000e+00> : vector<7x64xf32>
    %571 = tpu.matmul %570, %569, %cst_278 {dimension_numbers = #tpu.dot_dimension_numbers<[1], [0], [0], [1], [0, 0, 1, 1], [], []>} : vector<7x32xbf16>, vector<32x64xbf16>, vector<7x64xf32> -> vector<7x64xf32>
    %c0_279 = arith.constant 0 : index
    %c0_280 = arith.constant 0 : index
    %c0_281 = arith.constant 0 : index
    %572 = vector.load %arg32[%c0_279, %c0_280, %c0_281] : memref<2x1x64xf32, #tpu.memory_space<vmem>>, vector<1x1x64xf32>
    %573 = vector.shape_cast %572 : vector<1x1x64xf32> to vector<1x64xf32>
    %574 = vector.broadcast %573 : vector<1x64xf32> to vector<7x64xf32>
    %575 = arith.addf %571, %574 : vector<7x64xf32>
    %cst_282 = arith.constant 0.000000e+00 : f32
    %576 = vector.broadcast %cst_282 : f32 to vector<7x64xf32>
    %577 = arith.maximumf %575, %576 : vector<7x64xf32>
    %c0_283 = arith.constant 0 : index
    %c0_284 = arith.constant 0 : index
    %c0_285 = arith.constant 0 : index
    %578 = vector.load %arg33[%c0_283, %c0_284, %c0_285] : memref<2x64x32xbf16, #tpu.memory_space<vmem>>, vector<1x64x32xbf16>
    %579 = vector.shape_cast %578 : vector<1x64x32xbf16> to vector<64x32xbf16>
    %580 = arith.truncf %577 : vector<7x64xf32> to vector<7x64xbf16>
    %cst_286 = arith.constant dense<0.000000e+00> : vector<7x32xf32>
    %581 = tpu.matmul %580, %579, %cst_286 {dimension_numbers = #tpu.dot_dimension_numbers<[1], [0], [0], [1], [0, 0, 1, 1], [], []>} : vector<7x64xbf16>, vector<64x32xbf16>, vector<7x32xf32> -> vector<7x32xf32>
    %c0_287 = arith.constant 0 : index
    %c0_288 = arith.constant 0 : index
    %c0_289 = arith.constant 0 : index
    %582 = vector.load %arg34[%c0_287, %c0_288, %c0_289] : memref<2x1x32xf32, #tpu.memory_space<vmem>>, vector<1x1x32xf32>
    %583 = vector.shape_cast %582 : vector<1x1x32xf32> to vector<1x32xf32>
    %584 = vector.broadcast %583 : vector<1x32xf32> to vector<7x32xf32>
    %585 = arith.addf %581, %584 : vector<7x32xf32>
    %586 = arith.addf %567, %585 : vector<7x32xf32>
    %c0_290 = arith.constant 0 : index
    %c0_291 = arith.constant 0 : index
    %c0_292 = arith.constant 0 : index
    %587 = vector.load %arg37[%c0_290, %c0_291, %c0_292] : memref<2x1x32xf32, #tpu.memory_space<vmem>>, vector<1x1x32xf32>
    %588 = vector.shape_cast %587 : vector<1x1x32xf32> to vector<1x32xf32>
    %c0_293 = arith.constant 0 : index
    %c0_294 = arith.constant 0 : index
    %c0_295 = arith.constant 0 : index
    %589 = vector.load %arg38[%c0_293, %c0_294, %c0_295] : memref<2x1x32xf32, #tpu.memory_space<vmem>>, vector<1x1x32xf32>
    %590 = vector.shape_cast %589 : vector<1x1x32xf32> to vector<1x32xf32>
    %cst_296 = arith.constant dense<0.000000e+00> : vector<7xf32>
    %591 = vector.multi_reduction <add>, %586, %cst_296 [1] : vector<7x32xf32> to vector<7xf32>
    %592 = vector.shape_cast %591 : vector<7xf32> to vector<7x1xf32>
    %cst_297 = arith.constant 3.200000e+01 : f32
    %593 = vector.broadcast %cst_297 : f32 to vector<7x1xf32>
    %594 = arith.divf %592, %593 : vector<7x1xf32>
    %595 = vector.broadcast %594 : vector<7x1xf32> to vector<7x32xf32>
    %596 = arith.subf %586, %595 : vector<7x32xf32>
    %597 = arith.mulf %596, %596 : vector<7x32xf32>
    %cst_298 = arith.constant dense<0.000000e+00> : vector<7xf32>
    %598 = vector.multi_reduction <add>, %597, %cst_298 [1] : vector<7x32xf32> to vector<7xf32>
    %599 = vector.shape_cast %598 : vector<7xf32> to vector<7x1xf32>
    %cst_299 = arith.constant 3.200000e+01 : f32
    %600 = vector.broadcast %cst_299 : f32 to vector<7x1xf32>
    %601 = arith.divf %599, %600 : vector<7x1xf32>
    %602 = vector.broadcast %594 : vector<7x1xf32> to vector<7x32xf32>
    %603 = arith.subf %586, %602 : vector<7x32xf32>
    %cst_300 = arith.constant 9.99999974E-6 : f32
    %604 = vector.broadcast %cst_300 : f32 to vector<7x1xf32>
    %605 = arith.addf %601, %604 : vector<7x1xf32>
    %606 = math.rsqrt %605 : vector<7x1xf32>
    %607 = vector.broadcast %606 : vector<7x1xf32> to vector<7x32xf32>
    %608 = arith.mulf %603, %607 : vector<7x32xf32>
    %609 = vector.broadcast %588 : vector<1x32xf32> to vector<7x32xf32>
    %610 = arith.mulf %608, %609 : vector<7x32xf32>
    %611 = vector.broadcast %590 : vector<1x32xf32> to vector<7x32xf32>
    %612 = arith.addf %610, %611 : vector<7x32xf32>
    %c1_301 = arith.constant 1 : index
    %c0_302 = arith.constant 0 : index
    %c0_303 = arith.constant 0 : index
    %613 = vector.load %arg27[%c1_301, %c0_302, %c0_303] : memref<2x32x96xbf16, #tpu.memory_space<vmem>>, vector<1x32x96xbf16>
    %614 = vector.shape_cast %613 : vector<1x32x96xbf16> to vector<32x96xbf16>
    %615 = arith.truncf %612 : vector<7x32xf32> to vector<7x32xbf16>
    %cst_304 = arith.constant dense<0.000000e+00> : vector<7x96xf32>
    %616 = tpu.matmul %615, %614, %cst_304 {dimension_numbers = #tpu.dot_dimension_numbers<[1], [0], [0], [1], [0, 0, 1, 1], [], []>} : vector<7x32xbf16>, vector<32x96xbf16>, vector<7x96xf32> -> vector<7x96xf32>
    %c1_305 = arith.constant 1 : index
    %c0_306 = arith.constant 0 : index
    %c0_307 = arith.constant 0 : index
    %617 = vector.load %arg28[%c1_305, %c0_306, %c0_307] : memref<2x1x96xf32, #tpu.memory_space<vmem>>, vector<1x1x96xf32>
    %618 = vector.shape_cast %617 : vector<1x1x96xf32> to vector<1x96xf32>
    %619 = vector.broadcast %618 : vector<1x96xf32> to vector<7x96xf32>
    %620 = arith.addf %616, %619 : vector<7x96xf32>
    %cst_308 = arith.constant 0.000000e+00 : f32
    %621 = vector.broadcast %cst_308 : f32 to vector<7x32xf32>
    %622 = vector.extract_strided_slice %620 {offsets = [0, 0], sizes = [7, 8], strides = [1, 1]} : vector<7x96xf32> to vector<7x8xf32>
    %623 = vector.extract_strided_slice %620 {offsets = [0, 32], sizes = [7, 8], strides = [1, 1]} : vector<7x96xf32> to vector<7x8xf32>
    %624 = vector.extract_strided_slice %620 {offsets = [0, 64], sizes = [7, 8], strides = [1, 1]} : vector<7x96xf32> to vector<7x8xf32>
    %625 = arith.truncf %622 : vector<7x8xf32> to vector<7x8xbf16>
    %626 = arith.truncf %623 : vector<7x8xf32> to vector<7x8xbf16>
    %cst_309 = arith.constant dense<0.000000e+00> : vector<7x7xf32>
    %627 = tpu.matmul %625, %626, %cst_309 {dimension_numbers = #tpu.dot_dimension_numbers<[1], [1], [0], [0], [0, 0, 1, 0], [], []>} : vector<7x8xbf16>, vector<7x8xbf16>, vector<7x7xf32> -> vector<7x7xf32>
    %cst_310 = arith.constant 0.353553385 : f32
    %628 = vector.broadcast %cst_310 : f32 to vector<7x7xf32>
    %629 = arith.mulf %627, %628 : vector<7x7xf32>
    %cst_311 = arith.constant dense<0xFF800000> : vector<7xf32>
    %630 = vector.multi_reduction <maximumf>, %629, %cst_311 [1] : vector<7x7xf32> to vector<7xf32>
    %631 = vector.shape_cast %630 : vector<7xf32> to vector<7x1xf32>
    %632 = vector.broadcast %631 : vector<7x1xf32> to vector<7x7xf32>
    %633 = arith.subf %629, %632 : vector<7x7xf32>
    %634 = math.exp %633 : vector<7x7xf32>
    %cst_312 = arith.constant dense<0.000000e+00> : vector<7xf32>
    %635 = vector.multi_reduction <add>, %634, %cst_312 [1] : vector<7x7xf32> to vector<7xf32>
    %636 = vector.shape_cast %635 : vector<7xf32> to vector<7x1xf32>
    %637 = tpu.reciprocal %636 {approx = true} : vector<7x1xf32> -> vector<7x1xf32>
    %638 = vector.broadcast %637 : vector<7x1xf32> to vector<7x7xf32>
    %639 = arith.mulf %634, %638 : vector<7x7xf32>
    %640 = arith.truncf %639 : vector<7x7xf32> to vector<7x7xbf16>
    %641 = arith.truncf %624 : vector<7x8xf32> to vector<7x8xbf16>
    %cst_313 = arith.constant dense<0.000000e+00> : vector<7x8xf32>
    %642 = tpu.matmul %640, %641, %cst_313 {dimension_numbers = #tpu.dot_dimension_numbers<[1], [0], [0], [1], [0, 0, 1, 1], [], []>} : vector<7x7xbf16>, vector<7x8xbf16>, vector<7x8xf32> -> vector<7x8xf32>
    %c1_314 = arith.constant 1 : index
    %c0_315 = arith.constant 0 : index
    %c0_316 = arith.constant 0 : index
    %c0_317 = arith.constant 0 : index
    %643 = vector.load %arg29[%c1_314, %c0_315, %c0_316, %c0_317] : memref<2x4x8x32xbf16, #tpu.memory_space<vmem>>, vector<1x1x8x32xbf16>
    %644 = vector.shape_cast %643 : vector<1x1x8x32xbf16> to vector<8x32xbf16>
    %645 = arith.truncf %642 : vector<7x8xf32> to vector<7x8xbf16>
    %cst_318 = arith.constant dense<0.000000e+00> : vector<7x32xf32>
    %646 = tpu.matmul %645, %644, %cst_318 {dimension_numbers = #tpu.dot_dimension_numbers<[1], [0], [0], [1], [0, 0, 1, 1], [], []>} : vector<7x8xbf16>, vector<8x32xbf16>, vector<7x32xf32> -> vector<7x32xf32>
    %647 = arith.addf %621, %646 : vector<7x32xf32>
    %648 = vector.extract_strided_slice %620 {offsets = [0, 8], sizes = [7, 8], strides = [1, 1]} : vector<7x96xf32> to vector<7x8xf32>
    %649 = vector.extract_strided_slice %620 {offsets = [0, 40], sizes = [7, 8], strides = [1, 1]} : vector<7x96xf32> to vector<7x8xf32>
    %650 = vector.extract_strided_slice %620 {offsets = [0, 72], sizes = [7, 8], strides = [1, 1]} : vector<7x96xf32> to vector<7x8xf32>
    %651 = arith.truncf %648 : vector<7x8xf32> to vector<7x8xbf16>
    %652 = arith.truncf %649 : vector<7x8xf32> to vector<7x8xbf16>
    %cst_319 = arith.constant dense<0.000000e+00> : vector<7x7xf32>
    %653 = tpu.matmul %651, %652, %cst_319 {dimension_numbers = #tpu.dot_dimension_numbers<[1], [1], [0], [0], [0, 0, 1, 0], [], []>} : vector<7x8xbf16>, vector<7x8xbf16>, vector<7x7xf32> -> vector<7x7xf32>
    %cst_320 = arith.constant 0.353553385 : f32
    %654 = vector.broadcast %cst_320 : f32 to vector<7x7xf32>
    %655 = arith.mulf %653, %654 : vector<7x7xf32>
    %cst_321 = arith.constant dense<0xFF800000> : vector<7xf32>
    %656 = vector.multi_reduction <maximumf>, %655, %cst_321 [1] : vector<7x7xf32> to vector<7xf32>
    %657 = vector.shape_cast %656 : vector<7xf32> to vector<7x1xf32>
    %658 = vector.broadcast %657 : vector<7x1xf32> to vector<7x7xf32>
    %659 = arith.subf %655, %658 : vector<7x7xf32>
    %660 = math.exp %659 : vector<7x7xf32>
    %cst_322 = arith.constant dense<0.000000e+00> : vector<7xf32>
    %661 = vector.multi_reduction <add>, %660, %cst_322 [1] : vector<7x7xf32> to vector<7xf32>
    %662 = vector.shape_cast %661 : vector<7xf32> to vector<7x1xf32>
    %663 = tpu.reciprocal %662 {approx = true} : vector<7x1xf32> -> vector<7x1xf32>
    %664 = vector.broadcast %663 : vector<7x1xf32> to vector<7x7xf32>
    %665 = arith.mulf %660, %664 : vector<7x7xf32>
    %666 = arith.truncf %665 : vector<7x7xf32> to vector<7x7xbf16>
    %667 = arith.truncf %650 : vector<7x8xf32> to vector<7x8xbf16>
    %cst_323 = arith.constant dense<0.000000e+00> : vector<7x8xf32>
    %668 = tpu.matmul %666, %667, %cst_323 {dimension_numbers = #tpu.dot_dimension_numbers<[1], [0], [0], [1], [0, 0, 1, 1], [], []>} : vector<7x7xbf16>, vector<7x8xbf16>, vector<7x8xf32> -> vector<7x8xf32>
    %c1_324 = arith.constant 1 : index
    %c1_325 = arith.constant 1 : index
    %c0_326 = arith.constant 0 : index
    %c0_327 = arith.constant 0 : index
    %669 = vector.load %arg29[%c1_324, %c1_325, %c0_326, %c0_327] : memref<2x4x8x32xbf16, #tpu.memory_space<vmem>>, vector<1x1x8x32xbf16>
    %670 = vector.shape_cast %669 : vector<1x1x8x32xbf16> to vector<8x32xbf16>
    %671 = arith.truncf %668 : vector<7x8xf32> to vector<7x8xbf16>
    %cst_328 = arith.constant dense<0.000000e+00> : vector<7x32xf32>
    %672 = tpu.matmul %671, %670, %cst_328 {dimension_numbers = #tpu.dot_dimension_numbers<[1], [0], [0], [1], [0, 0, 1, 1], [], []>} : vector<7x8xbf16>, vector<8x32xbf16>, vector<7x32xf32> -> vector<7x32xf32>
    %673 = arith.addf %647, %672 : vector<7x32xf32>
    %674 = vector.extract_strided_slice %620 {offsets = [0, 16], sizes = [7, 8], strides = [1, 1]} : vector<7x96xf32> to vector<7x8xf32>
    %675 = vector.extract_strided_slice %620 {offsets = [0, 48], sizes = [7, 8], strides = [1, 1]} : vector<7x96xf32> to vector<7x8xf32>
    %676 = vector.extract_strided_slice %620 {offsets = [0, 80], sizes = [7, 8], strides = [1, 1]} : vector<7x96xf32> to vector<7x8xf32>
    %677 = arith.truncf %674 : vector<7x8xf32> to vector<7x8xbf16>
    %678 = arith.truncf %675 : vector<7x8xf32> to vector<7x8xbf16>
    %cst_329 = arith.constant dense<0.000000e+00> : vector<7x7xf32>
    %679 = tpu.matmul %677, %678, %cst_329 {dimension_numbers = #tpu.dot_dimension_numbers<[1], [1], [0], [0], [0, 0, 1, 0], [], []>} : vector<7x8xbf16>, vector<7x8xbf16>, vector<7x7xf32> -> vector<7x7xf32>
    %cst_330 = arith.constant 0.353553385 : f32
    %680 = vector.broadcast %cst_330 : f32 to vector<7x7xf32>
    %681 = arith.mulf %679, %680 : vector<7x7xf32>
    %cst_331 = arith.constant dense<0xFF800000> : vector<7xf32>
    %682 = vector.multi_reduction <maximumf>, %681, %cst_331 [1] : vector<7x7xf32> to vector<7xf32>
    %683 = vector.shape_cast %682 : vector<7xf32> to vector<7x1xf32>
    %684 = vector.broadcast %683 : vector<7x1xf32> to vector<7x7xf32>
    %685 = arith.subf %681, %684 : vector<7x7xf32>
    %686 = math.exp %685 : vector<7x7xf32>
    %cst_332 = arith.constant dense<0.000000e+00> : vector<7xf32>
    %687 = vector.multi_reduction <add>, %686, %cst_332 [1] : vector<7x7xf32> to vector<7xf32>
    %688 = vector.shape_cast %687 : vector<7xf32> to vector<7x1xf32>
    %689 = tpu.reciprocal %688 {approx = true} : vector<7x1xf32> -> vector<7x1xf32>
    %690 = vector.broadcast %689 : vector<7x1xf32> to vector<7x7xf32>
    %691 = arith.mulf %686, %690 : vector<7x7xf32>
    %692 = arith.truncf %691 : vector<7x7xf32> to vector<7x7xbf16>
    %693 = arith.truncf %676 : vector<7x8xf32> to vector<7x8xbf16>
    %cst_333 = arith.constant dense<0.000000e+00> : vector<7x8xf32>
    %694 = tpu.matmul %692, %693, %cst_333 {dimension_numbers = #tpu.dot_dimension_numbers<[1], [0], [0], [1], [0, 0, 1, 1], [], []>} : vector<7x7xbf16>, vector<7x8xbf16>, vector<7x8xf32> -> vector<7x8xf32>
    %c1_334 = arith.constant 1 : index
    %c2_335 = arith.constant 2 : index
    %c0_336 = arith.constant 0 : index
    %c0_337 = arith.constant 0 : index
    %695 = vector.load %arg29[%c1_334, %c2_335, %c0_336, %c0_337] : memref<2x4x8x32xbf16, #tpu.memory_space<vmem>>, vector<1x1x8x32xbf16>
    %696 = vector.shape_cast %695 : vector<1x1x8x32xbf16> to vector<8x32xbf16>
    %697 = arith.truncf %694 : vector<7x8xf32> to vector<7x8xbf16>
    %cst_338 = arith.constant dense<0.000000e+00> : vector<7x32xf32>
    %698 = tpu.matmul %697, %696, %cst_338 {dimension_numbers = #tpu.dot_dimension_numbers<[1], [0], [0], [1], [0, 0, 1, 1], [], []>} : vector<7x8xbf16>, vector<8x32xbf16>, vector<7x32xf32> -> vector<7x32xf32>
    %699 = arith.addf %673, %698 : vector<7x32xf32>
    %700 = vector.extract_strided_slice %620 {offsets = [0, 24], sizes = [7, 8], strides = [1, 1]} : vector<7x96xf32> to vector<7x8xf32>
    %701 = vector.extract_strided_slice %620 {offsets = [0, 56], sizes = [7, 8], strides = [1, 1]} : vector<7x96xf32> to vector<7x8xf32>
    %702 = vector.extract_strided_slice %620 {offsets = [0, 88], sizes = [7, 8], strides = [1, 1]} : vector<7x96xf32> to vector<7x8xf32>
    %703 = arith.truncf %700 : vector<7x8xf32> to vector<7x8xbf16>
    %704 = arith.truncf %701 : vector<7x8xf32> to vector<7x8xbf16>
    %cst_339 = arith.constant dense<0.000000e+00> : vector<7x7xf32>
    %705 = tpu.matmul %703, %704, %cst_339 {dimension_numbers = #tpu.dot_dimension_numbers<[1], [1], [0], [0], [0, 0, 1, 0], [], []>} : vector<7x8xbf16>, vector<7x8xbf16>, vector<7x7xf32> -> vector<7x7xf32>
    %cst_340 = arith.constant 0.353553385 : f32
    %706 = vector.broadcast %cst_340 : f32 to vector<7x7xf32>
    %707 = arith.mulf %705, %706 : vector<7x7xf32>
    %cst_341 = arith.constant dense<0xFF800000> : vector<7xf32>
    %708 = vector.multi_reduction <maximumf>, %707, %cst_341 [1] : vector<7x7xf32> to vector<7xf32>
    %709 = vector.shape_cast %708 : vector<7xf32> to vector<7x1xf32>
    %710 = vector.broadcast %709 : vector<7x1xf32> to vector<7x7xf32>
    %711 = arith.subf %707, %710 : vector<7x7xf32>
    %712 = math.exp %711 : vector<7x7xf32>
    %cst_342 = arith.constant dense<0.000000e+00> : vector<7xf32>
    %713 = vector.multi_reduction <add>, %712, %cst_342 [1] : vector<7x7xf32> to vector<7xf32>
    %714 = vector.shape_cast %713 : vector<7xf32> to vector<7x1xf32>
    %715 = tpu.reciprocal %714 {approx = true} : vector<7x1xf32> -> vector<7x1xf32>
    %716 = vector.broadcast %715 : vector<7x1xf32> to vector<7x7xf32>
    %717 = arith.mulf %712, %716 : vector<7x7xf32>
    %718 = arith.truncf %717 : vector<7x7xf32> to vector<7x7xbf16>
    %719 = arith.truncf %702 : vector<7x8xf32> to vector<7x8xbf16>
    %cst_343 = arith.constant dense<0.000000e+00> : vector<7x8xf32>
    %720 = tpu.matmul %718, %719, %cst_343 {dimension_numbers = #tpu.dot_dimension_numbers<[1], [0], [0], [1], [0, 0, 1, 1], [], []>} : vector<7x7xbf16>, vector<7x8xbf16>, vector<7x8xf32> -> vector<7x8xf32>
    %c1_344 = arith.constant 1 : index
    %c3_345 = arith.constant 3 : index
    %c0_346 = arith.constant 0 : index
    %c0_347 = arith.constant 0 : index
    %721 = vector.load %arg29[%c1_344, %c3_345, %c0_346, %c0_347] : memref<2x4x8x32xbf16, #tpu.memory_space<vmem>>, vector<1x1x8x32xbf16>
    %722 = vector.shape_cast %721 : vector<1x1x8x32xbf16> to vector<8x32xbf16>
    %723 = arith.truncf %720 : vector<7x8xf32> to vector<7x8xbf16>
    %cst_348 = arith.constant dense<0.000000e+00> : vector<7x32xf32>
    %724 = tpu.matmul %723, %722, %cst_348 {dimension_numbers = #tpu.dot_dimension_numbers<[1], [0], [0], [1], [0, 0, 1, 1], [], []>} : vector<7x8xbf16>, vector<8x32xbf16>, vector<7x32xf32> -> vector<7x32xf32>
    %725 = arith.addf %699, %724 : vector<7x32xf32>
    %c1_349 = arith.constant 1 : index
    %c0_350 = arith.constant 0 : index
    %c0_351 = arith.constant 0 : index
    %726 = vector.load %arg30[%c1_349, %c0_350, %c0_351] : memref<2x1x32xf32, #tpu.memory_space<vmem>>, vector<1x1x32xf32>
    %727 = vector.shape_cast %726 : vector<1x1x32xf32> to vector<1x32xf32>
    %728 = vector.broadcast %727 : vector<1x32xf32> to vector<7x32xf32>
    %729 = arith.addf %725, %728 : vector<7x32xf32>
    %730 = arith.addf %612, %729 : vector<7x32xf32>
    %c1_352 = arith.constant 1 : index
    %c0_353 = arith.constant 0 : index
    %c0_354 = arith.constant 0 : index
    %731 = vector.load %arg35[%c1_352, %c0_353, %c0_354] : memref<2x1x32xf32, #tpu.memory_space<vmem>>, vector<1x1x32xf32>
    %732 = vector.shape_cast %731 : vector<1x1x32xf32> to vector<1x32xf32>
    %c1_355 = arith.constant 1 : index
    %c0_356 = arith.constant 0 : index
    %c0_357 = arith.constant 0 : index
    %733 = vector.load %arg36[%c1_355, %c0_356, %c0_357] : memref<2x1x32xf32, #tpu.memory_space<vmem>>, vector<1x1x32xf32>
    %734 = vector.shape_cast %733 : vector<1x1x32xf32> to vector<1x32xf32>
    %cst_358 = arith.constant dense<0.000000e+00> : vector<7xf32>
    %735 = vector.multi_reduction <add>, %730, %cst_358 [1] : vector<7x32xf32> to vector<7xf32>
    %736 = vector.shape_cast %735 : vector<7xf32> to vector<7x1xf32>
    %cst_359 = arith.constant 3.200000e+01 : f32
    %737 = vector.broadcast %cst_359 : f32 to vector<7x1xf32>
    %738 = arith.divf %736, %737 : vector<7x1xf32>
    %739 = vector.broadcast %738 : vector<7x1xf32> to vector<7x32xf32>
    %740 = arith.subf %730, %739 : vector<7x32xf32>
    %741 = arith.mulf %740, %740 : vector<7x32xf32>
    %cst_360 = arith.constant dense<0.000000e+00> : vector<7xf32>
    %742 = vector.multi_reduction <add>, %741, %cst_360 [1] : vector<7x32xf32> to vector<7xf32>
    %743 = vector.shape_cast %742 : vector<7xf32> to vector<7x1xf32>
    %cst_361 = arith.constant 3.200000e+01 : f32
    %744 = vector.broadcast %cst_361 : f32 to vector<7x1xf32>
    %745 = arith.divf %743, %744 : vector<7x1xf32>
    %746 = vector.broadcast %738 : vector<7x1xf32> to vector<7x32xf32>
    %747 = arith.subf %730, %746 : vector<7x32xf32>
    %cst_362 = arith.constant 9.99999974E-6 : f32
    %748 = vector.broadcast %cst_362 : f32 to vector<7x1xf32>
    %749 = arith.addf %745, %748 : vector<7x1xf32>
    %750 = math.rsqrt %749 : vector<7x1xf32>
    %751 = vector.broadcast %750 : vector<7x1xf32> to vector<7x32xf32>
    %752 = arith.mulf %747, %751 : vector<7x32xf32>
    %753 = vector.broadcast %732 : vector<1x32xf32> to vector<7x32xf32>
    %754 = arith.mulf %752, %753 : vector<7x32xf32>
    %755 = vector.broadcast %734 : vector<1x32xf32> to vector<7x32xf32>
    %756 = arith.addf %754, %755 : vector<7x32xf32>
    %c1_363 = arith.constant 1 : index
    %c0_364 = arith.constant 0 : index
    %c0_365 = arith.constant 0 : index
    %757 = vector.load %arg31[%c1_363, %c0_364, %c0_365] : memref<2x32x64xbf16, #tpu.memory_space<vmem>>, vector<1x32x64xbf16>
    %758 = vector.shape_cast %757 : vector<1x32x64xbf16> to vector<32x64xbf16>
    %759 = arith.truncf %756 : vector<7x32xf32> to vector<7x32xbf16>
    %cst_366 = arith.constant dense<0.000000e+00> : vector<7x64xf32>
    %760 = tpu.matmul %759, %758, %cst_366 {dimension_numbers = #tpu.dot_dimension_numbers<[1], [0], [0], [1], [0, 0, 1, 1], [], []>} : vector<7x32xbf16>, vector<32x64xbf16>, vector<7x64xf32> -> vector<7x64xf32>
    %c1_367 = arith.constant 1 : index
    %c0_368 = arith.constant 0 : index
    %c0_369 = arith.constant 0 : index
    %761 = vector.load %arg32[%c1_367, %c0_368, %c0_369] : memref<2x1x64xf32, #tpu.memory_space<vmem>>, vector<1x1x64xf32>
    %762 = vector.shape_cast %761 : vector<1x1x64xf32> to vector<1x64xf32>
    %763 = vector.broadcast %762 : vector<1x64xf32> to vector<7x64xf32>
    %764 = arith.addf %760, %763 : vector<7x64xf32>
    %cst_370 = arith.constant 0.000000e+00 : f32
    %765 = vector.broadcast %cst_370 : f32 to vector<7x64xf32>
    %766 = arith.maximumf %764, %765 : vector<7x64xf32>
    %c1_371 = arith.constant 1 : index
    %c0_372 = arith.constant 0 : index
    %c0_373 = arith.constant 0 : index
    %767 = vector.load %arg33[%c1_371, %c0_372, %c0_373] : memref<2x64x32xbf16, #tpu.memory_space<vmem>>, vector<1x64x32xbf16>
    %768 = vector.shape_cast %767 : vector<1x64x32xbf16> to vector<64x32xbf16>
    %769 = arith.truncf %766 : vector<7x64xf32> to vector<7x64xbf16>
    %cst_374 = arith.constant dense<0.000000e+00> : vector<7x32xf32>
    %770 = tpu.matmul %769, %768, %cst_374 {dimension_numbers = #tpu.dot_dimension_numbers<[1], [0], [0], [1], [0, 0, 1, 1], [], []>} : vector<7x64xbf16>, vector<64x32xbf16>, vector<7x32xf32> -> vector<7x32xf32>
    %c1_375 = arith.constant 1 : index
    %c0_376 = arith.constant 0 : index
    %c0_377 = arith.constant 0 : index
    %771 = vector.load %arg34[%c1_375, %c0_376, %c0_377] : memref<2x1x32xf32, #tpu.memory_space<vmem>>, vector<1x1x32xf32>
    %772 = vector.shape_cast %771 : vector<1x1x32xf32> to vector<1x32xf32>
    %773 = vector.broadcast %772 : vector<1x32xf32> to vector<7x32xf32>
    %774 = arith.addf %770, %773 : vector<7x32xf32>
    %775 = arith.addf %756, %774 : vector<7x32xf32>
    %c1_378 = arith.constant 1 : index
    %c0_379 = arith.constant 0 : index
    %c0_380 = arith.constant 0 : index
    %776 = vector.load %arg37[%c1_378, %c0_379, %c0_380] : memref<2x1x32xf32, #tpu.memory_space<vmem>>, vector<1x1x32xf32>
    %777 = vector.shape_cast %776 : vector<1x1x32xf32> to vector<1x32xf32>
    %c1_381 = arith.constant 1 : index
    %c0_382 = arith.constant 0 : index
    %c0_383 = arith.constant 0 : index
    %778 = vector.load %arg38[%c1_381, %c0_382, %c0_383] : memref<2x1x32xf32, #tpu.memory_space<vmem>>, vector<1x1x32xf32>
    %779 = vector.shape_cast %778 : vector<1x1x32xf32> to vector<1x32xf32>
    %cst_384 = arith.constant dense<0.000000e+00> : vector<7xf32>
    %780 = vector.multi_reduction <add>, %775, %cst_384 [1] : vector<7x32xf32> to vector<7xf32>
    %781 = vector.shape_cast %780 : vector<7xf32> to vector<7x1xf32>
    %cst_385 = arith.constant 3.200000e+01 : f32
    %782 = vector.broadcast %cst_385 : f32 to vector<7x1xf32>
    %783 = arith.divf %781, %782 : vector<7x1xf32>
    %784 = vector.broadcast %783 : vector<7x1xf32> to vector<7x32xf32>
    %785 = arith.subf %775, %784 : vector<7x32xf32>
    %786 = arith.mulf %785, %785 : vector<7x32xf32>
    %cst_386 = arith.constant dense<0.000000e+00> : vector<7xf32>
    %787 = vector.multi_reduction <add>, %786, %cst_386 [1] : vector<7x32xf32> to vector<7xf32>
    %788 = vector.shape_cast %787 : vector<7xf32> to vector<7x1xf32>
    %cst_387 = arith.constant 3.200000e+01 : f32
    %789 = vector.broadcast %cst_387 : f32 to vector<7x1xf32>
    %790 = arith.divf %788, %789 : vector<7x1xf32>
    %791 = vector.broadcast %783 : vector<7x1xf32> to vector<7x32xf32>
    %792 = arith.subf %775, %791 : vector<7x32xf32>
    %cst_388 = arith.constant 9.99999974E-6 : f32
    %793 = vector.broadcast %cst_388 : f32 to vector<7x1xf32>
    %794 = arith.addf %790, %793 : vector<7x1xf32>
    %795 = math.rsqrt %794 : vector<7x1xf32>
    %796 = vector.broadcast %795 : vector<7x1xf32> to vector<7x32xf32>
    %797 = arith.mulf %792, %796 : vector<7x32xf32>
    %798 = vector.broadcast %777 : vector<1x32xf32> to vector<7x32xf32>
    %799 = arith.mulf %797, %798 : vector<7x32xf32>
    %800 = vector.broadcast %779 : vector<1x32xf32> to vector<7x32xf32>
    %801 = arith.addf %799, %800 : vector<7x32xf32>
    %cst_389 = arith.constant dense<0.000000e+00> : vector<32xf32>
    %802 = vector.multi_reduction <add>, %801, %cst_389 [0] : vector<7x32xf32> to vector<32xf32>
    %803 = vector.shape_cast %802 : vector<32xf32> to vector<1x32xf32>
    %cst_390 = arith.constant 7.000000e+00 : f32
    %804 = vector.broadcast %cst_390 : f32 to vector<1x32xf32>
    %805 = arith.divf %803, %804 : vector<1x32xf32>
    %806 = arith.addf %402, %805 : vector<1x32xf32>
    %c0_391 = arith.constant 0 : index
    %c0_392 = arith.constant 0 : index
    %807 = vector.load %arg39[%c0_391, %c0_392] : memref<32x64xbf16, #tpu.memory_space<vmem>>, vector<32x64xbf16>
    %808 = arith.truncf %806 : vector<1x32xf32> to vector<1x32xbf16>
    %cst_393 = arith.constant dense<0.000000e+00> : vector<1x64xf32>
    %809 = tpu.matmul %808, %807, %cst_393 {dimension_numbers = #tpu.dot_dimension_numbers<[1], [0], [0], [1], [0, 0, 1, 1], [], []>} : vector<1x32xbf16>, vector<32x64xbf16>, vector<1x64xf32> -> vector<1x64xf32>
    %c0_394 = arith.constant 0 : index
    %c0_395 = arith.constant 0 : index
    %810 = vector.load %arg40[%c0_394, %c0_395] : memref<1x64xf32, #tpu.memory_space<vmem>>, vector<1x64xf32>
    %811 = arith.addf %809, %810 : vector<1x64xf32>
    %cst_396 = arith.constant 0.000000e+00 : f32
    %812 = vector.broadcast %cst_396 : f32 to vector<1x64xf32>
    %813 = arith.maximumf %811, %812 : vector<1x64xf32>
    %c0_397 = arith.constant 0 : index
    %c0_398 = arith.constant 0 : index
    %814 = vector.load %arg41[%c0_397, %c0_398] : memref<64x128xbf16, #tpu.memory_space<vmem>>, vector<64x128xbf16>
    %815 = arith.truncf %813 : vector<1x64xf32> to vector<1x64xbf16>
    %cst_399 = arith.constant dense<0.000000e+00> : vector<1x128xf32>
    %816 = tpu.matmul %815, %814, %cst_399 {dimension_numbers = #tpu.dot_dimension_numbers<[1], [0], [0], [1], [0, 0, 1, 1], [], []>} : vector<1x64xbf16>, vector<64x128xbf16>, vector<1x128xf32> -> vector<1x128xf32>
    %c0_400 = arith.constant 0 : index
    %c0_401 = arith.constant 0 : index
    %817 = vector.load %arg42[%c0_400, %c0_401] : memref<1x128xf32, #tpu.memory_space<vmem>>, vector<1x128xf32>
    %818 = arith.addf %816, %817 : vector<1x128xf32>
    %c0_402 = arith.constant 0 : index
    %c0_403 = arith.constant 0 : index
    %c0_404 = arith.constant 0 : index
    %819 = vector.load %arg43[%c0_402, %c0_403, %c0_404] : memref<1x1x128xf32, #tpu.memory_space<vmem>>, vector<1x1x128xf32>
    %820 = vector.shape_cast %819 : vector<1x1x128xf32> to vector<1x128xf32>
    %821 = vector.shape_cast %818 : vector<1x128xf32> to vector<1x1x128xf32>
    tpu.vector_store %arg43[%c0_402, %c0_403, %c0_404], %821 {strides = array<i32>} : memref<1x1x128xf32, #tpu.memory_space<vmem>>, vector<1x1x128xf32>,
    return
  }
  func.func @transform_0(%arg0: i32) -> (i32, i32, i32) {
    %c0_i32 = arith.constant 0 : i32
    %c0_i32_0 = arith.constant 0 : i32
    %c0_i32_1 = arith.constant 0 : i32
    return %arg0, %c0_i32, %c0_i32_0 : i32, i32, i32
  }
  func.func @transform_1(%arg0: i32) -> (i32, i32) {
    %c0_i32 = arith.constant 0 : i32
    %c0_i32_0 = arith.constant 0 : i32
    %c0_i32_1 = arith.constant 0 : i32
    return %c0_i32, %c0_i32_0 : i32, i32
  }
  func.func @transform_2(%arg0: i32) -> (i32, i32) {
    %c0_i32 = arith.constant 0 : i32
    %c0_i32_0 = arith.constant 0 : i32
    %c0_i32_1 = arith.constant 0 : i32
    return %c0_i32, %c0_i32_0 : i32, i32
  }
  func.func @transform_3(%arg0: i32) -> (i32, i32) {
    %c0_i32 = arith.constant 0 : i32
    %c0_i32_0 = arith.constant 0 : i32
    %c0_i32_1 = arith.constant 0 : i32
    return %c0_i32, %c0_i32_0 : i32, i32
  }
  func.func @transform_4(%arg0: i32) -> (i32, i32) {
    %c0_i32 = arith.constant 0 : i32
    %c0_i32_0 = arith.constant 0 : i32
    %c0_i32_1 = arith.constant 0 : i32
    return %c0_i32, %c0_i32_0 : i32, i32
  }
  func.func @transform_5(%arg0: i32) -> (i32, i32) {
    %c0_i32 = arith.constant 0 : i32
    %c0_i32_0 = arith.constant 0 : i32
    %c0_i32_1 = arith.constant 0 : i32
    return %c0_i32, %c0_i32_0 : i32, i32
  }
  func.func @transform_6(%arg0: i32) -> (i32, i32) {
    %c0_i32 = arith.constant 0 : i32
    %c0_i32_0 = arith.constant 0 : i32
    %c0_i32_1 = arith.constant 0 : i32
    return %c0_i32, %c0_i32_0 : i32, i32
  }
  func.func @transform_7(%arg0: i32) -> (i32, i32, i32) {
    %c0_i32 = arith.constant 0 : i32
    %c0_i32_0 = arith.constant 0 : i32
    %c0_i32_1 = arith.constant 0 : i32
    %c0_i32_2 = arith.constant 0 : i32
    return %c0_i32, %c0_i32_0, %c0_i32_1 : i32, i32, i32
  }
  func.func @transform_8(%arg0: i32) -> (i32, i32, i32) {
    %c0_i32 = arith.constant 0 : i32
    %c0_i32_0 = arith.constant 0 : i32
    %c0_i32_1 = arith.constant 0 : i32
    %c0_i32_2 = arith.constant 0 : i32
    return %c0_i32, %c0_i32_0, %c0_i32_1 : i32, i32, i32
  }
  func.func @transform_9(%arg0: i32) -> (i32, i32, i32, i32) {
    %c0_i32 = arith.constant 0 : i32
    %c0_i32_0 = arith.constant 0 : i32
    %c0_i32_1 = arith.constant 0 : i32
    %c0_i32_2 = arith.constant 0 : i32
    %c0_i32_3 = arith.constant 0 : i32
    return %c0_i32, %c0_i32_0, %c0_i32_1, %c0_i32_2 : i32, i32, i32, i32
  }
  func.func @transform_10(%arg0: i32) -> (i32, i32, i32) {
    %c0_i32 = arith.constant 0 : i32
    %c0_i32_0 = arith.constant 0 : i32
    %c0_i32_1 = arith.constant 0 : i32
    %c0_i32_2 = arith.constant 0 : i32
    return %c0_i32, %c0_i32_0, %c0_i32_1 : i32, i32, i32
  }
  func.func @transform_11(%arg0: i32) -> (i32, i32, i32) {
    %c0_i32 = arith.constant 0 : i32
    %c0_i32_0 = arith.constant 0 : i32
    %c0_i32_1 = arith.constant 0 : i32
    %c0_i32_2 = arith.constant 0 : i32
    return %c0_i32, %c0_i32_0, %c0_i32_1 : i32, i32, i32
  }
  func.func @transform_12(%arg0: i32) -> (i32, i32, i32) {
    %c0_i32 = arith.constant 0 : i32
    %c0_i32_0 = arith.constant 0 : i32
    %c0_i32_1 = arith.constant 0 : i32
    %c0_i32_2 = arith.constant 0 : i32
    return %c0_i32, %c0_i32_0, %c0_i32_1 : i32, i32, i32
  }
  func.func @transform_13(%arg0: i32) -> (i32, i32, i32) {
    %c0_i32 = arith.constant 0 : i32
    %c0_i32_0 = arith.constant 0 : i32
    %c0_i32_1 = arith.constant 0 : i32
    %c0_i32_2 = arith.constant 0 : i32
    return %c0_i32, %c0_i32_0, %c0_i32_1 : i32, i32, i32
  }
  func.func @transform_14(%arg0: i32) -> (i32, i32, i32) {
    %c0_i32 = arith.constant 0 : i32
    %c0_i32_0 = arith.constant 0 : i32
    %c0_i32_1 = arith.constant 0 : i32
    %c0_i32_2 = arith.constant 0 : i32
    return %c0_i32, %c0_i32_0, %c0_i32_1 : i32, i32, i32
  }
  func.func @transform_15(%arg0: i32) -> (i32, i32, i32) {
    %c0_i32 = arith.constant 0 : i32
    %c0_i32_0 = arith.constant 0 : i32
    %c0_i32_1 = arith.constant 0 : i32
    %c0_i32_2 = arith.constant 0 : i32
    return %c0_i32, %c0_i32_0, %c0_i32_1 : i32, i32, i32
  }
  func.func @transform_16(%arg0: i32) -> (i32, i32, i32) {
    %c0_i32 = arith.constant 0 : i32
    %c0_i32_0 = arith.constant 0 : i32
    %c0_i32_1 = arith.constant 0 : i32
    %c0_i32_2 = arith.constant 0 : i32
    return %c0_i32, %c0_i32_0, %c0_i32_1 : i32, i32, i32
  }
  func.func @transform_17(%arg0: i32) -> (i32, i32, i32) {
    %c0_i32 = arith.constant 0 : i32
    %c0_i32_0 = arith.constant 0 : i32
    %c0_i32_1 = arith.constant 0 : i32
    %c0_i32_2 = arith.constant 0 : i32
    return %c0_i32, %c0_i32_0, %c0_i32_1 : i32, i32, i32
  }
  func.func @transform_18(%arg0: i32) -> (i32, i32, i32) {
    %c0_i32 = arith.constant 0 : i32
    %c0_i32_0 = arith.constant 0 : i32
    %c0_i32_1 = arith.constant 0 : i32
    %c0_i32_2 = arith.constant 0 : i32
    return %c0_i32, %c0_i32_0, %c0_i32_1 : i32, i32, i32
  }
  func.func @transform_19(%arg0: i32) -> (i32, i32, i32) {
    %c0_i32 = arith.constant 0 : i32
    %c0_i32_0 = arith.constant 0 : i32
    %c0_i32_1 = arith.constant 0 : i32
    return %arg0, %c0_i32, %c0_i32_0 : i32, i32, i32
  }
  func.func @transform_20(%arg0: i32) -> (i32, i32) {
    %c0_i32 = arith.constant 0 : i32
    %c0_i32_0 = arith.constant 0 : i32
    %c0_i32_1 = arith.constant 0 : i32
    return %c0_i32, %c0_i32_0 : i32, i32
  }
  func.func @transform_21(%arg0: i32) -> (i32, i32) {
    %c0_i32 = arith.constant 0 : i32
    %c0_i32_0 = arith.constant 0 : i32
    %c0_i32_1 = arith.constant 0 : i32
    return %c0_i32, %c0_i32_0 : i32, i32
  }
  func.func @transform_22(%arg0: i32) -> (i32, i32) {
    %c0_i32 = arith.constant 0 : i32
    %c0_i32_0 = arith.constant 0 : i32
    %c0_i32_1 = arith.constant 0 : i32
    return %c0_i32, %c0_i32_0 : i32, i32
  }
  func.func @transform_23(%arg0: i32) -> (i32, i32) {
    %c0_i32 = arith.constant 0 : i32
    %c0_i32_0 = arith.constant 0 : i32
    %c0_i32_1 = arith.constant 0 : i32
    return %c0_i32, %c0_i32_0 : i32, i32
  }
  func.func @transform_24(%arg0: i32) -> (i32, i32) {
    %c0_i32 = arith.constant 0 : i32
    %c0_i32_0 = arith.constant 0 : i32
    %c0_i32_1 = arith.constant 0 : i32
    return %c0_i32, %c0_i32_0 : i32, i32
  }
  func.func @transform_25(%arg0: i32) -> (i32, i32) {
    %c0_i32 = arith.constant 0 : i32
    %c0_i32_0 = arith.constant 0 : i32
    %c0_i32_1 = arith.constant 0 : i32
    return %c0_i32, %c0_i32_0 : i32, i32
  }
  func.func @transform_26(%arg0: i32) -> (i32, i32, i32) {
    %c0_i32 = arith.constant 0 : i32
    %c0_i32_0 = arith.constant 0 : i32
    %c0_i32_1 = arith.constant 0 : i32
    %c0_i32_2 = arith.constant 0 : i32
    return %c0_i32, %c0_i32_0, %c0_i32_1 : i32, i32, i32
  }
  func.func @transform_27(%arg0: i32) -> (i32, i32, i32) {
    %c0_i32 = arith.constant 0 : i32
    %c0_i32_0 = arith.constant 0 : i32
    %c0_i32_1 = arith.constant 0 : i32
    %c0_i32_2 = arith.constant 0 : i32
    return %c0_i32, %c0_i32_0, %c0_i32_1 : i32, i32, i32
  }
  func.func @transform_28(%arg0: i32) -> (i32, i32, i32, i32) {
    %c0_i32 = arith.constant 0 : i32
    %c0_i32_0 = arith.constant 0 : i32
    %c0_i32_1 = arith.constant 0 : i32
    %c0_i32_2 = arith.constant 0 : i32
    %c0_i32_3 = arith.constant 0 : i32
    return %c0_i32, %c0_i32_0, %c0_i32_1, %c0_i32_2 : i32, i32, i32, i32
  }
  func.func @transform_29(%arg0: i32) -> (i32, i32, i32) {
    %c0_i32 = arith.constant 0 : i32
    %c0_i32_0 = arith.constant 0 : i32
    %c0_i32_1 = arith.constant 0 : i32
    %c0_i32_2 = arith.constant 0 : i32
    return %c0_i32, %c0_i32_0, %c0_i32_1 : i32, i32, i32
  }
  func.func @transform_30(%arg0: i32) -> (i32, i32, i32) {
    %c0_i32 = arith.constant 0 : i32
    %c0_i32_0 = arith.constant 0 : i32
    %c0_i32_1 = arith.constant 0 : i32
    %c0_i32_2 = arith.constant 0 : i32
    return %c0_i32, %c0_i32_0, %c0_i32_1 : i32, i32, i32
  }
  func.func @transform_31(%arg0: i32) -> (i32, i32, i32) {
    %c0_i32 = arith.constant 0 : i32
    %c0_i32_0 = arith.constant 0 : i32
    %c0_i32_1 = arith.constant 0 : i32
    %c0_i32_2 = arith.constant 0 : i32
    return %c0_i32, %c0_i32_0, %c0_i32_1 : i32, i32, i32
  }
  func.func @transform_32(%arg0: i32) -> (i32, i32, i32) {
    %c0_i32 = arith.constant 0 : i32
    %c0_i32_0 = arith.constant 0 : i32
    %c0_i32_1 = arith.constant 0 : i32
    %c0_i32_2 = arith.constant 0 : i32
    return %c0_i32, %c0_i32_0, %c0_i32_1 : i32, i32, i32
  }
  func.func @transform_33(%arg0: i32) -> (i32, i32, i32) {
    %c0_i32 = arith.constant 0 : i32
    %c0_i32_0 = arith.constant 0 : i32
    %c0_i32_1 = arith.constant 0 : i32
    %c0_i32_2 = arith.constant 0 : i32
    return %c0_i32, %c0_i32_0, %c0_i32_1 : i32, i32, i32
  }
  func.func @transform_34(%arg0: i32) -> (i32, i32, i32) {
    %c0_i32 = arith.constant 0 : i32
    %c0_i32_0 = arith.constant 0 : i32
    %c0_i32_1 = arith.constant 0 : i32
    %c0_i32_2 = arith.constant 0 : i32
    return %c0_i32, %c0_i32_0, %c0_i32_1 : i32, i32, i32
  }
  func.func @transform_35(%arg0: i32) -> (i32, i32, i32) {
    %c0_i32 = arith.constant 0 : i32
    %c0_i32_0 = arith.constant 0 : i32
    %c0_i32_1 = arith.constant 0 : i32
    %c0_i32_2 = arith.constant 0 : i32
    return %c0_i32, %c0_i32_0, %c0_i32_1 : i32, i32, i32
  }
  func.func @transform_36(%arg0: i32) -> (i32, i32, i32) {
    %c0_i32 = arith.constant 0 : i32
    %c0_i32_0 = arith.constant 0 : i32
    %c0_i32_1 = arith.constant 0 : i32
    %c0_i32_2 = arith.constant 0 : i32
    return %c0_i32, %c0_i32_0, %c0_i32_1 : i32, i32, i32
  }
  func.func @transform_37(%arg0: i32) -> (i32, i32, i32) {
    %c0_i32 = arith.constant 0 : i32
    %c0_i32_0 = arith.constant 0 : i32
    %c0_i32_1 = arith.constant 0 : i32
    %c0_i32_2 = arith.constant 0 : i32
    return %c0_i32, %c0_i32_0, %c0_i32_1 : i32, i32, i32
  }
  func.func @transform_38(%arg0: i32) -> (i32, i32) {
    %c0_i32 = arith.constant 0 : i32
    %c0_i32_0 = arith.constant 0 : i32
    %c0_i32_1 = arith.constant 0 : i32
    return %c0_i32, %c0_i32_0 : i32, i32
  }
  func.func @transform_39(%arg0: i32) -> (i32, i32) {
    %c0_i32 = arith.constant 0 : i32
    %c0_i32_0 = arith.constant 0 : i32
    %c0_i32_1 = arith.constant 0 : i32
    return %c0_i32, %c0_i32_0 : i32, i32
  }
  func.func @transform_40(%arg0: i32) -> (i32, i32) {
    %c0_i32 = arith.constant 0 : i32
    %c0_i32_0 = arith.constant 0 : i32
    %c0_i32_1 = arith.constant 0 : i32
    return %c0_i32, %c0_i32_0 : i32, i32
  }
  func.func @transform_41(%arg0: i32) -> (i32, i32) {
    %c0_i32 = arith.constant 0 : i32
    %c0_i32_0 = arith.constant 0 : i32
    %c0_i32_1 = arith.constant 0 : i32
    return %c0_i32, %c0_i32_0 : i32, i32
  }
  func.func @transform_42(%arg0: i32) -> (i32, i32, i32) {
    %c0_i32 = arith.constant 0 : i32
    %c0_i32_0 = arith.constant 0 : i32
    %c0_i32_1 = arith.constant 0 : i32
    return %arg0, %c0_i32, %c0_i32_0 : i32, i32, i32
  }
}

</mosaic_0001>

<llo_original>
// kernel: tpu_custom_call.1
$region0: #{tpu_custom_call.1}
  #allocation0 [shape = 'u32[]', space=smem, size = 0x4, offset = 0x4, fixed_abs, tag = 'smem constant byte address 0x4 - core index']
  #allocation1 [shape = 'u32[72,128]{1,0:T(1,128)}', space=vmem, size = 0x9000, scoped, tag = 'internal scratch']
  %s0 = inlined_call_operand.smem [shape: u32[43], index: -1, kind: input, shape index: {}]
  %s1 = sld [smem:[%s0]]
  %s2 = scalar_lea.smem %s0, 1
  %s3 = sld [smem:[%s2]]
  %s4 = scalar_lea.smem %s0, 2
  %s5 = sld [smem:[%s4]]
  %s6 = scalar_lea.smem %s0, 3
  %s7 = sld [smem:[%s6]]
  %s8 = scalar_lea.smem %s0, 4
  %s9 = sld [smem:[%s8]]
  %s10 = scalar_lea.smem %s0, 5
  %s11 = sld [smem:[%s10]]
  %s12 = scalar_lea.smem %s0, 6
  %s13 = sld [smem:[%s12]]
  %s14 = scalar_lea.smem %s0, 7
  %s15 = sld [smem:[%s14]]
  %s16 = scalar_lea.smem %s0, 8
  %s17 = sld [smem:[%s16]]
  %s18 = scalar_lea.smem %s0, 9
  %s19 = sld [smem:[%s18]]
  %s20 = scalar_lea.smem %s0, 10
  %s21 = sld [smem:[%s20]]
  %s22 = scalar_lea.smem %s0, 11
  %s23 = sld [smem:[%s22]]
  %s24 = scalar_lea.smem %s0, 12
  %s25 = sld [smem:[%s24]]
  %s26 = scalar_lea.smem %s0, 13
  %s27 = sld [smem:[%s26]]
  %s28 = scalar_lea.smem %s0, 14
  %s29 = sld [smem:[%s28]]
  %s30 = scalar_lea.smem %s0, 15
  %s31 = sld [smem:[%s30]]
  %s32 = scalar_lea.smem %s0, 16
  %s33 = sld [smem:[%s32]]
  %s34 = scalar_lea.smem %s0, 17
  %s35 = sld [smem:[%s34]]
  %s36 = scalar_lea.smem %s0, 18
  %s37 = sld [smem:[%s36]]
  %s38 = scalar_lea.smem %s0, 19
  %s39 = sld [smem:[%s38]]
  %s40 = scalar_lea.smem %s0, 20
  %s41 = sld [smem:[%s40]]
  %s42 = scalar_lea.smem %s0, 21
  %s43 = sld [smem:[%s42]]
  %s44 = scalar_lea.smem %s0, 22
  %s45 = sld [smem:[%s44]]
  %s46 = scalar_lea.smem %s0, 23
  %s47 = sld [smem:[%s46]]
  %s48 = scalar_lea.smem %s0, 24
  %s49 = sld [smem:[%s48]]
  %s50 = scalar_lea.smem %s0, 25
  %s51 = sld [smem:[%s50]]
  %s52 = scalar_lea.smem %s0, 26
  %s53 = sld [smem:[%s52]]
  %s54 = scalar_lea.smem %s0, 27
  %s55 = sld [smem:[%s54]]
  %s56 = scalar_lea.smem %s0, 28
  %s57 = sld [smem:[%s56]]
  %s58 = scalar_lea.smem %s0, 29
  %s59 = sld [smem:[%s58]]
  %s60 = scalar_lea.smem %s0, 30
  %s61 = sld [smem:[%s60]]
  %s62 = scalar_lea.smem %s0, 31
  %s63 = sld [smem:[%s62]]
  %s64 = scalar_lea.smem %s0, 32
  %s65 = sld [smem:[%s64]]
  %s66 = scalar_lea.smem %s0, 33
  %s67 = sld [smem:[%s66]]
  %s68 = scalar_lea.smem %s0, 34
  %s69 = sld [smem:[%s68]]
  %s70 = scalar_lea.smem %s0, 35
  %s71 = sld [smem:[%s70]]
  %s72 = scalar_lea.smem %s0, 36
  %s73 = sld [smem:[%s72]]
  %s74 = scalar_lea.smem %s0, 37
  %s75 = sld [smem:[%s74]]
  %s76 = scalar_lea.smem %s0, 38
  %s77 = sld [smem:[%s76]]
  %s78 = scalar_lea.smem %s0, 39
  %s79 = sld [smem:[%s78]]
  %s80 = scalar_lea.smem %s0, 40
  %s81 = sld [smem:[%s80]]
  %s82 = scalar_lea.smem %s0, 41
  %s83 = sld [smem:[%s82]]
  %s84 = scalar_lea.smem %s0, 42
  %s85 = sld [smem:[%s84]]
  %s86 = sld [smem:[#allocation0]]
  $region301: #{tpu_custom_call.1} parent=0
    _
  %s88 = ssub.s32 1, %s86
  %s89 = scalar_select 0, %s88, %s86
  $region1: #{tpu_custom_call.1} parent=0
    #allocation2 [shape = 'u8[4096]{0}', space=vmem, size = 0x1000, scoped, tag = 'input window, operand 1, single buffered']
    #allocation3 [shape = 's32[2]{0}', space=sflag, size = 0x8, scoped, tag = 'scoped memory for tpu_custom_call.1']
    #allocation4 [shape = 's32[2]{0}', space=sflag, size = 0x8, scoped, tag = 'scoped memory for tpu_custom_call.1']
    #allocation5 [shape = 'u8[4096]{0}', space=vmem, size = 0x1000, scoped, tag = 'input window, operand 2, single buffered']
    #allocation6 [shape = 's32[1]{0}', space=sflag, size = 0x4, scoped, tag = 'scoped memory for tpu_custom_call.1']
    #allocation7 [shape = 'u8[1024]{0}', space=vmem, size = 0x400, scoped, tag = 'input window, operand 4, single buffered']
    #allocation8 [shape = 'u8[512]{0}', space=vmem, size = 0x400, scoped, tag = 'input window, operand 5, single buffered']
    #allocation9 [shape = 's32[1]{0}', space=sflag, size = 0x4, scoped, tag = 'scoped memory for tpu_custom_call.1']
    #allocation10 [shape = 'u8[8192]{0}', space=vmem, size = 0x2000, scoped, tag = 'input window, operand 6, single buffered']
    #allocation11 [shape = 'u8[1024]{0}', space=vmem, size = 0x400, scoped, tag = 'input window, operand 8, single buffered']
    #allocation12 [shape = 's32[1]{0}', space=sflag, size = 0x4, scoped, tag = 'scoped memory for tpu_custom_call.1']
    #allocation13 [shape = 'u8[1024]{0}', space=vmem, size = 0x400, scoped, tag = 'input window, operand 10, single buffered']
    #allocation14 [shape = 'u8[1024]{0}', space=vmem, size = 0x400, scoped, tag = 'input window, operand 12, single buffered']
    #allocation15 [shape = 's32[1]{0}', space=sflag, size = 0x4, scoped, tag = 'scoped memory for tpu_custom_call.1']
    #allocation16 [shape = 'u8[1024]{0}', space=vmem, size = 0x400, scoped, tag = 'input window, operand 14, single buffered']
    #allocation17 [shape = 'u8[1024]{0}', space=vmem, size = 0x400, scoped, tag = 'input window, operand 15, single buffered']
    #allocation18 [shape = 's32[1]{0}', space=sflag, size = 0x4, scoped, tag = 'scoped memory for tpu_custom_call.1']
    #allocation19 [shape = 'u8[1024]{0}', space=vmem, size = 0x400, scoped, tag = 'input window, operand 16, single buffered']
    #allocation20 [shape = 'u8[1024]{0}', space=vmem, size = 0x400, scoped, tag = 'input window, operand 17, single buffered']
    #allocation21 [shape = 's32[1]{0}', space=sflag, size = 0x4, scoped, tag = 'scoped memory for tpu_custom_call.1']
    #allocation22 [shape = 'u8[1024]{0}', space=vmem, size = 0x400, scoped, tag = 'input window, operand 18, single buffered']
    #allocation23 [shape = 'u8[2048]{0}', space=vmem, size = 0x800, scoped, tag = 'input window, operand 20, single buffered']
    #allocation24 [shape = 's32[1]{0}', space=sflag, size = 0x4, scoped, tag = 'scoped memory for tpu_custom_call.1']
    #allocation25 [shape = 'u8[2048]{0}', space=vmem, size = 0x800, scoped, tag = 'input window, operand 21, single buffered']
    #allocation26 [shape = 'u8[2048]{0}', space=vmem, size = 0x800, scoped, tag = 'input window, operand 22, single buffered']
    #allocation27 [shape = 's32[1]{0}', space=sflag, size = 0x4, scoped, tag = 'scoped memory for tpu_custom_call.1']
    #allocation28 [shape = 'u8[2048]{0}', space=vmem, size = 0x800, scoped, tag = 'input window, operand 23, single buffered']
    #allocation29 [shape = 'u8[512]{0}', space=vmem, size = 0x400, scoped, tag = 'input window, operand 24, single buffered']
    #allocation30 [shape = 's32[1]{0}', space=sflag, size = 0x4, scoped, tag = 'scoped memory for tpu_custom_call.1']
    #allocation31 [shape = 'u8[4096]{0}', space=vmem, size = 0x1000, scoped, tag = 'input window, operand 25, single buffered']
    #allocation32 [shape = 'u8[1024]{0}', space=vmem, size = 0x400, scoped, tag = 'input window, operand 27, single buffered']
    #allocation33 [shape = 's32[1]{0}', space=sflag, size = 0x4, scoped, tag = 'scoped memory for tpu_custom_call.1']
    #allocation34 [shape = 'u8[1024]{0}', space=vmem, size = 0x400, scoped, tag = 'input window, operand 29, single buffered']
    #allocation35 [shape = 'u8[1024]{0}', space=vmem, size = 0x400, scoped, tag = 'input window, operand 31, single buffered']
    #allocation36 [shape = 's32[1]{0}', space=sflag, size = 0x4, scoped, tag = 'scoped memory for tpu_custom_call.1']
    #allocation37 [shape = 'u8[1024]{0}', space=vmem, size = 0x400, scoped, tag = 'input window, operand 35, single buffered']
    #allocation38 [shape = 'u8[8192]{0}', space=vmem, size = 0x2000, scoped, tag = 'input window, operand 38, single buffered']
    #allocation39 [shape = 's32[1]{0}', space=sflag, size = 0x4, scoped, tag = 'scoped memory for tpu_custom_call.1']
    #allocation40 [shape = 'u8[512]{0}', space=vmem, size = 0x400, scoped, tag = 'input window, operand 39, single buffered']
    #allocation41 [shape = 'u8[1024]{0}', space=vmem, size = 0x400, scoped, tag = 'output window, operand 0']
    %90 = vsyncpa [#allocation3], 0
    %91 = vsyncpa [#allocation6], 0
    %92 = vsyncpa [#allocation9], 0
    %93 = vsyncpa [#allocation12], 0
    %94 = vsyncpa [#allocation15], 0
    %95 = vsyncpa [#allocation18], 0
    %96 = vsyncpa [#allocation21], 0
    %97 = vsyncpa [#allocation24], 0
    %98 = vsyncpa [#allocation27], 0
    %99 = vsyncpa [#allocation30], 0
    %100 = vsyncpa [#allocation33], 0
    %101 = vsyncpa [#allocation36], 0
    %102 = vsyncpa [#allocation39], 0
    %103 = vsyncpa [#allocation4], 0
    %s104 = scalar_lea.sflag [#allocation4], 1
    %105 = vsyncpa %s104, 0
    loop: start=0, step=1, limit=4
    $region2: #{tpu_custom_call.1} parent=1 // loop_pre_header
      _
    $region3: #{tpu_custom_call.1} parent=1 // loop_header
      %s107 = sphi 0, %s111
      %p108 = scmp.ge.s32.totalorder %s107, 4
      %s117 = sphi 0, %s119
      %s120 = sphi 0, %s117
      %s121 = sphi 0, %s120
      %s137 = sphi 0, %s121
      %s141 = sphi 0, %s141
      %s143 = sphi 0, %s141
      %s144 = sphi 0, %s143
      %s158 = sphi 0, %s144
      %s162 = sphi 0, %s162
      %s164 = sphi 0, %s162
      %s165 = sphi 0, %s164
      %s179 = sphi 0, %s165
      %s183 = sphi 0, %s183
      %s185 = sphi 0, %s183
      %s186 = sphi 0, %s185
      %s200 = sphi 0, %s186
      %s204 = sphi 0, %s204
      %s206 = sphi 0, %s204
      %s207 = sphi 0, %s206
      %s221 = sphi 0, %s207
      %s225 = sphi 0, %s225
      %s227 = sphi 0, %s225
      %s228 = sphi 0, %s227
      %s242 = sphi 0, %s228
      %s246 = sphi 0, %s246
      %s248 = sphi 0, %s246
      %s249 = sphi 0, %s248
      %s263 = sphi 0, %s249
      %s267 = sphi 0, %s267
      %s269 = sphi 0, %s267
      %s270 = sphi 0, %s269
      %s284 = sphi 0, %s270
      %s288 = sphi 0, %s288
      %s290 = sphi 0, %s288
      %s291 = sphi 0, %s290
      %s305 = sphi 0, %s291
      %s309 = sphi 0, %s309
      %s311 = sphi 0, %s309
      %s312 = sphi 0, %s311
      %s326 = sphi 0, %s312
      %s330 = sphi 0, %s330
      %s332 = sphi 0, %s330
      %s333 = sphi 0, %s332
      %s347 = sphi 0, %s333
      %s351 = sphi 0, %s351
      %s353 = sphi 0, %s351
      %s354 = sphi 0, %s353
      %s368 = sphi 0, %s354
      %s372 = sphi 0, %s372
      %s374 = sphi 0, %s372
      %s375 = sphi 0, %s374
      %s389 = sphi 0, %s375
      %s393 = sphi 0, %s393
      %s395 = sphi 0, %s393
      %s396 = sphi 0, %s395
      %s410 = sphi 0, %s396
      %s414 = sphi 0, %s414
      %s416 = sphi 0, %s414
      %s417 = sphi 0, %s416
      %s431 = sphi 0, %s417
      %s435 = sphi 0, %s435
      %s437 = sphi 0, %s435
      %s438 = sphi 0, %s437
      %s452 = sphi 0, %s438
      %s456 = sphi 0, %s456
      %s458 = sphi 0, %s456
      %s459 = sphi 0, %s458
      %s473 = sphi 0, %s459
      %s477 = sphi 0, %s477
      %s479 = sphi 0, %s477
      %s480 = sphi 0, %s479
      %s494 = sphi 0, %s480
      %s498 = sphi 0, %s498
      %s500 = sphi 0, %s498
      %s501 = sphi 0, %s500
      %s515 = sphi 0, %s501
      %s521 = sphi 0, %s523
      %s524 = sphi 0, %s521
      %s525 = sphi 0, %s524
      %s541 = sphi 0, %s525
      %s545 = sphi 0, %s545
      %s547 = sphi 0, %s545
      %s548 = sphi 0, %s547
      %s562 = sphi 0, %s548
      %s566 = sphi 0, %s566
      %s568 = sphi 0, %s566
      %s569 = sphi 0, %s568
      %s583 = sphi 0, %s569
      %s587 = sphi 0, %s587
      %s589 = sphi 0, %s587
      %s590 = sphi 0, %s589
      %s604 = sphi 0, %s590
      %s608 = sphi 0, %s608
      %s610 = sphi 0, %s608
      %s611 = sphi 0, %s610
      %s625 = sphi 0, %s611
      %s629 = sphi 0, %s629
      %s631 = sphi 0, %s629
      %s632 = sphi 0, %s631
      %s646 = sphi 0, %s632
      %s650 = sphi 0, %s650
      %s652 = sphi 0, %s650
      %s653 = sphi 0, %s652
      %s667 = sphi 0, %s653
      %s671 = sphi 0, %s671
      %s673 = sphi 0, %s671
      %s674 = sphi 0, %s673
      %s688 = sphi 0, %s674
      %s692 = sphi 0, %s692
      %s694 = sphi 0, %s692
      %s695 = sphi 0, %s694
      %s709 = sphi 0, %s695
      %s713 = sphi 0, %s713
      %s715 = sphi 0, %s713
      %s716 = sphi 0, %s715
      %s730 = sphi 0, %s716
      %s734 = sphi 0, %s734
      %s736 = sphi 0, %s734
      %s737 = sphi 0, %s736
      %s751 = sphi 0, %s737
      %s755 = sphi 0, %s755
      %s757 = sphi 0, %s755
      %s758 = sphi 0, %s757
      %s772 = sphi 0, %s758
      %s776 = sphi 0, %s776
      %s778 = sphi 0, %s776
      %s779 = sphi 0, %s778
      %s793 = sphi 0, %s779
      %s797 = sphi 0, %s797
      %s799 = sphi 0, %s797
      %s800 = sphi 0, %s799
      %s814 = sphi 0, %s800
      %s818 = sphi 0, %s818
      %s820 = sphi 0, %s818
      %s821 = sphi 0, %s820
      %s835 = sphi 0, %s821
      %s839 = sphi 0, %s839
      %s841 = sphi 0, %s839
      %s842 = sphi 0, %s841
      %s856 = sphi 0, %s842
      %s860 = sphi 0, %s860
      %s862 = sphi 0, %s860
      %s863 = sphi 0, %s862
      %s877 = sphi 0, %s863
      %s881 = sphi 0, %s881
      %s883 = sphi 0, %s881
      %s884 = sphi 0, %s883
      %s898 = sphi 0, %s884
      %s902 = sphi 0, %s902
      %s904 = sphi 0, %s902
      %s905 = sphi 0, %s904
      %s919 = sphi 0, %s905
      %s923 = sphi 0, %s923
      %s925 = sphi 0, %s923
      %s926 = sphi 0, %s925
      %s940 = sphi 0, %s926
      %s944 = sphi 0, %s944
      %s946 = sphi 0, %s944
      %s947 = sphi 0, %s946
      %s961 = sphi 0, %s947
      %s965 = sphi 0, %s965
      %s967 = sphi 0, %s965
      %s968 = sphi 0, %s967
      %s982 = sphi 0, %s968
      %s986 = sphi 0, %s986
      %s988 = sphi 0, %s986
      %s989 = sphi 0, %s988
      %s1003 = sphi 0, %s989
      %s1009 = sphi 0, %s1011
      %s1012 = sphi 0, %s1009
      %s1013 = sphi 0, %s1012
      %s1029 = sphi 0, %s1013
    $region4: #{tpu_custom_call.1} parent=1 // loop_header_branch
      %110 = sbr.rel (%p108) target = $region8
    $region5: #{tpu_custom_call.1} parent=1 // loop_body
      %s112 = ssub.s32 %s107, 1
      %s113 = ssub.s32 %s107, 2
      %s114 = sadd.s32 %s107, 1
      %s115 = ssub.s32 %s107, %s114
      %p116 = scmp.eq.s32.totalorder %s115, 0
      %s118 = sadd.s32 %s117, 1
      %s119 = scalar_select %p116, %s117, %s118
      %p122 = pneg %p116
      %p123 = scmp.eq.s32.totalorder %s107, 1
      %p124 = por %p122, %p123
      %p125 = scmp.ne.s32.totalorder %s117, %s120
      %p126 = scmp.eq.s32.totalorder %s107, 0
      %p127 = por %p125, %p126
      %p128 = scmp.ne.s32.totalorder %s117, %s120
      %p129 = scmp.eq.s32.totalorder %s112, 1
      %p130 = por %p128, %p129
      %p131 = scmp.ne.s32.totalorder %s120, %s121
      %p132 = scmp.eq.s32.totalorder %s112, 0
      %p133 = por %p131, %p132
      %p134 = scmp.ne.s32.totalorder %s120, %s121
      %p135 = scmp.eq.s32.totalorder %s113, 1
      %p136 = por %p134, %p135
      %p138 = scmp.ne.s32.totalorder %s121, %s137
      %p139 = scmp.eq.s32.totalorder %s113, 0
      %p140 = por %p138, %p139
      %s142 = sadd.s32 %s141, 1
      %p145 = scmp.eq.s32.totalorder %s107, 1
      %p146 = scmp.ne.s32.totalorder %s141, %s143
      %p147 = scmp.eq.s32.totalorder %s107, 0
      %p148 = por %p146, %p147
      %p149 = scmp.ne.s32.totalorder %s141, %s143
      %p150 = scmp.eq.s32.totalorder %s112, 1
      %p151 = por %p149, %p150
      %p152 = scmp.ne.s32.totalorder %s143, %s144
      %p153 = scmp.eq.s32.totalorder %s112, 0
      %p154 = por %p152, %p153
      %p155 = scmp.ne.s32.totalorder %s143, %s144
      %p156 = scmp.eq.s32.totalorder %s113, 1
      %p157 = por %p155, %p156
      %p159 = scmp.ne.s32.totalorder %s144, %s158
      %p160 = scmp.eq.s32.totalorder %s113, 0
      %p161 = por %p159, %p160
      %s163 = sadd.s32 %s162, 1
      %p166 = scmp.eq.s32.totalorder %s107, 1
      %p167 = scmp.ne.s32.totalorder %s162, %s164
      %p168 = scmp.eq.s32.totalorder %s107, 0
      %p169 = por %p167, %p168
      %p170 = scmp.ne.s32.totalorder %s162, %s164
      %p171 = scmp.eq.s32.totalorder %s112, 1
      %p172 = por %p170, %p171
      %p173 = scmp.ne.s32.totalorder %s164, %s165
      %p174 = scmp.eq.s32.totalorder %s112, 0
      %p175 = por %p173, %p174
      %p176 = scmp.ne.s32.totalorder %s164, %s165
      %p177 = scmp.eq.s32.totalorder %s113, 1
      %p178 = por %p176, %p177
      %p180 = scmp.ne.s32.totalorder %s165, %s179
      %p181 = scmp.eq.s32.totalorder %s113, 0
      %p182 = por %p180, %p181
      %s184 = sadd.s32 %s183, 1
      %p187 = scmp.eq.s32.totalorder %s107, 1
      %p188 = scmp.ne.s32.totalorder %s183, %s185
      %p189 = scmp.eq.s32.totalorder %s107, 0
      %p190 = por %p188, %p189
      %p191 = scmp.ne.s32.totalorder %s183, %s185
      %p192 = scmp.eq.s32.totalorder %s112, 1
      %p193 = por %p191, %p192
      %p194 = scmp.ne.s32.totalorder %s185, %s186
      %p195 = scmp.eq.s32.totalorder %s112, 0
      %p196 = por %p194, %p195
      %p197 = scmp.ne.s32.totalorder %s185, %s186
      %p198 = scmp.eq.s32.totalorder %s113, 1
      %p199 = por %p197, %p198
      %p201 = scmp.ne.s32.totalorder %s186, %s200
      %p202 = scmp.eq.s32.totalorder %s113, 0
      %p203 = por %p201, %p202
      %s205 = sadd.s32 %s204, 1
      %p208 = scmp.eq.s32.totalorder %s107, 1
      %p209 = scmp.ne.s32.totalorder %s204, %s206
      %p210 = scmp.eq.s32.totalorder %s107, 0
      %p211 = por %p209, %p210
      %p212 = scmp.ne.s32.totalorder %s204, %s206
      %p213 = scmp.eq.s32.totalorder %s112, 1
      %p214 = por %p212, %p213
      %p215 = scmp.ne.s32.totalorder %s206, %s207
      %p216 = scmp.eq.s32.totalorder %s112, 0
      %p217 = por %p215, %p216
      %p218 = scmp.ne.s32.totalorder %s206, %s207
      %p219 = scmp.eq.s32.totalorder %s113, 1
      %p220 = por %p218, %p219
      %p222 = scmp.ne.s32.totalorder %s207, %s221
      %p223 = scmp.eq.s32.totalorder %s113, 0
      %p224 = por %p222, %p223
      %s226 = sadd.s32 %s225, 1
      %p229 = scmp.eq.s32.totalorder %s107, 1
      %p230 = scmp.ne.s32.totalorder %s225, %s227
      %p231 = scmp.eq.s32.totalorder %s107, 0
      %p232 = por %p230, %p231
      %p233 = scmp.ne.s32.totalorder %s225, %s227
      %p234 = scmp.eq.s32.totalorder %s112, 1
      %p235 = por %p233, %p234
      %p236 = scmp.ne.s32.totalorder %s227, %s228
      %p237 = scmp.eq.s32.totalorder %s112, 0
      %p238 = por %p236, %p237
      %p239 = scmp.ne.s32.totalorder %s227, %s228
      %p240 = scmp.eq.s32.totalorder %s113, 1
      %p241 = por %p239, %p240
      %p243 = scmp.ne.s32.totalorder %s228, %s242
      %p244 = scmp.eq.s32.totalorder %s113, 0
      %p245 = por %p243, %p244
      %s247 = sadd.s32 %s246, 1
      %p250 = scmp.eq.s32.totalorder %s107, 1
      %p251 = scmp.ne.s32.totalorder %s246, %s248
      %p252 = scmp.eq.s32.totalorder %s107, 0
      %p253 = por %p251, %p252
      %p254 = scmp.ne.s32.totalorder %s246, %s248
      %p255 = scmp.eq.s32.totalorder %s112, 1
      %p256 = por %p254, %p255
      %p257 = scmp.ne.s32.totalorder %s248, %s249
      %p258 = scmp.eq.s32.totalorder %s112, 0
      %p259 = por %p257, %p258
      %p260 = scmp.ne.s32.totalorder %s248, %s249
      %p261 = scmp.eq.s32.totalorder %s113, 1
      %p262 = por %p260, %p261
      %p264 = scmp.ne.s32.totalorder %s249, %s263
      %p265 = scmp.eq.s32.totalorder %s113, 0
      %p266 = por %p264, %p265
      %s268 = sadd.s32 %s267, 1
      %p271 = scmp.eq.s32.totalorder %s107, 1
      %p272 = scmp.ne.s32.totalorder %s267, %s269
      %p273 = scmp.eq.s32.totalorder %s107, 0
      %p274 = por %p272, %p273
      %p275 = scmp.ne.s32.totalorder %s267, %s269
      %p276 = scmp.eq.s32.totalorder %s112, 1
      %p277 = por %p275, %p276
      %p278 = scmp.ne.s32.totalorder %s269, %s270
      %p279 = scmp.eq.s32.totalorder %s112, 0
      %p280 = por %p278, %p279
      %p281 = scmp.ne.s32.totalorder %s269, %s270
      %p282 = scmp.eq.s32.totalorder %s113, 1
      %p283 = por %p281, %p282
      %p285 = scmp.ne.s32.totalorder %s270, %s284
      %p286 = scmp.eq.s32.totalorder %s113, 0
      %p287 = por %p285, %p286
      %s289 = sadd.s32 %s288, 1
      %p292 = scmp.eq.s32.totalorder %s107, 1
      %p293 = scmp.ne.s32.totalorder %s288, %s290
      %p294 = scmp.eq.s32.totalorder %s107, 0
      %p295 = por %p293, %p294
      %p296 = scmp.ne.s32.totalorder %s288, %s290
      %p297 = scmp.eq.s32.totalorder %s112, 1
      %p298 = por %p296, %p297
      %p299 = scmp.ne.s32.totalorder %s290, %s291
      %p300 = scmp.eq.s32.totalorder %s112, 0
      %p301 = por %p299, %p300
      %p302 = scmp.ne.s32.totalorder %s290, %s291
      %p303 = scmp.eq.s32.totalorder %s113, 1
      %p304 = por %p302, %p303
      %p306 = scmp.ne.s32.totalorder %s291, %s305
      %p307 = scmp.eq.s32.totalorder %s113, 0
      %p308 = por %p306, %p307
      %s310 = sadd.s32 %s309, 1
      %p313 = scmp.eq.s32.totalorder %s107, 1
      %p314 = scmp.ne.s32.totalorder %s309, %s311
      %p315 = scmp.eq.s32.totalorder %s107, 0
      %p316 = por %p314, %p315
      %p317 = scmp.ne.s32.totalorder %s309, %s311
      %p318 = scmp.eq.s32.totalorder %s112, 1
      %p319 = por %p317, %p318
      %p320 = scmp.ne.s32.totalorder %s311, %s312
      %p321 = scmp.eq.s32.totalorder %s112, 0
      %p322 = por %p320, %p321
      %p323 = scmp.ne.s32.totalorder %s311, %s312
      %p324 = scmp.eq.s32.totalorder %s113, 1
      %p325 = por %p323, %p324
      %p327 = scmp.ne.s32.totalorder %s312, %s326
      %p328 = scmp.eq.s32.totalorder %s113, 0
      %p329 = por %p327, %p328
      %s331 = sadd.s32 %s330, 1
      %p334 = scmp.eq.s32.totalorder %s107, 1
      %p335 = scmp.ne.s32.totalorder %s330, %s332
      %p336 = scmp.eq.s32.totalorder %s107, 0
      %p337 = por %p335, %p336
      %p338 = scmp.ne.s32.totalorder %s330, %s332
      %p339 = scmp.eq.s32.totalorder %s112, 1
      %p340 = por %p338, %p339
      %p341 = scmp.ne.s32.totalorder %s332, %s333
      %p342 = scmp.eq.s32.totalorder %s112, 0
      %p343 = por %p341, %p342
      %p344 = scmp.ne.s32.totalorder %s332, %s333
      %p345 = scmp.eq.s32.totalorder %s113, 1
      %p346 = por %p344, %p345
      %p348 = scmp.ne.s32.totalorder %s333, %s347
      %p349 = scmp.eq.s32.totalorder %s113, 0
      %p350 = por %p348, %p349
      %s352 = sadd.s32 %s351, 1
      %p355 = scmp.eq.s32.totalorder %s107, 1
      %p356 = scmp.ne.s32.totalorder %s351, %s353
      %p357 = scmp.eq.s32.totalorder %s107, 0
      %p358 = por %p356, %p357
      %p359 = scmp.ne.s32.totalorder %s351, %s353
      %p360 = scmp.eq.s32.totalorder %s112, 1
      %p361 = por %p359, %p360
      %p362 = scmp.ne.s32.totalorder %s353, %s354
      %p363 = scmp.eq.s32.totalorder %s112, 0
      %p364 = por %p362, %p363
      %p365 = scmp.ne.s32.totalorder %s353, %s354
      %p366 = scmp.eq.s32.totalorder %s113, 1
      %p367 = por %p365, %p366
      %p369 = scmp.ne.s32.totalorder %s354, %s368
      %p370 = scmp.eq.s32.totalorder %s113, 0
      %p371 = por %p369, %p370
      %s373 = sadd.s32 %s372, 1
      %p376 = scmp.eq.s32.totalorder %s107, 1
      %p377 = scmp.ne.s32.totalorder %s372, %s374
      %p378 = scmp.eq.s32.totalorder %s107, 0
      %p379 = por %p377, %p378
      %p380 = scmp.ne.s32.totalorder %s372, %s374
      %p381 = scmp.eq.s32.totalorder %s112, 1
      %p382 = por %p380, %p381
      %p383 = scmp.ne.s32.totalorder %s374, %s375
      %p384 = scmp.eq.s32.totalorder %s112, 0
      %p385 = por %p383, %p384
      %p386 = scmp.ne.s32.totalorder %s374, %s375
      %p387 = scmp.eq.s32.totalorder %s113, 1
      %p388 = por %p386, %p387
      %p390 = scmp.ne.s32.totalorder %s375, %s389
      %p391 = scmp.eq.s32.totalorder %s113, 0
      %p392 = por %p390, %p391
      %s394 = sadd.s32 %s393, 1
      %p397 = scmp.eq.s32.totalorder %s107, 1
      %p398 = scmp.ne.s32.totalorder %s393, %s395
      %p399 = scmp.eq.s32.totalorder %s107, 0
      %p400 = por %p398, %p399
      %p401 = scmp.ne.s32.totalorder %s393, %s395
      %p402 = scmp.eq.s32.totalorder %s112, 1
      %p403 = por %p401, %p402
      %p404 = scmp.ne.s32.totalorder %s395, %s396
      %p405 = scmp.eq.s32.totalorder %s112, 0
      %p406 = por %p404, %p405
      %p407 = scmp.ne.s32.totalorder %s395, %s396
      %p408 = scmp.eq.s32.totalorder %s113, 1
      %p409 = por %p407, %p408
      %p411 = scmp.ne.s32.totalorder %s396, %s410
      %p412 = scmp.eq.s32.totalorder %s113, 0
      %p413 = por %p411, %p412
      %s415 = sadd.s32 %s414, 1
      %p418 = scmp.eq.s32.totalorder %s107, 1
      %p419 = scmp.ne.s32.totalorder %s414, %s416
      %p420 = scmp.eq.s32.totalorder %s107, 0
      %p421 = por %p419, %p420
      %p422 = scmp.ne.s32.totalorder %s414, %s416
      %p423 = scmp.eq.s32.totalorder %s112, 1
      %p424 = por %p422, %p423
      %p425 = scmp.ne.s32.totalorder %s416, %s417
      %p426 = scmp.eq.s32.totalorder %s112, 0
      %p427 = por %p425, %p426
      %p428 = scmp.ne.s32.totalorder %s416, %s417
      %p429 = scmp.eq.s32.totalorder %s113, 1
      %p430 = por %p428, %p429
      %p432 = scmp.ne.s32.totalorder %s417, %s431
      %p433 = scmp.eq.s32.totalorder %s113, 0
      %p434 = por %p432, %p433
      %s436 = sadd.s32 %s435, 1
      %p439 = scmp.eq.s32.totalorder %s107, 1
      %p440 = scmp.ne.s32.totalorder %s435, %s437
      %p441 = scmp.eq.s32.totalorder %s107, 0
      %p442 = por %p440, %p441
      %p443 = scmp.ne.s32.totalorder %s435, %s437
      %p444 = scmp.eq.s32.totalorder %s112, 1
      %p445 = por %p443, %p444
      %p446 = scmp.ne.s32.totalorder %s437, %s438
      %p447 = scmp.eq.s32.totalorder %s112, 0
      %p448 = por %p446, %p447
      %p449 = scmp.ne.s32.totalorder %s437, %s438
      %p450 = scmp.eq.s32.totalorder %s113, 1
      %p451 = por %p449, %p450
      %p453 = scmp.ne.s32.totalorder %s438, %s452
      %p454 = scmp.eq.s32.totalorder %s113, 0
      %p455 = por %p453, %p454
      %s457 = sadd.s32 %s456, 1
      %p460 = scmp.eq.s32.totalorder %s107, 1
      %p461 = scmp.ne.s32.totalorder %s456, %s458
      %p462 = scmp.eq.s32.totalorder %s107, 0
      %p463 = por %p461, %p462
      %p464 = scmp.ne.s32.totalorder %s456, %s458
      %p465 = scmp.eq.s32.totalorder %s112, 1
      %p466 = por %p464, %p465
      %p467 = scmp.ne.s32.totalorder %s458, %s459
      %p468 = scmp.eq.s32.totalorder %s112, 0
      %p469 = por %p467, %p468
      %p470 = scmp.ne.s32.totalorder %s458, %s459
      %p471 = scmp.eq.s32.totalorder %s113, 1
      %p472 = por %p470, %p471
      %p474 = scmp.ne.s32.totalorder %s459, %s473
      %p475 = scmp.eq.s32.totalorder %s113, 0
      %p476 = por %p474, %p475
      %s478 = sadd.s32 %s477, 1
      %p481 = scmp.eq.s32.totalorder %s107, 1
      %p482 = scmp.ne.s32.totalorder %s477, %s479
      %p483 = scmp.eq.s32.totalorder %s107, 0
      %p484 = por %p482, %p483
      %p485 = scmp.ne.s32.totalorder %s477, %s479
      %p486 = scmp.eq.s32.totalorder %s112, 1
      %p487 = por %p485, %p486
      %p488 = scmp.ne.s32.totalorder %s479, %s480
      %p489 = scmp.eq.s32.totalorder %s112, 0
      %p490 = por %p488, %p489
      %p491 = scmp.ne.s32.totalorder %s479, %s480
      %p492 = scmp.eq.s32.totalorder %s113, 1
      %p493 = por %p491, %p492
      %p495 = scmp.ne.s32.totalorder %s480, %s494
      %p496 = scmp.eq.s32.totalorder %s113, 0
      %p497 = por %p495, %p496
      %s499 = sadd.s32 %s498, 1
      %p502 = scmp.eq.s32.totalorder %s107, 1
      %p503 = scmp.ne.s32.totalorder %s498, %s500
      %p504 = scmp.eq.s32.totalorder %s107, 0
      %p505 = por %p503, %p504
      %p506 = scmp.ne.s32.totalorder %s498, %s500
      %p507 = scmp.eq.s32.totalorder %s112, 1
      %p508 = por %p506, %p507
      %p509 = scmp.ne.s32.totalorder %s500, %s501
      %p510 = scmp.eq.s32.totalorder %s112, 0
      %p511 = por %p509, %p510
      %p512 = scmp.ne.s32.totalorder %s500, %s501
      %p513 = scmp.eq.s32.totalorder %s113, 1
      %p514 = por %p512, %p513
      %p516 = scmp.ne.s32.totalorder %s501, %s515
      %p517 = scmp.eq.s32.totalorder %s113, 0
      %p518 = por %p516, %p517
      %s519 = ssub.s32 %s107, %s114
      %p520 = scmp.eq.s32.totalorder %s519, 0
      %s522 = sadd.s32 %s521, 1
      %s523 = scalar_select %p520, %s521, %s522
      %p526 = pneg %p520
      %p527 = scmp.eq.s32.totalorder %s107, 1
      %p528 = por %p526, %p527
      %p529 = scmp.ne.s32.totalorder %s521, %s524
      %p530 = scmp.eq.s32.totalorder %s107, 0
      %p531 = por %p529, %p530
      %p532 = scmp.ne.s32.totalorder %s521, %s524
      %p533 = scmp.eq.s32.totalorder %s112, 1
      %p534 = por %p532, %p533
      %p535 = scmp.ne.s32.totalorder %s524, %s525
      %p536 = scmp.eq.s32.totalorder %s112, 0
      %p537 = por %p535, %p536
      %p538 = scmp.ne.s32.totalorder %s524, %s525
      %p539 = scmp.eq.s32.totalorder %s113, 1
      %p540 = por %p538, %p539
      %p542 = scmp.ne.s32.totalorder %s525, %s541
      %p543 = scmp.eq.s32.totalorder %s113, 0
      %p544 = por %p542, %p543
      %s546 = sadd.s32 %s545, 1
      %p549 = scmp.eq.s32.totalorder %s107, 1
      %p550 = scmp.ne.s32.totalorder %s545, %s547
      %p551 = scmp.eq.s32.totalorder %s107, 0
      %p552 = por %p550, %p551
      %p553 = scmp.ne.s32.totalorder %s545, %s547
      %p554 = scmp.eq.s32.totalorder %s112, 1
      %p555 = por %p553, %p554
      %p556 = scmp.ne.s32.totalorder %s547, %s548
      %p557 = scmp.eq.s32.totalorder %s112, 0
      %p558 = por %p556, %p557
      %p559 = scmp.ne.s32.totalorder %s547, %s548
      %p560 = scmp.eq.s32.totalorder %s113, 1
      %p561 = por %p559, %p560
      %p563 = scmp.ne.s32.totalorder %s548, %s562
      %p564 = scmp.eq.s32.totalorder %s113, 0
      %p565 = por %p563, %p564
      %s567 = sadd.s32 %s566, 1
      %p570 = scmp.eq.s32.totalorder %s107, 1
      %p571 = scmp.ne.s32.totalorder %s566, %s568
      %p572 = scmp.eq.s32.totalorder %s107, 0
      %p573 = por %p571, %p572
      %p574 = scmp.ne.s32.totalorder %s566, %s568
      %p575 = scmp.eq.s32.totalorder %s112, 1
      %p576 = por %p574, %p575
      %p577 = scmp.ne.s32.totalorder %s568, %s569
      %p578 = scmp.eq.s32.totalorder %s112, 0
      %p579 = por %p577, %p578
      %p580 = scmp.ne.s32.totalorder %s568, %s569
      %p581 = scmp.eq.s32.totalorder %s113, 1
      %p582 = por %p580, %p581
      %p584 = scmp.ne.s32.totalorder %s569, %s583
      %p585 = scmp.eq.s32.totalorder %s113, 0
      %p586 = por %p584, %p585
      %s588 = sadd.s32 %s587, 1
      %p591 = scmp.eq.s32.totalorder %s107, 1
      %p592 = scmp.ne.s32.totalorder %s587, %s589
      %p593 = scmp.eq.s32.totalorder %s107, 0
      %p594 = por %p592, %p593
      %p595 = scmp.ne.s32.totalorder %s587, %s589
      %p596 = scmp.eq.s32.totalorder %s112, 1
      %p597 = por %p595, %p596
      %p598 = scmp.ne.s32.totalorder %s589, %s590
      %p599 = scmp.eq.s32.totalorder %s112, 0
      %p600 = por %p598, %p599
      %p601 = scmp.ne.s32.totalorder %s589, %s590
      %p602 = scmp.eq.s32.totalorder %s113, 1
      %p603 = por %p601, %p602
      %p605 = scmp.ne.s32.totalorder %s590, %s604
      %p606 = scmp.eq.s32.totalorder %s113, 0
      %p607 = por %p605, %p606
      %s609 = sadd.s32 %s608, 1
      %p612 = scmp.eq.s32.totalorder %s107, 1
      %p613 = scmp.ne.s32.totalorder %s608, %s610
      %p614 = scmp.eq.s32.totalorder %s107, 0
      %p615 = por %p613, %p614
      %p616 = scmp.ne.s32.totalorder %s608, %s610
      %p617 = scmp.eq.s32.totalorder %s112, 1
      %p618 = por %p616, %p617
      %p619 = scmp.ne.s32.totalorder %s610, %s611
      %p620 = scmp.eq.s32.totalorder %s112, 0
      %p621 = por %p619, %p620
      %p622 = scmp.ne.s32.totalorder %s610, %s611
      %p623 = scmp.eq.s32.totalorder %s113, 1
      %p624 = por %p622, %p623
      %p626 = scmp.ne.s32.totalorder %s611, %s625
      %p627 = scmp.eq.s32.totalorder %s113, 0
      %p628 = por %p626, %p627
      %s630 = sadd.s32 %s629, 1
      %p633 = scmp.eq.s32.totalorder %s107, 1
      %p634 = scmp.ne.s32.totalorder %s629, %s631
      %p635 = scmp.eq.s32.totalorder %s107, 0
      %p636 = por %p634, %p635
      %p637 = scmp.ne.s32.totalorder %s629, %s631
      %p638 = scmp.eq.s32.totalorder %s112, 1
      %p639 = por %p637, %p638
      %p640 = scmp.ne.s32.totalorder %s631, %s632
      %p641 = scmp.eq.s32.totalorder %s112, 0
      %p642 = por %p640, %p641
      %p643 = scmp.ne.s32.totalorder %s631, %s632
      %p644 = scmp.eq.s32.totalorder %s113, 1
      %p645 = por %p643, %p644
      %p647 = scmp.ne.s32.totalorder %s632, %s646
      %p648 = scmp.eq.s32.totalorder %s113, 0
      %p649 = por %p647, %p648
      %s651 = sadd.s32 %s650, 1
      %p654 = scmp.eq.s32.totalorder %s107, 1
      %p655 = scmp.ne.s32.totalorder %s650, %s652
      %p656 = scmp.eq.s32.totalorder %s107, 0
      %p657 = por %p655, %p656
      %p658 = scmp.ne.s32.totalorder %s650, %s652
      %p659 = scmp.eq.s32.totalorder %s112, 1
      %p660 = por %p658, %p659
      %p661 = scmp.ne.s32.totalorder %s652, %s653
      %p662 = scmp.eq.s32.totalorder %s112, 0
      %p663 = por %p661, %p662
      %p664 = scmp.ne.s32.totalorder %s652, %s653
      %p665 = scmp.eq.s32.totalorder %s113, 1
      %p666 = por %p664, %p665
      %p668 = scmp.ne.s32.totalorder %s653, %s667
      %p669 = scmp.eq.s32.totalorder %s113, 0
      %p670 = por %p668, %p669
      %s672 = sadd.s32 %s671, 1
      %p675 = scmp.eq.s32.totalorder %s107, 1
      %p676 = scmp.ne.s32.totalorder %s671, %s673
      %p677 = scmp.eq.s32.totalorder %s107, 0
      %p678 = por %p676, %p677
      %p679 = scmp.ne.s32.totalorder %s671, %s673
      %p680 = scmp.eq.s32.totalorder %s112, 1
      %p681 = por %p679, %p680
      %p682 = scmp.ne.s32.totalorder %s673, %s674
      %p683 = scmp.eq.s32.totalorder %s112, 0
      %p684 = por %p682, %p683
      %p685 = scmp.ne.s32.totalorder %s673, %s674
      %p686 = scmp.eq.s32.totalorder %s113, 1
      %p687 = por %p685, %p686
      %p689 = scmp.ne.s32.totalorder %s674, %s688
      %p690 = scmp.eq.s32.totalorder %s113, 0
      %p691 = por %p689, %p690
      %s693 = sadd.s32 %s692, 1
      %p696 = scmp.eq.s32.totalorder %s107, 1
      %p697 = scmp.ne.s32.totalorder %s692, %s694
      %p698 = scmp.eq.s32.totalorder %s107, 0
      %p699 = por %p697, %p698
      %p700 = scmp.ne.s32.totalorder %s692, %s694
      %p701 = scmp.eq.s32.totalorder %s112, 1
      %p702 = por %p700, %p701
      %p703 = scmp.ne.s32.totalorder %s694, %s695
      %p704 = scmp.eq.s32.totalorder %s112, 0
      %p705 = por %p703, %p704
      %p706 = scmp.ne.s32.totalorder %s694, %s695
      %p707 = scmp.eq.s32.totalorder %s113, 1
      %p708 = por %p706, %p707
      %p710 = scmp.ne.s32.totalorder %s695, %s709
      %p711 = scmp.eq.s32.totalorder %s113, 0
      %p712 = por %p710, %p711
      %s714 = sadd.s32 %s713, 1
      %p717 = scmp.eq.s32.totalorder %s107, 1
      %p718 = scmp.ne.s32.totalorder %s713, %s715
      %p719 = scmp.eq.s32.totalorder %s107, 0
      %p720 = por %p718, %p719
      %p721 = scmp.ne.s32.totalorder %s713, %s715
      %p722 = scmp.eq.s32.totalorder %s112, 1
      %p723 = por %p721, %p722
      %p724 = scmp.ne.s32.totalorder %s715, %s716
      %p725 = scmp.eq.s32.totalorder %s112, 0
      %p726 = por %p724, %p725
      %p727 = scmp.ne.s32.totalorder %s715, %s716
      %p728 = scmp.eq.s32.totalorder %s113, 1
      %p729 = por %p727, %p728
      %p731 = scmp.ne.s32.totalorder %s716, %s730
      %p732 = scmp.eq.s32.totalorder %s113, 0
      %p733 = por %p731, %p732
      %s735 = sadd.s32 %s734, 1
      %p738 = scmp.eq.s32.totalorder %s107, 1
      %p739 = scmp.ne.s32.totalorder %s734, %s736
      %p740 = scmp.eq.s32.totalorder %s107, 0
      %p741 = por %p739, %p740
      %p742 = scmp.ne.s32.totalorder %s734, %s736
      %p743 = scmp.eq.s32.totalorder %s112, 1
      %p744 = por %p742, %p743
      %p745 = scmp.ne.s32.totalorder %s736, %s737
      %p746 = scmp.eq.s32.totalorder %s112, 0
      %p747 = por %p745, %p746
      %p748 = scmp.ne.s32.totalorder %s736, %s737
      %p749 = scmp.eq.s32.totalorder %s113, 1
      %p750 = por %p748, %p749
      %p752 = scmp.ne.s32.totalorder %s737, %s751
      %p753 = scmp.eq.s32.totalorder %s113, 0
      %p754 = por %p752, %p753
      %s756 = sadd.s32 %s755, 1
      %p759 = scmp.eq.s32.totalorder %s107, 1
      %p760 = scmp.ne.s32.totalorder %s755, %s757
      %p761 = scmp.eq.s32.totalorder %s107, 0
      %p762 = por %p760, %p761
      %p763 = scmp.ne.s32.totalorder %s755, %s757
      %p764 = scmp.eq.s32.totalorder %s112, 1
      %p765 = por %p763, %p764
      %p766 = scmp.ne.s32.totalorder %s757, %s758
      %p767 = scmp.eq.s32.totalorder %s112, 0
      %p768 = por %p766, %p767
      %p769 = scmp.ne.s32.totalorder %s757, %s758
      %p770 = scmp.eq.s32.totalorder %s113, 1
      %p771 = por %p769, %p770
      %p773 = scmp.ne.s32.totalorder %s758, %s772
      %p774 = scmp.eq.s32.totalorder %s113, 0
      %p775 = por %p773, %p774
      %s777 = sadd.s32 %s776, 1
      %p780 = scmp.eq.s32.totalorder %s107, 1
      %p781 = scmp.ne.s32.totalorder %s776, %s778
      %p782 = scmp.eq.s32.totalorder %s107, 0
      %p783 = por %p781, %p782
      %p784 = scmp.ne.s32.totalorder %s776, %s778
      %p785 = scmp.eq.s32.totalorder %s112, 1
      %p786 = por %p784, %p785
      %p787 = scmp.ne.s32.totalorder %s778, %s779
      %p788 = scmp.eq.s32.totalorder %s112, 0
      %p789 = por %p787, %p788
      %p790 = scmp.ne.s32.totalorder %s778, %s779
      %p791 = scmp.eq.s32.totalorder %s113, 1
      %p792 = por %p790, %p791
      %p794 = scmp.ne.s32.totalorder %s779, %s793
      %p795 = scmp.eq.s32.totalorder %s113, 0
      %p796 = por %p794, %p795
      %s798 = sadd.s32 %s797, 1
      %p801 = scmp.eq.s32.totalorder %s107, 1
      %p802 = scmp.ne.s32.totalorder %s797, %s799
      %p803 = scmp.eq.s32.totalorder %s107, 0
      %p804 = por %p802, %p803
      %p805 = scmp.ne.s32.totalorder %s797, %s799
      %p806 = scmp.eq.s32.totalorder %s112, 1
      %p807 = por %p805, %p806
      %p808 = scmp.ne.s32.totalorder %s799, %s800
      %p809 = scmp.eq.s32.totalorder %s112, 0
      %p810 = por %p808, %p809
      %p811 = scmp.ne.s32.totalorder %s799, %s800
      %p812 = scmp.eq.s32.totalorder %s113, 1
      %p813 = por %p811, %p812
      %p815 = scmp.ne.s32.totalorder %s800, %s814
      %p816 = scmp.eq.s32.totalorder %s113, 0
      %p817 = por %p815, %p816
      %s819 = sadd.s32 %s818, 1
      %p822 = scmp.eq.s32.totalorder %s107, 1
      %p823 = scmp.ne.s32.totalorder %s818, %s820
      %p824 = scmp.eq.s32.totalorder %s107, 0
      %p825 = por %p823, %p824
      %p826 = scmp.ne.s32.totalorder %s818, %s820
      %p827 = scmp.eq.s32.totalorder %s112, 1
      %p828 = por %p826, %p827
      %p829 = scmp.ne.s32.totalorder %s820, %s821
      %p830 = scmp.eq.s32.totalorder %s112, 0
      %p831 = por %p829, %p830
      %p832 = scmp.ne.s32.totalorder %s820, %s821
      %p833 = scmp.eq.s32.totalorder %s113, 1
      %p834 = por %p832, %p833
      %p836 = scmp.ne.s32.totalorder %s821, %s835
      %p837 = scmp.eq.s32.totalorder %s113, 0
      %p838 = por %p836, %p837
      %s840 = sadd.s32 %s839, 1
      %p843 = scmp.eq.s32.totalorder %s107, 1
      %p844 = scmp.ne.s32.totalorder %s839, %s841
      %p845 = scmp.eq.s32.totalorder %s107, 0
      %p846 = por %p844, %p845
      %p847 = scmp.ne.s32.totalorder %s839, %s841
      %p848 = scmp.eq.s32.totalorder %s112, 1
      %p849 = por %p847, %p848
      %p850 = scmp.ne.s32.totalorder %s841, %s842
      %p851 = scmp.eq.s32.totalorder %s112, 0
      %p852 = por %p850, %p851
      %p853 = scmp.ne.s32.totalorder %s841, %s842
      %p854 = scmp.eq.s32.totalorder %s113, 1
      %p855 = por %p853, %p854
      %p857 = scmp.ne.s32.totalorder %s842, %s856
      %p858 = scmp.eq.s32.totalorder %s113, 0
      %p859 = por %p857, %p858
      %s861 = sadd.s32 %s860, 1
      %p864 = scmp.eq.s32.totalorder %s107, 1
      %p865 = scmp.ne.s32.totalorder %s860, %s862
      %p866 = scmp.eq.s32.totalorder %s107, 0
      %p867 = por %p865, %p866
      %p868 = scmp.ne.s32.totalorder %s860, %s862
      %p869 = scmp.eq.s32.totalorder %s112, 1
      %p870 = por %p868, %p869
      %p871 = scmp.ne.s32.totalorder %s862, %s863
      %p872 = scmp.eq.s32.totalorder %s112, 0
      %p873 = por %p871, %p872
      %p874 = scmp.ne.s32.totalorder %s862, %s863
      %p875 = scmp.eq.s32.totalorder %s113, 1
      %p876 = por %p874, %p875
      %p878 = scmp.ne.s32.totalorder %s863, %s877
      %p879 = scmp.eq.s32.totalorder %s113, 0
      %p880 = por %p878, %p879
      %s882 = sadd.s32 %s881, 1
      %p885 = scmp.eq.s32.totalorder %s107, 1
      %p886 = scmp.ne.s32.totalorder %s881, %s883
      %p887 = scmp.eq.s32.totalorder %s107, 0
      %p888 = por %p886, %p887
      %p889 = scmp.ne.s32.totalorder %s881, %s883
      %p890 = scmp.eq.s32.totalorder %s112, 1
      %p891 = por %p889, %p890
      %p892 = scmp.ne.s32.totalorder %s883, %s884
      %p893 = scmp.eq.s32.totalorder %s112, 0
      %p894 = por %p892, %p893
      %p895 = scmp.ne.s32.totalorder %s883, %s884
      %p896 = scmp.eq.s32.totalorder %s113, 1
      %p897 = por %p895, %p896
      %p899 = scmp.ne.s32.totalorder %s884, %s898
      %p900 = scmp.eq.s32.totalorder %s113, 0
      %p901 = por %p899, %p900
      %s903 = sadd.s32 %s902, 1
      %p906 = scmp.eq.s32.totalorder %s107, 1
      %p907 = scmp.ne.s32.totalorder %s902, %s904
      %p908 = scmp.eq.s32.totalorder %s107, 0
      %p909 = por %p907, %p908
      %p910 = scmp.ne.s32.totalorder %s902, %s904
      %p911 = scmp.eq.s32.totalorder %s112, 1
      %p912 = por %p910, %p911
      %p913 = scmp.ne.s32.totalorder %s904, %s905
      %p914 = scmp.eq.s32.totalorder %s112, 0
      %p915 = por %p913, %p914
      %p916 = scmp.ne.s32.totalorder %s904, %s905
      %p917 = scmp.eq.s32.totalorder %s113, 1
      %p918 = por %p916, %p917
      %p920 = scmp.ne.s32.totalorder %s905, %s919
      %p921 = scmp.eq.s32.totalorder %s113, 0
      %p922 = por %p920, %p921
      %s924 = sadd.s32 %s923, 1
      %p927 = scmp.eq.s32.totalorder %s107, 1
      %p928 = scmp.ne.s32.totalorder %s923, %s925
      %p929 = scmp.eq.s32.totalorder %s107, 0
      %p930 = por %p928, %p929
      %p931 = scmp.ne.s32.totalorder %s923, %s925
      %p932 = scmp.eq.s32.totalorder %s112, 1
      %p933 = por %p931, %p932
      %p934 = scmp.ne.s32.totalorder %s925, %s926
      %p935 = scmp.eq.s32.totalorder %s112, 0
      %p936 = por %p934, %p935
      %p937 = scmp.ne.s32.totalorder %s925, %s926
      %p938 = scmp.eq.s32.totalorder %s113, 1
      %p939 = por %p937, %p938
      %p941 = scmp.ne.s32.totalorder %s926, %s940
      %p942 = scmp.eq.s32.totalorder %s113, 0
      %p943 = por %p941, %p942
      %s945 = sadd.s32 %s944, 1
      %p948 = scmp.eq.s32.totalorder %s107, 1
      %p949 = scmp.ne.s32.totalorder %s944, %s946
      %p950 = scmp.eq.s32.totalorder %s107, 0
      %p951 = por %p949, %p950
      %p952 = scmp.ne.s32.totalorder %s944, %s946
      %p953 = scmp.eq.s32.totalorder %s112, 1
      %p954 = por %p952, %p953
      %p955 = scmp.ne.s32.totalorder %s946, %s947
      %p956 = scmp.eq.s32.totalorder %s112, 0
      %p957 = por %p955, %p956
      %p958 = scmp.ne.s32.totalorder %s946, %s947
      %p959 = scmp.eq.s32.totalorder %s113, 1
      %p960 = por %p958, %p959
      %p962 = scmp.ne.s32.totalorder %s947, %s961
      %p963 = scmp.eq.s32.totalorder %s113, 0
      %p964 = por %p962, %p963
      %s966 = sadd.s32 %s965, 1
      %p969 = scmp.eq.s32.totalorder %s107, 1
      %p970 = scmp.ne.s32.totalorder %s965, %s967
      %p971 = scmp.eq.s32.totalorder %s107, 0
      %p972 = por %p970, %p971
      %p973 = scmp.ne.s32.totalorder %s965, %s967
      %p974 = scmp.eq.s32.totalorder %s112, 1
      %p975 = por %p973, %p974
      %p976 = scmp.ne.s32.totalorder %s967, %s968
      %p977 = scmp.eq.s32.totalorder %s112, 0
      %p978 = por %p976, %p977
      %p979 = scmp.ne.s32.totalorder %s967, %s968
      %p980 = scmp.eq.s32.totalorder %s113, 1
      %p981 = por %p979, %p980
      %p983 = scmp.ne.s32.totalorder %s968, %s982
      %p984 = scmp.eq.s32.totalorder %s113, 0
      %p985 = por %p983, %p984
      %s987 = sadd.s32 %s986, 1
      %p990 = scmp.eq.s32.totalorder %s107, 1
      %p991 = scmp.ne.s32.totalorder %s986, %s988
      %p992 = scmp.eq.s32.totalorder %s107, 0
      %p993 = por %p991, %p992
      %p994 = scmp.ne.s32.totalorder %s986, %s988
      %p995 = scmp.eq.s32.totalorder %s112, 1
      %p996 = por %p994, %p995
      %p997 = scmp.ne.s32.totalorder %s988, %s989
      %p998 = scmp.eq.s32.totalorder %s112, 0
      %p999 = por %p997, %p998
      %p1000 = scmp.ne.s32.totalorder %s988, %s989
      %p1001 = scmp.eq.s32.totalorder %s113, 1
      %p1002 = por %p1000, %p1001
      %p1004 = scmp.ne.s32.totalorder %s989, %s1003
      %p1005 = scmp.eq.s32.totalorder %s113, 0
      %p1006 = por %p1004, %p1005
      %s1007 = ssub.s32 %s107, %s114
      %p1008 = scmp.eq.s32.totalorder %s1007, 0
      %s1010 = sadd.s32 %s1009, 1
      %s1011 = scalar_select %p1008, %s1009, %s1010
      %p1014 = pneg %p1008
      %p1015 = scmp.eq.s32.totalorder %s107, 1
      %p1016 = por %p1014, %p1015
      %p1017 = scmp.ne.s32.totalorder %s1009, %s1012
      %p1018 = scmp.eq.s32.totalorder %s107, 0
      %p1019 = por %p1017, %p1018
      %p1020 = scmp.ne.s32.totalorder %s1009, %s1012
      %p1021 = scmp.eq.s32.totalorder %s112, 1
      %p1022 = por %p1020, %p1021
      %p1023 = scmp.ne.s32.totalorder %s1012, %s1013
      %p1024 = scmp.eq.s32.totalorder %s112, 0
      %p1025 = por %p1023, %p1024
      %p1026 = scmp.ne.s32.totalorder %s1012, %s1013
      %p1027 = scmp.eq.s32.totalorder %s113, 1
      %p1028 = por %p1026, %p1027
      %p1030 = scmp.ne.s32.totalorder %s1013, %s1029
      %p1031 = scmp.eq.s32.totalorder %s113, 0
      %p1032 = por %p1030, %p1031
      %p1033 = scmp.le.s32.totalorder 1, %s107
      %p1034 = scmp.lt.s32.totalorder %s107, 3
      %p1035 = pnand %p1033, %p1034
      %p1036 = pneg %p1035
      // Predicated region
      $region9: #{tpu_custom_call.1} parent=5 // pred_check
        _
      $region10: #{tpu_custom_call.1} parent=5 // pred_check_branch
        %1038 = sbr.rel (%p1035) target = $region12
      $region11: #{tpu_custom_call.1} parent=5 // pred_region
        %s1039 = ssub.s32 %s107, 1
        // Predicated region
        $region13: #{tpu_custom_call.1} parent=11 // pred_check
          %p1040 = pneg %p154
        $region14: #{tpu_custom_call.1} parent=11 // pred_check_branch
          %1042 = sbr.rel (%p1040) target = $region16
        $region15: #{tpu_custom_call.1} parent=11 // pred_region
          %1044 = vsyncadd [#allocation3], 0
          %s1045 = sshll.u32 %s3, 4
          %s1046 = int_to_ptr.hbm [resolvable:$true] %s1045
          %s1047 = sshll.u32 [#allocation2], 4
          %s1048 = int_to_ptr.vmem [resolvable:$true] %s1047
          %1053 = dma.hbm_to_vmem [thread:$0]  %s1046, 128, %s1048, [#allocation3], 64, 64, 4
        $region16: #{tpu_custom_call.1} parent=11 // pred_fallthru
          _
        // Predicated region
        $region17: #{tpu_custom_call.1} parent=11 // pred_check
          %p1054 = pneg %p175
        $region18: #{tpu_custom_call.1} parent=11 // pred_check_branch
          %1056 = sbr.rel (%p1054) target = $region20
        $region19: #{tpu_custom_call.1} parent=11 // pred_region
          %1058 = vsyncadd [#allocation6], 0
          %s1059 = sshll.u32 %s5, 4
          %s1060 = int_to_ptr.hbm [resolvable:$true] %s1059
          %s1061 = sshll.u32 [#allocation5], 4
          %s1062 = int_to_ptr.vmem [resolvable:$true] %s1061
          %1067 = dma.hbm_to_vmem [thread:$0]  %s1060, 128, %s1062, [#allocation6], 64, 64, 4
        $region20: #{tpu_custom_call.1} parent=11 // pred_fallthru
          _
        // Predicated region
        $region21: #{tpu_custom_call.1} parent=11 // pred_check
          %p1068 = pneg %p196
        $region22: #{tpu_custom_call.1} parent=11 // pred_check_branch
          %1070 = sbr.rel (%p1068) target = $region24
        $region23: #{tpu_custom_call.1} parent=11 // pred_region
          _
        $region24: #{tpu_custom_call.1} parent=11 // pred_fallthru
          _
        // Predicated region
        $region25: #{tpu_custom_call.1} parent=11 // pred_check
          %p1071 = pneg %p217
        $region26: #{tpu_custom_call.1} parent=11 // pred_check_branch
          %1073 = sbr.rel (%p1071) target = $region28
        $region27: #{tpu_custom_call.1} parent=11 // pred_region
          %1075 = vsyncadd [#allocation6], 0
          %s1077 = sshll.u32 %s9, 4
          %s1078 = int_to_ptr.hbm [resolvable:$true] %s1077
          %s1079 = sshll.u32 [#allocation7], 4
          %s1080 = int_to_ptr.vmem [resolvable:$true] %s1079
          %1082 = dma.hbm_to_vmem [thread:$0]  %s1078, 32, %s1080, [#allocation6]
        $region28: #{tpu_custom_call.1} parent=11 // pred_fallthru
          _
        // Predicated region
        $region29: #{tpu_custom_call.1} parent=11 // pred_check
          %p1083 = pneg %p238
        $region30: #{tpu_custom_call.1} parent=11 // pred_check_branch
          %1085 = sbr.rel (%p1083) target = $region32
        $region31: #{tpu_custom_call.1} parent=11 // pred_region
          %1087 = vsyncadd [#allocation9], 0
          %s1089 = sshll.u32 %s11, 4
          %s1090 = int_to_ptr.hbm [resolvable:$true] %s1089
          %s1091 = sshll.u32 [#allocation8], 4
          %s1092 = int_to_ptr.vmem [resolvable:$true] %s1091
          %1094 = dma.hbm_to_vmem [thread:$0]  %s1090, 16, %s1092, [#allocation9]
        $region32: #{tpu_custom_call.1} parent=11 // pred_fallthru
          _
        // Predicated region
        $region33: #{tpu_custom_call.1} parent=11 // pred_check
          %p1095 = pneg %p259
        $region34: #{tpu_custom_call.1} parent=11 // pred_check_branch
          %1097 = sbr.rel (%p1095) target = $region36
        $region35: #{tpu_custom_call.1} parent=11 // pred_region
          %1099 = vsyncadd [#allocation9], 0
          %s1100 = sshll.u32 %s13, 4
          %s1101 = int_to_ptr.hbm [resolvable:$true] %s1100
          %s1102 = sshll.u32 [#allocation10], 4
          %s1103 = int_to_ptr.vmem [resolvable:$true] %s1102
          %1108 = dma.hbm_to_vmem [thread:$0]  %s1101, 256, %s1103, [#allocation9], 128, 128, 8
        $region36: #{tpu_custom_call.1} parent=11 // pred_fallthru
          _
        // Predicated region
        $region37: #{tpu_custom_call.1} parent=11 // pred_check
          %p1109 = pneg %p280
        $region38: #{tpu_custom_call.1} parent=11 // pred_check_branch
          %1111 = sbr.rel (%p1109) target = $region40
        $region39: #{tpu_custom_call.1} parent=11 // pred_region
          _
        $region40: #{tpu_custom_call.1} parent=11 // pred_fallthru
          _
        // Predicated region
        $region41: #{tpu_custom_call.1} parent=11 // pred_check
          %p1112 = pneg %p301
        $region42: #{tpu_custom_call.1} parent=11 // pred_check_branch
          %1114 = sbr.rel (%p1112) target = $region44
        $region43: #{tpu_custom_call.1} parent=11 // pred_region
          %1116 = vsyncadd [#allocation12], 0
          %s1117 = sshll.u32 %s17, 4
          %s1118 = int_to_ptr.hbm [resolvable:$true] %s1117
          %s1119 = sshll.u32 [#allocation11], 4
          %s1120 = int_to_ptr.vmem [resolvable:$true] %s1119
          %1125 = dma.hbm_to_vmem [thread:$0]  %s1118, 32, %s1120, [#allocation12], 16, 16, 1
        $region44: #{tpu_custom_call.1} parent=11 // pred_fallthru
          _
        // Predicated region
        $region45: #{tpu_custom_call.1} parent=11 // pred_check
          %p1126 = pneg %p322
        $region46: #{tpu_custom_call.1} parent=11 // pred_check_branch
          %1128 = sbr.rel (%p1126) target = $region48
        $region47: #{tpu_custom_call.1} parent=11 // pred_region
          _
        $region48: #{tpu_custom_call.1} parent=11 // pred_fallthru
          _
        // Predicated region
        $region49: #{tpu_custom_call.1} parent=11 // pred_check
          %p1129 = pneg %p343
        $region50: #{tpu_custom_call.1} parent=11 // pred_check_branch
          %1131 = sbr.rel (%p1129) target = $region52
        $region51: #{tpu_custom_call.1} parent=11 // pred_region
          %1133 = vsyncadd [#allocation12], 0
          %s1134 = sshll.u32 %s21, 4
          %s1135 = int_to_ptr.hbm [resolvable:$true] %s1134
          %s1136 = sshll.u32 [#allocation13], 4
          %s1137 = int_to_ptr.vmem [resolvable:$true] %s1136
          %1142 = dma.hbm_to_vmem [thread:$0]  %s1135, 32, %s1137, [#allocation12], 16, 16, 1
        $region52: #{tpu_custom_call.1} parent=11 // pred_fallthru
          _
        // Predicated region
        $region53: #{tpu_custom_call.1} parent=11 // pred_check
          %p1143 = pneg %p364
        $region54: #{tpu_custom_call.1} parent=11 // pred_check_branch
          %1145 = sbr.rel (%p1143) target = $region56
        $region55: #{tpu_custom_call.1} parent=11 // pred_region
          _
        $region56: #{tpu_custom_call.1} parent=11 // pred_fallthru
          _
        // Predicated region
        $region57: #{tpu_custom_call.1} parent=11 // pred_check
          %p1146 = pneg %p385
        $region58: #{tpu_custom_call.1} parent=11 // pred_check_branch
          %1148 = sbr.rel (%p1146) target = $region60
        $region59: #{tpu_custom_call.1} parent=11 // pred_region
          %1150 = vsyncadd [#allocation15], 0
          %s1151 = sshll.u32 %s25, 4
          %s1152 = int_to_ptr.hbm [resolvable:$true] %s1151
          %s1153 = sshll.u32 [#allocation14], 4
          %s1154 = int_to_ptr.vmem [resolvable:$true] %s1153
          %1159 = dma.hbm_to_vmem [thread:$0]  %s1152, 32, %s1154, [#allocation15], 16, 16, 1
        $region60: #{tpu_custom_call.1} parent=11 // pred_fallthru
          _
        // Predicated region
        $region61: #{tpu_custom_call.1} parent=11 // pred_check
          %p1160 = pneg %p406
        $region62: #{tpu_custom_call.1} parent=11 // pred_check_branch
          %1162 = sbr.rel (%p1160) target = $region64
        $region63: #{tpu_custom_call.1} parent=11 // pred_region
          _
        $region64: #{tpu_custom_call.1} parent=11 // pred_fallthru
          _
        // Predicated region
        $region65: #{tpu_custom_call.1} parent=11 // pred_check
          %p1163 = pneg %p427
        $region66: #{tpu_custom_call.1} parent=11 // pred_check_branch
          %1165 = sbr.rel (%p1163) target = $region68
        $region67: #{tpu_custom_call.1} parent=11 // pred_region
          %1167 = vsyncadd [#allocation15], 0
          %s1168 = sshll.u32 %s29, 4
          %s1169 = int_to_ptr.hbm [resolvable:$true] %s1168
          %s1170 = sshll.u32 [#allocation16], 4
          %s1171 = int_to_ptr.vmem [resolvable:$true] %s1170
          %1176 = dma.hbm_to_vmem [thread:$0]  %s1169, 32, %s1171, [#allocation15], 16, 16, 1
        $region68: #{tpu_custom_call.1} parent=11 // pred_fallthru
          _
        // Predicated region
        $region69: #{tpu_custom_call.1} parent=11 // pred_check
          %p1177 = pneg %p448
        $region70: #{tpu_custom_call.1} parent=11 // pred_check_branch
          %1179 = sbr.rel (%p1177) target = $region72
        $region71: #{tpu_custom_call.1} parent=11 // pred_region
          %1181 = vsyncadd [#allocation18], 0
          %s1182 = sshll.u32 %s31, 4
          %s1183 = int_to_ptr.hbm [resolvable:$true] %s1182
          %s1184 = sshll.u32 [#allocation17], 4
          %s1185 = int_to_ptr.vmem [resolvable:$true] %s1184
          %1190 = dma.hbm_to_vmem [thread:$0]  %s1183, 32, %s1185, [#allocation18], 16, 16, 1
        $region72: #{tpu_custom_call.1} parent=11 // pred_fallthru
          _
        // Predicated region
        $region73: #{tpu_custom_call.1} parent=11 // pred_check
          %p1191 = pneg %p469
        $region74: #{tpu_custom_call.1} parent=11 // pred_check_branch
          %1193 = sbr.rel (%p1191) target = $region76
        $region75: #{tpu_custom_call.1} parent=11 // pred_region
          %1195 = vsyncadd [#allocation18], 0
          %s1196 = sshll.u32 %s33, 4
          %s1197 = int_to_ptr.hbm [resolvable:$true] %s1196
          %s1198 = sshll.u32 [#allocation19], 4
          %s1199 = int_to_ptr.vmem [resolvable:$true] %s1198
          %1204 = dma.hbm_to_vmem [thread:$0]  %s1197, 32, %s1199, [#allocation18], 16, 16, 1
        $region76: #{tpu_custom_call.1} parent=11 // pred_fallthru
          _
        // Predicated region
        $region77: #{tpu_custom_call.1} parent=11 // pred_check
          %p1205 = pneg %p490
        $region78: #{tpu_custom_call.1} parent=11 // pred_check_branch
          %1207 = sbr.rel (%p1205) target = $region80
        $region79: #{tpu_custom_call.1} parent=11 // pred_region
          %1209 = vsyncadd [#allocation21], 0
          %s1210 = sshll.u32 %s35, 4
          %s1211 = int_to_ptr.hbm [resolvable:$true] %s1210
          %s1212 = sshll.u32 [#allocation20], 4
          %s1213 = int_to_ptr.vmem [resolvable:$true] %s1212
          %1218 = dma.hbm_to_vmem [thread:$0]  %s1211, 32, %s1213, [#allocation21], 16, 16, 1
        $region80: #{tpu_custom_call.1} parent=11 // pred_fallthru
          _
        // Predicated region
        $region81: #{tpu_custom_call.1} parent=11 // pred_check
          %p1219 = pneg %p511
        $region82: #{tpu_custom_call.1} parent=11 // pred_check_branch
          %1221 = sbr.rel (%p1219) target = $region84
        $region83: #{tpu_custom_call.1} parent=11 // pred_region
          %1223 = vsyncadd [#allocation21], 0
          %s1224 = sshll.u32 %s37, 4
          %s1225 = int_to_ptr.hbm [resolvable:$true] %s1224
          %s1226 = sshll.u32 [#allocation22], 4
          %s1227 = int_to_ptr.vmem [resolvable:$true] %s1226
          %1232 = dma.hbm_to_vmem [thread:$0]  %s1225, 32, %s1227, [#allocation21], 16, 16, 1
        $region84: #{tpu_custom_call.1} parent=11 // pred_fallthru
          _
        // Predicated region
        $region85: #{tpu_custom_call.1} parent=11 // pred_check
          %p1233 = pneg %p558
        $region86: #{tpu_custom_call.1} parent=11 // pred_check_branch
          %1235 = sbr.rel (%p1233) target = $region88
        $region87: #{tpu_custom_call.1} parent=11 // pred_region
          %1237 = vsyncadd [#allocation24], 0
          %s1239 = sshll.u32 %s41, 4
          %s1240 = int_to_ptr.hbm [resolvable:$true] %s1239
          %s1241 = sshll.u32 [#allocation23], 4
          %s1242 = int_to_ptr.vmem [resolvable:$true] %s1241
          %1244 = dma.hbm_to_vmem [thread:$0]  %s1240, 64, %s1242, [#allocation24]
        $region88: #{tpu_custom_call.1} parent=11 // pred_fallthru
          _
        // Predicated region
        $region89: #{tpu_custom_call.1} parent=11 // pred_check
          %p1245 = pneg %p579
        $region90: #{tpu_custom_call.1} parent=11 // pred_check_branch
          %1247 = sbr.rel (%p1245) target = $region92
        $region91: #{tpu_custom_call.1} parent=11 // pred_region
          %1249 = vsyncadd [#allocation24], 0
          %s1251 = sshll.u32 %s43, 4
          %s1252 = int_to_ptr.hbm [resolvable:$true] %s1251
          %s1253 = sshll.u32 [#allocation25], 4
          %s1254 = int_to_ptr.vmem [resolvable:$true] %s1253
          %1256 = dma.hbm_to_vmem [thread:$0]  %s1252, 64, %s1254, [#allocation24]
        $region92: #{tpu_custom_call.1} parent=11 // pred_fallthru
          _
        // Predicated region
        $region93: #{tpu_custom_call.1} parent=11 // pred_check
          %p1257 = pneg %p600
        $region94: #{tpu_custom_call.1} parent=11 // pred_check_branch
          %1259 = sbr.rel (%p1257) target = $region96
        $region95: #{tpu_custom_call.1} parent=11 // pred_region
          %1261 = vsyncadd [#allocation27], 0
          %s1263 = sshll.u32 %s45, 4
          %s1264 = int_to_ptr.hbm [resolvable:$true] %s1263
          %s1265 = sshll.u32 [#allocation26], 4
          %s1266 = int_to_ptr.vmem [resolvable:$true] %s1265
          %1268 = dma.hbm_to_vmem [thread:$0]  %s1264, 64, %s1266, [#allocation27]
        $region96: #{tpu_custom_call.1} parent=11 // pred_fallthru
          _
        // Predicated region
        $region97: #{tpu_custom_call.1} parent=11 // pred_check
          %p1269 = pneg %p621
        $region98: #{tpu_custom_call.1} parent=11 // pred_check_branch
          %1271 = sbr.rel (%p1269) target = $region100
        $region99: #{tpu_custom_call.1} parent=11 // pred_region
          %1273 = vsyncadd [#allocation27], 0
          %s1275 = sshll.u32 %s47, 4
          %s1276 = int_to_ptr.hbm [resolvable:$true] %s1275
          %s1277 = sshll.u32 [#allocation28], 4
          %s1278 = int_to_ptr.vmem [resolvable:$true] %s1277
          %1280 = dma.hbm_to_vmem [thread:$0]  %s1276, 64, %s1278, [#allocation27]
        $region100: #{tpu_custom_call.1} parent=11 // pred_fallthru
          _
        // Predicated region
        $region101: #{tpu_custom_call.1} parent=11 // pred_check
          %p1281 = pneg %p642
        $region102: #{tpu_custom_call.1} parent=11 // pred_check_branch
          %1283 = sbr.rel (%p1281) target = $region104
        $region103: #{tpu_custom_call.1} parent=11 // pred_region
          %1285 = vsyncadd [#allocation30], 0
          %s1287 = sshll.u32 %s49, 4
          %s1288 = int_to_ptr.hbm [resolvable:$true] %s1287
          %s1289 = sshll.u32 [#allocation29], 4
          %s1290 = int_to_ptr.vmem [resolvable:$true] %s1289
          %1292 = dma.hbm_to_vmem [thread:$0]  %s1288, 16, %s1290, [#allocation30]
        $region104: #{tpu_custom_call.1} parent=11 // pred_fallthru
          _
        // Predicated region
        $region105: #{tpu_custom_call.1} parent=11 // pred_check
          %p1293 = pneg %p663
        $region106: #{tpu_custom_call.1} parent=11 // pred_check_branch
          %1295 = sbr.rel (%p1293) target = $region108
        $region107: #{tpu_custom_call.1} parent=11 // pred_region
          %1297 = vsyncadd [#allocation30], 0
          %s1299 = sshll.u32 %s51, 4
          %s1300 = int_to_ptr.hbm [resolvable:$true] %s1299
          %s1301 = sshll.u32 [#allocation31], 4
          %s1302 = int_to_ptr.vmem [resolvable:$true] %s1301
          %1304 = dma.hbm_to_vmem [thread:$0]  %s1300, 128, %s1302, [#allocation30]
        $region108: #{tpu_custom_call.1} parent=11 // pred_fallthru
          _
        // Predicated region
        $region109: #{tpu_custom_call.1} parent=11 // pred_check
          %p1305 = pneg %p684
        $region110: #{tpu_custom_call.1} parent=11 // pred_check_branch
          %1307 = sbr.rel (%p1305) target = $region112
        $region111: #{tpu_custom_call.1} parent=11 // pred_region
          _
        $region112: #{tpu_custom_call.1} parent=11 // pred_fallthru
          _
        // Predicated region
        $region113: #{tpu_custom_call.1} parent=11 // pred_check
          %p1308 = pneg %p705
        $region114: #{tpu_custom_call.1} parent=11 // pred_check_branch
          %1310 = sbr.rel (%p1308) target = $region116
        $region115: #{tpu_custom_call.1} parent=11 // pred_region
          %1312 = vsyncadd [#allocation33], 0
          %s1313 = sshll.u32 %s55, 4
          %s1314 = int_to_ptr.hbm [resolvable:$true] %s1313
          %s1315 = sshll.u32 [#allocation32], 4
          %s1316 = int_to_ptr.vmem [resolvable:$true] %s1315
          %1321 = dma.hbm_to_vmem [thread:$0]  %s1314, 32, %s1316, [#allocation33], 16, 16, 1
        $region116: #{tpu_custom_call.1} parent=11 // pred_fallthru
          _
        // Predicated region
        $region117: #{tpu_custom_call.1} parent=11 // pred_check
          %p1322 = pneg %p726
        $region118: #{tpu_custom_call.1} parent=11 // pred_check_branch
          %1324 = sbr.rel (%p1322) target = $region120
        $region119: #{tpu_custom_call.1} parent=11 // pred_region
          _
        $region120: #{tpu_custom_call.1} parent=11 // pred_fallthru
          _
        // Predicated region
        $region121: #{tpu_custom_call.1} parent=11 // pred_check
          %p1325 = pneg %p747
        $region122: #{tpu_custom_call.1} parent=11 // pred_check_branch
          %1327 = sbr.rel (%p1325) target = $region124
        $region123: #{tpu_custom_call.1} parent=11 // pred_region
          %1329 = vsyncadd [#allocation33], 0
          %s1330 = sshll.u32 %s59, 4
          %s1331 = int_to_ptr.hbm [resolvable:$true] %s1330
          %s1332 = sshll.u32 [#allocation34], 4
          %s1333 = int_to_ptr.vmem [resolvable:$true] %s1332
          %1338 = dma.hbm_to_vmem [thread:$0]  %s1331, 32, %s1333, [#allocation33], 16, 16, 1
        $region124: #{tpu_custom_call.1} parent=11 // pred_fallthru
          _
        // Predicated region
        $region125: #{tpu_custom_call.1} parent=11 // pred_check
          %p1339 = pneg %p768
        $region126: #{tpu_custom_call.1} parent=11 // pred_check_branch
          %1341 = sbr.rel (%p1339) target = $region128
        $region127: #{tpu_custom_call.1} parent=11 // pred_region
          _
        $region128: #{tpu_custom_call.1} parent=11 // pred_fallthru
          _
        // Predicated region
        $region129: #{tpu_custom_call.1} parent=11 // pred_check
          %p1342 = pneg %p789
        $region130: #{tpu_custom_call.1} parent=11 // pred_check_branch
          %1344 = sbr.rel (%p1342) target = $region132
        $region131: #{tpu_custom_call.1} parent=11 // pred_region
          %1346 = vsyncadd [#allocation36], 0
          %s1347 = sshll.u32 %s63, 4
          %s1348 = int_to_ptr.hbm [resolvable:$true] %s1347
          %s1349 = sshll.u32 [#allocation35], 4
          %s1350 = int_to_ptr.vmem [resolvable:$true] %s1349
          %1355 = dma.hbm_to_vmem [thread:$0]  %s1348, 32, %s1350, [#allocation36], 16, 16, 1
        $region132: #{tpu_custom_call.1} parent=11 // pred_fallthru
          _
        // Predicated region
        $region133: #{tpu_custom_call.1} parent=11 // pred_check
          %p1356 = pneg %p810
        $region134: #{tpu_custom_call.1} parent=11 // pred_check_branch
          %1358 = sbr.rel (%p1356) target = $region136
        $region135: #{tpu_custom_call.1} parent=11 // pred_region
          _
        $region136: #{tpu_custom_call.1} parent=11 // pred_fallthru
          _
        // Predicated region
        $region137: #{tpu_custom_call.1} parent=11 // pred_check
          %p1359 = pneg %p831
        $region138: #{tpu_custom_call.1} parent=11 // pred_check_branch
          %1361 = sbr.rel (%p1359) target = $region140
        $region139: #{tpu_custom_call.1} parent=11 // pred_region
          _
        $region140: #{tpu_custom_call.1} parent=11 // pred_fallthru
          _
        // Predicated region
        $region141: #{tpu_custom_call.1} parent=11 // pred_check
          %p1362 = pneg %p852
        $region142: #{tpu_custom_call.1} parent=11 // pred_check_branch
          %1364 = sbr.rel (%p1362) target = $region144
        $region143: #{tpu_custom_call.1} parent=11 // pred_region
          _
        $region144: #{tpu_custom_call.1} parent=11 // pred_fallthru
          _
        // Predicated region
        $region145: #{tpu_custom_call.1} parent=11 // pred_check
          %p1365 = pneg %p873
        $region146: #{tpu_custom_call.1} parent=11 // pred_check_branch
          %1367 = sbr.rel (%p1365) target = $region148
        $region147: #{tpu_custom_call.1} parent=11 // pred_region
          %1369 = vsyncadd [#allocation36], 0
          %s1370 = sshll.u32 %s71, 4
          %s1371 = int_to_ptr.hbm [resolvable:$true] %s1370
          %s1372 = sshll.u32 [#allocation37], 4
          %s1373 = int_to_ptr.vmem [resolvable:$true] %s1372
          %1378 = dma.hbm_to_vmem [thread:$0]  %s1371, 32, %s1373, [#allocation36], 16, 16, 1
        $region148: #{tpu_custom_call.1} parent=11 // pred_fallthru
          _
        // Predicated region
        $region149: #{tpu_custom_call.1} parent=11 // pred_check
          %p1379 = pneg %p894
        $region150: #{tpu_custom_call.1} parent=11 // pred_check_branch
          %1381 = sbr.rel (%p1379) target = $region152
        $region151: #{tpu_custom_call.1} parent=11 // pred_region
          _
        $region152: #{tpu_custom_call.1} parent=11 // pred_fallthru
          _
        // Predicated region
        $region153: #{tpu_custom_call.1} parent=11 // pred_check
          %p1382 = pneg %p915
        $region154: #{tpu_custom_call.1} parent=11 // pred_check_branch
          %1384 = sbr.rel (%p1382) target = $region156
        $region155: #{tpu_custom_call.1} parent=11 // pred_region
          _
        $region156: #{tpu_custom_call.1} parent=11 // pred_fallthru
          _
        // Predicated region
        $region157: #{tpu_custom_call.1} parent=11 // pred_check
          %p1385 = pneg %p936
        $region158: #{tpu_custom_call.1} parent=11 // pred_check_branch
          %1387 = sbr.rel (%p1385) target = $region160
        $region159: #{tpu_custom_call.1} parent=11 // pred_region
          %1389 = vsyncadd [#allocation39], 0
          %s1390 = sshll.u32 %s77, 4
          %s1391 = int_to_ptr.hbm [resolvable:$true] %s1390
          %s1392 = sshll.u32 [#allocation38], 4
          %s1393 = int_to_ptr.vmem [resolvable:$true] %s1392
          %1398 = dma.hbm_to_vmem [thread:$0]  %s1391, 256, %s1393, [#allocation39], 64, 64, 4
        $region160: #{tpu_custom_call.1} parent=11 // pred_fallthru
          _
        // Predicated region
        $region161: #{tpu_custom_call.1} parent=11 // pred_check
          %p1399 = pneg %p957
        $region162: #{tpu_custom_call.1} parent=11 // pred_check_branch
          %1401 = sbr.rel (%p1399) target = $region164
        $region163: #{tpu_custom_call.1} parent=11 // pred_region
          %1403 = vsyncadd [#allocation39], 0
          %s1405 = sshll.u32 %s79, 4
          %s1406 = int_to_ptr.hbm [resolvable:$true] %s1405
          %s1407 = sshll.u32 [#allocation40], 4
          %s1408 = int_to_ptr.vmem [resolvable:$true] %s1407
          %1410 = dma.hbm_to_vmem [thread:$0]  %s1406, 16, %s1408, [#allocation39]
        $region164: #{tpu_custom_call.1} parent=11 // pred_fallthru
          _
        // Predicated region
        $region165: #{tpu_custom_call.1} parent=11 // pred_check
          %p1411 = pneg %p978
        $region166: #{tpu_custom_call.1} parent=11 // pred_check_branch
          %1413 = sbr.rel (%p1411) target = $region168
        $region167: #{tpu_custom_call.1} parent=11 // pred_region
          _
        $region168: #{tpu_custom_call.1} parent=11 // pred_fallthru
          _
        // Predicated region
        $region169: #{tpu_custom_call.1} parent=11 // pred_check
          %p1414 = pneg %p999
        $region170: #{tpu_custom_call.1} parent=11 // pred_check_branch
          %1416 = sbr.rel (%p1414) target = $region172
        $region171: #{tpu_custom_call.1} parent=11 // pred_region
          _
        $region172: #{tpu_custom_call.1} parent=11 // pred_fallthru
          _
      $region12: #{tpu_custom_call.1} parent=5 // pred_fallthru
        _
      %p1417 = scmp.lt.s32.totalorder %s107, 2
      // Predicated region
      $region173: #{tpu_custom_call.1} parent=5 // pred_check
        %p1418 = pneg %p1417
      $region174: #{tpu_custom_call.1} parent=5 // pred_check_branch
        %1420 = sbr.rel (%p1418) target = $region176
      $region175: #{tpu_custom_call.1} parent=5 // pred_region
        // Predicated region
        $region177: #{tpu_custom_call.1} parent=175 // pred_check
          %p1421 = pneg %p127
        $region178: #{tpu_custom_call.1} parent=175 // pred_check_branch
          %1423 = sbr.rel (%p1421) target = $region180
        $region179: #{tpu_custom_call.1} parent=175 // pred_region
          %p1424 = scmp.lt.s32.totalorder %s107, 1
          %s1425 = scalar_select %p1424, %s107, 1
          %s1426 = smul.addr %s1425, 2
          %s1427 = smul.addr %s1426, 8
          %s1428 = scalar_lea.vmem %s1, %s1427
        $region180: #{tpu_custom_call.1} parent=175 // pred_fallthru
          _
        // Predicated region
        $region181: #{tpu_custom_call.1} parent=175 // pred_check
          %p1429 = pneg %p531
        $region182: #{tpu_custom_call.1} parent=175 // pred_check_branch
          %1431 = sbr.rel (%p1429) target = $region184
        $region183: #{tpu_custom_call.1} parent=175 // pred_region
          %p1432 = scmp.lt.s32.totalorder %s107, 1
          %s1433 = scalar_select %p1432, %s107, 1
          %s1434 = smul.addr %s1433, 2
          %s1435 = smul.addr %s1434, 8
          %s1436 = scalar_lea.vmem %s39, %s1435
        $region184: #{tpu_custom_call.1} parent=175 // pred_fallthru
          _
      $region176: #{tpu_custom_call.1} parent=5 // pred_fallthru
        _
      %p1437 = scmp.le.s32.totalorder 1, %s107
      %p1438 = scmp.lt.s32.totalorder %s107, 3
      %p1439 = pnand %p1437, %p1438
      %p1440 = pneg %p1439
      // Predicated region
      $region185: #{tpu_custom_call.1} parent=5 // pred_check
        _
      $region186: #{tpu_custom_call.1} parent=5 // pred_check_branch
        %1442 = sbr.rel (%p1439) target = $region188
      $region187: #{tpu_custom_call.1} parent=5 // pred_region
        %s1443 = ssub.s32 %s107, 1
        // Predicated region
        $region189: #{tpu_custom_call.1} parent=187 // pred_check
          %p1444 = pneg %p154
        $region190: #{tpu_custom_call.1} parent=187 // pred_check_branch
          %1446 = sbr.rel (%p1444) target = $region192
        $region191: #{tpu_custom_call.1} parent=187 // pred_region
          %1448 = dma.done [#allocation3], 128
        $region192: #{tpu_custom_call.1} parent=187 // pred_fallthru
          _
        // Predicated region
        $region193: #{tpu_custom_call.1} parent=187 // pred_check
          %p1449 = pneg %p175
        $region194: #{tpu_custom_call.1} parent=187 // pred_check_branch
          %1451 = sbr.rel (%p1449) target = $region196
        $region195: #{tpu_custom_call.1} parent=187 // pred_region
          %1453 = dma.done [#allocation6], 128
        $region196: #{tpu_custom_call.1} parent=187 // pred_fallthru
          _
        // Predicated region
        $region197: #{tpu_custom_call.1} parent=187 // pred_check
          %p1454 = pneg %p217
        $region198: #{tpu_custom_call.1} parent=187 // pred_check_branch
          %1456 = sbr.rel (%p1454) target = $region200
        $region199: #{tpu_custom_call.1} parent=187 // pred_region
          %1458 = dma.done [#allocation6], 32
        $region200: #{tpu_custom_call.1} parent=187 // pred_fallthru
          _
        // Predicated region
        $region201: #{tpu_custom_call.1} parent=187 // pred_check
          %p1459 = pneg %p238
        $region202: #{tpu_custom_call.1} parent=187 // pred_check_branch
          %1461 = sbr.rel (%p1459) target = $region204
        $region203: #{tpu_custom_call.1} parent=187 // pred_region
          %1463 = dma.done [#allocation9], 16
        $region204: #{tpu_custom_call.1} parent=187 // pred_fallthru
          _
        // Predicated region
        $region205: #{tpu_custom_call.1} parent=187 // pred_check
          %p1464 = pneg %p259
        $region206: #{tpu_custom_call.1} parent=187 // pred_check_branch
          %1466 = sbr.rel (%p1464) target = $region208
        $region207: #{tpu_custom_call.1} parent=187 // pred_region
          %1468 = dma.done [#allocation9], 256
        $region208: #{tpu_custom_call.1} parent=187 // pred_fallthru
          _
        // Predicated region
        $region209: #{tpu_custom_call.1} parent=187 // pred_check
          %p1469 = pneg %p301
        $region210: #{tpu_custom_call.1} parent=187 // pred_check_branch
          %1471 = sbr.rel (%p1469) target = $region212
        $region211: #{tpu_custom_call.1} parent=187 // pred_region
          %1473 = dma.done [#allocation12], 32
        $region212: #{tpu_custom_call.1} parent=187 // pred_fallthru
          _
        // Predicated region
        $region213: #{tpu_custom_call.1} parent=187 // pred_check
          %p1474 = pneg %p343
        $region214: #{tpu_custom_call.1} parent=187 // pred_check_branch
          %1476 = sbr.rel (%p1474) target = $region216
        $region215: #{tpu_custom_call.1} parent=187 // pred_region
          %1478 = dma.done [#allocation12], 32
        $region216: #{tpu_custom_call.1} parent=187 // pred_fallthru
          _
        // Predicated region
        $region217: #{tpu_custom_call.1} parent=187 // pred_check
          %p1479 = pneg %p385
        $region218: #{tpu_custom_call.1} parent=187 // pred_check_branch
          %1481 = sbr.rel (%p1479) target = $region220
        $region219: #{tpu_custom_call.1} parent=187 // pred_region
          %1483 = dma.done [#allocation15], 32
        $region220: #{tpu_custom_call.1} parent=187 // pred_fallthru
          _
        // Predicated region
        $region221: #{tpu_custom_call.1} parent=187 // pred_check
          %p1484 = pneg %p427
        $region222: #{tpu_custom_call.1} parent=187 // pred_check_branch
          %1486 = sbr.rel (%p1484) target = $region224
        $region223: #{tpu_custom_call.1} parent=187 // pred_region
          %1488 = dma.done [#allocation15], 32
        $region224: #{tpu_custom_call.1} parent=187 // pred_fallthru
          _
        // Predicated region
        $region225: #{tpu_custom_call.1} parent=187 // pred_check
          %p1489 = pneg %p448
        $region226: #{tpu_custom_call.1} parent=187 // pred_check_branch
          %1491 = sbr.rel (%p1489) target = $region228
        $region227: #{tpu_custom_call.1} parent=187 // pred_region
          %1493 = dma.done [#allocation18], 32
        $region228: #{tpu_custom_call.1} parent=187 // pred_fallthru
          _
        // Predicated region
        $region229: #{tpu_custom_call.1} parent=187 // pred_check
          %p1494 = pneg %p469
        $region230: #{tpu_custom_call.1} parent=187 // pred_check_branch
          %1496 = sbr.rel (%p1494) target = $region232
        $region231: #{tpu_custom_call.1} parent=187 // pred_region
          %1498 = dma.done [#allocation18], 32
        $region232: #{tpu_custom_call.1} parent=187 // pred_fallthru
          _
        // Predicated region
        $region233: #{tpu_custom_call.1} parent=187 // pred_check
          %p1499 = pneg %p490
        $region234: #{tpu_custom_call.1} parent=187 // pred_check_branch
          %1501 = sbr.rel (%p1499) target = $region236
        $region235: #{tpu_custom_call.1} parent=187 // pred_region
          %1503 = dma.done [#allocation21], 32
        $region236: #{tpu_custom_call.1} parent=187 // pred_fallthru
          _
        // Predicated region
        $region237: #{tpu_custom_call.1} parent=187 // pred_check
          %p1504 = pneg %p511
        $region238: #{tpu_custom_call.1} parent=187 // pred_check_branch
          %1506 = sbr.rel (%p1504) target = $region240
        $region239: #{tpu_custom_call.1} parent=187 // pred_region
          %1508 = dma.done [#allocation21], 32
        $region240: #{tpu_custom_call.1} parent=187 // pred_fallthru
          _
        // Predicated region
        $region241: #{tpu_custom_call.1} parent=187 // pred_check
          %p1509 = pneg %p558
        $region242: #{tpu_custom_call.1} parent=187 // pred_check_branch
          %1511 = sbr.rel (%p1509) target = $region244
        $region243: #{tpu_custom_call.1} parent=187 // pred_region
          %1513 = dma.done [#allocation24], 64
        $region244: #{tpu_custom_call.1} parent=187 // pred_fallthru
          _
        // Predicated region
        $region245: #{tpu_custom_call.1} parent=187 // pred_check
          %p1514 = pneg %p579
        $region246: #{tpu_custom_call.1} parent=187 // pred_check_branch
          %1516 = sbr.rel (%p1514) target = $region248
        $region247: #{tpu_custom_call.1} parent=187 // pred_region
          %1518 = dma.done [#allocation24], 64
        $region248: #{tpu_custom_call.1} parent=187 // pred_fallthru
          _
        // Predicated region
        $region249: #{tpu_custom_call.1} parent=187 // pred_check
          %p1519 = pneg %p600
        $region250: #{tpu_custom_call.1} parent=187 // pred_check_branch
          %1521 = sbr.rel (%p1519) target = $region252
        $region251: #{tpu_custom_call.1} parent=187 // pred_region
          %1523 = dma.done [#allocation27], 64
        $region252: #{tpu_custom_call.1} parent=187 // pred_fallthru
          _
        // Predicated region
        $region253: #{tpu_custom_call.1} parent=187 // pred_check
          %p1524 = pneg %p621
        $region254: #{tpu_custom_call.1} parent=187 // pred_check_branch
          %1526 = sbr.rel (%p1524) target = $region256
        $region255: #{tpu_custom_call.1} parent=187 // pred_region
          %1528 = dma.done [#allocation27], 64
        $region256: #{tpu_custom_call.1} parent=187 // pred_fallthru
          _
        // Predicated region
        $region257: #{tpu_custom_call.1} parent=187 // pred_check
          %p1529 = pneg %p642
        $region258: #{tpu_custom_call.1} parent=187 // pred_check_branch
          %1531 = sbr.rel (%p1529) target = $region260
        $region259: #{tpu_custom_call.1} parent=187 // pred_region
          %1533 = dma.done [#allocation30], 16
        $region260: #{tpu_custom_call.1} parent=187 // pred_fallthru
          _
        // Predicated region
        $region261: #{tpu_custom_call.1} parent=187 // pred_check
          %p1534 = pneg %p663
        $region262: #{tpu_custom_call.1} parent=187 // pred_check_branch
          %1536 = sbr.rel (%p1534) target = $region264
        $region263: #{tpu_custom_call.1} parent=187 // pred_region
          %1538 = dma.done [#allocation30], 128
        $region264: #{tpu_custom_call.1} parent=187 // pred_fallthru
          _
        // Predicated region
        $region265: #{tpu_custom_call.1} parent=187 // pred_check
          %p1539 = pneg %p705
        $region266: #{tpu_custom_call.1} parent=187 // pred_check_branch
          %1541 = sbr.rel (%p1539) target = $region268
        $region267: #{tpu_custom_call.1} parent=187 // pred_region
          %1543 = dma.done [#allocation33], 32
        $region268: #{tpu_custom_call.1} parent=187 // pred_fallthru
          _
        // Predicated region
        $region269: #{tpu_custom_call.1} parent=187 // pred_check
          %p1544 = pneg %p747
        $region270: #{tpu_custom_call.1} parent=187 // pred_check_branch
          %1546 = sbr.rel (%p1544) target = $region272
        $region271: #{tpu_custom_call.1} parent=187 // pred_region
          %1548 = dma.done [#allocation33], 32
        $region272: #{tpu_custom_call.1} parent=187 // pred_fallthru
          _
        // Predicated region
        $region273: #{tpu_custom_call.1} parent=187 // pred_check
          %p1549 = pneg %p789
        $region274: #{tpu_custom_call.1} parent=187 // pred_check_branch
          %1551 = sbr.rel (%p1549) target = $region276
        $region275: #{tpu_custom_call.1} parent=187 // pred_region
          %1553 = dma.done [#allocation36], 32
        $region276: #{tpu_custom_call.1} parent=187 // pred_fallthru
          _
        // Predicated region
        $region277: #{tpu_custom_call.1} parent=187 // pred_check
          %p1554 = pneg %p873
        $region278: #{tpu_custom_call.1} parent=187 // pred_check_branch
          %1556 = sbr.rel (%p1554) target = $region280
        $region279: #{tpu_custom_call.1} parent=187 // pred_region
          %1558 = dma.done [#allocation36], 32
        $region280: #{tpu_custom_call.1} parent=187 // pred_fallthru
          _
        // Predicated region
        $region281: #{tpu_custom_call.1} parent=187 // pred_check
          %p1559 = pneg %p936
        $region282: #{tpu_custom_call.1} parent=187 // pred_check_branch
          %1561 = sbr.rel (%p1559) target = $region284
        $region283: #{tpu_custom_call.1} parent=187 // pred_region
          %1563 = dma.done [#allocation39], 256
        $region284: #{tpu_custom_call.1} parent=187 // pred_fallthru
          _
        // Predicated region
        $region285: #{tpu_custom_call.1} parent=187 // pred_check
          %p1564 = pneg %p957
        $region286: #{tpu_custom_call.1} parent=187 // pred_check_branch
          %1566 = sbr.rel (%p1564) target = $region288
        $region287: #{tpu_custom_call.1} parent=187 // pred_region
          %1568 = dma.done [#allocation39], 16
        $region288: #{tpu_custom_call.1} parent=187 // pred_fallthru
          _
        %p1569 = scmp.lt.s32.totalorder %s112, 1
        %s1570 = scalar_select %p1569, %s112, 1
        %s1571 = smul.addr %s1570, 2
        %s1572 = smul.addr %s1571, 8
        %s1573 = scalar_lea.vmem %s1, %s1572
        %p1574 = pneg %p133
        %p1575 = pneg %p130
        %p1576 = pneg %p154
        %p1577 = pneg %p151
        %p1578 = pneg %p175
        %p1579 = pneg %p172
        %p1580 = pneg %p196
        %p1581 = pneg %p193
        %p1582 = pneg %p217
        %p1583 = pneg %p214
        %p1584 = pneg %p238
        %p1585 = pneg %p235
        %p1586 = pneg %p259
        %p1587 = pneg %p256
        %p1588 = pneg %p280
        %p1589 = pneg %p277
        %p1590 = pneg %p301
        %p1591 = pneg %p298
        %p1592 = pneg %p322
        %p1593 = pneg %p319
        %p1594 = pneg %p343
        %p1595 = pneg %p340
        %p1596 = pneg %p364
        %p1597 = pneg %p361
        %p1598 = pneg %p385
        %p1599 = pneg %p382
        %p1600 = pneg %p406
        %p1601 = pneg %p403
        %p1602 = pneg %p427
        %p1603 = pneg %p424
        %p1604 = pneg %p448
        %p1605 = pneg %p445
        %p1606 = pneg %p469
        %p1607 = pneg %p466
        %p1608 = pneg %p490
        %p1609 = pneg %p487
        %p1610 = pneg %p511
        %p1611 = pneg %p508
        %p1612 = scmp.lt.s32.totalorder %s112, 1
        %s1613 = scalar_select %p1612, %s112, 1
        %s1614 = smul.addr %s1613, 2
        %s1615 = smul.addr %s1614, 8
        %s1616 = scalar_lea.vmem %s39, %s1615
        %p1617 = pneg %p537
        %p1618 = pneg %p534
        %p1619 = pneg %p558
        %p1620 = pneg %p555
        %p1621 = pneg %p579
        %p1622 = pneg %p576
        %p1623 = pneg %p600
        %p1624 = pneg %p597
        %p1625 = pneg %p621
        %p1626 = pneg %p618
        %p1627 = pneg %p642
        %p1628 = pneg %p639
        %p1629 = pneg %p663
        %p1630 = pneg %p660
        %p1631 = pneg %p684
        %p1632 = pneg %p681
        %p1633 = pneg %p705
        %p1634 = pneg %p702
        %p1635 = pneg %p726
        %p1636 = pneg %p723
        %p1637 = pneg %p747
        %p1638 = pneg %p744
        %p1639 = pneg %p768
        %p1640 = pneg %p765
        %p1641 = pneg %p789
        %p1642 = pneg %p786
        %p1643 = pneg %p810
        %p1644 = pneg %p807
        %p1645 = pneg %p831
        %p1646 = pneg %p828
        %p1647 = pneg %p852
        %p1648 = pneg %p849
        %p1649 = pneg %p873
        %p1650 = pneg %p870
        %p1651 = pneg %p894
        %p1652 = pneg %p891
        %p1653 = pneg %p915
        %p1654 = pneg %p912
        %p1655 = pneg %p936
        %p1656 = pneg %p933
        %p1657 = pneg %p957
        %p1658 = pneg %p954
        %p1659 = pneg %p978
        %p1660 = pneg %p975
        %p1661 = pneg %p999
        %p1662 = pneg %p996
        %p1663 = pneg %p1025
        %p1664 = pneg %p1022
        %s1665 = sand.u32 %s1012, 1
        %s1666 = scalar_lea.sflag [#allocation4], %s1665
        %s1667 = sand.u32 %s1012, 1
        %s1668 = scalar_lea.vmem [#allocation41], %s1667
        %p1669 = scmp.lt.s32.totalorder %s112, 1
        %s1670 = scalar_select %p1669, %s112, 1
        %s1671 = smul.addr %s1670, 2
        %s1672 = smul.addr %s1671, 8
        %s1673 = scalar_lea.vmem %s1, %s1672
        %p1674 = scmp.lt.s32.totalorder %s112, 1
        %s1675 = scalar_select %p1674, %s112, 1
        %s1676 = smul.addr %s1675, 2
        %s1677 = smul.addr %s1676, 8
        %s1678 = scalar_lea.vmem %s39, %s1677
        %v1680 = vld [vmem:[%s1673] sm:$0xff]
        %v1681 = vld [vmem:[%s1673 + $0x8] sm:$0xff]
        %v1682 = vpack.c.bf16 %v1681, %v1680
        %v1683 = vld [vmem:[%s7] sm:$0x3]
        %vm1684 = vcmask 31744
        %v1686 = vsel %vm1684, %v1682, 0
        %vm1688 = vcmask 1041408
        %v1690 = vsel %vm1688, %v1683, 0
        %1692 = vmatpush.bf16.msra.mxu0 0
        %1693 = vmatpush.bf16.msra.mxu0 0
        %1694 = vmatpush.bf16.msra.mxu0 0
        %1695 = vmatpush.bf16.msra.mxu0 0
        %1696 = vmatpush.bf16.msra.mxu0 0
        %1697 = vmatpush.bf16.msra.mxu0 0
        %1698 = vmatpush.bf16.msra.mxu0 0
        %1699 = vmatpush.bf16.msra.mxu0 %v1690
        %1700 = vmatmul.bf16.gmra.mxu0 %v1686
        %v1701 = vpop.f32.mrf.mxu0
        %v1702 = vadd.f32 0.0, %v1701
        %v1703 = vpop.f32.mrf.mxu0
        %v1704 = vadd.f32 0.0, %v1703
        %1705 = vdwg.mxu0
        %v1706 = vld [vmem:[#allocation7] sm:$0x3]
        %v1708 = vsel %vm1688, %v1706, 0
        %1710 = vmatpush.bf16.msra.mxu0 0
        %1711 = vmatpush.bf16.msra.mxu0 0
        %1712 = vmatpush.bf16.msra.mxu0 0
        %1713 = vmatpush.bf16.msra.mxu0 0
        %1714 = vmatpush.bf16.msra.mxu0 0
        %1715 = vmatpush.bf16.msra.mxu0 0
        %1716 = vmatpush.bf16.msra.mxu0 0
        %1717 = vmatpush.bf16.msra.mxu0 %v1708
        %1718 = vmatmul.bf16.gmra.mxu0 %v1686
        %v1719 = vpop.f32.mrf.mxu0
        %v1720 = vadd.f32 0.0, %v1719
        %v1721 = vpop.f32.mrf.mxu0
        %v1722 = vadd.f32 0.0, %v1721
        %1723 = vdwg.mxu0
        %v1724 = vld [vmem:[#allocation2] sm:$0xf]
        %v1725 = vld [vmem:[#allocation2 + $0x4] sm:$0x1]
        %v1726 = vpack.c.bf16 %v1704, %v1702
        %v1727 = vld [vmem:[#allocation5] sm:$0xf]
        %v1728 = vld [vmem:[#allocation5 + $0x4] sm:$0x1]
        %v1729 = vpack.c.bf16 %v1722, %v1720
        %v1732 = vunpack.c.l.b16 %v1727
        %v1733 = vunpack.c.l.b16 %v1728
        %v1734 = vpack.c.b16 %v1733, %v1732
        %vm1735 = vcmask 130048
        %v1737 = vsel %vm1735, %v1734, 0
        %1739 = vmatpush.bf16.msra.mxu0 0
        %1740 = vmatpush.bf16.msra.mxu0 0
        %1741 = vmatpush.bf16.msra.mxu0 0
        %1742 = vmatpush.bf16.msra.mxu0 0
        %1743 = vmatpush.bf16.msra.mxu0 0
        %1744 = vmatpush.bf16.msra.mxu0 0
        %1745 = vmatpush.bf16.msra.mxu0 0
        %1746 = vmatpush.bf16.msra.mxu0 %v1729
        %1747 = vmatmul.bf16.gmra.mxu0 %v1737
        %v1748 = vpop.f32.mrf.mxu0
        %v1749 = vadd.f32 0.0, %v1748
        %v1750 = vpop.f32.mrf.mxu0
        %v1751 = vadd.f32 0.0, %v1750
        %1752 = vdwg.mxu0
        %v1755 = vunpack.c.l.b16 %v1724
        %v1756 = vunpack.c.l.b16 %v1725
        %v1757 = vpack.c.b16 %v1756, %v1755
        %v1759 = vsel %vm1735, %v1757, 0
        %1761 = vmatpush.bf16.msra.mxu0 0
        %1762 = vmatpush.bf16.msra.mxu0 0
        %1763 = vmatpush.bf16.msra.mxu0 0
        %1764 = vmatpush.bf16.msra.mxu0 0
        %1765 = vmatpush.bf16.msra.mxu0 0
        %1766 = vmatpush.bf16.msra.mxu0 0
        %1767 = vmatpush.bf16.msra.mxu0 0
        %1768 = vmatpush.bf16.msra.mxu0 %v1726
        %1769 = vmatmul.bf16.gmra.mxu0 %v1759
        %v1770 = vpop.f32.mrf.mxu0
        %v1771 = vadd.f32 %v1749, %v1770
        %v1772 = vpop.f32.mrf.mxu0
        %v1773 = vadd.f32 %v1751, %v1772
        %1774 = vdwg.mxu0
        %v1775 = vld [vmem:[#allocation8] sm:$0x1]
        %v1777 = vperm.slane %v1775, 0
        %v1779 = vadd.f32 %v1771, %v1777
        %v1780 = vadd.f32 %v1773, %v1777
        %v1781 = vmul.f32 %v1779, 5.656854
        %v1782 = vmul.f32 %v1780, 5.656854
        %v1783 = vld [vmem:[#allocation10] sm:$0xff]
        %v1784 = vld [vmem:[#allocation10 + $0x8] sm:$0x1]
        %v1785 = vadd.f32 %v1781, %v1783
        %v1786 = vadd.f32 %v1782, %v1784
        %v1787 = vld [vmem:[%s15] sm:$0xf]
        %v1788 = vld [vmem:[%s15 + $0x4] sm:$0xf]
        %v1789 = vld [vmem:[%s15 + $0x8] sm:$0xf]
        %v1790 = vld [vmem:[%s15 + $0xc] sm:$0xf]
        %v1791 = vpack.c.bf16 %v1786, %v1785
        %v1792 = vld [vmem:[#allocation11] sm:$0x1]
        %v1794 = vperm.slane %v1792, 0
        %v1800 = vunpack.c.l.b16 %v1787
        %v1801 = vunpack.c.l.b16 %v1788
        %v1802 = vunpack.c.l.b16 %v1789
        %v1803 = vunpack.c.l.b16 %v1790
        %v1804 = vpack.c.b16 %v1801, %v1800
        %v1805 = vpack.c.b16 %v1803, %v1802
        %vm1808 = vcmask 261120
        %v1810 = vsel %vm1808, %v1791, 0
        %1812 = vmatpush.bf16.msra.mxu0 0
        %1813 = vmatpush.bf16.msra.mxu0 0
        %1814 = vmatpush.bf16.msra.mxu0 0
        %1815 = vmatpush.bf16.msra.mxu0 0
        %1816 = vmatpush.bf16.msra.mxu0 0
        %1817 = vmatpush.bf16.msra.mxu0 0
        %1818 = vmatpush.bf16.msra.mxu0 %v1805
        %1819 = vmatpush.bf16.msra.mxu0 %v1804
        %1820 = vmatmul.bf16.gmra.mxu0 %v1810
        %v1821 = vpop.f32.mrf.mxu0
        %v1822 = vadd.f32 %v1794, %v1821
        %v1823 = vpop.f32.mrf.mxu0
        %v1824 = vadd.f32 %v1794, %v1823
        %1825 = vdwg.mxu0
        %v1826 = vpack.c.bf16 %v1824, %v1822
        %1828 = vrot.lane.b32.xlu0 %v1826, 96
        %v1829 = vpop.permute.xlu0 %1828
        %vm1830 = vcmask 64512
        %v1832 = vsel %vm1830, %v1826, 0
        %v1835 = vsel %vm1830, %v1829, 0
        %1837 = vmatpush.bf16.xpose.msra.mxu0 0
        %1838 = vmatpush.bf16.xpose.msra.mxu0 0
        %1839 = vmatpush.bf16.xpose.msra.mxu0 0
        %1840 = vmatpush.bf16.xpose.msra.mxu0 0
        %1841 = vmatpush.bf16.xpose.msra.mxu0 0
        %1842 = vmatpush.bf16.xpose.msra.mxu0 0
        %1843 = vmatpush.bf16.xpose.msra.mxu0 0
        %1844 = vmatpush.bf16.xpose.msra.mxu0 %v1835
        %1845 = vmatmul.bf16.gmra.mxu0 %v1832
        %v1846 = vpop.f32.mrf.mxu0
        %v1847 = vadd.f32 0.0, %v1846
        %v1848 = vpop.f32.mrf.mxu0
        %v1849 = vadd.f32 0.0, %v1848
        %1850 = vdwg.mxu0
        %v1851 = vmul.f32 %v1847, 0.35355338
        %v1852 = vmul.f32 %v1849, 0.35355338
        %vm1853 = vcmask 72704
        %v1854 = vsel %vm1853, %v1851, -inf
        %1855 = vmax.xlane.f32.xlu0 %v1854
        %v1856 = vpop.xlane.xlu0 %1855
        %vm1857 = vcmask 65536
        %v1858 = vsel %vm1857, %v1852, -inf
        %1859 = vmax.xlane.f32.xlu0 %v1858
        %v1860 = vpop.xlane.xlu0 %1859
        %v1861 = vsub.f32 %v1851, %v1856
        %v1862 = vsub.f32 %v1852, %v1860
        %v1863 = vmul.f32 %v1861, 1.442695
        %v1864 = vpow.pop %v1863
        %v1865 = vmul.f32 %v1862, 1.442695
        %v1866 = vpow.pop %v1865
        %v1867 = vsel %vm1853, %v1864, 0.0
        %1868 = vadd.xlane.f32.xlu0 %v1867
        %v1869 = vpop.xlane.xlu0 %1868
        %v1870 = vsel %vm1857, %v1866, 0.0
        %1871 = vadd.xlane.f32.xlu0 %v1870
        %v1872 = vpop.xlane.xlu0 %1871
        %v1873 = vrcp.pop %v1869
        %v1874 = vrcp.pop %v1872
        %v1875 = vmul.f32 %v1864, %v1873
        %v1876 = vmul.f32 %v1866, %v1874
        %v1877 = vpack.c.bf16 %v1876, %v1875
        %1878 = vrot.lane.b32.xlu0 %v1826, 64
        %v1879 = vpop.permute.xlu0 %1878
        %v1881 = vsel %vm1853, %v1877, 0
        %vm1883 = vcmask 1043456
        %vm1884 = vcmask 1044480
        %v1885 = vsel %vm1883, 4294967295, 65535
        %v1886 = vsel %vm1884, %v1885, 0
        %v1888 = vand.u32 %v1879, %v1886
        %1890 = vmatpush.bf16.msra.mxu0 0
        %1891 = vmatpush.bf16.msra.mxu0 0
        %1892 = vmatpush.bf16.msra.mxu0 0
        %1893 = vmatpush.bf16.msra.mxu0 0
        %1894 = vmatpush.bf16.msra.mxu0 0
        %1895 = vmatpush.bf16.msra.mxu0 0
        %1896 = vmatpush.bf16.msra.mxu0 0
        %1897 = vmatpush.bf16.msra.mxu0 %v1888
        %1898 = vmatmul.bf16.gmra.mxu0 %v1881
        %v1899 = vpop.f32.mrf.mxu0
        %v1900 = vadd.f32 0.0, %v1899
        %v1901 = vpop.f32.mrf.mxu0
        %v1902 = vadd.f32 0.0, %v1901
        %1903 = vdwg.mxu0
        %v1904 = vld [vmem:[%s19] sm:$0xf]
        %v1905 = vpack.c.bf16 %v1902, %v1900
        %1906 = vrot.lane.b32.xlu0 %v1826, 120
        %v1907 = vpop.permute.xlu0 %1906
        %1908 = vrot.lane.b32.xlu0 %v1826, 88
        %v1909 = vpop.permute.xlu0 %1908
        %v1911 = vsel %vm1830, %v1907, 0
        %v1914 = vsel %vm1830, %v1909, 0
        %1916 = vmatpush.bf16.xpose.msra.mxu0 0
        %1917 = vmatpush.bf16.xpose.msra.mxu0 0
        %1918 = vmatpush.bf16.xpose.msra.mxu0 0
        %1919 = vmatpush.bf16.xpose.msra.mxu0 0
        %1920 = vmatpush.bf16.xpose.msra.mxu0 0
        %1921 = vmatpush.bf16.xpose.msra.mxu0 0
        %1922 = vmatpush.bf16.xpose.msra.mxu0 0
        %1923 = vmatpush.bf16.xpose.msra.mxu0 %v1914
        %1924 = vmatmul.bf16.gmra.mxu0 %v1911
        %v1925 = vpop.f32.mrf.mxu0
        %v1926 = vadd.f32 0.0, %v1925
        %v1927 = vpop.f32.mrf.mxu0
        %v1928 = vadd.f32 0.0, %v1927
        %1929 = vdwg.mxu0
        %v1930 = vmul.f32 %v1926, 0.35355338
        %v1931 = vmul.f32 %v1928, 0.35355338
        %v1932 = vsel %vm1853, %v1930, -inf
        %1933 = vmax.xlane.f32.xlu0 %v1932
        %v1934 = vpop.xlane.xlu0 %1933
        %v1935 = vsel %vm1857, %v1931, -inf
        %1936 = vmax.xlane.f32.xlu0 %v1935
        %v1937 = vpop.xlane.xlu0 %1936
        %v1938 = vsub.f32 %v1930, %v1934
        %v1939 = vsub.f32 %v1931, %v1937
        %v1940 = vmul.f32 %v1938, 1.442695
        %v1941 = vpow.pop %v1940
        %v1942 = vmul.f32 %v1939, 1.442695
        %v1943 = vpow.pop %v1942
        %v1944 = vsel %vm1853, %v1941, 0.0
        %1945 = vadd.xlane.f32.xlu0 %v1944
        %v1946 = vpop.xlane.xlu0 %1945
        %v1947 = vsel %vm1857, %v1943, 0.0
        %1948 = vadd.xlane.f32.xlu0 %v1947
        %v1949 = vpop.xlane.xlu0 %1948
        %v1950 = vrcp.pop %v1946
        %v1951 = vrcp.pop %v1949
        %v1952 = vmul.f32 %v1941, %v1950
        %v1953 = vmul.f32 %v1943, %v1951
        %v1954 = vpack.c.bf16 %v1953, %v1952
        %1955 = vrot.lane.b32.xlu0 %v1826, 56
        %v1956 = vpop.permute.xlu0 %1955
        %v1958 = vsel %vm1853, %v1954, 0
        %v1961 = vand.u32 %v1956, %v1886
        %1963 = vmatpush.bf16.msra.mxu0 0
        %1964 = vmatpush.bf16.msra.mxu0 0
        %1965 = vmatpush.bf16.msra.mxu0 0
        %1966 = vmatpush.bf16.msra.mxu0 0
        %1967 = vmatpush.bf16.msra.mxu0 0
        %1968 = vmatpush.bf16.msra.mxu0 0
        %1969 = vmatpush.bf16.msra.mxu0 0
        %1970 = vmatpush.bf16.msra.mxu0 %v1961
        %1971 = vmatmul.bf16.gmra.mxu0 %v1958
        %v1972 = vpop.f32.mrf.mxu0
        %v1973 = vadd.f32 0.0, %v1972
        %v1974 = vpop.f32.mrf.mxu0
        %v1975 = vadd.f32 0.0, %v1974
        %1976 = vdwg.mxu0
        %s1977 = scalar_lea.vmem %s19, 4
        %v1978 = vld [vmem:[%s1977] sm:$0xf]
        %v1979 = vpack.c.bf16 %v1975, %v1973
        %v1981 = vsel %vm1830, %v1979, 0
        %v1984 = vsel %vm1883, %v1978, 0
        %1986 = vmatpush.bf16.msra.mxu0 0
        %1987 = vmatpush.bf16.msra.mxu0 0
        %1988 = vmatpush.bf16.msra.mxu0 0
        %1989 = vmatpush.bf16.msra.mxu0 0
        %1990 = vmatpush.bf16.msra.mxu0 0
        %1991 = vmatpush.bf16.msra.mxu0 0
        %1992 = vmatpush.bf16.msra.mxu0 0
        %1993 = vmatpush.bf16.msra.mxu0 %v1984
        %1994 = vmatmul.bf16.gmra.mxu0 %v1981
        %v1995 = vpop.f32.mrf.mxu0
        %v1996 = vadd.f32 0.0, %v1995
        %v1997 = vpop.f32.mrf.mxu0
        %v1998 = vadd.f32 0.0, %v1997
        %1999 = vdwg.mxu0
        %v2001 = vsel %vm1830, %v1905, 0
        %v2004 = vsel %vm1883, %v1904, 0
        %2006 = vmatpush.bf16.msra.mxu0 0
        %2007 = vmatpush.bf16.msra.mxu0 0
        %2008 = vmatpush.bf16.msra.mxu0 0
        %2009 = vmatpush.bf16.msra.mxu0 0
        %2010 = vmatpush.bf16.msra.mxu0 0
        %2011 = vmatpush.bf16.msra.mxu0 0
        %2012 = vmatpush.bf16.msra.mxu0 0
        %2013 = vmatpush.bf16.msra.mxu0 %v2004
        %2014 = vmatmul.bf16.gmra.mxu0 %v2001
        %v2015 = vpop.f32.mrf.mxu0
        %v2016 = vadd.f32 %v1996, %v2015
        %v2017 = vpop.f32.mrf.mxu0
        %v2018 = vadd.f32 %v1998, %v2017
        %2019 = vdwg.mxu0
        %2020 = vrot.lane.b32.xlu0 %v1826, 112
        %v2021 = vpop.permute.xlu0 %2020
        %2022 = vrot.lane.b32.xlu0 %v1826, 80
        %v2023 = vpop.permute.xlu0 %2022
        %v2025 = vsel %vm1830, %v2021, 0
        %v2028 = vsel %vm1830, %v2023, 0
        %2030 = vmatpush.bf16.xpose.msra.mxu0 0
        %2031 = vmatpush.bf16.xpose.msra.mxu0 0
        %2032 = vmatpush.bf16.xpose.msra.mxu0 0
        %2033 = vmatpush.bf16.xpose.msra.mxu0 0
        %2034 = vmatpush.bf16.xpose.msra.mxu0 0
        %2035 = vmatpush.bf16.xpose.msra.mxu0 0
        %2036 = vmatpush.bf16.xpose.msra.mxu0 0
        %2037 = vmatpush.bf16.xpose.msra.mxu0 %v2028
        %2038 = vmatmul.bf16.gmra.mxu0 %v2025
        %v2039 = vpop.f32.mrf.mxu0
        %v2040 = vadd.f32 0.0, %v2039
        %v2041 = vpop.f32.mrf.mxu0
        %v2042 = vadd.f32 0.0, %v2041
        %2043 = vdwg.mxu0
        %v2044 = vmul.f32 %v2040, 0.35355338
        %v2045 = vmul.f32 %v2042, 0.35355338
        %v2046 = vsel %vm1853, %v2044, -inf
        %2047 = vmax.xlane.f32.xlu0 %v2046
        %v2048 = vpop.xlane.xlu0 %2047
        %v2049 = vsel %vm1857, %v2045, -inf
        %2050 = vmax.xlane.f32.xlu0 %v2049
        %v2051 = vpop.xlane.xlu0 %2050
        %v2052 = vsub.f32 %v2044, %v2048
        %v2053 = vsub.f32 %v2045, %v2051
        %v2054 = vmul.f32 %v2052, 1.442695
        %v2055 = vpow.pop %v2054
        %v2056 = vmul.f32 %v2053, 1.442695
        %v2057 = vpow.pop %v2056
        %v2058 = vsel %vm1853, %v2055, 0.0
        %2059 = vadd.xlane.f32.xlu0 %v2058
        %v2060 = vpop.xlane.xlu0 %2059
        %v2061 = vsel %vm1857, %v2057, 0.0
        %2062 = vadd.xlane.f32.xlu0 %v2061
        %v2063 = vpop.xlane.xlu0 %2062
        %v2064 = vrcp.pop %v2060
        %v2065 = vrcp.pop %v2063
        %v2066 = vmul.f32 %v2055, %v2064
        %v2067 = vmul.f32 %v2057, %v2065
        %v2068 = vpack.c.bf16 %v2067, %v2066
        %2069 = vrot.lane.b32.xlu0 %v1826, 48
        %v2070 = vpop.permute.xlu0 %2069
        %v2072 = vsel %vm1853, %v2068, 0
        %v2075 = vand.u32 %v2070, %v1886
        %2077 = vmatpush.bf16.msra.mxu0 0
        %2078 = vmatpush.bf16.msra.mxu0 0
        %2079 = vmatpush.bf16.msra.mxu0 0
        %2080 = vmatpush.bf16.msra.mxu0 0
        %2081 = vmatpush.bf16.msra.mxu0 0
        %2082 = vmatpush.bf16.msra.mxu0 0
        %2083 = vmatpush.bf16.msra.mxu0 0
        %2084 = vmatpush.bf16.msra.mxu0 %v2075
        %2085 = vmatmul.bf16.gmra.mxu0 %v2072
        %v2086 = vpop.f32.mrf.mxu0
        %v2087 = vadd.f32 0.0, %v2086
        %v2088 = vpop.f32.mrf.mxu0
        %v2089 = vadd.f32 0.0, %v2088
        %2090 = vdwg.mxu0
        %s2091 = scalar_lea.vmem %s19, 8
        %v2092 = vld [vmem:[%s2091] sm:$0xf]
        %v2093 = vpack.c.bf16 %v2089, %v2087
        %v2095 = vsel %vm1830, %v2093, 0
        %v2098 = vsel %vm1883, %v2092, 0
        %2100 = vmatpush.bf16.msra.mxu0 0
        %2101 = vmatpush.bf16.msra.mxu0 0
        %2102 = vmatpush.bf16.msra.mxu0 0
        %2103 = vmatpush.bf16.msra.mxu0 0
        %2104 = vmatpush.bf16.msra.mxu0 0
        %2105 = vmatpush.bf16.msra.mxu0 0
        %2106 = vmatpush.bf16.msra.mxu0 0
        %2107 = vmatpush.bf16.msra.mxu0 %v2098
        %2108 = vmatmul.bf16.gmra.mxu0 %v2095
        %v2109 = vpop.f32.mrf.mxu0
        %v2110 = vadd.f32 0.0, %v2109
        %v2111 = vpop.f32.mrf.mxu0
        %v2112 = vadd.f32 0.0, %v2111
        %2113 = vdwg.mxu0
        %v2114 = vadd.f32 %v2016, %v2110
        %v2115 = vadd.f32 %v2018, %v2112
        %2116 = vrot.lane.b32.xlu0 %v1826, 104
        %v2117 = vpop.permute.xlu0 %2116
        %2118 = vrot.lane.b32.xlu0 %v1826, 72
        %v2119 = vpop.permute.xlu0 %2118
        %v2121 = vsel %vm1830, %v2117, 0
        %v2124 = vsel %vm1830, %v2119, 0
        %2126 = vmatpush.bf16.xpose.msra.mxu0 0
        %2127 = vmatpush.bf16.xpose.msra.mxu0 0
        %2128 = vmatpush.bf16.xpose.msra.mxu0 0
        %2129 = vmatpush.bf16.xpose.msra.mxu0 0
        %2130 = vmatpush.bf16.xpose.msra.mxu0 0
        %2131 = vmatpush.bf16.xpose.msra.mxu0 0
        %2132 = vmatpush.bf16.xpose.msra.mxu0 0
        %2133 = vmatpush.bf16.xpose.msra.mxu0 %v2124
        %2134 = vmatmul.bf16.gmra.mxu0 %v2121
        %v2135 = vpop.f32.mrf.mxu0
        %v2136 = vadd.f32 0.0, %v2135
        %v2137 = vpop.f32.mrf.mxu0
        %v2138 = vadd.f32 0.0, %v2137
        %2139 = vdwg.mxu0
        %v2140 = vmul.f32 %v2136, 0.35355338
        %v2141 = vmul.f32 %v2138, 0.35355338
        %v2142 = vsel %vm1853, %v2140, -inf
        %2143 = vmax.xlane.f32.xlu0 %v2142
        %v2144 = vpop.xlane.xlu0 %2143
        %v2145 = vsel %vm1857, %v2141, -inf
        %2146 = vmax.xlane.f32.xlu0 %v2145
        %v2147 = vpop.xlane.xlu0 %2146
        %v2148 = vsub.f32 %v2140, %v2144
        %v2149 = vsub.f32 %v2141, %v2147
        %v2150 = vmul.f32 %v2148, 1.442695
        %v2151 = vpow.pop %v2150
        %v2152 = vmul.f32 %v2149, 1.442695
        %v2153 = vpow.pop %v2152
        %v2154 = vsel %vm1853, %v2151, 0.0
        %2155 = vadd.xlane.f32.xlu0 %v2154
        %v2156 = vpop.xlane.xlu0 %2155
        %v2157 = vsel %vm1857, %v2153, 0.0
        %2158 = vadd.xlane.f32.xlu0 %v2157
        %v2159 = vpop.xlane.xlu0 %2158
        %v2160 = vrcp.pop %v2156
        %v2161 = vrcp.pop %v2159
        %v2162 = vmul.f32 %v2151, %v2160
        %v2163 = vmul.f32 %v2153, %v2161
        %v2164 = vpack.c.bf16 %v2163, %v2162
        %2165 = vrot.lane.b32.xlu0 %v1826, 40
        %v2166 = vpop.permute.xlu0 %2165
        %v2168 = vsel %vm1853, %v2164, 0
        %v2171 = vand.u32 %v2166, %v1886
        %2173 = vmatpush.bf16.msra.mxu0 0
        %2174 = vmatpush.bf16.msra.mxu0 0
        %2175 = vmatpush.bf16.msra.mxu0 0
        %2176 = vmatpush.bf16.msra.mxu0 0
        %2177 = vmatpush.bf16.msra.mxu0 0
        %2178 = vmatpush.bf16.msra.mxu0 0
        %2179 = vmatpush.bf16.msra.mxu0 0
        %2180 = vmatpush.bf16.msra.mxu0 %v2171
        %2181 = vmatmul.bf16.gmra.mxu0 %v2168
        %v2182 = vpop.f32.mrf.mxu0
        %v2183 = vadd.f32 0.0, %v2182
        %v2184 = vpop.f32.mrf.mxu0
        %v2185 = vadd.f32 0.0, %v2184
        %2186 = vdwg.mxu0
        %s2187 = scalar_lea.vmem %s19, 12
        %v2188 = vld [vmem:[%s2187] sm:$0xf]
        %v2189 = vpack.c.bf16 %v2185, %v2183
        %v2191 = vsel %vm1830, %v2189, 0
        %v2194 = vsel %vm1883, %v2188, 0
        %2196 = vmatpush.bf16.msra.mxu0 0
        %2197 = vmatpush.bf16.msra.mxu0 0
        %2198 = vmatpush.bf16.msra.mxu0 0
        %2199 = vmatpush.bf16.msra.mxu0 0
        %2200 = vmatpush.bf16.msra.mxu0 0
        %2201 = vmatpush.bf16.msra.mxu0 0
        %2202 = vmatpush.bf16.msra.mxu0 0
        %2203 = vmatpush.bf16.msra.mxu0 %v2194
        %2204 = vmatmul.bf16.gmra.mxu0 %v2191
        %v2205 = vpop.f32.mrf.mxu0
        %v2206 = vadd.f32 0.0, %v2205
        %v2207 = vpop.f32.mrf.mxu0
        %v2208 = vadd.f32 0.0, %v2207
        %2209 = vdwg.mxu0
        %v2210 = vadd.f32 %v2114, %v2206
        %v2211 = vadd.f32 %v2115, %v2208
        %v2212 = vld [vmem:[#allocation13] sm:$0x1]
        %v2214 = vperm.slane %v2212, 0
        %v2216 = vadd.f32 %v2210, %v2214
        %v2217 = vadd.f32 %v2211, %v2214
        %v2218 = vadd.f32 %v1785, %v2216
        %v2219 = vadd.f32 %v1786, %v2217
        %v2220 = vld [vmem:[#allocation17] sm:$0x1]
        %v2221 = vld [vmem:[#allocation19] sm:$0x1]
        %v2222 = vsel %vm1808, %v2218, 0.0
        %2223 = vadd.xlane.f32.xlu0 %v2222
        %v2224 = vpop.xlane.xlu0 %2223
        %vm2225 = vcmask 253952
        %v2226 = vsel %vm2225, %v2219, 0.0
        %2227 = vadd.xlane.f32.xlu0 %v2226
        %v2228 = vpop.xlane.xlu0 %2227
        %v2229 = vrcp.pop 32.0
        %v2230 = vmul.f32 32.0, %v2229
        %v2231 = vsub.f32 1.0, %v2230
        %v2232 = vmul.f32 %v2229, %v2231
        %v2233 = vadd.f32 %v2229, %v2232
        %vm2234 = vweird.f32 %v2229
        %v2235 = vsel %vm2234, %v2229, %v2233
        %v2236 = vmul.f32 %v2224, %v2235
        %v2237 = vmul.f32 %v2228, %v2235
        %v2238 = vsub.f32 %v2218, %v2236
        %v2239 = vsub.f32 %v2219, %v2237
        %v2240 = vmul.f32 %v2238, %v2238
        %v2241 = vmul.f32 %v2239, %v2239
        %v2242 = vsel %vm1808, %v2240, 0.0
        %2243 = vadd.xlane.f32.xlu0 %v2242
        %v2244 = vpop.xlane.xlu0 %2243
        %v2245 = vsel %vm2225, %v2241, 0.0
        %2246 = vadd.xlane.f32.xlu0 %v2245
        %v2247 = vpop.xlane.xlu0 %2246
        %v2248 = vmul.f32 %v2244, %v2235
        %v2249 = vmul.f32 %v2247, %v2235
        %v2250 = vadd.f32 %v2248, 1e-05
        %v2251 = vadd.f32 %v2249, 1e-05
        %v2252 = vrsqrt.pop %v2250
        %v2253 = vmul.f32 %v2252, %v2250
        %v2254 = vmul.f32 %v2253, %v2252
        %v2255 = vmul.f32 0.5, %v2254
        %v2256 = vsub.f32 1.5, %v2255
        %v2257 = vmul.f32 %v2252, %v2256
        %vm2258 = vweird.f32 %v2250
        %vm2259 = vweird.f32 %v2252
        %vm2260 = vmor %vm2258, %vm2259
        %v2261 = vsel %vm2260, %v2252, %v2257
        %v2262 = vrsqrt.pop %v2251
        %v2263 = vmul.f32 %v2262, %v2251
        %v2264 = vmul.f32 %v2263, %v2262
        %v2265 = vmul.f32 0.5, %v2264
        %v2266 = vsub.f32 1.5, %v2265
        %v2267 = vmul.f32 %v2262, %v2266
        %vm2268 = vweird.f32 %v2251
        %vm2269 = vweird.f32 %v2262
        %vm2270 = vmor %vm2268, %vm2269
        %v2271 = vsel %vm2270, %v2262, %v2267
        %v2272 = vmul.f32 %v2238, %v2261
        %v2273 = vmul.f32 %v2239, %v2271
        %v2275 = vperm.slane %v2220, 0
        %v2277 = vmul.f32 %v2272, %v2275
        %v2278 = vmul.f32 %v2273, %v2275
        %v2280 = vperm.slane %v2221, 0
        %v2282 = vadd.f32 %v2277, %v2280
        %v2283 = vadd.f32 %v2278, %v2280
        %v2284 = vld [vmem:[%s23] sm:$0xf]
        %v2285 = vld [vmem:[%s23 + $0x4] sm:$0xf]
        %v2286 = vld [vmem:[%s23 + $0x8] sm:$0xf]
        %v2287 = vld [vmem:[%s23 + $0xc] sm:$0xf]
        %v2288 = vpack.c.bf16 %v2283, %v2282
        %v2289 = vld [vmem:[#allocation14] sm:$0x1]
        %v2291 = vperm.slane %v2289, 0
        %v2297 = vunpack.c.l.b16 %v2284
        %v2298 = vunpack.c.l.b16 %v2285
        %v2299 = vunpack.c.l.b16 %v2286
        %v2300 = vunpack.c.l.b16 %v2287
        %v2301 = vpack.c.b16 %v2298, %v2297
        %v2302 = vpack.c.b16 %v2300, %v2299
        %v2306 = vsel %vm1808, %v2288, 0
        %2308 = vmatpush.bf16.msra.mxu0 0
        %2309 = vmatpush.bf16.msra.mxu0 0
        %2310 = vmatpush.bf16.msra.mxu0 0
        %2311 = vmatpush.bf16.msra.mxu0 0
        %2312 = vmatpush.bf16.msra.mxu0 0
        %2313 = vmatpush.bf16.msra.mxu0 0
        %2314 = vmatpush.bf16.msra.mxu0 %v2302
        %2315 = vmatpush.bf16.msra.mxu0 %v2301
        %2316 = vmatmul.bf16.gmra.mxu0 %v2306
        %v2317 = vpop.f32.mrf.mxu0
        %v2318 = vadd.f32 %v2291, %v2317
        %v2319 = vpop.f32.mrf.mxu0
        %v2320 = vadd.f32 %v2291, %v2319
        %2321 = vdwg.mxu0
        %v2322 = vmax.f32 %v2318, 0.0
        %v2323 = vmax.f32 %v2320, 0.0
        %v2324 = vld [vmem:[%s27] sm:$0xf]
        %v2325 = vld [vmem:[%s27 + $0x4] sm:$0xf]
        %v2326 = vld [vmem:[%s27 + $0x8] sm:$0xf]
        %v2327 = vld [vmem:[%s27 + $0xc] sm:$0xf]
        %v2328 = vld [vmem:[%s27 + $0x10] sm:$0xf]
        %v2329 = vld [vmem:[%s27 + $0x14] sm:$0xf]
        %v2330 = vld [vmem:[%s27 + $0x18] sm:$0xf]
        %v2331 = vld [vmem:[%s27 + $0x1c] sm:$0xf]
        %v2332 = vpack.c.bf16 %v2323, %v2322
        %v2333 = vld [vmem:[#allocation16] sm:$0x1]
        %v2335 = vperm.slane %v2333, 0
        %v2345 = vunpack.c.l.b16 %v2324
        %v2346 = vunpack.c.l.b16 %v2325
        %v2347 = vunpack.c.l.b16 %v2326
        %v2348 = vunpack.c.l.b16 %v2327
        %v2349 = vunpack.c.l.b16 %v2328
        %v2350 = vunpack.c.l.b16 %v2329
        %v2351 = vunpack.c.l.b16 %v2330
        %v2352 = vunpack.c.l.b16 %v2331
        %v2353 = vpack.c.b16 %v2346, %v2345
        %v2354 = vpack.c.b16 %v2348, %v2347
        %v2355 = vpack.c.b16 %v2350, %v2349
        %v2356 = vpack.c.b16 %v2352, %v2351
        %vm2361 = vcmask 523264
        %v2363 = vsel %vm2361, %v2332, 0
        %2365 = vmatpush.bf16.msra.mxu0 0
        %2366 = vmatpush.bf16.msra.mxu0 0
        %2367 = vmatpush.bf16.msra.mxu0 0
        %2368 = vmatpush.bf16.msra.mxu0 0
        %2369 = vmatpush.bf16.msra.mxu0 %v2356
        %2370 = vmatpush.bf16.msra.mxu0 %v2355
        %2371 = vmatpush.bf16.msra.mxu0 %v2354
        %2372 = vmatpush.bf16.msra.mxu0 %v2353
        %2373 = vmatmul.bf16.gmra.mxu0 %v2363
        %v2374 = vpop.f32.mrf.mxu0
        %v2375 = vadd.f32 %v2335, %v2374
        %v2376 = vpop.f32.mrf.mxu0
        %v2377 = vadd.f32 %v2335, %v2376
        %2378 = vdwg.mxu0
        %v2379 = vadd.f32 %v2282, %v2375
        %v2380 = vadd.f32 %v2283, %v2377
        %v2381 = vld [vmem:[#allocation20] sm:$0x1]
        %v2382 = vld [vmem:[#allocation22] sm:$0x1]
        %v2383 = vsel %vm1808, %v2379, 0.0
        %2384 = vadd.xlane.f32.xlu0 %v2383
        %v2385 = vpop.xlane.xlu0 %2384
        %v2386 = vsel %vm2225, %v2380, 0.0
        %2387 = vadd.xlane.f32.xlu0 %v2386
        %v2388 = vpop.xlane.xlu0 %2387
        %v2389 = vmul.f32 %v2385, %v2235
        %v2390 = vmul.f32 %v2388, %v2235
        %v2391 = vsub.f32 %v2379, %v2389
        %v2392 = vsub.f32 %v2380, %v2390
        %v2393 = vmul.f32 %v2391, %v2391
        %v2394 = vmul.f32 %v2392, %v2392
        %v2395 = vsel %vm1808, %v2393, 0.0
        %2396 = vadd.xlane.f32.xlu0 %v2395
        %v2397 = vpop.xlane.xlu0 %2396
        %v2398 = vsel %vm2225, %v2394, 0.0
        %2399 = vadd.xlane.f32.xlu0 %v2398
        %v2400 = vpop.xlane.xlu0 %2399
        %v2401 = vmul.f32 %v2397, %v2235
        %v2402 = vmul.f32 %v2400, %v2235
        %v2403 = vadd.f32 %v2401, 1e-05
        %v2404 = vadd.f32 %v2402, 1e-05
        %v2405 = vrsqrt.pop %v2403
        %v2406 = vmul.f32 %v2405, %v2403
        %v2407 = vmul.f32 %v2406, %v2405
        %v2408 = vmul.f32 0.5, %v2407
        %v2409 = vsub.f32 1.5, %v2408
        %v2410 = vmul.f32 %v2405, %v2409
        %vm2411 = vweird.f32 %v2403
        %vm2412 = vweird.f32 %v2405
        %vm2413 = vmor %vm2411, %vm2412
        %v2414 = vsel %vm2413, %v2405, %v2410
        %v2415 = vrsqrt.pop %v2404
        %v2416 = vmul.f32 %v2415, %v2404
        %v2417 = vmul.f32 %v2416, %v2415
        %v2418 = vmul.f32 0.5, %v2417
        %v2419 = vsub.f32 1.5, %v2418
        %v2420 = vmul.f32 %v2415, %v2419
        %vm2421 = vweird.f32 %v2404
        %vm2422 = vweird.f32 %v2415
        %vm2423 = vmor %vm2421, %vm2422
        %v2424 = vsel %vm2423, %v2415, %v2420
        %v2425 = vmul.f32 %v2391, %v2414
        %v2426 = vmul.f32 %v2392, %v2424
        %v2428 = vperm.slane %v2381, 0
        %v2430 = vmul.f32 %v2425, %v2428
        %v2431 = vmul.f32 %v2426, %v2428
        %v2433 = vperm.slane %v2382, 0
        %v2435 = vadd.f32 %v2430, %v2433
        %v2436 = vadd.f32 %v2431, %v2433
        %s2437 = scalar_lea.vmem %s15, 16
        %v2438 = vld [vmem:[%s2437] sm:$0xf]
        %v2439 = vld [vmem:[%s2437 + $0x4] sm:$0xf]
        %v2440 = vld [vmem:[%s2437 + $0x8] sm:$0xf]
        %v2441 = vld [vmem:[%s2437 + $0xc] sm:$0xf]
        %v2442 = vpack.c.bf16 %v2436, %v2435
        %s2443 = scalar_lea.vmem [#allocation11], 1
        %v2444 = vld [vmem:[%s2443] sm:$0x1]
        %v2446 = vperm.slane %v2444, 0
        %v2452 = vunpack.c.l.b16 %v2438
        %v2453 = vunpack.c.l.b16 %v2439
        %v2454 = vunpack.c.l.b16 %v2440
        %v2455 = vunpack.c.l.b16 %v2441
        %v2456 = vpack.c.b16 %v2453, %v2452
        %v2457 = vpack.c.b16 %v2455, %v2454
        %v2461 = vsel %vm1808, %v2442, 0
        %2463 = vmatpush.bf16.msra.mxu0 0
        %2464 = vmatpush.bf16.msra.mxu0 0
        %2465 = vmatpush.bf16.msra.mxu0 0
        %2466 = vmatpush.bf16.msra.mxu0 0
        %2467 = vmatpush.bf16.msra.mxu0 0
        %2468 = vmatpush.bf16.msra.mxu0 0
        %2469 = vmatpush.bf16.msra.mxu0 %v2457
        %2470 = vmatpush.bf16.msra.mxu0 %v2456
        %2471 = vmatmul.bf16.gmra.mxu0 %v2461
        %v2472 = vpop.f32.mrf.mxu0
        %v2473 = vadd.f32 %v2446, %v2472
        %v2474 = vpop.f32.mrf.mxu0
        %v2475 = vadd.f32 %v2446, %v2474
        %2476 = vdwg.mxu0
        %v2477 = vpack.c.bf16 %v2475, %v2473
        %2479 = vrot.lane.b32.xlu0 %v2477, 96
        %v2480 = vpop.permute.xlu0 %2479
        %v2482 = vsel %vm1830, %v2477, 0
        %v2485 = vsel %vm1830, %v2480, 0
        %2487 = vmatpush.bf16.xpose.msra.mxu0 0
        %2488 = vmatpush.bf16.xpose.msra.mxu0 0
        %2489 = vmatpush.bf16.xpose.msra.mxu0 0
        %2490 = vmatpush.bf16.xpose.msra.mxu0 0
        %2491 = vmatpush.bf16.xpose.msra.mxu0 0
        %2492 = vmatpush.bf16.xpose.msra.mxu0 0
        %2493 = vmatpush.bf16.xpose.msra.mxu0 0
        %2494 = vmatpush.bf16.xpose.msra.mxu0 %v2485
        %2495 = vmatmul.bf16.gmra.mxu0 %v2482
        %v2496 = vpop.f32.mrf.mxu0
        %v2497 = vadd.f32 0.0, %v2496
        %v2498 = vpop.f32.mrf.mxu0
        %v2499 = vadd.f32 0.0, %v2498
        %2500 = vdwg.mxu0
        %v2501 = vmul.f32 %v2497, 0.35355338
        %v2502 = vmul.f32 %v2499, 0.35355338
        %v2503 = vsel %vm1853, %v2501, -inf
        %2504 = vmax.xlane.f32.xlu0 %v2503
        %v2505 = vpop.xlane.xlu0 %2504
        %v2506 = vsel %vm1857, %v2502, -inf
        %2507 = vmax.xlane.f32.xlu0 %v2506
        %v2508 = vpop.xlane.xlu0 %2507
        %v2509 = vsub.f32 %v2501, %v2505
        %v2510 = vsub.f32 %v2502, %v2508
        %v2511 = vmul.f32 %v2509, 1.442695
        %v2512 = vpow.pop %v2511
        %v2513 = vmul.f32 %v2510, 1.442695
        %v2514 = vpow.pop %v2513
        %v2515 = vsel %vm1853, %v2512, 0.0
        %2516 = vadd.xlane.f32.xlu0 %v2515
        %v2517 = vpop.xlane.xlu0 %2516
        %v2518 = vsel %vm1857, %v2514, 0.0
        %2519 = vadd.xlane.f32.xlu0 %v2518
        %v2520 = vpop.xlane.xlu0 %2519
        %v2521 = vrcp.pop %v2517
        %v2522 = vrcp.pop %v2520
        %v2523 = vmul.f32 %v2512, %v2521
        %v2524 = vmul.f32 %v2514, %v2522
        %v2525 = vpack.c.bf16 %v2524, %v2523
        %2526 = vrot.lane.b32.xlu0 %v2477, 64
        %v2527 = vpop.permute.xlu0 %2526
        %v2529 = vsel %vm1853, %v2525, 0
        %v2532 = vand.u32 %v2527, %v1886
        %2534 = vmatpush.bf16.msra.mxu0 0
        %2535 = vmatpush.bf16.msra.mxu0 0
        %2536 = vmatpush.bf16.msra.mxu0 0
        %2537 = vmatpush.bf16.msra.mxu0 0
        %2538 = vmatpush.bf16.msra.mxu0 0
        %2539 = vmatpush.bf16.msra.mxu0 0
        %2540 = vmatpush.bf16.msra.mxu0 0
        %2541 = vmatpush.bf16.msra.mxu0 %v2532
        %2542 = vmatmul.bf16.gmra.mxu0 %v2529
        %v2543 = vpop.f32.mrf.mxu0
        %v2544 = vadd.f32 0.0, %v2543
        %v2545 = vpop.f32.mrf.mxu0
        %v2546 = vadd.f32 0.0, %v2545
        %2547 = vdwg.mxu0
        %s2548 = scalar_lea.vmem %s19, 16
        %v2549 = vld [vmem:[%s2548] sm:$0xf]
        %v2550 = vpack.c.bf16 %v2546, %v2544
        %2551 = vrot.lane.b32.xlu0 %v2477, 120
        %v2552 = vpop.permute.xlu0 %2551
        %2553 = vrot.lane.b32.xlu0 %v2477, 88
        %v2554 = vpop.permute.xlu0 %2553
        %v2556 = vsel %vm1830, %v2552, 0
        %v2559 = vsel %vm1830, %v2554, 0
        %2561 = vmatpush.bf16.xpose.msra.mxu0 0
        %2562 = vmatpush.bf16.xpose.msra.mxu0 0
        %2563 = vmatpush.bf16.xpose.msra.mxu0 0
        %2564 = vmatpush.bf16.xpose.msra.mxu0 0
        %2565 = vmatpush.bf16.xpose.msra.mxu0 0
        %2566 = vmatpush.bf16.xpose.msra.mxu0 0
        %2567 = vmatpush.bf16.xpose.msra.mxu0 0
        %2568 = vmatpush.bf16.xpose.msra.mxu0 %v2559
        %2569 = vmatmul.bf16.gmra.mxu0 %v2556
        %v2570 = vpop.f32.mrf.mxu0
        %v2571 = vadd.f32 0.0, %v2570
        %v2572 = vpop.f32.mrf.mxu0
        %v2573 = vadd.f32 0.0, %v2572
        %2574 = vdwg.mxu0
        %v2575 = vmul.f32 %v2571, 0.35355338
        %v2576 = vmul.f32 %v2573, 0.35355338
        %v2577 = vsel %vm1853, %v2575, -inf
        %2578 = vmax.xlane.f32.xlu0 %v2577
        %v2579 = vpop.xlane.xlu0 %2578
        %v2580 = vsel %vm1857, %v2576, -inf
        %2581 = vmax.xlane.f32.xlu0 %v2580
        %v2582 = vpop.xlane.xlu0 %2581
        %v2583 = vsub.f32 %v2575, %v2579
        %v2584 = vsub.f32 %v2576, %v2582
        %v2585 = vmul.f32 %v2583, 1.442695
        %v2586 = vpow.pop %v2585
        %v2587 = vmul.f32 %v2584, 1.442695
        %v2588 = vpow.pop %v2587
        %v2589 = vsel %vm1853, %v2586, 0.0
        %2590 = vadd.xlane.f32.xlu0 %v2589
        %v2591 = vpop.xlane.xlu0 %2590
        %v2592 = vsel %vm1857, %v2588, 0.0
        %2593 = vadd.xlane.f32.xlu0 %v2592
        %v2594 = vpop.xlane.xlu0 %2593
        %v2595 = vrcp.pop %v2591
        %v2596 = vrcp.pop %v2594
        %v2597 = vmul.f32 %v2586, %v2595
        %v2598 = vmul.f32 %v2588, %v2596
        %v2599 = vpack.c.bf16 %v2598, %v2597
        %2600 = vrot.lane.b32.xlu0 %v2477, 56
        %v2601 = vpop.permute.xlu0 %2600
        %v2603 = vsel %vm1853, %v2599, 0
        %v2606 = vand.u32 %v2601, %v1886
        %2608 = vmatpush.bf16.msra.mxu0 0
        %2609 = vmatpush.bf16.msra.mxu0 0
        %2610 = vmatpush.bf16.msra.mxu0 0
        %2611 = vmatpush.bf16.msra.mxu0 0
        %2612 = vmatpush.bf16.msra.mxu0 0
        %2613 = vmatpush.bf16.msra.mxu0 0
        %2614 = vmatpush.bf16.msra.mxu0 0
        %2615 = vmatpush.bf16.msra.mxu0 %v2606
        %2616 = vmatmul.bf16.gmra.mxu0 %v2603
        %v2617 = vpop.f32.mrf.mxu0
        %v2618 = vadd.f32 0.0, %v2617
        %v2619 = vpop.f32.mrf.mxu0
        %v2620 = vadd.f32 0.0, %v2619
        %2621 = vdwg.mxu0
        %s2622 = scalar_lea.vmem %s19, 20
        %v2623 = vld [vmem:[%s2622] sm:$0xf]
        %v2624 = vpack.c.bf16 %v2620, %v2618
        %v2626 = vsel %vm1830, %v2624, 0
        %v2629 = vsel %vm1883, %v2623, 0
        %2631 = vmatpush.bf16.msra.mxu0 0
        %2632 = vmatpush.bf16.msra.mxu0 0
        %2633 = vmatpush.bf16.msra.mxu0 0
        %2634 = vmatpush.bf16.msra.mxu0 0
        %2635 = vmatpush.bf16.msra.mxu0 0
        %2636 = vmatpush.bf16.msra.mxu0 0
        %2637 = vmatpush.bf16.msra.mxu0 0
        %2638 = vmatpush.bf16.msra.mxu0 %v2629
        %2639 = vmatmul.bf16.gmra.mxu0 %v2626
        %v2640 = vpop.f32.mrf.mxu0
        %v2641 = vadd.f32 0.0, %v2640
        %v2642 = vpop.f32.mrf.mxu0
        %v2643 = vadd.f32 0.0, %v2642
        %2644 = vdwg.mxu0
        %v2646 = vsel %vm1830, %v2550, 0
        %v2649 = vsel %vm1883, %v2549, 0
        %2651 = vmatpush.bf16.msra.mxu0 0
        %2652 = vmatpush.bf16.msra.mxu0 0
        %2653 = vmatpush.bf16.msra.mxu0 0
        %2654 = vmatpush.bf16.msra.mxu0 0
        %2655 = vmatpush.bf16.msra.mxu0 0
        %2656 = vmatpush.bf16.msra.mxu0 0
        %2657 = vmatpush.bf16.msra.mxu0 0
        %2658 = vmatpush.bf16.msra.mxu0 %v2649
        %2659 = vmatmul.bf16.gmra.mxu0 %v2646
        %v2660 = vpop.f32.mrf.mxu0
        %v2661 = vadd.f32 %v2641, %v2660
        %v2662 = vpop.f32.mrf.mxu0
        %v2663 = vadd.f32 %v2643, %v2662
        %2664 = vdwg.mxu0
        %2665 = vrot.lane.b32.xlu0 %v2477, 112
        %v2666 = vpop.permute.xlu0 %2665
        %2667 = vrot.lane.b32.xlu0 %v2477, 80
        %v2668 = vpop.permute.xlu0 %2667
        %v2670 = vsel %vm1830, %v2666, 0
        %v2673 = vsel %vm1830, %v2668, 0
        %2675 = vmatpush.bf16.xpose.msra.mxu0 0
        %2676 = vmatpush.bf16.xpose.msra.mxu0 0
        %2677 = vmatpush.bf16.xpose.msra.mxu0 0
        %2678 = vmatpush.bf16.xpose.msra.mxu0 0
        %2679 = vmatpush.bf16.xpose.msra.mxu0 0
        %2680 = vmatpush.bf16.xpose.msra.mxu0 0
        %2681 = vmatpush.bf16.xpose.msra.mxu0 0
        %2682 = vmatpush.bf16.xpose.msra.mxu0 %v2673
        %2683 = vmatmul.bf16.gmra.mxu0 %v2670
        %v2684 = vpop.f32.mrf.mxu0
        %v2685 = vadd.f32 0.0, %v2684
        %v2686 = vpop.f32.mrf.mxu0
        %v2687 = vadd.f32 0.0, %v2686
        %2688 = vdwg.mxu0
        %v2689 = vmul.f32 %v2685, 0.35355338
        %v2690 = vmul.f32 %v2687, 0.35355338
        %v2691 = vsel %vm1853, %v2689, -inf
        %2692 = vmax.xlane.f32.xlu0 %v2691
        %v2693 = vpop.xlane.xlu0 %2692
        %v2694 = vsel %vm1857, %v2690, -inf
        %2695 = vmax.xlane.f32.xlu0 %v2694
        %v2696 = vpop.xlane.xlu0 %2695
        %v2697 = vsub.f32 %v2689, %v2693
        %v2698 = vsub.f32 %v2690, %v2696
        %v2699 = vmul.f32 %v2697, 1.442695
        %v2700 = vpow.pop %v2699
        %v2701 = vmul.f32 %v2698, 1.442695
        %v2702 = vpow.pop %v2701
        %v2703 = vsel %vm1853, %v2700, 0.0
        %2704 = vadd.xlane.f32.xlu0 %v2703
        %v2705 = vpop.xlane.xlu0 %2704
        %v2706 = vsel %vm1857, %v2702, 0.0
        %2707 = vadd.xlane.f32.xlu0 %v2706
        %v2708 = vpop.xlane.xlu0 %2707
        %v2709 = vrcp.pop %v2705
        %v2710 = vrcp.pop %v2708
        %v2711 = vmul.f32 %v2700, %v2709
        %v2712 = vmul.f32 %v2702, %v2710
        %v2713 = vpack.c.bf16 %v2712, %v2711
        %2714 = vrot.lane.b32.xlu0 %v2477, 48
        %v2715 = vpop.permute.xlu0 %2714
        %v2717 = vsel %vm1853, %v2713, 0
        %v2720 = vand.u32 %v2715, %v1886
        %2722 = vmatpush.bf16.msra.mxu0 0
        %2723 = vmatpush.bf16.msra.mxu0 0
        %2724 = vmatpush.bf16.msra.mxu0 0
        %2725 = vmatpush.bf16.msra.mxu0 0
        %2726 = vmatpush.bf16.msra.mxu0 0
        %2727 = vmatpush.bf16.msra.mxu0 0
        %2728 = vmatpush.bf16.msra.mxu0 0
        %2729 = vmatpush.bf16.msra.mxu0 %v2720
        %2730 = vmatmul.bf16.gmra.mxu0 %v2717
        %v2731 = vpop.f32.mrf.mxu0
        %v2732 = vadd.f32 0.0, %v2731
        %v2733 = vpop.f32.mrf.mxu0
        %v2734 = vadd.f32 0.0, %v2733
        %2735 = vdwg.mxu0
        %s2736 = scalar_lea.vmem %s19, 24
        %v2737 = vld [vmem:[%s2736] sm:$0xf]
        %v2738 = vpack.c.bf16 %v2734, %v2732
        %v2740 = vsel %vm1830, %v2738, 0
        %v2743 = vsel %vm1883, %v2737, 0
        %2745 = vmatpush.bf16.msra.mxu0 0
        %2746 = vmatpush.bf16.msra.mxu0 0
        %2747 = vmatpush.bf16.msra.mxu0 0
        %2748 = vmatpush.bf16.msra.mxu0 0
        %2749 = vmatpush.bf16.msra.mxu0 0
        %2750 = vmatpush.bf16.msra.mxu0 0
        %2751 = vmatpush.bf16.msra.mxu0 0
        %2752 = vmatpush.bf16.msra.mxu0 %v2743
        %2753 = vmatmul.bf16.gmra.mxu0 %v2740
        %v2754 = vpop.f32.mrf.mxu0
        %v2755 = vadd.f32 0.0, %v2754
        %v2756 = vpop.f32.mrf.mxu0
        %v2757 = vadd.f32 0.0, %v2756
        %2758 = vdwg.mxu0
        %v2759 = vadd.f32 %v2661, %v2755
        %v2760 = vadd.f32 %v2663, %v2757
        %2761 = vrot.lane.b32.xlu0 %v2477, 104
        %v2762 = vpop.permute.xlu0 %2761
        %2763 = vrot.lane.b32.xlu0 %v2477, 72
        %v2764 = vpop.permute.xlu0 %2763
        %v2766 = vsel %vm1830, %v2762, 0
        %v2769 = vsel %vm1830, %v2764, 0
        %2771 = vmatpush.bf16.xpose.msra.mxu0 0
        %2772 = vmatpush.bf16.xpose.msra.mxu0 0
        %2773 = vmatpush.bf16.xpose.msra.mxu0 0
        %2774 = vmatpush.bf16.xpose.msra.mxu0 0
        %2775 = vmatpush.bf16.xpose.msra.mxu0 0
        %2776 = vmatpush.bf16.xpose.msra.mxu0 0
        %2777 = vmatpush.bf16.xpose.msra.mxu0 0
        %2778 = vmatpush.bf16.xpose.msra.mxu0 %v2769
        %2779 = vmatmul.bf16.gmra.mxu0 %v2766
        %v2780 = vpop.f32.mrf.mxu0
        %v2781 = vadd.f32 0.0, %v2780
        %v2782 = vpop.f32.mrf.mxu0
        %v2783 = vadd.f32 0.0, %v2782
        %2784 = vdwg.mxu0
        %v2785 = vmul.f32 %v2781, 0.35355338
        %v2786 = vmul.f32 %v2783, 0.35355338
        %v2787 = vsel %vm1853, %v2785, -inf
        %2788 = vmax.xlane.f32.xlu0 %v2787
        %v2789 = vpop.xlane.xlu0 %2788
        %v2790 = vsel %vm1857, %v2786, -inf
        %2791 = vmax.xlane.f32.xlu0 %v2790
        %v2792 = vpop.xlane.xlu0 %2791
        %v2793 = vsub.f32 %v2785, %v2789
        %v2794 = vsub.f32 %v2786, %v2792
        %v2795 = vmul.f32 %v2793, 1.442695
        %v2796 = vpow.pop %v2795
        %v2797 = vmul.f32 %v2794, 1.442695
        %v2798 = vpow.pop %v2797
        %v2799 = vsel %vm1853, %v2796, 0.0
        %2800 = vadd.xlane.f32.xlu0 %v2799
        %v2801 = vpop.xlane.xlu0 %2800
        %v2802 = vsel %vm1857, %v2798, 0.0
        %2803 = vadd.xlane.f32.xlu0 %v2802
        %v2804 = vpop.xlane.xlu0 %2803
        %v2805 = vrcp.pop %v2801
        %v2806 = vrcp.pop %v2804
        %v2807 = vmul.f32 %v2796, %v2805
        %v2808 = vmul.f32 %v2798, %v2806
        %v2809 = vpack.c.bf16 %v2808, %v2807
        %2810 = vrot.lane.b32.xlu0 %v2477, 40
        %v2811 = vpop.permute.xlu0 %2810
        %v2813 = vsel %vm1853, %v2809, 0
        %v2816 = vand.u32 %v2811, %v1886
        %2818 = vmatpush.bf16.msra.mxu0 0
        %2819 = vmatpush.bf16.msra.mxu0 0
        %2820 = vmatpush.bf16.msra.mxu0 0
        %2821 = vmatpush.bf16.msra.mxu0 0
        %2822 = vmatpush.bf16.msra.mxu0 0
        %2823 = vmatpush.bf16.msra.mxu0 0
        %2824 = vmatpush.bf16.msra.mxu0 0
        %2825 = vmatpush.bf16.msra.mxu0 %v2816
        %2826 = vmatmul.bf16.gmra.mxu0 %v2813
        %v2827 = vpop.f32.mrf.mxu0
        %v2828 = vadd.f32 0.0, %v2827
        %v2829 = vpop.f32.mrf.mxu0
        %v2830 = vadd.f32 0.0, %v2829
        %2831 = vdwg.mxu0
        %s2832 = scalar_lea.vmem %s19, 28
        %v2833 = vld [vmem:[%s2832] sm:$0xf]
        %v2834 = vpack.c.bf16 %v2830, %v2828
        %v2836 = vsel %vm1830, %v2834, 0
        %v2839 = vsel %vm1883, %v2833, 0
        %2841 = vmatpush.bf16.msra.mxu0 0
        %2842 = vmatpush.bf16.msra.mxu0 0
        %2843 = vmatpush.bf16.msra.mxu0 0
        %2844 = vmatpush.bf16.msra.mxu0 0
        %2845 = vmatpush.bf16.msra.mxu0 0
        %2846 = vmatpush.bf16.msra.mxu0 0
        %2847 = vmatpush.bf16.msra.mxu0 0
        %2848 = vmatpush.bf16.msra.mxu0 %v2839
        %2849 = vmatmul.bf16.gmra.mxu0 %v2836
        %v2850 = vpop.f32.mrf.mxu0
        %v2851 = vadd.f32 0.0, %v2850
        %v2852 = vpop.f32.mrf.mxu0
        %v2853 = vadd.f32 0.0, %v2852
        %2854 = vdwg.mxu0
        %v2855 = vadd.f32 %v2759, %v2851
        %v2856 = vadd.f32 %v2760, %v2853
        %s2857 = scalar_lea.vmem [#allocation13], 1
        %v2858 = vld [vmem:[%s2857] sm:$0x1]
        %v2860 = vperm.slane %v2858, 0
        %v2862 = vadd.f32 %v2855, %v2860
        %v2863 = vadd.f32 %v2856, %v2860
        %v2864 = vadd.f32 %v2435, %v2862
        %v2865 = vadd.f32 %v2436, %v2863
        %s2866 = scalar_lea.vmem [#allocation17], 1
        %v2867 = vld [vmem:[%s2866] sm:$0x1]
        %s2868 = scalar_lea.vmem [#allocation19], 1
        %v2869 = vld [vmem:[%s2868] sm:$0x1]
        %v2870 = vsel %vm1808, %v2864, 0.0
        %2871 = vadd.xlane.f32.xlu0 %v2870
        %v2872 = vpop.xlane.xlu0 %2871
        %v2873 = vsel %vm2225, %v2865, 0.0
        %2874 = vadd.xlane.f32.xlu0 %v2873
        %v2875 = vpop.xlane.xlu0 %2874
        %v2876 = vmul.f32 %v2872, %v2235
        %v2877 = vmul.f32 %v2875, %v2235
        %v2878 = vsub.f32 %v2864, %v2876
        %v2879 = vsub.f32 %v2865, %v2877
        %v2880 = vmul.f32 %v2878, %v2878
        %v2881 = vmul.f32 %v2879, %v2879
        %v2882 = vsel %vm1808, %v2880, 0.0
        %2883 = vadd.xlane.f32.xlu0 %v2882
        %v2884 = vpop.xlane.xlu0 %2883
        %v2885 = vsel %vm2225, %v2881, 0.0
        %2886 = vadd.xlane.f32.xlu0 %v2885
        %v2887 = vpop.xlane.xlu0 %2886
        %v2888 = vmul.f32 %v2884, %v2235
        %v2889 = vmul.f32 %v2887, %v2235
        %v2890 = vadd.f32 %v2888, 1e-05
        %v2891 = vadd.f32 %v2889, 1e-05
        %v2892 = vrsqrt.pop %v2890
        %v2893 = vmul.f32 %v2892, %v2890
        %v2894 = vmul.f32 %v2893, %v2892
        %v2895 = vmul.f32 0.5, %v2894
        %v2896 = vsub.f32 1.5, %v2895
        %v2897 = vmul.f32 %v2892, %v2896
        %vm2898 = vweird.f32 %v2890
        %vm2899 = vweird.f32 %v2892
        %vm2900 = vmor %vm2898, %vm2899
        %v2901 = vsel %vm2900, %v2892, %v2897
        %v2902 = vrsqrt.pop %v2891
        %v2903 = vmul.f32 %v2902, %v2891
        %v2904 = vmul.f32 %v2903, %v2902
        %v2905 = vmul.f32 0.5, %v2904
        %v2906 = vsub.f32 1.5, %v2905
        %v2907 = vmul.f32 %v2902, %v2906
        %vm2908 = vweird.f32 %v2891
        %vm2909 = vweird.f32 %v2902
        %vm2910 = vmor %vm2908, %vm2909
        %v2911 = vsel %vm2910, %v2902, %v2907
        %v2912 = vmul.f32 %v2878, %v2901
        %v2913 = vmul.f32 %v2879, %v2911
        %v2915 = vperm.slane %v2867, 0
        %v2917 = vmul.f32 %v2912, %v2915
        %v2918 = vmul.f32 %v2913, %v2915
        %v2920 = vperm.slane %v2869, 0
        %v2922 = vadd.f32 %v2917, %v2920
        %v2923 = vadd.f32 %v2918, %v2920
        %s2924 = scalar_lea.vmem %s23, 16
        %v2925 = vld [vmem:[%s2924] sm:$0xf]
        %v2926 = vld [vmem:[%s2924 + $0x4] sm:$0xf]
        %v2927 = vld [vmem:[%s2924 + $0x8] sm:$0xf]
        %v2928 = vld [vmem:[%s2924 + $0xc] sm:$0xf]
        %v2929 = vpack.c.bf16 %v2923, %v2922
        %s2930 = scalar_lea.vmem [#allocation14], 1
        %v2931 = vld [vmem:[%s2930] sm:$0x1]
        %v2933 = vperm.slane %v2931, 0
        %v2939 = vunpack.c.l.b16 %v2925
        %v2940 = vunpack.c.l.b16 %v2926
        %v2941 = vunpack.c.l.b16 %v2927
        %v2942 = vunpack.c.l.b16 %v2928
        %v2943 = vpack.c.b16 %v2940, %v2939
        %v2944 = vpack.c.b16 %v2942, %v2941
        %v2948 = vsel %vm1808, %v2929, 0
        %2950 = vmatpush.bf16.msra.mxu0 0
        %2951 = vmatpush.bf16.msra.mxu0 0
        %2952 = vmatpush.bf16.msra.mxu0 0
        %2953 = vmatpush.bf16.msra.mxu0 0
        %2954 = vmatpush.bf16.msra.mxu0 0
        %2955 = vmatpush.bf16.msra.mxu0 0
        %2956 = vmatpush.bf16.msra.mxu0 %v2944
        %2957 = vmatpush.bf16.msra.mxu0 %v2943
        %2958 = vmatmul.bf16.gmra.mxu0 %v2948
        %v2959 = vpop.f32.mrf.mxu0
        %v2960 = vadd.f32 %v2933, %v2959
        %v2961 = vpop.f32.mrf.mxu0
        %v2962 = vadd.f32 %v2933, %v2961
        %2963 = vdwg.mxu0
        %v2964 = vmax.f32 %v2960, 0.0
        %v2965 = vmax.f32 %v2962, 0.0
        %s2966 = scalar_lea.vmem %s27, 32
        %v2967 = vld [vmem:[%s2966] sm:$0xf]
        %v2968 = vld [vmem:[%s2966 + $0x4] sm:$0xf]
        %v2969 = vld [vmem:[%s2966 + $0x8] sm:$0xf]
        %v2970 = vld [vmem:[%s2966 + $0xc] sm:$0xf]
        %v2971 = vld [vmem:[%s2966 + $0x10] sm:$0xf]
        %v2972 = vld [vmem:[%s2966 + $0x14] sm:$0xf]
        %v2973 = vld [vmem:[%s2966 + $0x18] sm:$0xf]
        %v2974 = vld [vmem:[%s2966 + $0x1c] sm:$0xf]
        %v2975 = vpack.c.bf16 %v2965, %v2964
        %s2976 = scalar_lea.vmem [#allocation16], 1
        %v2977 = vld [vmem:[%s2976] sm:$0x1]
        %v2979 = vperm.slane %v2977, 0
        %v2989 = vunpack.c.l.b16 %v2967
        %v2990 = vunpack.c.l.b16 %v2968
        %v2991 = vunpack.c.l.b16 %v2969
        %v2992 = vunpack.c.l.b16 %v2970
        %v2993 = vunpack.c.l.b16 %v2971
        %v2994 = vunpack.c.l.b16 %v2972
        %v2995 = vunpack.c.l.b16 %v2973
        %v2996 = vunpack.c.l.b16 %v2974
        %v2997 = vpack.c.b16 %v2990, %v2989
        %v2998 = vpack.c.b16 %v2992, %v2991
        %v2999 = vpack.c.b16 %v2994, %v2993
        %v3000 = vpack.c.b16 %v2996, %v2995
        %v3006 = vsel %vm2361, %v2975, 0
        %3008 = vmatpush.bf16.msra.mxu0 0
        %3009 = vmatpush.bf16.msra.mxu0 0
        %3010 = vmatpush.bf16.msra.mxu0 0
        %3011 = vmatpush.bf16.msra.mxu0 0
        %3012 = vmatpush.bf16.msra.mxu0 %v3000
        %3013 = vmatpush.bf16.msra.mxu0 %v2999
        %3014 = vmatpush.bf16.msra.mxu0 %v2998
        %3015 = vmatpush.bf16.msra.mxu0 %v2997
        %3016 = vmatmul.bf16.gmra.mxu0 %v3006
        %v3017 = vpop.f32.mrf.mxu0
        %v3018 = vadd.f32 %v2979, %v3017
        %v3019 = vpop.f32.mrf.mxu0
        %v3020 = vadd.f32 %v2979, %v3019
        %3021 = vdwg.mxu0
        %v3022 = vadd.f32 %v2922, %v3018
        %v3023 = vadd.f32 %v2923, %v3020
        %s3024 = scalar_lea.vmem [#allocation20], 1
        %v3025 = vld [vmem:[%s3024] sm:$0x1]
        %s3026 = scalar_lea.vmem [#allocation22], 1
        %v3027 = vld [vmem:[%s3026] sm:$0x1]
        %v3028 = vsel %vm1808, %v3022, 0.0
        %3029 = vadd.xlane.f32.xlu0 %v3028
        %v3030 = vpop.xlane.xlu0 %3029
        %v3031 = vsel %vm2225, %v3023, 0.0
        %3032 = vadd.xlane.f32.xlu0 %v3031
        %v3033 = vpop.xlane.xlu0 %3032
        %v3034 = vmul.f32 %v3030, %v2235
        %v3035 = vmul.f32 %v3033, %v2235
        %v3036 = vsub.f32 %v3022, %v3034
        %v3037 = vsub.f32 %v3023, %v3035
        %v3038 = vmul.f32 %v3036, %v3036
        %v3039 = vmul.f32 %v3037, %v3037
        %v3040 = vsel %vm1808, %v3038, 0.0
        %3041 = vadd.xlane.f32.xlu0 %v3040
        %v3042 = vpop.xlane.xlu0 %3041
        %v3043 = vsel %vm2225, %v3039, 0.0
        %3044 = vadd.xlane.f32.xlu0 %v3043
        %v3045 = vpop.xlane.xlu0 %3044
        %v3046 = vmul.f32 %v3042, %v2235
        %v3047 = vmul.f32 %v3045, %v2235
        %v3048 = vadd.f32 %v3046, 1e-05
        %v3049 = vadd.f32 %v3047, 1e-05
        %v3050 = vrsqrt.pop %v3048
        %v3051 = vmul.f32 %v3050, %v3048
        %v3052 = vmul.f32 %v3051, %v3050
        %v3053 = vmul.f32 0.5, %v3052
        %v3054 = vsub.f32 1.5, %v3053
        %v3055 = vmul.f32 %v3050, %v3054
        %vm3056 = vweird.f32 %v3048
        %vm3057 = vweird.f32 %v3050
        %vm3058 = vmor %vm3056, %vm3057
        %v3059 = vsel %vm3058, %v3050, %v3055
        %v3060 = vrsqrt.pop %v3049
        %v3061 = vmul.f32 %v3060, %v3049
        %v3062 = vmul.f32 %v3061, %v3060
        %v3063 = vmul.f32 0.5, %v3062
        %v3064 = vsub.f32 1.5, %v3063
        %v3065 = vmul.f32 %v3060, %v3064
        %vm3066 = vweird.f32 %v3049
        %vm3067 = vweird.f32 %v3060
        %vm3068 = vmor %vm3066, %vm3067
        %v3069 = vsel %vm3068, %v3060, %v3065
        %v3070 = vmul.f32 %v3036, %v3059
        %v3071 = vmul.f32 %v3037, %v3069
        %v3073 = vperm.slane %v3025, 0
        %v3075 = vmul.f32 %v3070, %v3073
        %v3076 = vmul.f32 %v3071, %v3073
        %v3078 = vperm.slane %v3027, 0
        %v3080 = vadd.f32 %v3075, %v3078
        %v3081 = vadd.f32 %v3076, %v3078
        %v3082 = vsel %vm1808, %v3080, 0.0
        %v3083 = vsel %vm2225, %v3081, 0.0
        %v3084 = vadd.f32 %v3082, %v3083
        %v3085 = vrot.slane %v3084, 4
        %v3086 = vadd.f32 %v3084, %v3085
        %v3087 = vrot.slane %v3086, 2
        %v3088 = vadd.f32 %v3086, %v3087
        %v3089 = vrot.slane %v3088, 1
        %v3090 = vadd.f32 %v3088, %v3089
        %v3091 = vrcp.pop 9.0
        %v3092 = vmul.f32 9.0, %v3091
        %v3093 = vsub.f32 1.0, %v3092
        %v3094 = vmul.f32 %v3091, %v3093
        %v3095 = vadd.f32 %v3091, %v3094
        %vm3096 = vweird.f32 %v3091
        %v3097 = vsel %vm3096, %v3091, %v3095
        %v3098 = vmul.f32 %v3090, %v3097
        %v3099 = vld [vmem:[%s1678] sm:$0xff]
        %v3100 = vld [vmem:[%s1678 + $0x8] sm:$0xf]
        %v3101 = vpack.c.bf16 %v3100, %v3099
        %v3102 = vld [vmem:[#allocation26] sm:$0x7]
        %vm3103 = vcmask 48128
        %v3105 = vsel %vm3103, %v3101, 0
        %vm3107 = vcmask 1042432
        %v3109 = vsel %vm3107, %v3102, 0
        %3111 = vmatpush.bf16.msra.mxu0 0
        %3112 = vmatpush.bf16.msra.mxu0 0
        %3113 = vmatpush.bf16.msra.mxu0 0
        %3114 = vmatpush.bf16.msra.mxu0 0
        %3115 = vmatpush.bf16.msra.mxu0 0
        %3116 = vmatpush.bf16.msra.mxu0 0
        %3117 = vmatpush.bf16.msra.mxu0 0
        %3118 = vmatpush.bf16.msra.mxu0 %v3109
        %3119 = vmatmul.bf16.gmra.mxu0 %v3105
        %v3120 = vpop.f32.mrf.mxu0
        %v3121 = vadd.f32 0.0, %v3120
        %v3122 = vpop.f32.mrf.mxu0
        %v3123 = vadd.f32 0.0, %v3122
        %3124 = vdwg.mxu0
        %v3125 = vld [vmem:[#allocation28] sm:$0x7]
        %v3127 = vsel %vm3107, %v3125, 0
        %3129 = vmatpush.bf16.msra.mxu0 0
        %3130 = vmatpush.bf16.msra.mxu0 0
        %3131 = vmatpush.bf16.msra.mxu0 0
        %3132 = vmatpush.bf16.msra.mxu0 0
        %3133 = vmatpush.bf16.msra.mxu0 0
        %3134 = vmatpush.bf16.msra.mxu0 0
        %3135 = vmatpush.bf16.msra.mxu0 0
        %3136 = vmatpush.bf16.msra.mxu0 %v3127
        %3137 = vmatmul.bf16.gmra.mxu0 %v3105
        %v3138 = vpop.f32.mrf.mxu0
        %v3139 = vadd.f32 0.0, %v3138
        %v3140 = vpop.f32.mrf.mxu0
        %v3141 = vadd.f32 0.0, %v3140
        %3142 = vdwg.mxu0
        %v3143 = vld [vmem:[#allocation23] sm:$0xf]
        %v3144 = vpack.c.bf16 %v3123, %v3121
        %v3145 = vld [vmem:[#allocation25] sm:$0xf]
        %v3146 = vpack.c.bf16 %v3141, %v3139
        %vm3147 = vcmask 97280
        %v3149 = vsel %vm3147, %v3145, 0
        %vm3151 = vcmask 1045504
        %v3153 = vsel %vm3151, %v3146, 0
        %3155 = vmatpush.bf16.msra.mxu0 0
        %3156 = vmatpush.bf16.msra.mxu0 0
        %3157 = vmatpush.bf16.msra.mxu0 0
        %3158 = vmatpush.bf16.msra.mxu0 0
        %3159 = vmatpush.bf16.msra.mxu0 0
        %3160 = vmatpush.bf16.msra.mxu0 0
        %3161 = vmatpush.bf16.msra.mxu0 0
        %3162 = vmatpush.bf16.msra.mxu0 %v3153
        %3163 = vmatmul.bf16.gmra.mxu0 %v3149
        %v3164 = vpop.f32.mrf.mxu0
        %v3165 = vadd.f32 0.0, %v3164
        %v3166 = vpop.f32.mrf.mxu0
        %3167 = vdwg.mxu0
        %v3169 = vsel %vm3147, %v3143, 0
        %v3172 = vsel %vm3151, %v3144, 0
        %3174 = vmatpush.bf16.msra.mxu0 0
        %3175 = vmatpush.bf16.msra.mxu0 0
        %3176 = vmatpush.bf16.msra.mxu0 0
        %3177 = vmatpush.bf16.msra.mxu0 0
        %3178 = vmatpush.bf16.msra.mxu0 0
        %3179 = vmatpush.bf16.msra.mxu0 0
        %3180 = vmatpush.bf16.msra.mxu0 0
        %3181 = vmatpush.bf16.msra.mxu0 %v3172
        %3182 = vmatmul.bf16.gmra.mxu0 %v3169
        %v3183 = vpop.f32.mrf.mxu0
        %v3184 = vadd.f32 %v3165, %v3183
        %v3185 = vpop.f32.mrf.mxu0
        %3186 = vdwg.mxu0
        %v3187 = vld [vmem:[#allocation29] sm:$0x1]
        %v3189 = vperm.slane %v3187, 0
        %v3191 = vadd.f32 %v3184, %v3189
        %v3192 = vmul.f32 %v3191, 5.656854
        %v3193 = vld [vmem:[#allocation31] sm:$0x7f]
        %v3194 = vadd.f32 %v3192, %v3193
        %v3195 = vld [vmem:[%s53] sm:$0xf]
        %v3196 = vld [vmem:[%s53 + $0x4] sm:$0xf]
        %v3197 = vld [vmem:[%s53 + $0x8] sm:$0xf]
        %v3198 = vld [vmem:[%s53 + $0xc] sm:$0xf]
        %v3199 = vpack.c.bf16 %v3194, %v3194
        %v3200 = vld [vmem:[#allocation32] sm:$0x1]
        %v3202 = vperm.slane %v3200, 0
        %v3208 = vunpack.c.l.b16 %v3195
        %v3209 = vunpack.c.l.b16 %v3196
        %v3210 = vunpack.c.l.b16 %v3197
        %v3211 = vunpack.c.l.b16 %v3198
        %v3212 = vpack.c.b16 %v3209, %v3208
        %v3213 = vpack.c.b16 %v3211, %v3210
        %v3217 = vsel %vm1808, %v3199, 0
        %3219 = vmatpush.bf16.msra.mxu0 0
        %3220 = vmatpush.bf16.msra.mxu0 0
        %3221 = vmatpush.bf16.msra.mxu0 0
        %3222 = vmatpush.bf16.msra.mxu0 0
        %3223 = vmatpush.bf16.msra.mxu0 0
        %3224 = vmatpush.bf16.msra.mxu0 0
        %3225 = vmatpush.bf16.msra.mxu0 %v3213
        %3226 = vmatpush.bf16.msra.mxu0 %v3212
        %3227 = vmatmul.bf16.gmra.mxu0 %v3217
        %v3228 = vpop.f32.mrf.mxu0
        %v3229 = vadd.f32 %v3202, %v3228
        %v3230 = vpop.f32.mrf.mxu0
        %3231 = vdwg.mxu0
        %v3232 = vpack.c.bf16 %v3229, %v3229
        %3234 = vrot.lane.b32.xlu0 %v3232, 96
        %v3235 = vpop.permute.xlu0 %3234
        %v3237 = vsel %vm1830, %v3232, 0
        %v3240 = vsel %vm1830, %v3235, 0
        %3242 = vmatpush.bf16.xpose.msra.mxu0 0
        %3243 = vmatpush.bf16.xpose.msra.mxu0 0
        %3244 = vmatpush.bf16.xpose.msra.mxu0 0
        %3245 = vmatpush.bf16.xpose.msra.mxu0 0
        %3246 = vmatpush.bf16.xpose.msra.mxu0 0
        %3247 = vmatpush.bf16.xpose.msra.mxu0 0
        %3248 = vmatpush.bf16.xpose.msra.mxu0 0
        %3249 = vmatpush.bf16.xpose.msra.mxu0 %v3240
        %3250 = vmatmul.bf16.gmra.mxu0 %v3237
        %v3251 = vpop.f32.mrf.mxu0
        %v3252 = vadd.f32 0.0, %v3251
        %v3253 = vpop.f32.mrf.mxu0
        %3254 = vdwg.mxu0
        %v3255 = vmul.f32 %v3252, 0.35355338
        %vm3256 = vcmask 55296
        %v3257 = vsel %vm3256, %v3255, -inf
        %3258 = vmax.xlane.f32.xlu0 %v3257
        %v3259 = vpop.xlane.xlu0 %3258
        %v3260 = vsub.f32 %v3255, %v3259
        %v3261 = vmul.f32 %v3260, 1.442695
        %v3262 = vpow.pop %v3261
        %v3263 = vsel %vm3256, %v3262, 0.0
        %3264 = vadd.xlane.f32.xlu0 %v3263
        %v3265 = vpop.xlane.xlu0 %3264
        %v3266 = vrcp.pop %v3265
        %v3267 = vmul.f32 %v3262, %v3266
        %v3268 = vpack.c.bf16 %v3267, %v3267
        %3269 = vrot.lane.b32.xlu0 %v3232, 64
        %v3270 = vpop.permute.xlu0 %3269
        %vm3271 = vcmask 56320
        %v3273 = vsel %vm3271, %v3268, 0
        %v3275 = vsel %vm3107, 4294967295, 65535
        %v3276 = vsel %vm1883, %v3275, 0
        %v3278 = vand.u32 %v3270, %v3276
        %3280 = vmatpush.bf16.msra.mxu0 0
        %3281 = vmatpush.bf16.msra.mxu0 0
        %3282 = vmatpush.bf16.msra.mxu0 0
        %3283 = vmatpush.bf16.msra.mxu0 0
        %3284 = vmatpush.bf16.msra.mxu0 0
        %3285 = vmatpush.bf16.msra.mxu0 0
        %3286 = vmatpush.bf16.msra.mxu0 0
        %3287 = vmatpush.bf16.msra.mxu0 %v3278
        %3288 = vmatmul.bf16.gmra.mxu0 %v3273
        %v3289 = vpop.f32.mrf.mxu0
        %v3290 = vadd.f32 0.0, %v3289
        %v3291 = vpop.f32.mrf.mxu0
        %3292 = vdwg.mxu0
        %v3293 = vld [vmem:[%s57] sm:$0xf]
        %v3294 = vpack.c.bf16 %v3290, %v3290
        %3295 = vrot.lane.b32.xlu0 %v3232, 120
        %v3296 = vpop.permute.xlu0 %3295
        %3297 = vrot.lane.b32.xlu0 %v3232, 88
        %v3298 = vpop.permute.xlu0 %3297
        %v3300 = vsel %vm1830, %v3296, 0
        %v3303 = vsel %vm1830, %v3298, 0
        %3305 = vmatpush.bf16.xpose.msra.mxu0 0
        %3306 = vmatpush.bf16.xpose.msra.mxu0 0
        %3307 = vmatpush.bf16.xpose.msra.mxu0 0
        %3308 = vmatpush.bf16.xpose.msra.mxu0 0
        %3309 = vmatpush.bf16.xpose.msra.mxu0 0
        %3310 = vmatpush.bf16.xpose.msra.mxu0 0
        %3311 = vmatpush.bf16.xpose.msra.mxu0 0
        %3312 = vmatpush.bf16.xpose.msra.mxu0 %v3303
        %3313 = vmatmul.bf16.gmra.mxu0 %v3300
        %v3314 = vpop.f32.mrf.mxu0
        %v3315 = vadd.f32 0.0, %v3314
        %v3316 = vpop.f32.mrf.mxu0
        %3317 = vdwg.mxu0
        %v3318 = vmul.f32 %v3315, 0.35355338
        %v3319 = vsel %vm3256, %v3318, -inf
        %3320 = vmax.xlane.f32.xlu0 %v3319
        %v3321 = vpop.xlane.xlu0 %3320
        %v3322 = vsub.f32 %v3318, %v3321
        %v3323 = vmul.f32 %v3322, 1.442695
        %v3324 = vpow.pop %v3323
        %v3325 = vsel %vm3256, %v3324, 0.0
        %3326 = vadd.xlane.f32.xlu0 %v3325
        %v3327 = vpop.xlane.xlu0 %3326
        %v3328 = vrcp.pop %v3327
        %v3329 = vmul.f32 %v3324, %v3328
        %v3330 = vpack.c.bf16 %v3329, %v3329
        %3331 = vrot.lane.b32.xlu0 %v3232, 56
        %v3332 = vpop.permute.xlu0 %3331
        %v3334 = vsel %vm3271, %v3330, 0
        %v3337 = vand.u32 %v3332, %v3276
        %3339 = vmatpush.bf16.msra.mxu0 0
        %3340 = vmatpush.bf16.msra.mxu0 0
        %3341 = vmatpush.bf16.msra.mxu0 0
        %3342 = vmatpush.bf16.msra.mxu0 0
        %3343 = vmatpush.bf16.msra.mxu0 0
        %3344 = vmatpush.bf16.msra.mxu0 0
        %3345 = vmatpush.bf16.msra.mxu0 0
        %3346 = vmatpush.bf16.msra.mxu0 %v3337
        %3347 = vmatmul.bf16.gmra.mxu0 %v3334
        %v3348 = vpop.f32.mrf.mxu0
        %v3349 = vadd.f32 0.0, %v3348
        %v3350 = vpop.f32.mrf.mxu0
        %3351 = vdwg.mxu0
        %s3352 = scalar_lea.vmem %s57, 4
        %v3353 = vld [vmem:[%s3352] sm:$0xf]
        %v3354 = vpack.c.bf16 %v3349, %v3349
        %v3356 = vsel %vm1830, %v3354, 0
        %v3359 = vsel %vm1883, %v3353, 0
        %3361 = vmatpush.bf16.msra.mxu0 0
        %3362 = vmatpush.bf16.msra.mxu0 0
        %3363 = vmatpush.bf16.msra.mxu0 0
        %3364 = vmatpush.bf16.msra.mxu0 0
        %3365 = vmatpush.bf16.msra.mxu0 0
        %3366 = vmatpush.bf16.msra.mxu0 0
        %3367 = vmatpush.bf16.msra.mxu0 0
        %3368 = vmatpush.bf16.msra.mxu0 %v3359
        %3369 = vmatmul.bf16.gmra.mxu0 %v3356
        %v3370 = vpop.f32.mrf.mxu0
        %v3371 = vadd.f32 0.0, %v3370
        %v3372 = vpop.f32.mrf.mxu0
        %3373 = vdwg.mxu0
        %v3375 = vsel %vm1830, %v3294, 0
        %v3378 = vsel %vm1883, %v3293, 0
        %3380 = vmatpush.bf16.msra.mxu0 0
        %3381 = vmatpush.bf16.msra.mxu0 0
        %3382 = vmatpush.bf16.msra.mxu0 0
        %3383 = vmatpush.bf16.msra.mxu0 0
        %3384 = vmatpush.bf16.msra.mxu0 0
        %3385 = vmatpush.bf16.msra.mxu0 0
        %3386 = vmatpush.bf16.msra.mxu0 0
        %3387 = vmatpush.bf16.msra.mxu0 %v3378
        %3388 = vmatmul.bf16.gmra.mxu0 %v3375
        %v3389 = vpop.f32.mrf.mxu0
        %v3390 = vadd.f32 %v3371, %v3389
        %v3391 = vpop.f32.mrf.mxu0
        %3392 = vdwg.mxu0
        %3393 = vrot.lane.b32.xlu0 %v3232, 112
        %v3394 = vpop.permute.xlu0 %3393
        %3395 = vrot.lane.b32.xlu0 %v3232, 80
        %v3396 = vpop.permute.xlu0 %3395
        %v3398 = vsel %vm1830, %v3394, 0
        %v3401 = vsel %vm1830, %v3396, 0
        %3403 = vmatpush.bf16.xpose.msra.mxu0 0
        %3404 = vmatpush.bf16.xpose.msra.mxu0 0
        %3405 = vmatpush.bf16.xpose.msra.mxu0 0
        %3406 = vmatpush.bf16.xpose.msra.mxu0 0
        %3407 = vmatpush.bf16.xpose.msra.mxu0 0
        %3408 = vmatpush.bf16.xpose.msra.mxu0 0
        %3409 = vmatpush.bf16.xpose.msra.mxu0 0
        %3410 = vmatpush.bf16.xpose.msra.mxu0 %v3401
        %3411 = vmatmul.bf16.gmra.mxu0 %v3398
        %v3412 = vpop.f32.mrf.mxu0
        %v3413 = vadd.f32 0.0, %v3412
        %v3414 = vpop.f32.mrf.mxu0
        %3415 = vdwg.mxu0
        %v3416 = vmul.f32 %v3413, 0.35355338
        %v3417 = vsel %vm3256, %v3416, -inf
        %3418 = vmax.xlane.f32.xlu0 %v3417
        %v3419 = vpop.xlane.xlu0 %3418
        %v3420 = vsub.f32 %v3416, %v3419
        %v3421 = vmul.f32 %v3420, 1.442695
        %v3422 = vpow.pop %v3421
        %v3423 = vsel %vm3256, %v3422, 0.0
        %3424 = vadd.xlane.f32.xlu0 %v3423
        %v3425 = vpop.xlane.xlu0 %3424
        %v3426 = vrcp.pop %v3425
        %v3427 = vmul.f32 %v3422, %v3426
        %v3428 = vpack.c.bf16 %v3427, %v3427
        %3429 = vrot.lane.b32.xlu0 %v3232, 48
        %v3430 = vpop.permute.xlu0 %3429
        %v3432 = vsel %vm3271, %v3428, 0
        %v3435 = vand.u32 %v3430, %v3276
        %3437 = vmatpush.bf16.msra.mxu0 0
        %3438 = vmatpush.bf16.msra.mxu0 0
        %3439 = vmatpush.bf16.msra.mxu0 0
        %3440 = vmatpush.bf16.msra.mxu0 0
        %3441 = vmatpush.bf16.msra.mxu0 0
        %3442 = vmatpush.bf16.msra.mxu0 0
        %3443 = vmatpush.bf16.msra.mxu0 0
        %3444 = vmatpush.bf16.msra.mxu0 %v3435
        %3445 = vmatmul.bf16.gmra.mxu0 %v3432
        %v3446 = vpop.f32.mrf.mxu0
        %v3447 = vadd.f32 0.0, %v3446
        %v3448 = vpop.f32.mrf.mxu0
        %3449 = vdwg.mxu0
        %s3450 = scalar_lea.vmem %s57, 8
        %v3451 = vld [vmem:[%s3450] sm:$0xf]
        %v3452 = vpack.c.bf16 %v3447, %v3447
        %v3454 = vsel %vm1830, %v3452, 0
        %v3457 = vsel %vm1883, %v3451, 0
        %3459 = vmatpush.bf16.msra.mxu0 0
        %3460 = vmatpush.bf16.msra.mxu0 0
        %3461 = vmatpush.bf16.msra.mxu0 0
        %3462 = vmatpush.bf16.msra.mxu0 0
        %3463 = vmatpush.bf16.msra.mxu0 0
        %3464 = vmatpush.bf16.msra.mxu0 0
        %3465 = vmatpush.bf16.msra.mxu0 0
        %3466 = vmatpush.bf16.msra.mxu0 %v3457
        %3467 = vmatmul.bf16.gmra.mxu0 %v3454
        %v3468 = vpop.f32.mrf.mxu0
        %v3469 = vadd.f32 0.0, %v3468
        %v3470 = vpop.f32.mrf.mxu0
        %3471 = vdwg.mxu0
        %v3472 = vadd.f32 %v3390, %v3469
        %3473 = vrot.lane.b32.xlu0 %v3232, 104
        %v3474 = vpop.permute.xlu0 %3473
        %3475 = vrot.lane.b32.xlu0 %v3232, 72
        %v3476 = vpop.permute.xlu0 %3475
        %v3478 = vsel %vm1830, %v3474, 0
        %v3481 = vsel %vm1830, %v3476, 0
        %3483 = vmatpush.bf16.xpose.msra.mxu0 0
        %3484 = vmatpush.bf16.xpose.msra.mxu0 0
        %3485 = vmatpush.bf16.xpose.msra.mxu0 0
        %3486 = vmatpush.bf16.xpose.msra.mxu0 0
        %3487 = vmatpush.bf16.xpose.msra.mxu0 0
        %3488 = vmatpush.bf16.xpose.msra.mxu0 0
        %3489 = vmatpush.bf16.xpose.msra.mxu0 0
        %3490 = vmatpush.bf16.xpose.msra.mxu0 %v3481
        %3491 = vmatmul.bf16.gmra.mxu0 %v3478
        %v3492 = vpop.f32.mrf.mxu0
        %v3493 = vadd.f32 0.0, %v3492
        %v3494 = vpop.f32.mrf.mxu0
        %3495 = vdwg.mxu0
        %v3496 = vmul.f32 %v3493, 0.35355338
        %v3497 = vsel %vm3256, %v3496, -inf
        %3498 = vmax.xlane.f32.xlu0 %v3497
        %v3499 = vpop.xlane.xlu0 %3498
        %v3500 = vsub.f32 %v3496, %v3499
        %v3501 = vmul.f32 %v3500, 1.442695
        %v3502 = vpow.pop %v3501
        %v3503 = vsel %vm3256, %v3502, 0.0
        %3504 = vadd.xlane.f32.xlu0 %v3503
        %v3505 = vpop.xlane.xlu0 %3504
        %v3506 = vrcp.pop %v3505
        %v3507 = vmul.f32 %v3502, %v3506
        %v3508 = vpack.c.bf16 %v3507, %v3507
        %3509 = vrot.lane.b32.xlu0 %v3232, 40
        %v3510 = vpop.permute.xlu0 %3509
        %v3512 = vsel %vm3271, %v3508, 0
        %v3515 = vand.u32 %v3510, %v3276
        %3517 = vmatpush.bf16.msra.mxu0 0
        %3518 = vmatpush.bf16.msra.mxu0 0
        %3519 = vmatpush.bf16.msra.mxu0 0
        %3520 = vmatpush.bf16.msra.mxu0 0
        %3521 = vmatpush.bf16.msra.mxu0 0
        %3522 = vmatpush.bf16.msra.mxu0 0
        %3523 = vmatpush.bf16.msra.mxu0 0
        %3524 = vmatpush.bf16.msra.mxu0 %v3515
        %3525 = vmatmul.bf16.gmra.mxu0 %v3512
        %v3526 = vpop.f32.mrf.mxu0
        %v3527 = vadd.f32 0.0, %v3526
        %v3528 = vpop.f32.mrf.mxu0
        %3529 = vdwg.mxu0
        %s3530 = scalar_lea.vmem %s57, 12
        %v3531 = vld [vmem:[%s3530] sm:$0xf]
        %v3532 = vpack.c.bf16 %v3527, %v3527
        %v3534 = vsel %vm1830, %v3532, 0
        %v3537 = vsel %vm1883, %v3531, 0
        %3539 = vmatpush.bf16.msra.mxu0 0
        %3540 = vmatpush.bf16.msra.mxu0 0
        %3541 = vmatpush.bf16.msra.mxu0 0
        %3542 = vmatpush.bf16.msra.mxu0 0
        %3543 = vmatpush.bf16.msra.mxu0 0
        %3544 = vmatpush.bf16.msra.mxu0 0
        %3545 = vmatpush.bf16.msra.mxu0 0
        %3546 = vmatpush.bf16.msra.mxu0 %v3537
        %3547 = vmatmul.bf16.gmra.mxu0 %v3534
        %v3548 = vpop.f32.mrf.mxu0
        %v3549 = vadd.f32 0.0, %v3548
        %v3550 = vpop.f32.mrf.mxu0
        %3551 = vdwg.mxu0
        %v3552 = vadd.f32 %v3472, %v3549
        %v3553 = vld [vmem:[#allocation34] sm:$0x1]
        %v3555 = vperm.slane %v3553, 0
        %v3557 = vadd.f32 %v3552, %v3555
        %v3558 = vadd.f32 %v3194, %v3557
        %v3559 = vld [vmem:[%s69] sm:$0x1]
        %v3560 = vld [vmem:[#allocation37] sm:$0x1]
        %vm3561 = vcmask 260096
        %v3562 = vsel %vm3561, %v3558, 0.0
        %3563 = vadd.xlane.f32.xlu0 %v3562
        %v3564 = vpop.xlane.xlu0 %3563
        %v3565 = vmul.f32 %v3564, %v2235
        %v3566 = vsub.f32 %v3558, %v3565
        %v3567 = vmul.f32 %v3566, %v3566
        %v3568 = vsel %vm3561, %v3567, 0.0
        %3569 = vadd.xlane.f32.xlu0 %v3568
        %v3570 = vpop.xlane.xlu0 %3569
        %v3571 = vmul.f32 %v3570, %v2235
        %v3572 = vadd.f32 %v3571, 1e-05
        %v3573 = vrsqrt.pop %v3572
        %v3574 = vmul.f32 %v3573, %v3572
        %v3575 = vmul.f32 %v3574, %v3573
        %v3576 = vmul.f32 0.5, %v3575
        %v3577 = vsub.f32 1.5, %v3576
        %v3578 = vmul.f32 %v3573, %v3577
        %vm3579 = vweird.f32 %v3572
        %vm3580 = vweird.f32 %v3573
        %vm3581 = vmor %vm3579, %vm3580
        %v3582 = vsel %vm3581, %v3573, %v3578
        %v3583 = vmul.f32 %v3566, %v3582
        %v3585 = vperm.slane %v3559, 0
        %v3587 = vmul.f32 %v3583, %v3585
        %v3589 = vperm.slane %v3560, 0
        %v3591 = vadd.f32 %v3587, %v3589
        %v3592 = vld [vmem:[%s61] sm:$0xf]
        %v3593 = vld [vmem:[%s61 + $0x4] sm:$0xf]
        %v3594 = vld [vmem:[%s61 + $0x8] sm:$0xf]
        %v3595 = vld [vmem:[%s61 + $0xc] sm:$0xf]
        %v3596 = vpack.c.bf16 %v3591, %v3591
        %v3597 = vld [vmem:[#allocation35] sm:$0x1]
        %v3599 = vperm.slane %v3597, 0
        %v3605 = vunpack.c.l.b16 %v3592
        %v3606 = vunpack.c.l.b16 %v3593
        %v3607 = vunpack.c.l.b16 %v3594
        %v3608 = vunpack.c.l.b16 %v3595
        %v3609 = vpack.c.b16 %v3606, %v3605
        %v3610 = vpack.c.b16 %v3608, %v3607
        %v3614 = vsel %vm1808, %v3596, 0
        %3616 = vmatpush.bf16.msra.mxu0 0
        %3617 = vmatpush.bf16.msra.mxu0 0
        %3618 = vmatpush.bf16.msra.mxu0 0
        %3619 = vmatpush.bf16.msra.mxu0 0
        %3620 = vmatpush.bf16.msra.mxu0 0
        %3621 = vmatpush.bf16.msra.mxu0 0
        %3622 = vmatpush.bf16.msra.mxu0 %v3610
        %3623 = vmatpush.bf16.msra.mxu0 %v3609
        %3624 = vmatmul.bf16.gmra.mxu0 %v3614
        %v3625 = vpop.f32.mrf.mxu0
        %v3626 = vadd.f32 %v3599, %v3625
        %v3627 = vpop.f32.mrf.mxu0
        %3628 = vdwg.mxu0
        %v3629 = vmax.f32 %v3626, 0.0
        %v3630 = vld [vmem:[%s65] sm:$0xf]
        %v3631 = vld [vmem:[%s65 + $0x4] sm:$0xf]
        %v3632 = vld [vmem:[%s65 + $0x8] sm:$0xf]
        %v3633 = vld [vmem:[%s65 + $0xc] sm:$0xf]
        %v3634 = vld [vmem:[%s65 + $0x10] sm:$0xf]
        %v3635 = vld [vmem:[%s65 + $0x14] sm:$0xf]
        %v3636 = vld [vmem:[%s65 + $0x18] sm:$0xf]
        %v3637 = vld [vmem:[%s65 + $0x1c] sm:$0xf]
        %v3638 = vpack.c.bf16 %v3629, %v3629
        %v3639 = vld [vmem:[%s67] sm:$0x1]
        %v3641 = vperm.slane %v3639, 0
        %v3651 = vunpack.c.l.b16 %v3630
        %v3652 = vunpack.c.l.b16 %v3631
        %v3653 = vunpack.c.l.b16 %v3632
        %v3654 = vunpack.c.l.b16 %v3633
        %v3655 = vunpack.c.l.b16 %v3634
        %v3656 = vunpack.c.l.b16 %v3635
        %v3657 = vunpack.c.l.b16 %v3636
        %v3658 = vunpack.c.l.b16 %v3637
        %v3659 = vpack.c.b16 %v3652, %v3651
        %v3660 = vpack.c.b16 %v3654, %v3653
        %v3661 = vpack.c.b16 %v3656, %v3655
        %v3662 = vpack.c.b16 %v3658, %v3657
        %v3668 = vsel %vm2361, %v3638, 0
        %3670 = vmatpush.bf16.msra.mxu0 0
        %3671 = vmatpush.bf16.msra.mxu0 0
        %3672 = vmatpush.bf16.msra.mxu0 0
        %3673 = vmatpush.bf16.msra.mxu0 0
        %3674 = vmatpush.bf16.msra.mxu0 %v3662
        %3675 = vmatpush.bf16.msra.mxu0 %v3661
        %3676 = vmatpush.bf16.msra.mxu0 %v3660
        %3677 = vmatpush.bf16.msra.mxu0 %v3659
        %3678 = vmatmul.bf16.gmra.mxu0 %v3668
        %v3679 = vpop.f32.mrf.mxu0
        %v3680 = vadd.f32 %v3641, %v3679
        %v3681 = vpop.f32.mrf.mxu0
        %3682 = vdwg.mxu0
        %v3683 = vadd.f32 %v3591, %v3680
        %v3684 = vld [vmem:[%s73] sm:$0x1]
        %v3685 = vld [vmem:[%s75] sm:$0x1]
        %v3686 = vsel %vm3561, %v3683, 0.0
        %3687 = vadd.xlane.f32.xlu0 %v3686
        %v3688 = vpop.xlane.xlu0 %3687
        %v3689 = vmul.f32 %v3688, %v2235
        %v3690 = vsub.f32 %v3683, %v3689
        %v3691 = vmul.f32 %v3690, %v3690
        %v3692 = vsel %vm3561, %v3691, 0.0
        %3693 = vadd.xlane.f32.xlu0 %v3692
        %v3694 = vpop.xlane.xlu0 %3693
        %v3695 = vmul.f32 %v3694, %v2235
        %v3696 = vadd.f32 %v3695, 1e-05
        %v3697 = vrsqrt.pop %v3696
        %v3698 = vmul.f32 %v3697, %v3696
        %v3699 = vmul.f32 %v3698, %v3697
        %v3700 = vmul.f32 0.5, %v3699
        %v3701 = vsub.f32 1.5, %v3700
        %v3702 = vmul.f32 %v3697, %v3701
        %vm3703 = vweird.f32 %v3696
        %vm3704 = vweird.f32 %v3697
        %vm3705 = vmor %vm3703, %vm3704
        %v3706 = vsel %vm3705, %v3697, %v3702
        %v3707 = vmul.f32 %v3690, %v3706
        %v3709 = vperm.slane %v3684, 0
        %v3711 = vmul.f32 %v3707, %v3709
        %v3713 = vperm.slane %v3685, 0
        %v3715 = vadd.f32 %v3711, %v3713
        %s3716 = scalar_lea.vmem %s53, 16
        %v3717 = vld [vmem:[%s3716] sm:$0xf]
        %v3718 = vld [vmem:[%s3716 + $0x4] sm:$0xf]
        %v3719 = vld [vmem:[%s3716 + $0x8] sm:$0xf]
        %v3720 = vld [vmem:[%s3716 + $0xc] sm:$0xf]
        %v3721 = vpack.c.bf16 %v3715, %v3715
        %s3722 = scalar_lea.vmem [#allocation32], 1
        %v3723 = vld [vmem:[%s3722] sm:$0x1]
        %v3725 = vperm.slane %v3723, 0
        %v3731 = vunpack.c.l.b16 %v3717
        %v3732 = vunpack.c.l.b16 %v3718
        %v3733 = vunpack.c.l.b16 %v3719
        %v3734 = vunpack.c.l.b16 %v3720
        %v3735 = vpack.c.b16 %v3732, %v3731
        %v3736 = vpack.c.b16 %v3734, %v3733
        %v3740 = vsel %vm1808, %v3721, 0
        %3742 = vmatpush.bf16.msra.mxu0 0
        %3743 = vmatpush.bf16.msra.mxu0 0
        %3744 = vmatpush.bf16.msra.mxu0 0
        %3745 = vmatpush.bf16.msra.mxu0 0
        %3746 = vmatpush.bf16.msra.mxu0 0
        %3747 = vmatpush.bf16.msra.mxu0 0
        %3748 = vmatpush.bf16.msra.mxu0 %v3736
        %3749 = vmatpush.bf16.msra.mxu0 %v3735
        %3750 = vmatmul.bf16.gmra.mxu0 %v3740
        %v3751 = vpop.f32.mrf.mxu0
        %v3752 = vadd.f32 %v3725, %v3751
        %v3753 = vpop.f32.mrf.mxu0
        %3754 = vdwg.mxu0
        %v3755 = vpack.c.bf16 %v3752, %v3752
        %3757 = vrot.lane.b32.xlu0 %v3755, 96
        %v3758 = vpop.permute.xlu0 %3757
        %v3760 = vsel %vm1830, %v3755, 0
        %v3763 = vsel %vm1830, %v3758, 0
        %3765 = vmatpush.bf16.xpose.msra.mxu0 0
        %3766 = vmatpush.bf16.xpose.msra.mxu0 0
        %3767 = vmatpush.bf16.xpose.msra.mxu0 0
        %3768 = vmatpush.bf16.xpose.msra.mxu0 0
        %3769 = vmatpush.bf16.xpose.msra.mxu0 0
        %3770 = vmatpush.bf16.xpose.msra.mxu0 0
        %3771 = vmatpush.bf16.xpose.msra.mxu0 0
        %3772 = vmatpush.bf16.xpose.msra.mxu0 %v3763
        %3773 = vmatmul.bf16.gmra.mxu0 %v3760
        %v3774 = vpop.f32.mrf.mxu0
        %v3775 = vadd.f32 0.0, %v3774
        %v3776 = vpop.f32.mrf.mxu0
        %3777 = vdwg.mxu0
        %v3778 = vmul.f32 %v3775, 0.35355338
        %v3779 = vsel %vm3256, %v3778, -inf
        %3780 = vmax.xlane.f32.xlu0 %v3779
        %v3781 = vpop.xlane.xlu0 %3780
        %v3782 = vsub.f32 %v3778, %v3781
        %v3783 = vmul.f32 %v3782, 1.442695
        %v3784 = vpow.pop %v3783
        %v3785 = vsel %vm3256, %v3784, 0.0
        %3786 = vadd.xlane.f32.xlu0 %v3785
        %v3787 = vpop.xlane.xlu0 %3786
        %v3788 = vrcp.pop %v3787
        %v3789 = vmul.f32 %v3784, %v3788
        %v3790 = vpack.c.bf16 %v3789, %v3789
        %3791 = vrot.lane.b32.xlu0 %v3755, 64
        %v3792 = vpop.permute.xlu0 %3791
        %v3794 = vsel %vm3271, %v3790, 0
        %v3797 = vand.u32 %v3792, %v3276
        %3799 = vmatpush.bf16.msra.mxu0 0
        %3800 = vmatpush.bf16.msra.mxu0 0
        %3801 = vmatpush.bf16.msra.mxu0 0
        %3802 = vmatpush.bf16.msra.mxu0 0
        %3803 = vmatpush.bf16.msra.mxu0 0
        %3804 = vmatpush.bf16.msra.mxu0 0
        %3805 = vmatpush.bf16.msra.mxu0 0
        %3806 = vmatpush.bf16.msra.mxu0 %v3797
        %3807 = vmatmul.bf16.gmra.mxu0 %v3794
        %v3808 = vpop.f32.mrf.mxu0
        %v3809 = vadd.f32 0.0, %v3808
        %v3810 = vpop.f32.mrf.mxu0
        %3811 = vdwg.mxu0
        %s3812 = scalar_lea.vmem %s57, 16
        %v3813 = vld [vmem:[%s3812] sm:$0xf]
        %v3814 = vpack.c.bf16 %v3809, %v3809
        %3815 = vrot.lane.b32.xlu0 %v3755, 120
        %v3816 = vpop.permute.xlu0 %3815
        %3817 = vrot.lane.b32.xlu0 %v3755, 88
        %v3818 = vpop.permute.xlu0 %3817
        %v3820 = vsel %vm1830, %v3816, 0
        %v3823 = vsel %vm1830, %v3818, 0
        %3825 = vmatpush.bf16.xpose.msra.mxu0 0
        %3826 = vmatpush.bf16.xpose.msra.mxu0 0
        %3827 = vmatpush.bf16.xpose.msra.mxu0 0
        %3828 = vmatpush.bf16.xpose.msra.mxu0 0
        %3829 = vmatpush.bf16.xpose.msra.mxu0 0
        %3830 = vmatpush.bf16.xpose.msra.mxu0 0
        %3831 = vmatpush.bf16.xpose.msra.mxu0 0
        %3832 = vmatpush.bf16.xpose.msra.mxu0 %v3823
        %3833 = vmatmul.bf16.gmra.mxu0 %v3820
        %v3834 = vpop.f32.mrf.mxu0
        %v3835 = vadd.f32 0.0, %v3834
        %v3836 = vpop.f32.mrf.mxu0
        %3837 = vdwg.mxu0
        %v3838 = vmul.f32 %v3835, 0.35355338
        %v3839 = vsel %vm3256, %v3838, -inf
        %3840 = vmax.xlane.f32.xlu0 %v3839
        %v3841 = vpop.xlane.xlu0 %3840
        %v3842 = vsub.f32 %v3838, %v3841
        %v3843 = vmul.f32 %v3842, 1.442695
        %v3844 = vpow.pop %v3843
        %v3845 = vsel %vm3256, %v3844, 0.0
        %3846 = vadd.xlane.f32.xlu0 %v3845
        %v3847 = vpop.xlane.xlu0 %3846
        %v3848 = vrcp.pop %v3847
        %v3849 = vmul.f32 %v3844, %v3848
        %v3850 = vpack.c.bf16 %v3849, %v3849
        %3851 = vrot.lane.b32.xlu0 %v3755, 56
        %v3852 = vpop.permute.xlu0 %3851
        %v3854 = vsel %vm3271, %v3850, 0
        %v3857 = vand.u32 %v3852, %v3276
        %3859 = vmatpush.bf16.msra.mxu0 0
        %3860 = vmatpush.bf16.msra.mxu0 0
        %3861 = vmatpush.bf16.msra.mxu0 0
        %3862 = vmatpush.bf16.msra.mxu0 0
        %3863 = vmatpush.bf16.msra.mxu0 0
        %3864 = vmatpush.bf16.msra.mxu0 0
        %3865 = vmatpush.bf16.msra.mxu0 0
        %3866 = vmatpush.bf16.msra.mxu0 %v3857
        %3867 = vmatmul.bf16.gmra.mxu0 %v3854
        %v3868 = vpop.f32.mrf.mxu0
        %v3869 = vadd.f32 0.0, %v3868
        %v3870 = vpop.f32.mrf.mxu0
        %3871 = vdwg.mxu0
        %s3872 = scalar_lea.vmem %s57, 20
        %v3873 = vld [vmem:[%s3872] sm:$0xf]
        %v3874 = vpack.c.bf16 %v3869, %v3869
        %v3876 = vsel %vm1830, %v3874, 0
        %v3879 = vsel %vm1883, %v3873, 0
        %3881 = vmatpush.bf16.msra.mxu0 0
        %3882 = vmatpush.bf16.msra.mxu0 0
        %3883 = vmatpush.bf16.msra.mxu0 0
        %3884 = vmatpush.bf16.msra.mxu0 0
        %3885 = vmatpush.bf16.msra.mxu0 0
        %3886 = vmatpush.bf16.msra.mxu0 0
        %3887 = vmatpush.bf16.msra.mxu0 0
        %3888 = vmatpush.bf16.msra.mxu0 %v3879
        %3889 = vmatmul.bf16.gmra.mxu0 %v3876
        %v3890 = vpop.f32.mrf.mxu0
        %v3891 = vadd.f32 0.0, %v3890
        %v3892 = vpop.f32.mrf.mxu0
        %3893 = vdwg.mxu0
        %v3895 = vsel %vm1830, %v3814, 0
        %v3898 = vsel %vm1883, %v3813, 0
        %3900 = vmatpush.bf16.msra.mxu0 0
        %3901 = vmatpush.bf16.msra.mxu0 0
        %3902 = vmatpush.bf16.msra.mxu0 0
        %3903 = vmatpush.bf16.msra.mxu0 0
        %3904 = vmatpush.bf16.msra.mxu0 0
        %3905 = vmatpush.bf16.msra.mxu0 0
        %3906 = vmatpush.bf16.msra.mxu0 0
        %3907 = vmatpush.bf16.msra.mxu0 %v3898
        %3908 = vmatmul.bf16.gmra.mxu0 %v3895
        %v3909 = vpop.f32.mrf.mxu0
        %v3910 = vadd.f32 %v3891, %v3909
        %v3911 = vpop.f32.mrf.mxu0
        %3912 = vdwg.mxu0
        %3913 = vrot.lane.b32.xlu0 %v3755, 112
        %v3914 = vpop.permute.xlu0 %3913
        %3915 = vrot.lane.b32.xlu0 %v3755, 80
        %v3916 = vpop.permute.xlu0 %3915
        %v3918 = vsel %vm1830, %v3914, 0
        %v3921 = vsel %vm1830, %v3916, 0
        %3923 = vmatpush.bf16.xpose.msra.mxu0 0
        %3924 = vmatpush.bf16.xpose.msra.mxu0 0
        %3925 = vmatpush.bf16.xpose.msra.mxu0 0
        %3926 = vmatpush.bf16.xpose.msra.mxu0 0
        %3927 = vmatpush.bf16.xpose.msra.mxu0 0
        %3928 = vmatpush.bf16.xpose.msra.mxu0 0
        %3929 = vmatpush.bf16.xpose.msra.mxu0 0
        %3930 = vmatpush.bf16.xpose.msra.mxu0 %v3921
        %3931 = vmatmul.bf16.gmra.mxu0 %v3918
        %v3932 = vpop.f32.mrf.mxu0
        %v3933 = vadd.f32 0.0, %v3932
        %v3934 = vpop.f32.mrf.mxu0
        %3935 = vdwg.mxu0
        %v3936 = vmul.f32 %v3933, 0.35355338
        %v3937 = vsel %vm3256, %v3936, -inf
        %3938 = vmax.xlane.f32.xlu0 %v3937
        %v3939 = vpop.xlane.xlu0 %3938
        %v3940 = vsub.f32 %v3936, %v3939
        %v3941 = vmul.f32 %v3940, 1.442695
        %v3942 = vpow.pop %v3941
        %v3943 = vsel %vm3256, %v3942, 0.0
        %3944 = vadd.xlane.f32.xlu0 %v3943
        %v3945 = vpop.xlane.xlu0 %3944
        %v3946 = vrcp.pop %v3945
        %v3947 = vmul.f32 %v3942, %v3946
        %v3948 = vpack.c.bf16 %v3947, %v3947
        %3949 = vrot.lane.b32.xlu0 %v3755, 48
        %v3950 = vpop.permute.xlu0 %3949
        %v3952 = vsel %vm3271, %v3948, 0
        %v3955 = vand.u32 %v3950, %v3276
        %3957 = vmatpush.bf16.msra.mxu0 0
        %3958 = vmatpush.bf16.msra.mxu0 0
        %3959 = vmatpush.bf16.msra.mxu0 0
        %3960 = vmatpush.bf16.msra.mxu0 0
        %3961 = vmatpush.bf16.msra.mxu0 0
        %3962 = vmatpush.bf16.msra.mxu0 0
        %3963 = vmatpush.bf16.msra.mxu0 0
        %3964 = vmatpush.bf16.msra.mxu0 %v3955
        %3965 = vmatmul.bf16.gmra.mxu0 %v3952
        %v3966 = vpop.f32.mrf.mxu0
        %v3967 = vadd.f32 0.0, %v3966
        %v3968 = vpop.f32.mrf.mxu0
        %3969 = vdwg.mxu0
        %s3970 = scalar_lea.vmem %s57, 24
        %v3971 = vld [vmem:[%s3970] sm:$0xf]
        %v3972 = vpack.c.bf16 %v3967, %v3967
        %v3974 = vsel %vm1830, %v3972, 0
        %v3977 = vsel %vm1883, %v3971, 0
        %3979 = vmatpush.bf16.msra.mxu0 0
        %3980 = vmatpush.bf16.msra.mxu0 0
        %3981 = vmatpush.bf16.msra.mxu0 0
        %3982 = vmatpush.bf16.msra.mxu0 0
        %3983 = vmatpush.bf16.msra.mxu0 0
        %3984 = vmatpush.bf16.msra.mxu0 0
        %3985 = vmatpush.bf16.msra.mxu0 0
        %3986 = vmatpush.bf16.msra.mxu0 %v3977
        %3987 = vmatmul.bf16.gmra.mxu0 %v3974
        %v3988 = vpop.f32.mrf.mxu0
        %v3989 = vadd.f32 0.0, %v3988
        %v3990 = vpop.f32.mrf.mxu0
        %3991 = vdwg.mxu0
        %v3992 = vadd.f32 %v3910, %v3989
        %3993 = vrot.lane.b32.xlu0 %v3755, 104
        %v3994 = vpop.permute.xlu0 %3993
        %3995 = vrot.lane.b32.xlu0 %v3755, 72
        %v3996 = vpop.permute.xlu0 %3995
        %v3998 = vsel %vm1830, %v3994, 0
        %v4001 = vsel %vm1830, %v3996, 0
        %4003 = vmatpush.bf16.xpose.msra.mxu0 0
        %4004 = vmatpush.bf16.xpose.msra.mxu0 0
        %4005 = vmatpush.bf16.xpose.msra.mxu0 0
        %4006 = vmatpush.bf16.xpose.msra.mxu0 0
        %4007 = vmatpush.bf16.xpose.msra.mxu0 0
        %4008 = vmatpush.bf16.xpose.msra.mxu0 0
        %4009 = vmatpush.bf16.xpose.msra.mxu0 0
        %4010 = vmatpush.bf16.xpose.msra.mxu0 %v4001
        %4011 = vmatmul.bf16.gmra.mxu0 %v3998
        %v4012 = vpop.f32.mrf.mxu0
        %v4013 = vadd.f32 0.0, %v4012
        %v4014 = vpop.f32.mrf.mxu0
        %4015 = vdwg.mxu0
        %v4016 = vmul.f32 %v4013, 0.35355338
        %v4017 = vsel %vm3256, %v4016, -inf
        %4018 = vmax.xlane.f32.xlu0 %v4017
        %v4019 = vpop.xlane.xlu0 %4018
        %v4020 = vsub.f32 %v4016, %v4019
        %v4021 = vmul.f32 %v4020, 1.442695
        %v4022 = vpow.pop %v4021
        %v4023 = vsel %vm3256, %v4022, 0.0
        %4024 = vadd.xlane.f32.xlu0 %v4023
        %v4025 = vpop.xlane.xlu0 %4024
        %v4026 = vrcp.pop %v4025
        %v4027 = vmul.f32 %v4022, %v4026
        %v4028 = vpack.c.bf16 %v4027, %v4027
        %4029 = vrot.lane.b32.xlu0 %v3755, 40
        %v4030 = vpop.permute.xlu0 %4029
        %v4032 = vsel %vm3271, %v4028, 0
        %v4035 = vand.u32 %v4030, %v3276
        %4037 = vmatpush.bf16.msra.mxu0 0
        %4038 = vmatpush.bf16.msra.mxu0 0
        %4039 = vmatpush.bf16.msra.mxu0 0
        %4040 = vmatpush.bf16.msra.mxu0 0
        %4041 = vmatpush.bf16.msra.mxu0 0
        %4042 = vmatpush.bf16.msra.mxu0 0
        %4043 = vmatpush.bf16.msra.mxu0 0
        %4044 = vmatpush.bf16.msra.mxu0 %v4035
        %4045 = vmatmul.bf16.gmra.mxu0 %v4032
        %v4046 = vpop.f32.mrf.mxu0
        %v4047 = vadd.f32 0.0, %v4046
        %v4048 = vpop.f32.mrf.mxu0
        %4049 = vdwg.mxu0
        %s4050 = scalar_lea.vmem %s57, 28
        %v4051 = vld [vmem:[%s4050] sm:$0xf]
        %v4052 = vpack.c.bf16 %v4047, %v4047
        %v4054 = vsel %vm1830, %v4052, 0
        %v4057 = vsel %vm1883, %v4051, 0
        %4059 = vmatpush.bf16.msra.mxu0 0
        %4060 = vmatpush.bf16.msra.mxu0 0
        %4061 = vmatpush.bf16.msra.mxu0 0
        %4062 = vmatpush.bf16.msra.mxu0 0
        %4063 = vmatpush.bf16.msra.mxu0 0
        %4064 = vmatpush.bf16.msra.mxu0 0
        %4065 = vmatpush.bf16.msra.mxu0 0
        %4066 = vmatpush.bf16.msra.mxu0 %v4057
        %4067 = vmatmul.bf16.gmra.mxu0 %v4054
        %v4068 = vpop.f32.mrf.mxu0
        %v4069 = vadd.f32 0.0, %v4068
        %v4070 = vpop.f32.mrf.mxu0
        %4071 = vdwg.mxu0
        %v4072 = vadd.f32 %v3992, %v4069
        %s4073 = scalar_lea.vmem [#allocation34], 1
        %v4074 = vld [vmem:[%s4073] sm:$0x1]
        %v4076 = vperm.slane %v4074, 0
        %v4078 = vadd.f32 %v4072, %v4076
        %v4079 = vadd.f32 %v3715, %v4078
        %s4080 = scalar_lea.vmem %s69, 1
        %v4081 = vld [vmem:[%s4080] sm:$0x1]
        %s4082 = scalar_lea.vmem [#allocation37], 1
        %v4083 = vld [vmem:[%s4082] sm:$0x1]
        %v4084 = vsel %vm3561, %v4079, 0.0
        %4085 = vadd.xlane.f32.xlu0 %v4084
        %v4086 = vpop.xlane.xlu0 %4085
        %v4087 = vmul.f32 %v4086, %v2235
        %v4088 = vsub.f32 %v4079, %v4087
        %v4089 = vmul.f32 %v4088, %v4088
        %v4090 = vsel %vm3561, %v4089, 0.0
        %4091 = vadd.xlane.f32.xlu0 %v4090
        %v4092 = vpop.xlane.xlu0 %4091
        %v4093 = vmul.f32 %v4092, %v2235
        %v4094 = vadd.f32 %v4093, 1e-05
        %v4095 = vrsqrt.pop %v4094
        %v4096 = vmul.f32 %v4095, %v4094
        %v4097 = vmul.f32 %v4096, %v4095
        %v4098 = vmul.f32 0.5, %v4097
        %v4099 = vsub.f32 1.5, %v4098
        %v4100 = vmul.f32 %v4095, %v4099
        %vm4101 = vweird.f32 %v4094
        %vm4102 = vweird.f32 %v4095
        %vm4103 = vmor %vm4101, %vm4102
        %v4104 = vsel %vm4103, %v4095, %v4100
        %v4105 = vmul.f32 %v4088, %v4104
        %v4107 = vperm.slane %v4081, 0
        %v4109 = vmul.f32 %v4105, %v4107
        %v4111 = vperm.slane %v4083, 0
        %v4113 = vadd.f32 %v4109, %v4111
        %s4114 = scalar_lea.vmem %s61, 16
        %v4115 = vld [vmem:[%s4114] sm:$0xf]
        %v4116 = vld [vmem:[%s4114 + $0x4] sm:$0xf]
        %v4117 = vld [vmem:[%s4114 + $0x8] sm:$0xf]
        %v4118 = vld [vmem:[%s4114 + $0xc] sm:$0xf]
        %v4119 = vpack.c.bf16 %v4113, %v4113
        %s4120 = scalar_lea.vmem [#allocation35], 1
        %v4121 = vld [vmem:[%s4120] sm:$0x1]
        %v4123 = vperm.slane %v4121, 0
        %v4129 = vunpack.c.l.b16 %v4115
        %v4130 = vunpack.c.l.b16 %v4116
        %v4131 = vunpack.c.l.b16 %v4117
        %v4132 = vunpack.c.l.b16 %v4118
        %v4133 = vpack.c.b16 %v4130, %v4129
        %v4134 = vpack.c.b16 %v4132, %v4131
        %v4138 = vsel %vm1808, %v4119, 0
        %4140 = vmatpush.bf16.msra.mxu0 0
        %4141 = vmatpush.bf16.msra.mxu0 0
        %4142 = vmatpush.bf16.msra.mxu0 0
        %4143 = vmatpush.bf16.msra.mxu0 0
        %4144 = vmatpush.bf16.msra.mxu0 0
        %4145 = vmatpush.bf16.msra.mxu0 0
        %4146 = vmatpush.bf16.msra.mxu0 %v4134
        %4147 = vmatpush.bf16.msra.mxu0 %v4133
        %4148 = vmatmul.bf16.gmra.mxu0 %v4138
        %v4149 = vpop.f32.mrf.mxu0
        %v4150 = vadd.f32 %v4123, %v4149
        %v4151 = vpop.f32.mrf.mxu0
        %4152 = vdwg.mxu0
        %v4153 = vmax.f32 %v4150, 0.0
        %s4154 = scalar_lea.vmem %s65, 32
        %v4155 = vld [vmem:[%s4154] sm:$0xf]
        %v4156 = vld [vmem:[%s4154 + $0x4] sm:$0xf]
        %v4157 = vld [vmem:[%s4154 + $0x8] sm:$0xf]
        %v4158 = vld [vmem:[%s4154 + $0xc] sm:$0xf]
        %v4159 = vld [vmem:[%s4154 + $0x10] sm:$0xf]
        %v4160 = vld [vmem:[%s4154 + $0x14] sm:$0xf]
        %v4161 = vld [vmem:[%s4154 + $0x18] sm:$0xf]
        %v4162 = vld [vmem:[%s4154 + $0x1c] sm:$0xf]
        %v4163 = vpack.c.bf16 %v4153, %v4153
        %s4164 = scalar_lea.vmem %s67, 1
        %v4165 = vld [vmem:[%s4164] sm:$0x1]
        %v4167 = vperm.slane %v4165, 0
        %v4177 = vunpack.c.l.b16 %v4155
        %v4178 = vunpack.c.l.b16 %v4156
        %v4179 = vunpack.c.l.b16 %v4157
        %v4180 = vunpack.c.l.b16 %v4158
        %v4181 = vunpack.c.l.b16 %v4159
        %v4182 = vunpack.c.l.b16 %v4160
        %v4183 = vunpack.c.l.b16 %v4161
        %v4184 = vunpack.c.l.b16 %v4162
        %v4185 = vpack.c.b16 %v4178, %v4177
        %v4186 = vpack.c.b16 %v4180, %v4179
        %v4187 = vpack.c.b16 %v4182, %v4181
        %v4188 = vpack.c.b16 %v4184, %v4183
        %v4194 = vsel %vm2361, %v4163, 0
        %4196 = vmatpush.bf16.msra.mxu0 0
        %4197 = vmatpush.bf16.msra.mxu0 0
        %4198 = vmatpush.bf16.msra.mxu0 0
        %4199 = vmatpush.bf16.msra.mxu0 0
        %4200 = vmatpush.bf16.msra.mxu0 %v4188
        %4201 = vmatpush.bf16.msra.mxu0 %v4187
        %4202 = vmatpush.bf16.msra.mxu0 %v4186
        %4203 = vmatpush.bf16.msra.mxu0 %v4185
        %4204 = vmatmul.bf16.gmra.mxu0 %v4194
        %v4205 = vpop.f32.mrf.mxu0
        %v4206 = vadd.f32 %v4167, %v4205
        %v4207 = vpop.f32.mrf.mxu0
        %4208 = vdwg.mxu0
        %v4209 = vadd.f32 %v4113, %v4206
        %s4210 = scalar_lea.vmem %s73, 1
        %v4211 = vld [vmem:[%s4210] sm:$0x1]
        %s4212 = scalar_lea.vmem %s75, 1
        %v4213 = vld [vmem:[%s4212] sm:$0x1]
        %v4214 = vsel %vm3561, %v4209, 0.0
        %4215 = vadd.xlane.f32.xlu0 %v4214
        %v4216 = vpop.xlane.xlu0 %4215
        %v4217 = vmul.f32 %v4216, %v2235
        %v4218 = vsub.f32 %v4209, %v4217
        %v4219 = vmul.f32 %v4218, %v4218
        %v4220 = vsel %vm3561, %v4219, 0.0
        %4221 = vadd.xlane.f32.xlu0 %v4220
        %v4222 = vpop.xlane.xlu0 %4221
        %v4223 = vmul.f32 %v4222, %v2235
        %v4224 = vadd.f32 %v4223, 1e-05
        %v4225 = vrsqrt.pop %v4224
        %v4226 = vmul.f32 %v4225, %v4224
        %v4227 = vmul.f32 %v4226, %v4225
        %v4228 = vmul.f32 0.5, %v4227
        %v4229 = vsub.f32 1.5, %v4228
        %v4230 = vmul.f32 %v4225, %v4229
        %vm4231 = vweird.f32 %v4224
        %vm4232 = vweird.f32 %v4225
        %vm4233 = vmor %vm4231, %vm4232
        %v4234 = vsel %vm4233, %v4225, %v4230
        %v4235 = vmul.f32 %v4218, %v4234
        %v4237 = vperm.slane %v4211, 0
        %v4239 = vmul.f32 %v4235, %v4237
        %v4241 = vperm.slane %v4213, 0
        %v4243 = vadd.f32 %v4239, %v4241
        %v4244 = vsel %vm3561, %v4243, 0.0
        %v4245 = vrot.slane %v4244, 4
        %v4246 = vadd.f32 %v4244, %v4245
        %v4247 = vrot.slane %v4246, 2
        %v4248 = vadd.f32 %v4246, %v4247
        %v4249 = vrot.slane %v4248, 1
        %v4250 = vadd.f32 %v4248, %v4249
        %v4251 = vrcp.pop 7.0
        %v4252 = vmul.f32 7.0, %v4251
        %v4253 = vsub.f32 1.0, %v4252
        %v4254 = vmul.f32 %v4251, %v4253
        %v4255 = vadd.f32 %v4251, %v4254
        %vm4256 = vweird.f32 %v4251
        %v4257 = vsel %vm4256, %v4251, %v4255
        %v4258 = vmul.f32 %v4250, %v4257
        %v4259 = vadd.f32 %v3098, %v4258
        %v4260 = vld [vmem:[#allocation38] sm:$0xf]
        %v4261 = vld [vmem:[#allocation38 + $0x4] sm:$0xf]
        %v4262 = vld [vmem:[#allocation38 + $0x8] sm:$0xf]
        %v4263 = vld [vmem:[#allocation38 + $0xc] sm:$0xf]
        %v4264 = vpack.c.bf16 %v4259, %v4259
        %v4265 = vld [vmem:[#allocation40] sm:$0x1]
        %v4270 = vunpack.c.l.b16 %v4260
        %v4271 = vunpack.c.l.b16 %v4261
        %v4272 = vunpack.c.l.b16 %v4262
        %v4273 = vunpack.c.l.b16 %v4263
        %v4274 = vpack.c.b16 %v4271, %v4270
        %v4275 = vpack.c.b16 %v4273, %v4272
        %v4279 = vsel %vm1808, %v4264, 0
        %4281 = vmatpush.bf16.msra.mxu0 0
        %4282 = vmatpush.bf16.msra.mxu0 0
        %4283 = vmatpush.bf16.msra.mxu0 0
        %4284 = vmatpush.bf16.msra.mxu0 0
        %4285 = vmatpush.bf16.msra.mxu0 0
        %4286 = vmatpush.bf16.msra.mxu0 0
        %4287 = vmatpush.bf16.msra.mxu0 %v4275
        %4288 = vmatpush.bf16.msra.mxu0 %v4274
        %4289 = vmatmul.bf16.gmra.mxu0 %v4279
        %v4290 = vpop.f32.mrf.mxu0
        %v4291 = vadd.f32 %v4265, %v4290
        %v4292 = vpop.f32.mrf.mxu0
        %4293 = vdwg.mxu0
        %v4294 = vmax.f32 %v4291, 0.0
        %v4295 = vld [vmem:[%s81] sm:$0xf]
        %v4296 = vld [vmem:[%s81 + $0x4] sm:$0xf]
        %v4297 = vld [vmem:[%s81 + $0x8] sm:$0xf]
        %v4298 = vld [vmem:[%s81 + $0xc] sm:$0xf]
        %v4299 = vld [vmem:[%s81 + $0x10] sm:$0xf]
        %v4300 = vld [vmem:[%s81 + $0x14] sm:$0xf]
        %v4301 = vld [vmem:[%s81 + $0x18] sm:$0xf]
        %v4302 = vld [vmem:[%s81 + $0x1c] sm:$0xf]
        %v4303 = vpack.c.bf16 %v4294, %v4294
        %v4304 = vld [vmem:[%s83] sm:$0x1]
        %v4313 = vunpack.c.l.b16 %v4295
        %v4314 = vunpack.c.l.b16 %v4296
        %v4315 = vunpack.c.l.b16 %v4297
        %v4316 = vunpack.c.l.b16 %v4298
        %v4317 = vunpack.c.l.b16 %v4299
        %v4318 = vunpack.c.l.b16 %v4300
        %v4319 = vunpack.c.l.b16 %v4301
        %v4320 = vunpack.c.l.b16 %v4302
        %v4321 = vpack.c.b16 %v4314, %v4313
        %v4322 = vpack.c.b16 %v4316, %v4315
        %v4323 = vpack.c.b16 %v4318, %v4317
        %v4324 = vpack.c.b16 %v4320, %v4319
        %v4330 = vsel %vm2361, %v4303, 0
        %4332 = vmatpush.bf16.msra.mxu0 0
        %4333 = vmatpush.bf16.msra.mxu0 0
        %4334 = vmatpush.bf16.msra.mxu0 0
        %4335 = vmatpush.bf16.msra.mxu0 0
        %4336 = vmatpush.bf16.msra.mxu0 %v4324
        %4337 = vmatpush.bf16.msra.mxu0 %v4323
        %4338 = vmatpush.bf16.msra.mxu0 %v4322
        %4339 = vmatpush.bf16.msra.mxu0 %v4321
        %4340 = vmatmul.bf16.gmra.mxu0 %v4330
        %v4341 = vpop.f32.mrf.mxu0
        %v4342 = vadd.f32 %v4304, %v4341
        %v4343 = vpop.f32.mrf.mxu0
        %4344 = vdwg.mxu0
        %4345 = vst [vmem:[%s1668] sm:$0x1] %v4342
        %s4346 = sand.u32 %s1012, 1
        %s4347 = scalar_lea.sflag [#allocation4], %s4346
        %s4348 = sand.u32 %s1012, 1
        %s4349 = scalar_lea.vmem [#allocation41], %s4348
        // Predicated region
        $region289: #{tpu_custom_call.1} parent=187 // pred_check
          %p4350 = pneg %p1022
        $region290: #{tpu_custom_call.1} parent=187 // pred_check_branch
          %4352 = sbr.rel (%p4350) target = $region292
        $region291: #{tpu_custom_call.1} parent=187 // pred_region
          %4354 = vsyncadd %s4347, 0
          %s4355 = scalar_lea.hbm %s85, %s112
          %s4357 = sshll.u32 %s4349, 4
          %s4358 = int_to_ptr.vmem [resolvable:$true] %s4357
          %s4359 = sshll.u32 %s4355, 4
          %s4360 = int_to_ptr.hbm [resolvable:$true] %s4359
          %4362 = dma.vmem_to_hbm [thread:$0]  %s4358, 16, %s4360, %s4347
        $region292: #{tpu_custom_call.1} parent=187 // pred_fallthru
          _
      $region188: #{tpu_custom_call.1} parent=5 // pred_fallthru
        _
      %p4363 = scmp.le.s32.totalorder 2, %s107
      // Predicated region
      $region293: #{tpu_custom_call.1} parent=5 // pred_check
        %p4364 = pneg %p4363
      $region294: #{tpu_custom_call.1} parent=5 // pred_check_branch
        %4366 = sbr.rel (%p4364) target = $region296
      $region295: #{tpu_custom_call.1} parent=5 // pred_region
        %s4367 = ssub.s32 %s107, 2
        // Predicated region
        $region297: #{tpu_custom_call.1} parent=295 // pred_check
          %p4368 = pneg %p1028
        $region298: #{tpu_custom_call.1} parent=295 // pred_check_branch
          %4370 = sbr.rel (%p4368) target = $region300
        $region299: #{tpu_custom_call.1} parent=295 // pred_region
          %s4371 = sand.u32 %s1013, 1
          %s4372 = scalar_lea.sflag [#allocation4], %s4371
          %s4373 = sand.u32 %s1013, 1
          %s4374 = scalar_lea.vmem [#allocation41], %s4373
          %4376 = dma.done %s4372, 16
        $region300: #{tpu_custom_call.1} parent=295 // pred_fallthru
          _
      $region296: #{tpu_custom_call.1} parent=5 // pred_fallthru
        _
    $region6: #{tpu_custom_call.1} parent=1 // loop_footer
      %s111 = sadd.s32 1, %s107
    $region7: #{tpu_custom_call.1} parent=1 // loop_footer_branch
      %106 = sbr.rel target = $region3
    $region8: #{tpu_custom_call.1} parent=1 // loop_exit
      _
    %4377 = vsyncpa [#allocation3], 1
    %s4378 = scalar_lea.sflag [#allocation3], 1
    %4379 = vsyncpa %s4378, 1
    %4380 = vsyncpa [#allocation6], 1
    %4381 = vsyncpa [#allocation9], 1
    %4382 = vsyncpa [#allocation12], 1
    %4383 = vsyncpa [#allocation15], 1
    %4384 = vsyncpa [#allocation18], 1
    %4385 = vsyncpa [#allocation21], 1
    %4386 = vsyncpa [#allocation24], 1
    %4387 = vsyncpa [#allocation27], 1
    %4388 = vsyncpa [#allocation30], 1
    %4389 = vsyncpa [#allocation33], 1
    %4390 = vsyncpa [#allocation36], 1
    %4391 = vsyncpa [#allocation39], 1
    %4392 = vsyncpa [#allocation4], 1
    %s4393 = scalar_lea.sflag [#allocation4], 1
    %4394 = vsyncpa %s4393, 1

</llo_original>
